<compile_context>
chip_gen: v6e
topology: v6e:2x2x1
jax: 0.10.0
libtpu: 0.0.40
codegen_flags: <defaults>
</compile_context>

<pallas_src>
import functools

import jax
import jax.numpy as jnp
from jax.experimental import pallas as pl
from jax.experimental.pallas import tpu as pltpu

LN_EPS = 1e-5  # PyTorch nn.LayerNorm default


def _layernorm_f32(x, gamma, beta):
    # x: (rows, C) f32; gamma/beta: (C,) f32
    mu = jnp.mean(x, axis=-1, keepdims=True)
    var = jnp.mean(jnp.square(x - mu), axis=-1, keepdims=True)
    return (x - mu) * jax.lax.rsqrt(var + LN_EPS) * gamma + beta


def _heads_per_group(num_heads, head_dim):
    # Largest group keeping the per-group lane width <= 256 (one MXU output tile on v6e/v7x)
    # so the grouped q / output-projection matmuls stay >=128 lanes wide.
    for hp in (4, 2, 1):
        if num_heads % hp == 0 and hp * head_dim <= 256:
            return hp
    return 1


def _tpu_defaults():
    """Generation-aware (default q_tile, vmem_limit_bytes)."""
    kind = ""
    try:
        kind = jax.devices()[0].device_kind.lower()
    except Exception:
        pass
    vmem_cap = None
    try:
        vmem_cap = int(pltpu.get_tpu_info().vmem_capacity_bytes)
    except Exception:
        # v7x has 64 MiB of VMEM per TensorCore, v5e/v6e have 128 MiB.
        vmem_cap = 64 * 1024 * 1024 if "7" in kind else 128 * 1024 * 1024
    # v5e's MXU is 128x128 (already saturated at TQ=128); v6e/v7x are 256-wide.
    q_tile = 128 if "v5" in kind else 256
    # ~80% of capacity (headroom for Mosaic-internal scratch), capped at 100 MiB.
    vmem_limit = min(int(vmem_cap * 4 // 5), 100 * 1024 * 1024)
    return q_tile, vmem_limit


# --------------------------------------------------------------------------------------
# Kernel 1: LayerNorm1 + K/V projection (computed once per token)
# --------------------------------------------------------------------------------------
def _ln1_kv_kernel(x_ref, g1_ref, b1_ref, wk_ref, wv_ref, kt_ref, v_ref,
                   stage, kt_stage, *, num_heads):
    C = x_ref.shape[2]
    D = C // num_heads
    dt = x_ref.dtype

    xn = _layernorm_f32(
        x_ref[0].astype(jnp.float32),          # f32 only for LN statistics
        g1_ref[0].astype(jnp.float32),
        b1_ref[0].astype(jnp.float32),
    ).astype(dt)                               # MXU inputs stay in the input dtype

    # K: one (TQ, C) -> (C, TQ) transpose per token tile (hoisted out of kernel 2's
    # attention loop), then head-major (D, TQ) slabs with the token axis lane-dense.
    k = jnp.dot(xn, wk_ref[...], preferred_element_type=jnp.float32).astype(dt)
    kt_stage[...] = k.T
    for h in range(num_heads):                 # static, straight-line, once per token
        kt_ref[0, h] = kt_stage[pl.ds(h * D, D), :]

    # V: head-major (TQ, D) slabs so kernel 2 indexes heads on a leading dim only.
    stage[...] = jnp.dot(xn, wv_ref[...], preferred_element_type=jnp.float32).astype(dt)
    for h in range(num_heads):
        v_ref[0, h] = stage[:, pl.ds(h * D, D)]


# --------------------------------------------------------------------------------------
# Kernel 2: q proj + attention + out proj + residual + LayerNorm2 + MLP + residual
# --------------------------------------------------------------------------------------
def _attn_mlp_kernel(x_ref, kt_ref, v_ref,
                     wq_ref, g1_ref, b1_ref,
                     wp_ref, bproj_ref,
                     g2_ref, b2_ref,
                     w1_ref, bf1_ref, w2_ref, bf2_ref,
                     o_ref,
                     xn_scr, y_scr, qp_scr, o_scr,
                     *, num_heads, heads_per_group):
    C = x_ref.shape[2]
    H = num_heads
    HP = heads_per_group
    G = H // HP
    D = C // H
    dt = x_ref.dtype

    # ---- LayerNorm1 for the q path (K/V were produced by kernel 1) ----
    xn = _layernorm_f32(
        x_ref[0].astype(jnp.float32),
        g1_ref[0].astype(jnp.float32),
        b1_ref[0].astype(jnp.float32),
    )
    xn_scr[...] = xn.astype(dt)
    y_scr[...] = jnp.zeros_like(y_scr)

    # ---- multi-head attention: real loop over head groups (bounded live ranges) ----
    def group_body(g, carry):
        # q for this group of heads; the softmax 1/sqrt(D) is pre-folded into the weights.
        qp = jnp.dot(xn_scr[...], wq_ref[g], preferred_element_type=jnp.float32)
        qp_scr[...] = qp.astype(dt)                           # (TQ, HP*D)
        for j in range(HP):                                   # HP is small & static
            h = g * HP + j
            qh = qp_scr[:, pl.ds(j * D, D)]                   # (TQ, D)
            s = jnp.dot(qh, kt_ref[0, h],                     # (TQ, D) @ (D, N)
                        preferred_element_type=jnp.float32)
            m = jnp.max(s, axis=-1, keepdims=True)            # softmax stats in f32
            e = jnp.exp(s - m)
            l = jnp.sum(e, axis=-1, keepdims=True)
            oh = jnp.dot(e.astype(dt), v_ref[0, h],           # (TQ, N) @ (N, D)
                         preferred_element_type=jnp.float32)
            oh = oh * (1.0 / l)                               # deferred, exact normalization
            o_scr[:, pl.ds(j * D, D)] = oh.astype(dt)
        # Fold this group's contribution straight through the output projection
        # (wp_ref[g] is the matching (HP*D, C) weight slab; no (TQ, C) head-scatter).
        y_scr[...] += jnp.dot(o_scr[...], wp_ref[g], preferred_element_type=jnp.float32)
        return carry

    jax.lax.fori_loop(0, G, group_body, None)

    # ---- output-projection bias + residual 1 ----
    x1 = x_ref[0].astype(jnp.float32) + y_scr[...] + bproj_ref[0].astype(jnp.float32)

    # ---- LayerNorm2 + MLP + residual 2 ----
    xn2 = _layernorm_f32(x1, g2_ref[0].astype(jnp.float32), b2_ref[0].astype(jnp.float32))
    h1 = jnp.dot(xn2.astype(dt), w1_ref[...], preferred_element_type=jnp.float32)
    h1 = h1 + bf1_ref[0].astype(jnp.float32)
    # TODO(synk): PyTorch nn.GELU() is the exact erf formulation; tanh approximation used
    # here (erf has no guaranteed Mosaic lowering). Max abs deviation ~1e-3.
    h1 = jax.nn.gelu(h1, approximate=True)
    y2 = jnp.dot(h1.astype(dt), w2_ref[...], preferred_element_type=jnp.float32)
    y2 = y2 + bf2_ref[0].astype(jnp.float32)

    o_ref[0] = (x1 + y2).astype(o_ref.dtype)


# --------------------------------------------------------------------------------------
# Wrapper
# --------------------------------------------------------------------------------------
def _vit_block_impl(x, ln1_g, ln1_b, w_qkv, w_proj, b_proj,
                    ln2_g, ln2_b, w_fc1, b_fc1, w_fc2, b_fc2,
                    *, num_heads, q_tile, vmem_limit, single_buffer):
    B, N, C = x.shape
    HID = w_fc1.shape[1]
    H = num_heads
    D = C // H
    HP = _heads_per_group(H, D)
    G = H // HP
    W = HP * D
    TQ = q_tile

    scale = D ** (-0.5)
    w_q = w_qkv[:, :C] * scale                               # fold softmax scale into W_q
    w_k = w_qkv[:, C:2 * C].astype(x.dtype)
    w_v = w_qkv[:, 2 * C:].astype(x.dtype)
    # Head-group-major rearrangements (done once, outside the kernels).
    wq_hm = jnp.transpose(w_q.reshape(C, G, W), (1, 0, 2)).astype(x.dtype)   # (G, C, W)
    wp_hm = w_proj.reshape(G, W, C).astype(x.dtype)                          # (G, W, C)

    g1_2d, b1_2d = ln1_g.reshape(1, C), ln1_b.reshape(1, C)
    g2_2d, b2_2d = ln2_g.reshape(1, C), ln2_b.reshape(1, C)
    bproj_2d = b_proj.reshape(1, C)
    bf1_2d = b_fc1.reshape(1, HID)
    bf2_2d = b_fc2.reshape(1, C)

    def inv(shape, imap):
        # Grid-invariant blocks: single-buffered (double-buffering them only wastes VMEM).
        if single_buffer:
            return pl.BlockSpec(shape, imap, pipeline_mode=pl.Buffered(1))
        return pl.BlockSpec(shape, imap)

    cparams = pltpu.CompilerParams(
        dimension_semantics=("parallel", "parallel"),
        vmem_limit_bytes=vmem_limit,
    )

    # ---- Kernel 1: LN1 + K/V projection ----
    k1 = functools.partial(_ln1_kv_kernel, num_heads=H)
    kt, v = pl.pallas_call(
        k1,
        out_shape=(jax.ShapeDtypeStruct((B, H, D, N), x.dtype),    # K^T, head-major
                   jax.ShapeDtypeStruct((B, H, N, D), x.dtype)),   # V,  head-major
        grid_spec=pltpu.PrefetchScalarGridSpec(
            num_scalar_prefetch=0,
            grid=(B, N // TQ),
            in_specs=[
                pl.BlockSpec((1, TQ, C), lambda b, i: (b, i, 0)),  # x
                inv((1, C), lambda b, i: (0, 0)),                  # ln1 gamma
                inv((1, C), lambda b, i: (0, 0)),                  # ln1 beta
                inv((C, C), lambda b, i: (0, 0)),                  # W_k
                inv((C, C), lambda b, i: (0, 0)),                  # W_v
            ],
            out_specs=(
                pl.BlockSpec((1, H, D, TQ), lambda b, i: (b, 0, 0, i)),
                pl.BlockSpec((1, H, TQ, D), lambda b, i: (b, 0, i, 0)),
            ),
            scratch_shapes=[
                pltpu.VMEM((TQ, C), x.dtype),   # projection staging
                pltpu.VMEM((C, TQ), x.dtype),   # transposed-K staging
            ],
        ),
        compiler_params=cparams,
    )(x, g1_2d, b1_2d, w_k, w_v)

    # ---- Kernel 2: q proj + attention + proj + residual + LN2 + MLP + residual ----
    k2 = functools.partial(_attn_mlp_kernel, num_heads=H, heads_per_group=HP)
    out = pl.pallas_call(
        k2,
        out_shape=jax.ShapeDtypeStruct((B, N, C), x.dtype),
        grid_spec=pltpu.PrefetchScalarGridSpec(
            num_scalar_prefetch=0,
            grid=(B, N // TQ),
            in_specs=[
                pl.BlockSpec((1, TQ, C), lambda b, i: (b, i, 0)),   # x (residual + q path)
                inv((1, H, D, N), lambda b, i: (b, 0, 0, 0)),       # K^T (full sequence)
                inv((1, H, N, D), lambda b, i: (b, 0, 0, 0)),       # V   (full sequence)
                inv((G, C, W), lambda b, i: (0, 0, 0)),             # W_q (scaled, grouped)
                inv((1, C), lambda b, i: (0, 0)),                   # ln1 gamma
                inv((1, C), lambda b, i: (0, 0)),                   # ln1 beta
                inv((G, W, C), lambda b, i: (0, 0, 0)),             # W_proj (grouped rows)
                inv((1, C), lambda b, i: (0, 0)),                   # b_proj
                inv((1, C), lambda b, i: (0, 0)),                   # ln2 gamma
                inv((1, C), lambda b, i: (0, 0)),                   # ln2 beta
                inv((C, HID), lambda b, i: (0, 0)),                 # w_fc1
                inv((1, HID), lambda b, i: (0, 0)),                 # b_fc1
                inv((HID, C), lambda b, i: (0, 0)),                 # w_fc2
                inv((1, C), lambda b, i: (0, 0)),                   # b_fc2
            ],
            out_specs=pl.BlockSpec((1, TQ, C), lambda b, i: (b, i, 0)),
            scratch_shapes=[
                pltpu.VMEM((TQ, C), x.dtype),       # LN1(x) for the q path
                pltpu.VMEM((TQ, C), jnp.float32),   # projected-attention accumulator
                pltpu.VMEM((TQ, W), x.dtype),       # q of the current head group
                pltpu.VMEM((TQ, W), x.dtype),       # attention output of the current group
            ],
        ),
        compiler_params=cparams,
    )(x, kt, v, wq_hm, g1_2d, b1_2d, wp_hm, bproj_2d, g2_2d, b2_2d,
      w_fc1, bf1_2d, w_fc2, bf2_2d)
    return out


def vit_block_pallas(x, ln1_g, ln1_b, w_qkv, w_proj, b_proj,
                     ln2_g, ln2_b, w_fc1, b_fc1, w_fc2, b_fc2,
                     *, num_heads, q_tile=None):
    """x: (B, N, C). Weights are (in_features, out_features); biases are 1-D."""
    B, N, C = x.shape
    assert C % num_heads == 0

    default_tq, vmem_limit = _tpu_defaults()
    if q_tile is None:
        q_tile = min(N, default_tq)
    # TODO(synk): N % q_tile == 0 is required (e.g. ViT's N=197 needs caller-side padding).
    assert N % q_tile == 0
    # K^T is written in token-lane-dense tiles, so the token tile must be lane aligned.
    assert q_tile == N or q_tile % 128 == 0, "q_tile must be a multiple of 128 (or == N)"

    args = (x, ln1_g, ln1_b, w_qkv, w_proj, b_proj,
            ln2_g, ln2_b, w_fc1, b_fc1, w_fc2, b_fc2)
    kwargs = dict(num_heads=num_heads, q_tile=q_tile, vmem_limit=vmem_limit)
    try:
        return _vit_block_impl(*args, **kwargs, single_buffer=True)
    except Exception:
        # TODO(synk): pipeline_mode=pl.Buffered(1) not supported by this jax/Mosaic build;
        # fall back to default double-buffering (correct, just uses more VMEM).
        return _vit_block_impl(*args, **kwargs, single_buffer=False)


# --------------------------------------------------------------------------------------
# Pure-JAX reference mirroring the PyTorch Block.forward
# --------------------------------------------------------------------------------------
def vit_block_reference(x, ln1_g, ln1_b, w_qkv, w_proj, b_proj,
                        ln2_g, ln2_b, w_fc1, b_fc1, w_fc2, b_fc2, *, num_heads):
    B, N, C = x.shape
    D = C // num_heads

    def ln(h, g, b):
        mu = h.mean(-1, keepdims=True)
        var = ((h - mu) ** 2).mean(-1, keepdims=True)
        return (h - mu) / jnp.sqrt(var + LN_EPS) * g + b

    h = ln(x, ln1_g, ln1_b)
    qkv = (h @ w_qkv).reshape(B, N, 3, num_heads, D).transpose(2, 0, 3, 1, 4)
    q, k, v = qkv[0], qkv[1], qkv[2]                                   # (B, H, N, D)
    attn = (q @ jnp.swapaxes(k, -1, -2)) * (D ** -0.5)
    attn = jax.nn.softmax(attn, axis=-1)
    a = (attn @ v).transpose(0, 2, 1, 3).reshape(B, N, C)
    x1 = x + a @ w_proj + b_proj

    h2 = ln(x1, ln2_g, ln2_b)
    m = jax.nn.gelu(h2 @ w_fc1 + b_fc1, approximate=True) @ w_fc2 + b_fc2
    return x1 + m


if __name__ == "__main__":
    B, N, C = 2, 256, 256
    num_heads = 8
    HID = 4 * C

    key = jax.random.PRNGKey(0)
    ks = jax.random.split(key, 12)

    x = jax.random.normal(ks[0], (B, N, C), dtype=jnp.float32)
    ln1_g = 1.0 + 0.1 * jax.random.normal(ks[1], (C,), jnp.float32)
    ln1_b = 0.1 * jax.random.normal(ks[2], (C,), jnp.float32)
    w_qkv = jax.random.normal(ks[3], (C, 3 * C), jnp.float32) * (C ** -0.5)
    w_proj = jax.random.normal(ks[4], (C, C), jnp.float32) * (C ** -0.5)
    b_proj = 0.02 * jax.random.normal(ks[5], (C,), jnp.float32)
    ln2_g = 1.0 + 0.1 * jax.random.normal(ks[6], (C,), jnp.float32)
    ln2_b = 0.1 * jax.random.normal(ks[7], (C,), jnp.float32)
    w_fc1 = jax.random.normal(ks[8], (C, HID), jnp.float32) * (C ** -0.5)
    b_fc1 = 0.02 * jax.random.normal(ks[9], (HID,), jnp.float32)
    w_fc2 = jax.random.normal(ks[10], (HID, C), jnp.float32) * (HID ** -0.5)
    b_fc2 = 0.02 * jax.random.normal(ks[11], (C,), jnp.float32)

    out = vit_block_pallas(x, ln1_g, ln1_b, w_qkv, w_proj, b_proj,
                           ln2_g, ln2_b, w_fc1, b_fc1, w_fc2, b_fc2,
                           num_heads=num_heads, q_tile=128)
    out = jax.block_until_ready(out)

    with jax.default_matmul_precision("float32"):
        ref = vit_block_reference(x, ln1_g, ln1_b, w_qkv, w_proj, b_proj,
                                  ln2_g, ln2_b, w_fc1, b_fc1, w_fc2, b_fc2,
                                  num_heads=num_heads)
        ref = jax.block_until_ready(ref)

    assert out.shape == (B, N, C)
    max_err = float(jnp.max(jnp.abs(out - ref)))
    assert jnp.allclose(out, ref, atol=5e-2, rtol=5e-2), max_err

    print("KERNEL_OK")
</pallas_src>

<mosaic_0001>
module attributes {stable_mosaic.version = 11 : i64} {
  func.func @_ln1_kv_kernel(%arg0: i32, %arg1: i32, %arg2: memref<1x128x256xf32, #tpu.memory_space<vmem>>, %arg3: memref<1x256xf32, #tpu.memory_space<vmem>>, %arg4: memref<1x256xf32, #tpu.memory_space<vmem>>, %arg5: memref<256x256xf32, #tpu.memory_space<vmem>>, %arg6: memref<256x256xf32, #tpu.memory_space<vmem>>, %arg7: memref<1x8x32x128xf32, #tpu.memory_space<vmem>>, %arg8: memref<1x8x128x32xf32, #tpu.memory_space<vmem>>, %arg9: memref<128x256xf32, #tpu.memory_space<vmem>>, %arg10: memref<256x128xf32, #tpu.memory_space<vmem>>) attributes {dimension_semantics = [#tpu.dimension_semantics<parallel>, #tpu.dimension_semantics<parallel>], iteration_bounds = array<i64: 2, 2>, scalar_prefetch = 0 : i64, scratch_operands = 2 : i64, tpu.core_type = #tpu.core_type<tc>, window_params = [{transform_indices = @transform_0, window_bounds = array<i64: 1, 128, 256>}, {pipeline_mode = #tpu.pipeline_mode<synchronous>, transform_indices = @transform_1, window_bounds = array<i64: 1, 256>}, {pipeline_mode = #tpu.pipeline_mode<synchronous>, transform_indices = @transform_2, window_bounds = array<i64: 1, 256>}, {pipeline_mode = #tpu.pipeline_mode<synchronous>, transform_indices = @transform_3, window_bounds = array<i64: 256, 256>}, {pipeline_mode = #tpu.pipeline_mode<synchronous>, transform_indices = @transform_4, window_bounds = array<i64: 256, 256>}, {transform_indices = @transform_5, window_bounds = array<i64: 1, 8, 32, 128>}, {transform_indices = @transform_6, window_bounds = array<i64: 1, 8, 128, 32>}]} {
    %c0 = arith.constant 0 : index
    %c0_0 = arith.constant 0 : index
    %c0_1 = arith.constant 0 : index
    %0 = vector.load %arg2[%c0, %c0_0, %c0_1] : memref<1x128x256xf32, #tpu.memory_space<vmem>>, vector<1x128x256xf32>
    %1 = vector.shape_cast %0 : vector<1x128x256xf32> to vector<128x256xf32>
    %c0_2 = arith.constant 0 : index
    %c0_3 = arith.constant 0 : index
    %2 = vector.load %arg3[%c0_2, %c0_3] : memref<1x256xf32, #tpu.memory_space<vmem>>, vector<1x256xf32>
    %3 = vector.shape_cast %2 : vector<1x256xf32> to vector<256xf32>
    %c0_4 = arith.constant 0 : index
    %c0_5 = arith.constant 0 : index
    %4 = vector.load %arg4[%c0_4, %c0_5] : memref<1x256xf32, #tpu.memory_space<vmem>>, vector<1x256xf32>
    %5 = vector.shape_cast %4 : vector<1x256xf32> to vector<256xf32>
    %cst = arith.constant dense<0.000000e+00> : vector<128xf32>
    %6 = vector.multi_reduction <add>, %1, %cst [1] : vector<128x256xf32> to vector<128xf32>
    %7 = vector.shape_cast %6 : vector<128xf32> to vector<128x1xf32>
    %cst_6 = arith.constant 2.560000e+02 : f32
    %8 = vector.broadcast %cst_6 : f32 to vector<128x1xf32>
    %9 = arith.divf %7, %8 : vector<128x1xf32>
    %10 = vector.broadcast %9 : vector<128x1xf32> to vector<128x256xf32>
    %11 = arith.subf %1, %10 : vector<128x256xf32>
    %12 = arith.mulf %11, %11 : vector<128x256xf32>
    %cst_7 = arith.constant dense<0.000000e+00> : vector<128xf32>
    %13 = vector.multi_reduction <add>, %12, %cst_7 [1] : vector<128x256xf32> to vector<128xf32>
    %14 = vector.shape_cast %13 : vector<128xf32> to vector<128x1xf32>
    %cst_8 = arith.constant 2.560000e+02 : f32
    %15 = vector.broadcast %cst_8 : f32 to vector<128x1xf32>
    %16 = arith.divf %14, %15 : vector<128x1xf32>
    %17 = vector.broadcast %9 : vector<128x1xf32> to vector<128x256xf32>
    %18 = arith.subf %1, %17 : vector<128x256xf32>
    %cst_9 = arith.constant 9.99999974E-6 : f32
    %19 = vector.broadcast %cst_9 : f32 to vector<128x1xf32>
    %20 = arith.addf %16, %19 : vector<128x1xf32>
    %21 = math.rsqrt %20 : vector<128x1xf32>
    %22 = vector.broadcast %21 : vector<128x1xf32> to vector<128x256xf32>
    %23 = arith.mulf %18, %22 : vector<128x256xf32>
    %24 = vector.shape_cast %3 : vector<256xf32> to vector<1x256xf32>
    %25 = vector.broadcast %24 : vector<1x256xf32> to vector<128x256xf32>
    %26 = arith.mulf %23, %25 : vector<128x256xf32>
    %27 = vector.shape_cast %5 : vector<256xf32> to vector<1x256xf32>
    %28 = vector.broadcast %27 : vector<1x256xf32> to vector<128x256xf32>
    %29 = arith.addf %26, %28 : vector<128x256xf32>
    %c0_10 = arith.constant 0 : index
    %c0_11 = arith.constant 0 : index
    %30 = vector.load %arg5[%c0_10, %c0_11] : memref<256x256xf32, #tpu.memory_space<vmem>>, vector<256x256xf32>
    %cst_12 = arith.constant dense<0.000000e+00> : vector<128x256xf32>
    %31 = tpu.matmul %29, %30, %cst_12 {dimension_numbers = #tpu.dot_dimension_numbers<[1], [0], [0], [1], [0, 0, 1, 1], [], []>} : vector<128x256xf32>, vector<256x256xf32>, vector<128x256xf32> -> vector<128x256xf32>
    %32 = tpu.transpose %31, [1, 0] : vector<128x256xf32> -> vector<256x128xf32>
    %c0_13 = arith.constant 0 : index
    %c0_14 = arith.constant 0 : index
    %33 = vector.load %arg10[%c0_13, %c0_14] : memref<256x128xf32, #tpu.memory_space<vmem>>, vector<256x128xf32>
    tpu.vector_store %arg10[%c0_13, %c0_14], %32 {strides = array<i32>} : memref<256x128xf32, #tpu.memory_space<vmem>>, vector<256x128xf32>,
    %c0_15 = arith.constant 0 : index
    %c0_16 = arith.constant 0 : index
    %34 = vector.load %arg10[%c0_15, %c0_16] : memref<256x128xf32, #tpu.memory_space<vmem>>, vector<32x128xf32>
    %c0_17 = arith.constant 0 : index
    %c0_18 = arith.constant 0 : index
    %c0_19 = arith.constant 0 : index
    %c0_20 = arith.constant 0 : index
    %35 = vector.load %arg7[%c0_17, %c0_18, %c0_19, %c0_20] : memref<1x8x32x128xf32, #tpu.memory_space<vmem>>, vector<1x1x32x128xf32>
    %36 = vector.shape_cast %35 : vector<1x1x32x128xf32> to vector<32x128xf32>
    %37 = vector.shape_cast %34 : vector<32x128xf32> to vector<1x1x32x128xf32>
    tpu.vector_store %arg7[%c0_17, %c0_18, %c0_19, %c0_20], %37 {strides = array<i32>} : memref<1x8x32x128xf32, #tpu.memory_space<vmem>>, vector<1x1x32x128xf32>,
    %c32 = arith.constant 32 : index
    %c0_21 = arith.constant 0 : index
    %38 = vector.load %arg10[%c32, %c0_21] : memref<256x128xf32, #tpu.memory_space<vmem>>, vector<32x128xf32>
    %c0_22 = arith.constant 0 : index
    %c1 = arith.constant 1 : index
    %c0_23 = arith.constant 0 : index
    %c0_24 = arith.constant 0 : index
    %39 = vector.load %arg7[%c0_22, %c1, %c0_23, %c0_24] : memref<1x8x32x128xf32, #tpu.memory_space<vmem>>, vector<1x1x32x128xf32>
    %40 = vector.shape_cast %39 : vector<1x1x32x128xf32> to vector<32x128xf32>
    %41 = vector.shape_cast %38 : vector<32x128xf32> to vector<1x1x32x128xf32>
    tpu.vector_store %arg7[%c0_22, %c1, %c0_23, %c0_24], %41 {strides = array<i32>} : memref<1x8x32x128xf32, #tpu.memory_space<vmem>>, vector<1x1x32x128xf32>,
    %c64 = arith.constant 64 : index
    %c0_25 = arith.constant 0 : index
    %42 = vector.load %arg10[%c64, %c0_25] : memref<256x128xf32, #tpu.memory_space<vmem>>, vector<32x128xf32>
    %c0_26 = arith.constant 0 : index
    %c2 = arith.constant 2 : index
    %c0_27 = arith.constant 0 : index
    %c0_28 = arith.constant 0 : index
    %43 = vector.load %arg7[%c0_26, %c2, %c0_27, %c0_28] : memref<1x8x32x128xf32, #tpu.memory_space<vmem>>, vector<1x1x32x128xf32>
    %44 = vector.shape_cast %43 : vector<1x1x32x128xf32> to vector<32x128xf32>
    %45 = vector.shape_cast %42 : vector<32x128xf32> to vector<1x1x32x128xf32>
    tpu.vector_store %arg7[%c0_26, %c2, %c0_27, %c0_28], %45 {strides = array<i32>} : memref<1x8x32x128xf32, #tpu.memory_space<vmem>>, vector<1x1x32x128xf32>,
    %c96 = arith.constant 96 : index
    %c0_29 = arith.constant 0 : index
    %46 = vector.load %arg10[%c96, %c0_29] : memref<256x128xf32, #tpu.memory_space<vmem>>, vector<32x128xf32>
    %c0_30 = arith.constant 0 : index
    %c3 = arith.constant 3 : index
    %c0_31 = arith.constant 0 : index
    %c0_32 = arith.constant 0 : index
    %47 = vector.load %arg7[%c0_30, %c3, %c0_31, %c0_32] : memref<1x8x32x128xf32, #tpu.memory_space<vmem>>, vector<1x1x32x128xf32>
    %48 = vector.shape_cast %47 : vector<1x1x32x128xf32> to vector<32x128xf32>
    %49 = vector.shape_cast %46 : vector<32x128xf32> to vector<1x1x32x128xf32>
    tpu.vector_store %arg7[%c0_30, %c3, %c0_31, %c0_32], %49 {strides = array<i32>} : memref<1x8x32x128xf32, #tpu.memory_space<vmem>>, vector<1x1x32x128xf32>,
    %c128 = arith.constant 128 : index
    %c0_33 = arith.constant 0 : index
    %50 = vector.load %arg10[%c128, %c0_33] : memref<256x128xf32, #tpu.memory_space<vmem>>, vector<32x128xf32>
    %c0_34 = arith.constant 0 : index
    %c4 = arith.constant 4 : index
    %c0_35 = arith.constant 0 : index
    %c0_36 = arith.constant 0 : index
    %51 = vector.load %arg7[%c0_34, %c4, %c0_35, %c0_36] : memref<1x8x32x128xf32, #tpu.memory_space<vmem>>, vector<1x1x32x128xf32>
    %52 = vector.shape_cast %51 : vector<1x1x32x128xf32> to vector<32x128xf32>
    %53 = vector.shape_cast %50 : vector<32x128xf32> to vector<1x1x32x128xf32>
    tpu.vector_store %arg7[%c0_34, %c4, %c0_35, %c0_36], %53 {strides = array<i32>} : memref<1x8x32x128xf32, #tpu.memory_space<vmem>>, vector<1x1x32x128xf32>,
    %c160 = arith.constant 160 : index
    %c0_37 = arith.constant 0 : index
    %54 = vector.load %arg10[%c160, %c0_37] : memref<256x128xf32, #tpu.memory_space<vmem>>, vector<32x128xf32>
    %c0_38 = arith.constant 0 : index
    %c5 = arith.constant 5 : index
    %c0_39 = arith.constant 0 : index
    %c0_40 = arith.constant 0 : index
    %55 = vector.load %arg7[%c0_38, %c5, %c0_39, %c0_40] : memref<1x8x32x128xf32, #tpu.memory_space<vmem>>, vector<1x1x32x128xf32>
    %56 = vector.shape_cast %55 : vector<1x1x32x128xf32> to vector<32x128xf32>
    %57 = vector.shape_cast %54 : vector<32x128xf32> to vector<1x1x32x128xf32>
    tpu.vector_store %arg7[%c0_38, %c5, %c0_39, %c0_40], %57 {strides = array<i32>} : memref<1x8x32x128xf32, #tpu.memory_space<vmem>>, vector<1x1x32x128xf32>,
    %c192 = arith.constant 192 : index
    %c0_41 = arith.constant 0 : index
    %58 = vector.load %arg10[%c192, %c0_41] : memref<256x128xf32, #tpu.memory_space<vmem>>, vector<32x128xf32>
    %c0_42 = arith.constant 0 : index
    %c6 = arith.constant 6 : index
    %c0_43 = arith.constant 0 : index
    %c0_44 = arith.constant 0 : index
    %59 = vector.load %arg7[%c0_42, %c6, %c0_43, %c0_44] : memref<1x8x32x128xf32, #tpu.memory_space<vmem>>, vector<1x1x32x128xf32>
    %60 = vector.shape_cast %59 : vector<1x1x32x128xf32> to vector<32x128xf32>
    %61 = vector.shape_cast %58 : vector<32x128xf32> to vector<1x1x32x128xf32>
    tpu.vector_store %arg7[%c0_42, %c6, %c0_43, %c0_44], %61 {strides = array<i32>} : memref<1x8x32x128xf32, #tpu.memory_space<vmem>>, vector<1x1x32x128xf32>,
    %c224 = arith.constant 224 : index
    %c0_45 = arith.constant 0 : index
    %62 = vector.load %arg10[%c224, %c0_45] : memref<256x128xf32, #tpu.memory_space<vmem>>, vector<32x128xf32>
    %c0_46 = arith.constant 0 : index
    %c7 = arith.constant 7 : index
    %c0_47 = arith.constant 0 : index
    %c0_48 = arith.constant 0 : index
    %63 = vector.load %arg7[%c0_46, %c7, %c0_47, %c0_48] : memref<1x8x32x128xf32, #tpu.memory_space<vmem>>, vector<1x1x32x128xf32>
    %64 = vector.shape_cast %63 : vector<1x1x32x128xf32> to vector<32x128xf32>
    %65 = vector.shape_cast %62 : vector<32x128xf32> to vector<1x1x32x128xf32>
    tpu.vector_store %arg7[%c0_46, %c7, %c0_47, %c0_48], %65 {strides = array<i32>} : memref<1x8x32x128xf32, #tpu.memory_space<vmem>>, vector<1x1x32x128xf32>,
    %c0_49 = arith.constant 0 : index
    %c0_50 = arith.constant 0 : index
    %66 = vector.load %arg6[%c0_49, %c0_50] : memref<256x256xf32, #tpu.memory_space<vmem>>, vector<256x256xf32>
    %cst_51 = arith.constant dense<0.000000e+00> : vector<128x256xf32>
    %67 = tpu.matmul %29, %66, %cst_51 {dimension_numbers = #tpu.dot_dimension_numbers<[1], [0], [0], [1], [0, 0, 1, 1], [], []>} : vector<128x256xf32>, vector<256x256xf32>, vector<128x256xf32> -> vector<128x256xf32>
    %c0_52 = arith.constant 0 : index
    %c0_53 = arith.constant 0 : index
    %68 = vector.load %arg9[%c0_52, %c0_53] : memref<128x256xf32, #tpu.memory_space<vmem>>, vector<128x256xf32>
    tpu.vector_store %arg9[%c0_52, %c0_53], %67 {strides = array<i32>} : memref<128x256xf32, #tpu.memory_space<vmem>>, vector<128x256xf32>,
    %c0_54 = arith.constant 0 : index
    %c0_55 = arith.constant 0 : index
    %69 = vector.load %arg9[%c0_54, %c0_55] : memref<128x256xf32, #tpu.memory_space<vmem>>, vector<128x32xf32>
    %c0_56 = arith.constant 0 : index
    %c0_57 = arith.constant 0 : index
    %c0_58 = arith.constant 0 : index
    %c0_59 = arith.constant 0 : index
    %70 = vector.load %arg8[%c0_56, %c0_57, %c0_58, %c0_59] : memref<1x8x128x32xf32, #tpu.memory_space<vmem>>, vector<1x1x128x32xf32>
    %71 = vector.shape_cast %70 : vector<1x1x128x32xf32> to vector<128x32xf32>
    %72 = vector.shape_cast %69 : vector<128x32xf32> to vector<1x1x128x32xf32>
    tpu.vector_store %arg8[%c0_56, %c0_57, %c0_58, %c0_59], %72 {strides = array<i32>} : memref<1x8x128x32xf32, #tpu.memory_space<vmem>>, vector<1x1x128x32xf32>,
    %c0_60 = arith.constant 0 : index
    %c32_61 = arith.constant 32 : index
    %73 = vector.load %arg9[%c0_60, %c32_61] : memref<128x256xf32, #tpu.memory_space<vmem>>, vector<128x32xf32>
    %c0_62 = arith.constant 0 : index
    %c1_63 = arith.constant 1 : index
    %c0_64 = arith.constant 0 : index
    %c0_65 = arith.constant 0 : index
    %74 = vector.load %arg8[%c0_62, %c1_63, %c0_64, %c0_65] : memref<1x8x128x32xf32, #tpu.memory_space<vmem>>, vector<1x1x128x32xf32>
    %75 = vector.shape_cast %74 : vector<1x1x128x32xf32> to vector<128x32xf32>
    %76 = vector.shape_cast %73 : vector<128x32xf32> to vector<1x1x128x32xf32>
    tpu.vector_store %arg8[%c0_62, %c1_63, %c0_64, %c0_65], %76 {strides = array<i32>} : memref<1x8x128x32xf32, #tpu.memory_space<vmem>>, vector<1x1x128x32xf32>,
    %c0_66 = arith.constant 0 : index
    %c64_67 = arith.constant 64 : index
    %77 = vector.load %arg9[%c0_66, %c64_67] : memref<128x256xf32, #tpu.memory_space<vmem>>, vector<128x32xf32>
    %c0_68 = arith.constant 0 : index
    %c2_69 = arith.constant 2 : index
    %c0_70 = arith.constant 0 : index
    %c0_71 = arith.constant 0 : index
    %78 = vector.load %arg8[%c0_68, %c2_69, %c0_70, %c0_71] : memref<1x8x128x32xf32, #tpu.memory_space<vmem>>, vector<1x1x128x32xf32>
    %79 = vector.shape_cast %78 : vector<1x1x128x32xf32> to vector<128x32xf32>
    %80 = vector.shape_cast %77 : vector<128x32xf32> to vector<1x1x128x32xf32>
    tpu.vector_store %arg8[%c0_68, %c2_69, %c0_70, %c0_71], %80 {strides = array<i32>} : memref<1x8x128x32xf32, #tpu.memory_space<vmem>>, vector<1x1x128x32xf32>,
    %c0_72 = arith.constant 0 : index
    %c96_73 = arith.constant 96 : index
    %81 = vector.load %arg9[%c0_72, %c96_73] : memref<128x256xf32, #tpu.memory_space<vmem>>, vector<128x32xf32>
    %c0_74 = arith.constant 0 : index
    %c3_75 = arith.constant 3 : index
    %c0_76 = arith.constant 0 : index
    %c0_77 = arith.constant 0 : index
    %82 = vector.load %arg8[%c0_74, %c3_75, %c0_76, %c0_77] : memref<1x8x128x32xf32, #tpu.memory_space<vmem>>, vector<1x1x128x32xf32>
    %83 = vector.shape_cast %82 : vector<1x1x128x32xf32> to vector<128x32xf32>
    %84 = vector.shape_cast %81 : vector<128x32xf32> to vector<1x1x128x32xf32>
    tpu.vector_store %arg8[%c0_74, %c3_75, %c0_76, %c0_77], %84 {strides = array<i32>} : memref<1x8x128x32xf32, #tpu.memory_space<vmem>>, vector<1x1x128x32xf32>,
    %c0_78 = arith.constant 0 : index
    %c128_79 = arith.constant 128 : index
    %85 = vector.load %arg9[%c0_78, %c128_79] : memref<128x256xf32, #tpu.memory_space<vmem>>, vector<128x32xf32>
    %c0_80 = arith.constant 0 : index
    %c4_81 = arith.constant 4 : index
    %c0_82 = arith.constant 0 : index
    %c0_83 = arith.constant 0 : index
    %86 = vector.load %arg8[%c0_80, %c4_81, %c0_82, %c0_83] : memref<1x8x128x32xf32, #tpu.memory_space<vmem>>, vector<1x1x128x32xf32>
    %87 = vector.shape_cast %86 : vector<1x1x128x32xf32> to vector<128x32xf32>
    %88 = vector.shape_cast %85 : vector<128x32xf32> to vector<1x1x128x32xf32>
    tpu.vector_store %arg8[%c0_80, %c4_81, %c0_82, %c0_83], %88 {strides = array<i32>} : memref<1x8x128x32xf32, #tpu.memory_space<vmem>>, vector<1x1x128x32xf32>,
    %c0_84 = arith.constant 0 : index
    %c160_85 = arith.constant 160 : index
    %89 = vector.load %arg9[%c0_84, %c160_85] : memref<128x256xf32, #tpu.memory_space<vmem>>, vector<128x32xf32>
    %c0_86 = arith.constant 0 : index
    %c5_87 = arith.constant 5 : index
    %c0_88 = arith.constant 0 : index
    %c0_89 = arith.constant 0 : index
    %90 = vector.load %arg8[%c0_86, %c5_87, %c0_88, %c0_89] : memref<1x8x128x32xf32, #tpu.memory_space<vmem>>, vector<1x1x128x32xf32>
    %91 = vector.shape_cast %90 : vector<1x1x128x32xf32> to vector<128x32xf32>
    %92 = vector.shape_cast %89 : vector<128x32xf32> to vector<1x1x128x32xf32>
    tpu.vector_store %arg8[%c0_86, %c5_87, %c0_88, %c0_89], %92 {strides = array<i32>} : memref<1x8x128x32xf32, #tpu.memory_space<vmem>>, vector<1x1x128x32xf32>,
    %c0_90 = arith.constant 0 : index
    %c192_91 = arith.constant 192 : index
    %93 = vector.load %arg9[%c0_90, %c192_91] : memref<128x256xf32, #tpu.memory_space<vmem>>, vector<128x32xf32>
    %c0_92 = arith.constant 0 : index
    %c6_93 = arith.constant 6 : index
    %c0_94 = arith.constant 0 : index
    %c0_95 = arith.constant 0 : index
    %94 = vector.load %arg8[%c0_92, %c6_93, %c0_94, %c0_95] : memref<1x8x128x32xf32, #tpu.memory_space<vmem>>, vector<1x1x128x32xf32>
    %95 = vector.shape_cast %94 : vector<1x1x128x32xf32> to vector<128x32xf32>
    %96 = vector.shape_cast %93 : vector<128x32xf32> to vector<1x1x128x32xf32>
    tpu.vector_store %arg8[%c0_92, %c6_93, %c0_94, %c0_95], %96 {strides = array<i32>} : memref<1x8x128x32xf32, #tpu.memory_space<vmem>>, vector<1x1x128x32xf32>,
    %c0_96 = arith.constant 0 : index
    %c224_97 = arith.constant 224 : index
    %97 = vector.load %arg9[%c0_96, %c224_97] : memref<128x256xf32, #tpu.memory_space<vmem>>, vector<128x32xf32>
    %c0_98 = arith.constant 0 : index
    %c7_99 = arith.constant 7 : index
    %c0_100 = arith.constant 0 : index
    %c0_101 = arith.constant 0 : index
    %98 = vector.load %arg8[%c0_98, %c7_99, %c0_100, %c0_101] : memref<1x8x128x32xf32, #tpu.memory_space<vmem>>, vector<1x1x128x32xf32>
    %99 = vector.shape_cast %98 : vector<1x1x128x32xf32> to vector<128x32xf32>
    %100 = vector.shape_cast %97 : vector<128x32xf32> to vector<1x1x128x32xf32>
    tpu.vector_store %arg8[%c0_98, %c7_99, %c0_100, %c0_101], %100 {strides = array<i32>} : memref<1x8x128x32xf32, #tpu.memory_space<vmem>>, vector<1x1x128x32xf32>,
    return
  }
  func.func @transform_0(%arg0: i32, %arg1: i32) -> (i32, i32, i32) {
    %c0_i32 = arith.constant 0 : i32
    %c0_i32_0 = arith.constant 0 : i32
    return %arg0, %arg1, %c0_i32 : i32, i32, i32
  }
  func.func @transform_1(%arg0: i32, %arg1: i32) -> (i32, i32) {
    %c0_i32 = arith.constant 0 : i32
    %c0_i32_0 = arith.constant 0 : i32
    %c0_i32_1 = arith.constant 0 : i32
    return %c0_i32, %c0_i32_0 : i32, i32
  }
  func.func @transform_2(%arg0: i32, %arg1: i32) -> (i32, i32) {
    %c0_i32 = arith.constant 0 : i32
    %c0_i32_0 = arith.constant 0 : i32
    %c0_i32_1 = arith.constant 0 : i32
    return %c0_i32, %c0_i32_0 : i32, i32
  }
  func.func @transform_3(%arg0: i32, %arg1: i32) -> (i32, i32) {
    %c0_i32 = arith.constant 0 : i32
    %c0_i32_0 = arith.constant 0 : i32
    %c0_i32_1 = arith.constant 0 : i32
    return %c0_i32, %c0_i32_0 : i32, i32
  }
  func.func @transform_4(%arg0: i32, %arg1: i32) -> (i32, i32) {
    %c0_i32 = arith.constant 0 : i32
    %c0_i32_0 = arith.constant 0 : i32
    %c0_i32_1 = arith.constant 0 : i32
    return %c0_i32, %c0_i32_0 : i32, i32
  }
  func.func @transform_5(%arg0: i32, %arg1: i32) -> (i32, i32, i32, i32) {
    %c0_i32 = arith.constant 0 : i32
    %c0_i32_0 = arith.constant 0 : i32
    %c0_i32_1 = arith.constant 0 : i32
    return %arg0, %c0_i32, %c0_i32_0, %arg1 : i32, i32, i32, i32
  }
  func.func @transform_6(%arg0: i32, %arg1: i32) -> (i32, i32, i32, i32) {
    %c0_i32 = arith.constant 0 : i32
    %c0_i32_0 = arith.constant 0 : i32
    %c0_i32_1 = arith.constant 0 : i32
    return %arg0, %c0_i32, %arg1, %c0_i32_0 : i32, i32, i32, i32
  }
}

module attributes {stable_mosaic.version = 11 : i64} {
  func.func @_ln1_kv_kernel(%arg0: i32, %arg1: i32, %arg2: memref<1x128x256xf32, #tpu.memory_space<vmem>>, %arg3: memref<1x256xf32, #tpu.memory_space<vmem>>, %arg4: memref<1x256xf32, #tpu.memory_space<vmem>>, %arg5: memref<256x256xf32, #tpu.memory_space<vmem>>, %arg6: memref<256x256xf32, #tpu.memory_space<vmem>>, %arg7: memref<1x8x32x128xf32, #tpu.memory_space<vmem>>, %arg8: memref<1x8x128x32xf32, #tpu.memory_space<vmem>>, %arg9: memref<128x256xf32, #tpu.memory_space<vmem>>, %arg10: memref<256x128xf32, #tpu.memory_space<vmem>>) attributes {dimension_semantics = [#tpu.dimension_semantics<parallel>, #tpu.dimension_semantics<parallel>], iteration_bounds = array<i64: 2, 2>, scalar_prefetch = 0 : i64, scratch_operands = 2 : i64, tpu.core_type = #tpu.core_type<tc>, window_params = [{transform_indices = @transform_0, window_bounds = array<i64: 1, 128, 256>}, {pipeline_mode = #tpu.pipeline_mode<synchronous>, transform_indices = @transform_1, window_bounds = array<i64: 1, 256>}, {pipeline_mode = #tpu.pipeline_mode<synchronous>, transform_indices = @transform_2, window_bounds = array<i64: 1, 256>}, {pipeline_mode = #tpu.pipeline_mode<synchronous>, transform_indices = @transform_3, window_bounds = array<i64: 256, 256>}, {pipeline_mode = #tpu.pipeline_mode<synchronous>, transform_indices = @transform_4, window_bounds = array<i64: 256, 256>}, {transform_indices = @transform_5, window_bounds = array<i64: 1, 8, 32, 128>}, {transform_indices = @transform_6, window_bounds = array<i64: 1, 8, 128, 32>}]} {
    %c0 = arith.constant 0 : index
    %c0_0 = arith.constant 0 : index
    %c0_1 = arith.constant 0 : index
    %0 = vector.load %arg2[%c0, %c0_0, %c0_1] : memref<1x128x256xf32, #tpu.memory_space<vmem>>, vector<1x128x256xf32>
    %1 = vector.shape_cast %0 : vector<1x128x256xf32> to vector<128x256xf32>
    %c0_2 = arith.constant 0 : index
    %c0_3 = arith.constant 0 : index
    %2 = vector.load %arg3[%c0_2, %c0_3] : memref<1x256xf32, #tpu.memory_space<vmem>>, vector<1x256xf32>
    %3 = vector.shape_cast %2 : vector<1x256xf32> to vector<256xf32>
    %c0_4 = arith.constant 0 : index
    %c0_5 = arith.constant 0 : index
    %4 = vector.load %arg4[%c0_4, %c0_5] : memref<1x256xf32, #tpu.memory_space<vmem>>, vector<1x256xf32>
    %5 = vector.shape_cast %4 : vector<1x256xf32> to vector<256xf32>
    %cst = arith.constant dense<0.000000e+00> : vector<128xf32>
    %6 = vector.multi_reduction <add>, %1, %cst [1] : vector<128x256xf32> to vector<128xf32>
    %7 = vector.shape_cast %6 : vector<128xf32> to vector<128x1xf32>
    %cst_6 = arith.constant 2.560000e+02 : f32
    %8 = vector.broadcast %cst_6 : f32 to vector<128x1xf32>
    %9 = arith.divf %7, %8 : vector<128x1xf32>
    %10 = vector.broadcast %9 : vector<128x1xf32> to vector<128x256xf32>
    %11 = arith.subf %1, %10 : vector<128x256xf32>
    %12 = arith.mulf %11, %11 : vector<128x256xf32>
    %cst_7 = arith.constant dense<0.000000e+00> : vector<128xf32>
    %13 = vector.multi_reduction <add>, %12, %cst_7 [1] : vector<128x256xf32> to vector<128xf32>
    %14 = vector.shape_cast %13 : vector<128xf32> to vector<128x1xf32>
    %cst_8 = arith.constant 2.560000e+02 : f32
    %15 = vector.broadcast %cst_8 : f32 to vector<128x1xf32>
    %16 = arith.divf %14, %15 : vector<128x1xf32>
    %17 = vector.broadcast %9 : vector<128x1xf32> to vector<128x256xf32>
    %18 = arith.subf %1, %17 : vector<128x256xf32>
    %cst_9 = arith.constant 9.99999974E-6 : f32
    %19 = vector.broadcast %cst_9 : f32 to vector<128x1xf32>
    %20 = arith.addf %16, %19 : vector<128x1xf32>
    %21 = math.rsqrt %20 : vector<128x1xf32>
    %22 = vector.broadcast %21 : vector<128x1xf32> to vector<128x256xf32>
    %23 = arith.mulf %18, %22 : vector<128x256xf32>
    %24 = vector.shape_cast %3 : vector<256xf32> to vector<1x256xf32>
    %25 = vector.broadcast %24 : vector<1x256xf32> to vector<128x256xf32>
    %26 = arith.mulf %23, %25 : vector<128x256xf32>
    %27 = vector.shape_cast %5 : vector<256xf32> to vector<1x256xf32>
    %28 = vector.broadcast %27 : vector<1x256xf32> to vector<128x256xf32>
    %29 = arith.addf %26, %28 : vector<128x256xf32>
    %c0_10 = arith.constant 0 : index
    %c0_11 = arith.constant 0 : index
    %30 = vector.load %arg5[%c0_10, %c0_11] : memref<256x256xf32, #tpu.memory_space<vmem>>, vector<256x256xf32>
    %cst_12 = arith.constant dense<0.000000e+00> : vector<128x256xf32>
    %31 = tpu.matmul %29, %30, %cst_12 {dimension_numbers = #tpu.dot_dimension_numbers<[1], [0], [0], [1], [0, 0, 1, 1], [], []>} : vector<128x256xf32>, vector<256x256xf32>, vector<128x256xf32> -> vector<128x256xf32>
    %32 = tpu.transpose %31, [1, 0] : vector<128x256xf32> -> vector<256x128xf32>
    %c0_13 = arith.constant 0 : index
    %c0_14 = arith.constant 0 : index
    %33 = vector.load %arg10[%c0_13, %c0_14] : memref<256x128xf32, #tpu.memory_space<vmem>>, vector<256x128xf32>
    tpu.vector_store %arg10[%c0_13, %c0_14], %32 {strides = array<i32>} : memref<256x128xf32, #tpu.memory_space<vmem>>, vector<256x128xf32>,
    %c0_15 = arith.constant 0 : index
    %c0_16 = arith.constant 0 : index
    %34 = vector.load %arg10[%c0_15, %c0_16] : memref<256x128xf32, #tpu.memory_space<vmem>>, vector<32x128xf32>
    %c0_17 = arith.constant 0 : index
    %c0_18 = arith.constant 0 : index
    %c0_19 = arith.constant 0 : index
    %c0_20 = arith.constant 0 : index
    %35 = vector.load %arg7[%c0_17, %c0_18, %c0_19, %c0_20] : memref<1x8x32x128xf32, #tpu.memory_space<vmem>>, vector<1x1x32x128xf32>
    %36 = vector.shape_cast %35 : vector<1x1x32x128xf32> to vector<32x128xf32>
    %37 = vector.shape_cast %34 : vector<32x128xf32> to vector<1x1x32x128xf32>
    tpu.vector_store %arg7[%c0_17, %c0_18, %c0_19, %c0_20], %37 {strides = array<i32>} : memref<1x8x32x128xf32, #tpu.memory_space<vmem>>, vector<1x1x32x128xf32>,
    %c32 = arith.constant 32 : index
    %c0_21 = arith.constant 0 : index
    %38 = vector.load %arg10[%c32, %c0_21] : memref<256x128xf32, #tpu.memory_space<vmem>>, vector<32x128xf32>
    %c0_22 = arith.constant 0 : index
    %c1 = arith.constant 1 : index
    %c0_23 = arith.constant 0 : index
    %c0_24 = arith.constant 0 : index
    %39 = vector.load %arg7[%c0_22, %c1, %c0_23, %c0_24] : memref<1x8x32x128xf32, #tpu.memory_space<vmem>>, vector<1x1x32x128xf32>
    %40 = vector.shape_cast %39 : vector<1x1x32x128xf32> to vector<32x128xf32>
    %41 = vector.shape_cast %38 : vector<32x128xf32> to vector<1x1x32x128xf32>
    tpu.vector_store %arg7[%c0_22, %c1, %c0_23, %c0_24], %41 {strides = array<i32>} : memref<1x8x32x128xf32, #tpu.memory_space<vmem>>, vector<1x1x32x128xf32>,
    %c64 = arith.constant 64 : index
    %c0_25 = arith.constant 0 : index
    %42 = vector.load %arg10[%c64, %c0_25] : memref<256x128xf32, #tpu.memory_space<vmem>>, vector<32x128xf32>
    %c0_26 = arith.constant 0 : index
    %c2 = arith.constant 2 : index
    %c0_27 = arith.constant 0 : index
    %c0_28 = arith.constant 0 : index
    %43 = vector.load %arg7[%c0_26, %c2, %c0_27, %c0_28] : memref<1x8x32x128xf32, #tpu.memory_space<vmem>>, vector<1x1x32x128xf32>
    %44 = vector.shape_cast %43 : vector<1x1x32x128xf32> to vector<32x128xf32>
    %45 = vector.shape_cast %42 : vector<32x128xf32> to vector<1x1x32x128xf32>
    tpu.vector_store %arg7[%c0_26, %c2, %c0_27, %c0_28], %45 {strides = array<i32>} : memref<1x8x32x128xf32, #tpu.memory_space<vmem>>, vector<1x1x32x128xf32>,
    %c96 = arith.constant 96 : index
    %c0_29 = arith.constant 0 : index
    %46 = vector.load %arg10[%c96, %c0_29] : memref<256x128xf32, #tpu.memory_space<vmem>>, vector<32x128xf32>
    %c0_30 = arith.constant 0 : index
    %c3 = arith.constant 3 : index
    %c0_31 = arith.constant 0 : index
    %c0_32 = arith.constant 0 : index
    %47 = vector.load %arg7[%c0_30, %c3, %c0_31, %c0_32] : memref<1x8x32x128xf32, #tpu.memory_space<vmem>>, vector<1x1x32x128xf32>
    %48 = vector.shape_cast %47 : vector<1x1x32x128xf32> to vector<32x128xf32>
    %49 = vector.shape_cast %46 : vector<32x128xf32> to vector<1x1x32x128xf32>
    tpu.vector_store %arg7[%c0_30, %c3, %c0_31, %c0_32], %49 {strides = array<i32>} : memref<1x8x32x128xf32, #tpu.memory_space<vmem>>, vector<1x1x32x128xf32>,
    %c128 = arith.constant 128 : index
    %c0_33 = arith.constant 0 : index
    %50 = vector.load %arg10[%c128, %c0_33] : memref<256x128xf32, #tpu.memory_space<vmem>>, vector<32x128xf32>
    %c0_34 = arith.constant 0 : index
    %c4 = arith.constant 4 : index
    %c0_35 = arith.constant 0 : index
    %c0_36 = arith.constant 0 : index
    %51 = vector.load %arg7[%c0_34, %c4, %c0_35, %c0_36] : memref<1x8x32x128xf32, #tpu.memory_space<vmem>>, vector<1x1x32x128xf32>
    %52 = vector.shape_cast %51 : vector<1x1x32x128xf32> to vector<32x128xf32>
    %53 = vector.shape_cast %50 : vector<32x128xf32> to vector<1x1x32x128xf32>
    tpu.vector_store %arg7[%c0_34, %c4, %c0_35, %c0_36], %53 {strides = array<i32>} : memref<1x8x32x128xf32, #tpu.memory_space<vmem>>, vector<1x1x32x128xf32>,
    %c160 = arith.constant 160 : index
    %c0_37 = arith.constant 0 : index
    %54 = vector.load %arg10[%c160, %c0_37] : memref<256x128xf32, #tpu.memory_space<vmem>>, vector<32x128xf32>
    %c0_38 = arith.constant 0 : index
    %c5 = arith.constant 5 : index
    %c0_39 = arith.constant 0 : index
    %c0_40 = arith.constant 0 : index
    %55 = vector.load %arg7[%c0_38, %c5, %c0_39, %c0_40] : memref<1x8x32x128xf32, #tpu.memory_space<vmem>>, vector<1x1x32x128xf32>
    %56 = vector.shape_cast %55 : vector<1x1x32x128xf32> to vector<32x128xf32>
    %57 = vector.shape_cast %54 : vector<32x128xf32> to vector<1x1x32x128xf32>
    tpu.vector_store %arg7[%c0_38, %c5, %c0_39, %c0_40], %57 {strides = array<i32>} : memref<1x8x32x128xf32, #tpu.memory_space<vmem>>, vector<1x1x32x128xf32>,
    %c192 = arith.constant 192 : index
    %c0_41 = arith.constant 0 : index
    %58 = vector.load %arg10[%c192, %c0_41] : memref<256x128xf32, #tpu.memory_space<vmem>>, vector<32x128xf32>
    %c0_42 = arith.constant 0 : index
    %c6 = arith.constant 6 : index
    %c0_43 = arith.constant 0 : index
    %c0_44 = arith.constant 0 : index
    %59 = vector.load %arg7[%c0_42, %c6, %c0_43, %c0_44] : memref<1x8x32x128xf32, #tpu.memory_space<vmem>>, vector<1x1x32x128xf32>
    %60 = vector.shape_cast %59 : vector<1x1x32x128xf32> to vector<32x128xf32>
    %61 = vector.shape_cast %58 : vector<32x128xf32> to vector<1x1x32x128xf32>
    tpu.vector_store %arg7[%c0_42, %c6, %c0_43, %c0_44], %61 {strides = array<i32>} : memref<1x8x32x128xf32, #tpu.memory_space<vmem>>, vector<1x1x32x128xf32>,
    %c224 = arith.constant 224 : index
    %c0_45 = arith.constant 0 : index
    %62 = vector.load %arg10[%c224, %c0_45] : memref<256x128xf32, #tpu.memory_space<vmem>>, vector<32x128xf32>
    %c0_46 = arith.constant 0 : index
    %c7 = arith.constant 7 : index
    %c0_47 = arith.constant 0 : index
    %c0_48 = arith.constant 0 : index
    %63 = vector.load %arg7[%c0_46, %c7, %c0_47, %c0_48] : memref<1x8x32x128xf32, #tpu.memory_space<vmem>>, vector<1x1x32x128xf32>
    %64 = vector.shape_cast %63 : vector<1x1x32x128xf32> to vector<32x128xf32>
    %65 = vector.shape_cast %62 : vector<32x128xf32> to vector<1x1x32x128xf32>
    tpu.vector_store %arg7[%c0_46, %c7, %c0_47, %c0_48], %65 {strides = array<i32>} : memref<1x8x32x128xf32, #tpu.memory_space<vmem>>, vector<1x1x32x128xf32>,
    %c0_49 = arith.constant 0 : index
    %c0_50 = arith.constant 0 : index
    %66 = vector.load %arg6[%c0_49, %c0_50] : memref<256x256xf32, #tpu.memory_space<vmem>>, vector<256x256xf32>
    %cst_51 = arith.constant dense<0.000000e+00> : vector<128x256xf32>
    %67 = tpu.matmul %29, %66, %cst_51 {dimension_numbers = #tpu.dot_dimension_numbers<[1], [0], [0], [1], [0, 0, 1, 1], [], []>} : vector<128x256xf32>, vector<256x256xf32>, vector<128x256xf32> -> vector<128x256xf32>
    %c0_52 = arith.constant 0 : index
    %c0_53 = arith.constant 0 : index
    %68 = vector.load %arg9[%c0_52, %c0_53] : memref<128x256xf32, #tpu.memory_space<vmem>>, vector<128x256xf32>
    tpu.vector_store %arg9[%c0_52, %c0_53], %67 {strides = array<i32>} : memref<128x256xf32, #tpu.memory_space<vmem>>, vector<128x256xf32>,
    %c0_54 = arith.constant 0 : index
    %c0_55 = arith.constant 0 : index
    %69 = vector.load %arg9[%c0_54, %c0_55] : memref<128x256xf32, #tpu.memory_space<vmem>>, vector<128x32xf32>
    %c0_56 = arith.constant 0 : index
    %c0_57 = arith.constant 0 : index
    %c0_58 = arith.constant 0 : index
    %c0_59 = arith.constant 0 : index
    %70 = vector.load %arg8[%c0_56, %c0_57, %c0_58, %c0_59] : memref<1x8x128x32xf32, #tpu.memory_space<vmem>>, vector<1x1x128x32xf32>
    %71 = vector.shape_cast %70 : vector<1x1x128x32xf32> to vector<128x32xf32>
    %72 = vector.shape_cast %69 : vector<128x32xf32> to vector<1x1x128x32xf32>
    tpu.vector_store %arg8[%c0_56, %c0_57, %c0_58, %c0_59], %72 {strides = array<i32>} : memref<1x8x128x32xf32, #tpu.memory_space<vmem>>, vector<1x1x128x32xf32>,
    %c0_60 = arith.constant 0 : index
    %c32_61 = arith.constant 32 : index
    %73 = vector.load %arg9[%c0_60, %c32_61] : memref<128x256xf32, #tpu.memory_space<vmem>>, vector<128x32xf32>
    %c0_62 = arith.constant 0 : index
    %c1_63 = arith.constant 1 : index
    %c0_64 = arith.constant 0 : index
    %c0_65 = arith.constant 0 : index
    %74 = vector.load %arg8[%c0_62, %c1_63, %c0_64, %c0_65] : memref<1x8x128x32xf32, #tpu.memory_space<vmem>>, vector<1x1x128x32xf32>
    %75 = vector.shape_cast %74 : vector<1x1x128x32xf32> to vector<128x32xf32>
    %76 = vector.shape_cast %73 : vector<128x32xf32> to vector<1x1x128x32xf32>
    tpu.vector_store %arg8[%c0_62, %c1_63, %c0_64, %c0_65], %76 {strides = array<i32>} : memref<1x8x128x32xf32, #tpu.memory_space<vmem>>, vector<1x1x128x32xf32>,
    %c0_66 = arith.constant 0 : index
    %c64_67 = arith.constant 64 : index
    %77 = vector.load %arg9[%c0_66, %c64_67] : memref<128x256xf32, #tpu.memory_space<vmem>>, vector<128x32xf32>
    %c0_68 = arith.constant 0 : index
    %c2_69 = arith.constant 2 : index
    %c0_70 = arith.constant 0 : index
    %c0_71 = arith.constant 0 : index
    %78 = vector.load %arg8[%c0_68, %c2_69, %c0_70, %c0_71] : memref<1x8x128x32xf32, #tpu.memory_space<vmem>>, vector<1x1x128x32xf32>
    %79 = vector.shape_cast %78 : vector<1x1x128x32xf32> to vector<128x32xf32>
    %80 = vector.shape_cast %77 : vector<128x32xf32> to vector<1x1x128x32xf32>
    tpu.vector_store %arg8[%c0_68, %c2_69, %c0_70, %c0_71], %80 {strides = array<i32>} : memref<1x8x128x32xf32, #tpu.memory_space<vmem>>, vector<1x1x128x32xf32>,
    %c0_72 = arith.constant 0 : index
    %c96_73 = arith.constant 96 : index
    %81 = vector.load %arg9[%c0_72, %c96_73] : memref<128x256xf32, #tpu.memory_space<vmem>>, vector<128x32xf32>
    %c0_74 = arith.constant 0 : index
    %c3_75 = arith.constant 3 : index
    %c0_76 = arith.constant 0 : index
    %c0_77 = arith.constant 0 : index
    %82 = vector.load %arg8[%c0_74, %c3_75, %c0_76, %c0_77] : memref<1x8x128x32xf32, #tpu.memory_space<vmem>>, vector<1x1x128x32xf32>
    %83 = vector.shape_cast %82 : vector<1x1x128x32xf32> to vector<128x32xf32>
    %84 = vector.shape_cast %81 : vector<128x32xf32> to vector<1x1x128x32xf32>
    tpu.vector_store %arg8[%c0_74, %c3_75, %c0_76, %c0_77], %84 {strides = array<i32>} : memref<1x8x128x32xf32, #tpu.memory_space<vmem>>, vector<1x1x128x32xf32>,
    %c0_78 = arith.constant 0 : index
    %c128_79 = arith.constant 128 : index
    %85 = vector.load %arg9[%c0_78, %c128_79] : memref<128x256xf32, #tpu.memory_space<vmem>>, vector<128x32xf32>
    %c0_80 = arith.constant 0 : index
    %c4_81 = arith.constant 4 : index
    %c0_82 = arith.constant 0 : index
    %c0_83 = arith.constant 0 : index
    %86 = vector.load %arg8[%c0_80, %c4_81, %c0_82, %c0_83] : memref<1x8x128x32xf32, #tpu.memory_space<vmem>>, vector<1x1x128x32xf32>
    %87 = vector.shape_cast %86 : vector<1x1x128x32xf32> to vector<128x32xf32>
    %88 = vector.shape_cast %85 : vector<128x32xf32> to vector<1x1x128x32xf32>
    tpu.vector_store %arg8[%c0_80, %c4_81, %c0_82, %c0_83], %88 {strides = array<i32>} : memref<1x8x128x32xf32, #tpu.memory_space<vmem>>, vector<1x1x128x32xf32>,
    %c0_84 = arith.constant 0 : index
    %c160_85 = arith.constant 160 : index
    %89 = vector.load %arg9[%c0_84, %c160_85] : memref<128x256xf32, #tpu.memory_space<vmem>>, vector<128x32xf32>
    %c0_86 = arith.constant 0 : index
    %c5_87 = arith.constant 5 : index
    %c0_88 = arith.constant 0 : index
    %c0_89 = arith.constant 0 : index
    %90 = vector.load %arg8[%c0_86, %c5_87, %c0_88, %c0_89] : memref<1x8x128x32xf32, #tpu.memory_space<vmem>>, vector<1x1x128x32xf32>
    %91 = vector.shape_cast %90 : vector<1x1x128x32xf32> to vector<128x32xf32>
    %92 = vector.shape_cast %89 : vector<128x32xf32> to vector<1x1x128x32xf32>
    tpu.vector_store %arg8[%c0_86, %c5_87, %c0_88, %c0_89], %92 {strides = array<i32>} : memref<1x8x128x32xf32, #tpu.memory_space<vmem>>, vector<1x1x128x32xf32>,
    %c0_90 = arith.constant 0 : index
    %c192_91 = arith.constant 192 : index
    %93 = vector.load %arg9[%c0_90, %c192_91] : memref<128x256xf32, #tpu.memory_space<vmem>>, vector<128x32xf32>
    %c0_92 = arith.constant 0 : index
    %c6_93 = arith.constant 6 : index
    %c0_94 = arith.constant 0 : index
    %c0_95 = arith.constant 0 : index
    %94 = vector.load %arg8[%c0_92, %c6_93, %c0_94, %c0_95] : memref<1x8x128x32xf32, #tpu.memory_space<vmem>>, vector<1x1x128x32xf32>
    %95 = vector.shape_cast %94 : vector<1x1x128x32xf32> to vector<128x32xf32>
    %96 = vector.shape_cast %93 : vector<128x32xf32> to vector<1x1x128x32xf32>
    tpu.vector_store %arg8[%c0_92, %c6_93, %c0_94, %c0_95], %96 {strides = array<i32>} : memref<1x8x128x32xf32, #tpu.memory_space<vmem>>, vector<1x1x128x32xf32>,
    %c0_96 = arith.constant 0 : index
    %c224_97 = arith.constant 224 : index
    %97 = vector.load %arg9[%c0_96, %c224_97] : memref<128x256xf32, #tpu.memory_space<vmem>>, vector<128x32xf32>
    %c0_98 = arith.constant 0 : index
    %c7_99 = arith.constant 7 : index
    %c0_100 = arith.constant 0 : index
    %c0_101 = arith.constant 0 : index
    %98 = vector.load %arg8[%c0_98, %c7_99, %c0_100, %c0_101] : memref<1x8x128x32xf32, #tpu.memory_space<vmem>>, vector<1x1x128x32xf32>
    %99 = vector.shape_cast %98 : vector<1x1x128x32xf32> to vector<128x32xf32>
    %100 = vector.shape_cast %97 : vector<128x32xf32> to vector<1x1x128x32xf32>
    tpu.vector_store %arg8[%c0_98, %c7_99, %c0_100, %c0_101], %100 {strides = array<i32>} : memref<1x8x128x32xf32, #tpu.memory_space<vmem>>, vector<1x1x128x32xf32>,
    return
  }
  func.func @transform_0(%arg0: i32, %arg1: i32) -> (i32, i32, i32) {
    %c0_i32 = arith.constant 0 : i32
    %c0_i32_0 = arith.constant 0 : i32
    return %arg0, %arg1, %c0_i32 : i32, i32, i32
  }
  func.func @transform_1(%arg0: i32, %arg1: i32) -> (i32, i32) {
    %c0_i32 = arith.constant 0 : i32
    %c0_i32_0 = arith.constant 0 : i32
    %c0_i32_1 = arith.constant 0 : i32
    return %c0_i32, %c0_i32_0 : i32, i32
  }
  func.func @transform_2(%arg0: i32, %arg1: i32) -> (i32, i32) {
    %c0_i32 = arith.constant 0 : i32
    %c0_i32_0 = arith.constant 0 : i32
    %c0_i32_1 = arith.constant 0 : i32
    return %c0_i32, %c0_i32_0 : i32, i32
  }
  func.func @transform_3(%arg0: i32, %arg1: i32) -> (i32, i32) {
    %c0_i32 = arith.constant 0 : i32
    %c0_i32_0 = arith.constant 0 : i32
    %c0_i32_1 = arith.constant 0 : i32
    return %c0_i32, %c0_i32_0 : i32, i32
  }
  func.func @transform_4(%arg0: i32, %arg1: i32) -> (i32, i32) {
    %c0_i32 = arith.constant 0 : i32
    %c0_i32_0 = arith.constant 0 : i32
    %c0_i32_1 = arith.constant 0 : i32
    return %c0_i32, %c0_i32_0 : i32, i32
  }
  func.func @transform_5(%arg0: i32, %arg1: i32) -> (i32, i32, i32, i32) {
    %c0_i32 = arith.constant 0 : i32
    %c0_i32_0 = arith.constant 0 : i32
    %c0_i32_1 = arith.constant 0 : i32
    return %arg0, %c0_i32, %c0_i32_0, %arg1 : i32, i32, i32, i32
  }
  func.func @transform_6(%arg0: i32, %arg1: i32) -> (i32, i32, i32, i32) {
    %c0_i32 = arith.constant 0 : i32
    %c0_i32_0 = arith.constant 0 : i32
    %c0_i32_1 = arith.constant 0 : i32
    return %arg0, %c0_i32, %arg1, %c0_i32_0 : i32, i32, i32, i32
  }
}

</mosaic_0001>

<llo_original>
// kernel: tpu_custom_call.1
$region0: #{tpu_custom_call.1}
  #allocation0 [shape = 'u32[]', space=smem, size = 0x4, offset = 0x4, fixed_abs, tag = 'smem constant byte address 0x4 - core index']
  #allocation1 [shape = 'u32[144,128]{1,0:T(1,128)}', space=vmem, size = 0x12000, scoped, tag = 'internal scratch']
  #allocation2 [shape = 'f32[128,256]{1,0:T(8,128)}', space=vmem, size = 0x20000, scoped, tag = 'scratch operand']
  #allocation3 [shape = 'f32[256,128]{1,0:T(8,128)}', space=vmem, size = 0x20000, scoped, tag = 'scratch operand']
  %s0 = inlined_call_operand.hbm [shape: f32[2,256,256], index: 0, kind: input, shape index: {}]
  %s1 = inlined_call_operand.hbm [shape: f32[1,256], index: 1, kind: input, shape index: {}]
  %s2 = inlined_call_operand.hbm [shape: f32[1,256], index: 2, kind: input, shape index: {}]
  %s3 = inlined_call_operand.hbm [shape: f32[256,256], index: 3, kind: input, shape index: {}]
  %s4 = inlined_call_operand.hbm [shape: f32[256,256], index: 4, kind: input, shape index: {}]
  %s5 = inlined_call_operand.hbm [shape: f32[2,8,32,256], index: 5, kind: output, shape index: {0}]
  %s6 = inlined_call_operand.vmem [shape: f32[2,8,256,32], index: 6, kind: output, shape index: {1}]
  %7 = xla_tuple %s5, %s6
  %s8 = sld [smem:[#allocation0]]
  $region115: #{tpu_custom_call.1} parent=0
    _
  %s10 = ssub.s32 1, %s8
  %s11 = scalar_select 0, %s10, %s8
  $region1: #{tpu_custom_call.1} parent=0
    #allocation4 [shape = 'u8[262144]{0}', space=vmem, size = 0x40000, scoped, tag = 'input window, operand 0']
    #allocation5 [shape = 's32[2]{0}', space=sflag, size = 0x8, scoped, tag = 'scoped memory for tpu_custom_call.1']
    #allocation6 [shape = 's32[2]{0}', space=sflag, size = 0x8, scoped, tag = 'scoped memory for tpu_custom_call.1']
    #allocation7 [shape = 'u8[1024]{0}', space=vmem, size = 0x400, scoped, tag = 'input window, operand 1, single buffered']
    #allocation8 [shape = 's32[1]{0}', space=sflag, size = 0x4, scoped, tag = 'scoped memory for tpu_custom_call.1']
    #allocation9 [shape = 'u8[1024]{0}', space=vmem, size = 0x400, scoped, tag = 'input window, operand 2, single buffered']
    #allocation10 [shape = 'u8[262144]{0}', space=vmem, size = 0x40000, scoped, tag = 'input window, operand 3, single buffered']
    #allocation11 [shape = 's32[1]{0}', space=sflag, size = 0x4, scoped, tag = 'scoped memory for tpu_custom_call.1']
    #allocation12 [shape = 'u8[262144]{0}', space=vmem, size = 0x40000, scoped, tag = 'input window, operand 4, single buffered']
    #allocation13 [shape = 'u8[262144]{0}', space=vmem, size = 0x40000, scoped, tag = 'output window, operand 0']
    #allocation14 [shape = 'u8[1048576]{0}', space=vmem, size = 0x100000, scoped, tag = 'output window, operand 1']
    %12 = vsyncpa [#allocation5], 0
    %s13 = scalar_lea.sflag [#allocation5], 1
    %14 = vsyncpa %s13, 0
    %15 = vsyncpa [#allocation8], 0
    %16 = vsyncpa [#allocation11], 0
    %17 = vsyncpa [#allocation6], 0
    %s18 = scalar_lea.sflag [#allocation6], 1
    %19 = vsyncpa %s18, 0
    loop: start=0, step=1, limit=6
    $region2: #{tpu_custom_call.1} parent=1 // loop_pre_header
      _
    $region3: #{tpu_custom_call.1} parent=1 // loop_header
      %s21 = sphi 0, %s25
      %p22 = scmp.ge.s32.totalorder %s21, 6
      %s28 = sphi 0, %s40
      %s29 = sphi 0, %s36
      %s30 = sphi 0, %s28
      %s31 = sphi 0, %s29
      %s32 = sphi 0, %s30
      %s33 = sphi 0, %s31
      %s45 = sphi 0, %s47
      %s48 = sphi 0, %s45
      %s49 = sphi 0, %s48
      %s65 = sphi 0, %s49
      %s69 = sphi 0, %s69
      %s71 = sphi 0, %s69
      %s72 = sphi 0, %s71
      %s86 = sphi 0, %s72
      %s90 = sphi 0, %s90
      %s92 = sphi 0, %s90
      %s93 = sphi 0, %s92
      %s107 = sphi 0, %s93
      %s111 = sphi 0, %s111
      %s113 = sphi 0, %s111
      %s114 = sphi 0, %s113
      %s128 = sphi 0, %s114
      %s132 = sphi 0, %s132
      %s134 = sphi 0, %s132
      %s135 = sphi 0, %s134
      %s149 = sphi 0, %s135
      %s157 = sphi 0, %s159
      %s160 = sphi 0, %s157
      %s161 = sphi 0, %s160
      %s177 = sphi 0, %s161
      %s185 = sphi 0, %s187
      %s188 = sphi 0, %s185
      %s189 = sphi 0, %s188
      %s205 = sphi 0, %s189
    $region4: #{tpu_custom_call.1} parent=1 // loop_header_branch
      %24 = sbr.rel (%p22) target = $region8
    $region5: #{tpu_custom_call.1} parent=1 // loop_body
      %s26 = ssub.s32 %s21, 1
      %s27 = ssub.s32 %s21, 2
      %s34 = sadd.s32 1, %s29
      %p35 = scmp.ge.s32.totalorder %s34, 2
      %s36 = scalar_select %p35, 0, %s34
      %s37 = sadd.s32 1, %s28
      %s38 = scalar_select %p35, %s37, %s28
      %p39 = scmp.ge.s32.totalorder %s38, 2
      %s40 = scalar_select %p39, 0, %s38
      %s41 = ssub.s32 %s28, %s40
      %s42 = ssub.s32 %s29, %s36
      %s43 = sor.u32 %s41, %s42
      %p44 = scmp.eq.s32.totalorder %s43, 0
      %s46 = sadd.s32 %s45, 1
      %s47 = scalar_select %p44, %s45, %s46
      %p50 = pneg %p44
      %p51 = scmp.eq.s32.totalorder %s21, 3
      %p52 = por %p50, %p51
      %p53 = scmp.ne.s32.totalorder %s45, %s48
      %p54 = scmp.eq.s32.totalorder %s21, 0
      %p55 = por %p53, %p54
      %p56 = scmp.ne.s32.totalorder %s45, %s48
      %p57 = scmp.eq.s32.totalorder %s26, 3
      %p58 = por %p56, %p57
      %p59 = scmp.ne.s32.totalorder %s48, %s49
      %p60 = scmp.eq.s32.totalorder %s26, 0
      %p61 = por %p59, %p60
      %p62 = scmp.ne.s32.totalorder %s48, %s49
      %p63 = scmp.eq.s32.totalorder %s27, 3
      %p64 = por %p62, %p63
      %p66 = scmp.ne.s32.totalorder %s49, %s65
      %p67 = scmp.eq.s32.totalorder %s27, 0
      %p68 = por %p66, %p67
      %s70 = sadd.s32 %s69, 1
      %p73 = scmp.eq.s32.totalorder %s21, 3
      %p74 = scmp.ne.s32.totalorder %s69, %s71
      %p75 = scmp.eq.s32.totalorder %s21, 0
      %p76 = por %p74, %p75
      %p77 = scmp.ne.s32.totalorder %s69, %s71
      %p78 = scmp.eq.s32.totalorder %s26, 3
      %p79 = por %p77, %p78
      %p80 = scmp.ne.s32.totalorder %s71, %s72
      %p81 = scmp.eq.s32.totalorder %s26, 0
      %p82 = por %p80, %p81
      %p83 = scmp.ne.s32.totalorder %s71, %s72
      %p84 = scmp.eq.s32.totalorder %s27, 3
      %p85 = por %p83, %p84
      %p87 = scmp.ne.s32.totalorder %s72, %s86
      %p88 = scmp.eq.s32.totalorder %s27, 0
      %p89 = por %p87, %p88
      %s91 = sadd.s32 %s90, 1
      %p94 = scmp.eq.s32.totalorder %s21, 3
      %p95 = scmp.ne.s32.totalorder %s90, %s92
      %p96 = scmp.eq.s32.totalorder %s21, 0
      %p97 = por %p95, %p96
      %p98 = scmp.ne.s32.totalorder %s90, %s92
      %p99 = scmp.eq.s32.totalorder %s26, 3
      %p100 = por %p98, %p99
      %p101 = scmp.ne.s32.totalorder %s92, %s93
      %p102 = scmp.eq.s32.totalorder %s26, 0
      %p103 = por %p101, %p102
      %p104 = scmp.ne.s32.totalorder %s92, %s93
      %p105 = scmp.eq.s32.totalorder %s27, 3
      %p106 = por %p104, %p105
      %p108 = scmp.ne.s32.totalorder %s93, %s107
      %p109 = scmp.eq.s32.totalorder %s27, 0
      %p110 = por %p108, %p109
      %s112 = sadd.s32 %s111, 1
      %p115 = scmp.eq.s32.totalorder %s21, 3
      %p116 = scmp.ne.s32.totalorder %s111, %s113
      %p117 = scmp.eq.s32.totalorder %s21, 0
      %p118 = por %p116, %p117
      %p119 = scmp.ne.s32.totalorder %s111, %s113
      %p120 = scmp.eq.s32.totalorder %s26, 3
      %p121 = por %p119, %p120
      %p122 = scmp.ne.s32.totalorder %s113, %s114
      %p123 = scmp.eq.s32.totalorder %s26, 0
      %p124 = por %p122, %p123
      %p125 = scmp.ne.s32.totalorder %s113, %s114
      %p126 = scmp.eq.s32.totalorder %s27, 3
      %p127 = por %p125, %p126
      %p129 = scmp.ne.s32.totalorder %s114, %s128
      %p130 = scmp.eq.s32.totalorder %s27, 0
      %p131 = por %p129, %p130
      %s133 = sadd.s32 %s132, 1
      %p136 = scmp.eq.s32.totalorder %s21, 3
      %p137 = scmp.ne.s32.totalorder %s132, %s134
      %p138 = scmp.eq.s32.totalorder %s21, 0
      %p139 = por %p137, %p138
      %p140 = scmp.ne.s32.totalorder %s132, %s134
      %p141 = scmp.eq.s32.totalorder %s26, 3
      %p142 = por %p140, %p141
      %p143 = scmp.ne.s32.totalorder %s134, %s135
      %p144 = scmp.eq.s32.totalorder %s26, 0
      %p145 = por %p143, %p144
      %p146 = scmp.ne.s32.totalorder %s134, %s135
      %p147 = scmp.eq.s32.totalorder %s27, 3
      %p148 = por %p146, %p147
      %p150 = scmp.ne.s32.totalorder %s135, %s149
      %p151 = scmp.eq.s32.totalorder %s27, 0
      %p152 = por %p150, %p151
      %s153 = ssub.s32 %s28, %s40
      %s154 = ssub.s32 %s29, %s36
      %s155 = sor.u32 %s153, %s154
      %p156 = scmp.eq.s32.totalorder %s155, 0
      %s158 = sadd.s32 %s157, 1
      %s159 = scalar_select %p156, %s157, %s158
      %p162 = pneg %p156
      %p163 = scmp.eq.s32.totalorder %s21, 3
      %p164 = por %p162, %p163
      %p165 = scmp.ne.s32.totalorder %s157, %s160
      %p166 = scmp.eq.s32.totalorder %s21, 0
      %p167 = por %p165, %p166
      %p168 = scmp.ne.s32.totalorder %s157, %s160
      %p169 = scmp.eq.s32.totalorder %s26, 3
      %p170 = por %p168, %p169
      %p171 = scmp.ne.s32.totalorder %s160, %s161
      %p172 = scmp.eq.s32.totalorder %s26, 0
      %p173 = por %p171, %p172
      %p174 = scmp.ne.s32.totalorder %s160, %s161
      %p175 = scmp.eq.s32.totalorder %s27, 3
      %p176 = por %p174, %p175
      %p178 = scmp.ne.s32.totalorder %s161, %s177
      %p179 = scmp.eq.s32.totalorder %s27, 0
      %p180 = por %p178, %p179
      %s181 = ssub.s32 %s28, %s40
      %s182 = ssub.s32 %s29, %s36
      %s183 = sor.u32 %s181, %s182
      %p184 = scmp.eq.s32.totalorder %s183, 0
      %s186 = sadd.s32 %s185, 1
      %s187 = scalar_select %p184, %s185, %s186
      %p190 = pneg %p184
      %p191 = scmp.eq.s32.totalorder %s21, 3
      %p192 = por %p190, %p191
      %p193 = scmp.ne.s32.totalorder %s185, %s188
      %p194 = scmp.eq.s32.totalorder %s21, 0
      %p195 = por %p193, %p194
      %p196 = scmp.ne.s32.totalorder %s185, %s188
      %p197 = scmp.eq.s32.totalorder %s26, 3
      %p198 = por %p196, %p197
      %p199 = scmp.ne.s32.totalorder %s188, %s189
      %p200 = scmp.eq.s32.totalorder %s26, 0
      %p201 = por %p199, %p200
      %p202 = scmp.ne.s32.totalorder %s188, %s189
      %p203 = scmp.eq.s32.totalorder %s27, 3
      %p204 = por %p202, %p203
      %p206 = scmp.ne.s32.totalorder %s189, %s205
      %p207 = scmp.eq.s32.totalorder %s27, 0
      %p208 = por %p206, %p207
      %p209 = scmp.le.s32.totalorder 1, %s21
      %p210 = scmp.lt.s32.totalorder %s21, 5
      %p211 = pnand %p209, %p210
      %p212 = pneg %p211
      // Predicated region
      $region9: #{tpu_custom_call.1} parent=5 // pred_check
        _
      $region10: #{tpu_custom_call.1} parent=5 // pred_check_branch
        %214 = sbr.rel (%p211) target = $region12
      $region11: #{tpu_custom_call.1} parent=5 // pred_region
        %s215 = ssub.s32 %s21, 1
        // Predicated region
        $region13: #{tpu_custom_call.1} parent=11 // pred_check
          %p216 = pneg %p82
        $region14: #{tpu_custom_call.1} parent=11 // pred_check_branch
          %218 = sbr.rel (%p216) target = $region16
        $region15: #{tpu_custom_call.1} parent=11 // pred_region
          %s220 = ssub.s32 32, 32
          %221 = vsyncadd [#allocation8], %s220
          %s223 = sshll.u32 [#allocation7], 4
          %s224 = int_to_ptr.vmem [resolvable:$true] %s223
          %226 = dma.hbm_to_vmem [thread:$0]  %s1, 32, %s224, [#allocation8]
        $region16: #{tpu_custom_call.1} parent=11 // pred_fallthru
          _
        // Predicated region
        $region17: #{tpu_custom_call.1} parent=11 // pred_check
          %p227 = pneg %p103
        $region18: #{tpu_custom_call.1} parent=11 // pred_check_branch
          %229 = sbr.rel (%p227) target = $region20
        $region19: #{tpu_custom_call.1} parent=11 // pred_region
          %s231 = ssub.s32 32, 32
          %232 = vsyncadd [#allocation8], %s231
          %s234 = sshll.u32 [#allocation9], 4
          %s235 = int_to_ptr.vmem [resolvable:$true] %s234
          %237 = dma.hbm_to_vmem [thread:$0]  %s2, 32, %s235, [#allocation8]
        $region20: #{tpu_custom_call.1} parent=11 // pred_fallthru
          _
        // Predicated region
        $region21: #{tpu_custom_call.1} parent=11 // pred_check
          %p238 = pneg %p124
        $region22: #{tpu_custom_call.1} parent=11 // pred_check_branch
          %240 = sbr.rel (%p238) target = $region24
        $region23: #{tpu_custom_call.1} parent=11 // pred_region
          %s242 = ssub.s32 8192, 8192
          %243 = vsyncadd [#allocation11], %s242
          %s244 = sshll.u32 [#allocation10], 4
          %s245 = int_to_ptr.vmem [resolvable:$true] %s244
          %250 = dma.hbm_to_vmem [thread:$0]  %s3, 8192, %s245, [#allocation11], 256, 256, 16
        $region24: #{tpu_custom_call.1} parent=11 // pred_fallthru
          _
        // Predicated region
        $region25: #{tpu_custom_call.1} parent=11 // pred_check
          %p251 = pneg %p145
        $region26: #{tpu_custom_call.1} parent=11 // pred_check_branch
          %253 = sbr.rel (%p251) target = $region28
        $region27: #{tpu_custom_call.1} parent=11 // pred_region
          %s255 = ssub.s32 8192, 8192
          %256 = vsyncadd [#allocation11], %s255
          %s257 = sshll.u32 [#allocation12], 4
          %s258 = int_to_ptr.vmem [resolvable:$true] %s257
          %263 = dma.hbm_to_vmem [thread:$0]  %s4, 8192, %s258, [#allocation11], 256, 256, 16
        $region28: #{tpu_custom_call.1} parent=11 // pred_fallthru
          _
      $region12: #{tpu_custom_call.1} parent=5 // pred_fallthru
        _
      %p264 = scmp.lt.s32.totalorder %s21, 4
      // Predicated region
      $region29: #{tpu_custom_call.1} parent=5 // pred_check
        %p265 = pneg %p264
      $region30: #{tpu_custom_call.1} parent=5 // pred_check_branch
        %267 = sbr.rel (%p265) target = $region32
      $region31: #{tpu_custom_call.1} parent=5 // pred_region
        // Predicated region
        $region33: #{tpu_custom_call.1} parent=31 // pred_check
          %p268 = pneg %p55
        $region34: #{tpu_custom_call.1} parent=31 // pred_check_branch
          %270 = sbr.rel (%p268) target = $region36
        $region35: #{tpu_custom_call.1} parent=31 // pred_region
          %s271 = sand.u32 %s45, 1
          %s272 = scalar_lea.sflag [#allocation5], %s271
          %s273 = sand.u32 %s45, 1
          %s274 = smul.addr %s273, 256
          %s275 = scalar_lea.vmem [#allocation4], %s274
          %s276 = smul.u32 16, %s29
          %s278 = ssub.s32 4096, 4096
          %279 = vsyncadd %s272, %s278
          %s280 = smul.addr %s276, 2
          %s281 = smul.addr %s28, 64
          %s282 = sadd.s32 %s280, %s281
          %s283 = smul.addr %s282, 128
          %s284 = scalar_lea.hbm %s0, %s283
          %s285 = sshll.u32 %s275, 4
          %s286 = int_to_ptr.vmem [resolvable:$true] %s285
          %291 = dma.hbm_to_vmem [thread:$0]  %s284, 4096, %s286, %s272, 256, 256, 16
        $region36: #{tpu_custom_call.1} parent=31 // pred_fallthru
          _
      $region32: #{tpu_custom_call.1} parent=5 // pred_fallthru
        _
      %p292 = scmp.le.s32.totalorder 1, %s21
      %p293 = scmp.lt.s32.totalorder %s21, 5
      %p294 = pnand %p292, %p293
      %p295 = pneg %p294
      // Predicated region
      $region37: #{tpu_custom_call.1} parent=5 // pred_check
        _
      $region38: #{tpu_custom_call.1} parent=5 // pred_check_branch
        %297 = sbr.rel (%p294) target = $region40
      $region39: #{tpu_custom_call.1} parent=5 // pred_region
        %s298 = ssub.s32 %s21, 1
        %s299 = sand.u32 %s48, 1
        %s300 = scalar_lea.sflag [#allocation5], %s299
        %s301 = sand.u32 %s48, 1
        %s302 = smul.addr %s301, 256
        %s303 = scalar_lea.vmem [#allocation4], %s302
        // Predicated region
        $region41: #{tpu_custom_call.1} parent=39 // pred_check
          %p304 = pneg %p61
        $region42: #{tpu_custom_call.1} parent=39 // pred_check_branch
          %306 = sbr.rel (%p304) target = $region44
        $region43: #{tpu_custom_call.1} parent=39 // pred_region
          %307 = dma.done %s300, 4096
        $region44: #{tpu_custom_call.1} parent=39 // pred_fallthru
          _
        // Predicated region
        $region45: #{tpu_custom_call.1} parent=39 // pred_check
          %p308 = pneg %p82
        $region46: #{tpu_custom_call.1} parent=39 // pred_check_branch
          %310 = sbr.rel (%p308) target = $region48
        $region47: #{tpu_custom_call.1} parent=39 // pred_region
          %311 = dma.done [#allocation8], 32
        $region48: #{tpu_custom_call.1} parent=39 // pred_fallthru
          _
        // Predicated region
        $region49: #{tpu_custom_call.1} parent=39 // pred_check
          %p312 = pneg %p103
        $region50: #{tpu_custom_call.1} parent=39 // pred_check_branch
          %314 = sbr.rel (%p312) target = $region52
        $region51: #{tpu_custom_call.1} parent=39 // pred_region
          %315 = dma.done [#allocation8], 32
        $region52: #{tpu_custom_call.1} parent=39 // pred_fallthru
          _
        // Predicated region
        $region53: #{tpu_custom_call.1} parent=39 // pred_check
          %p316 = pneg %p124
        $region54: #{tpu_custom_call.1} parent=39 // pred_check_branch
          %318 = sbr.rel (%p316) target = $region56
        $region55: #{tpu_custom_call.1} parent=39 // pred_region
          %319 = dma.done [#allocation11], 8192
        $region56: #{tpu_custom_call.1} parent=39 // pred_fallthru
          _
        // Predicated region
        $region57: #{tpu_custom_call.1} parent=39 // pred_check
          %p320 = pneg %p145
        $region58: #{tpu_custom_call.1} parent=39 // pred_check_branch
          %322 = sbr.rel (%p320) target = $region60
        $region59: #{tpu_custom_call.1} parent=39 // pred_region
          %323 = dma.done [#allocation11], 8192
        $region60: #{tpu_custom_call.1} parent=39 // pred_fallthru
          _
        %s324 = sand.u32 %s48, 1
        %s325 = scalar_lea.sflag [#allocation5], %s324
        %s326 = sand.u32 %s48, 1
        %s327 = smul.addr %s326, 256
        %s328 = scalar_lea.vmem [#allocation4], %s327
        %p329 = pneg %p61
        %p330 = pneg %p58
        %p331 = pneg %p82
        %p332 = pneg %p79
        %p333 = pneg %p103
        %p334 = pneg %p100
        %p335 = pneg %p124
        %p336 = pneg %p121
        %p337 = pneg %p145
        %p338 = pneg %p142
        %p339 = pneg %p173
        %p340 = pneg %p170
        %s341 = sand.u32 %s160, 1
        %s342 = scalar_lea.sflag [#allocation6], %s341
        %s343 = sand.u32 %s160, 1
        %s344 = smul.addr %s343, 256
        %s345 = scalar_lea.vmem [#allocation13], %s344
        %p346 = pneg %p201
        %p347 = pneg %p198
        %s348 = sand.u32 %s188, 1
        %s349 = sand.u32 %s188, 1
        %s350 = smul.addr %s349, 1024
        %s351 = scalar_lea.vmem [#allocation14], %s350
        %s352 = smul.u32 16, %s31
        %s353 = smul.u32 16, %s31
        %v354 = vld [vmem:[%s303] sm:$0xff]
        %v355 = vld [vmem:[%s303 + $0x8] sm:$0xff]
        %v356 = vld [vmem:[%s303 + $0x10] sm:$0xff]
        %v357 = vld [vmem:[%s303 + $0x18] sm:$0xff]
        %v358 = vld [vmem:[%s303 + $0x20] sm:$0xff]
        %v359 = vld [vmem:[%s303 + $0x28] sm:$0xff]
        %v360 = vld [vmem:[%s303 + $0x30] sm:$0xff]
        %v361 = vld [vmem:[%s303 + $0x38] sm:$0xff]
        %v362 = vld [vmem:[%s303 + $0x40] sm:$0xff]
        %v363 = vld [vmem:[%s303 + $0x48] sm:$0xff]
        %v364 = vld [vmem:[%s303 + $0x50] sm:$0xff]
        %v365 = vld [vmem:[%s303 + $0x58] sm:$0xff]
        %v366 = vld [vmem:[%s303 + $0x60] sm:$0xff]
        %v367 = vld [vmem:[%s303 + $0x68] sm:$0xff]
        %v368 = vld [vmem:[%s303 + $0x70] sm:$0xff]
        %v369 = vld [vmem:[%s303 + $0x78] sm:$0xff]
        %v370 = vld [vmem:[%s303 + $0x80] sm:$0xff]
        %v371 = vld [vmem:[%s303 + $0x88] sm:$0xff]
        %v372 = vld [vmem:[%s303 + $0x90] sm:$0xff]
        %v373 = vld [vmem:[%s303 + $0x98] sm:$0xff]
        %v374 = vld [vmem:[%s303 + $0xa0] sm:$0xff]
        %v375 = vld [vmem:[%s303 + $0xa8] sm:$0xff]
        %v376 = vld [vmem:[%s303 + $0xb0] sm:$0xff]
        %v377 = vld [vmem:[%s303 + $0xb8] sm:$0xff]
        %v378 = vld [vmem:[%s303 + $0xc0] sm:$0xff]
        %v379 = vld [vmem:[%s303 + $0xc8] sm:$0xff]
        %v380 = vld [vmem:[%s303 + $0xd0] sm:$0xff]
        %v381 = vld [vmem:[%s303 + $0xd8] sm:$0xff]
        %v382 = vld [vmem:[%s303 + $0xe0] sm:$0xff]
        %v383 = vld [vmem:[%s303 + $0xe8] sm:$0xff]
        %v384 = vld [vmem:[%s303 + $0xf0] sm:$0xff]
        %v385 = vld [vmem:[%s303 + $0xf8] sm:$0xff]
        %v386 = vld [vmem:[#allocation7] sm:$0x3]
        %v387 = vld [vmem:[#allocation9] sm:$0x3]
        %v388 = vadd.f32 %v354, %v355
        %389 = vadd.xlane.f32.xlu0 %v388
        %v390 = vpop.xlane.xlu0 %389
        %v391 = vadd.f32 %v356, %v357
        %392 = vadd.xlane.f32.xlu0 %v391
        %v393 = vpop.xlane.xlu0 %392
        %v394 = vadd.f32 %v358, %v359
        %395 = vadd.xlane.f32.xlu0 %v394
        %v396 = vpop.xlane.xlu0 %395
        %v397 = vadd.f32 %v360, %v361
        %398 = vadd.xlane.f32.xlu0 %v397
        %v399 = vpop.xlane.xlu0 %398
        %v400 = vadd.f32 %v362, %v363
        %401 = vadd.xlane.f32.xlu0 %v400
        %v402 = vpop.xlane.xlu0 %401
        %v403 = vadd.f32 %v364, %v365
        %404 = vadd.xlane.f32.xlu0 %v403
        %v405 = vpop.xlane.xlu0 %404
        %v406 = vadd.f32 %v366, %v367
        %407 = vadd.xlane.f32.xlu0 %v406
        %v408 = vpop.xlane.xlu0 %407
        %v409 = vadd.f32 %v368, %v369
        %410 = vadd.xlane.f32.xlu0 %v409
        %v411 = vpop.xlane.xlu0 %410
        %v412 = vadd.f32 %v370, %v371
        %413 = vadd.xlane.f32.xlu0 %v412
        %v414 = vpop.xlane.xlu0 %413
        %v415 = vadd.f32 %v372, %v373
        %416 = vadd.xlane.f32.xlu0 %v415
        %v417 = vpop.xlane.xlu0 %416
        %v418 = vadd.f32 %v374, %v375
        %419 = vadd.xlane.f32.xlu0 %v418
        %v420 = vpop.xlane.xlu0 %419
        %v421 = vadd.f32 %v376, %v377
        %422 = vadd.xlane.f32.xlu0 %v421
        %v423 = vpop.xlane.xlu0 %422
        %v424 = vadd.f32 %v378, %v379
        %425 = vadd.xlane.f32.xlu0 %v424
        %v426 = vpop.xlane.xlu0 %425
        %v427 = vadd.f32 %v380, %v381
        %428 = vadd.xlane.f32.xlu0 %v427
        %v429 = vpop.xlane.xlu0 %428
        %v430 = vadd.f32 %v382, %v383
        %431 = vadd.xlane.f32.xlu0 %v430
        %v432 = vpop.xlane.xlu0 %431
        %v433 = vadd.f32 %v384, %v385
        %434 = vadd.xlane.f32.xlu0 %v433
        %v435 = vpop.xlane.xlu0 %434
        %v436 = vrcp.pop 256.0
        %v437 = vmul.f32 %v390, %v436
        %v438 = vmul.f32 %v393, %v436
        %v439 = vmul.f32 %v396, %v436
        %v440 = vmul.f32 %v399, %v436
        %v441 = vmul.f32 %v402, %v436
        %v442 = vmul.f32 %v405, %v436
        %v443 = vmul.f32 %v408, %v436
        %v444 = vmul.f32 %v411, %v436
        %v445 = vmul.f32 %v414, %v436
        %v446 = vmul.f32 %v417, %v436
        %v447 = vmul.f32 %v420, %v436
        %v448 = vmul.f32 %v423, %v436
        %v449 = vmul.f32 %v426, %v436
        %v450 = vmul.f32 %v429, %v436
        %v451 = vmul.f32 %v432, %v436
        %v452 = vmul.f32 %v435, %v436
        %v453 = vsub.f32 %v354, %v437
        %v454 = vsub.f32 %v355, %v437
        %v455 = vsub.f32 %v356, %v438
        %v456 = vsub.f32 %v357, %v438
        %v457 = vsub.f32 %v358, %v439
        %v458 = vsub.f32 %v359, %v439
        %v459 = vsub.f32 %v360, %v440
        %v460 = vsub.f32 %v361, %v440
        %v461 = vsub.f32 %v362, %v441
        %v462 = vsub.f32 %v363, %v441
        %v463 = vsub.f32 %v364, %v442
        %v464 = vsub.f32 %v365, %v442
        %v465 = vsub.f32 %v366, %v443
        %v466 = vsub.f32 %v367, %v443
        %v467 = vsub.f32 %v368, %v444
        %v468 = vsub.f32 %v369, %v444
        %v469 = vsub.f32 %v370, %v445
        %v470 = vsub.f32 %v371, %v445
        %v471 = vsub.f32 %v372, %v446
        %v472 = vsub.f32 %v373, %v446
        %v473 = vsub.f32 %v374, %v447
        %v474 = vsub.f32 %v375, %v447
        %v475 = vsub.f32 %v376, %v448
        %v476 = vsub.f32 %v377, %v448
        %v477 = vsub.f32 %v378, %v449
        %v478 = vsub.f32 %v379, %v449
        %v479 = vsub.f32 %v380, %v450
        %v480 = vsub.f32 %v381, %v450
        %v481 = vsub.f32 %v382, %v451
        %v482 = vsub.f32 %v383, %v451
        %v483 = vsub.f32 %v384, %v452
        %v484 = vsub.f32 %v385, %v452
        %v485 = vmul.f32 %v453, %v453
        %v486 = vmul.f32 %v454, %v454
        %v487 = vmul.f32 %v455, %v455
        %v488 = vmul.f32 %v456, %v456
        %v489 = vmul.f32 %v457, %v457
        %v490 = vmul.f32 %v458, %v458
        %v491 = vmul.f32 %v459, %v459
        %v492 = vmul.f32 %v460, %v460
        %v493 = vmul.f32 %v461, %v461
        %v494 = vmul.f32 %v462, %v462
        %v495 = vmul.f32 %v463, %v463
        %v496 = vmul.f32 %v464, %v464
        %v497 = vmul.f32 %v465, %v465
        %v498 = vmul.f32 %v466, %v466
        %v499 = vmul.f32 %v467, %v467
        %v500 = vmul.f32 %v468, %v468
        %v501 = vmul.f32 %v469, %v469
        %v502 = vmul.f32 %v470, %v470
        %v503 = vmul.f32 %v471, %v471
        %v504 = vmul.f32 %v472, %v472
        %v505 = vmul.f32 %v473, %v473
        %v506 = vmul.f32 %v474, %v474
        %v507 = vmul.f32 %v475, %v475
        %v508 = vmul.f32 %v476, %v476
        %v509 = vmul.f32 %v477, %v477
        %v510 = vmul.f32 %v478, %v478
        %v511 = vmul.f32 %v479, %v479
        %v512 = vmul.f32 %v480, %v480
        %v513 = vmul.f32 %v481, %v481
        %v514 = vmul.f32 %v482, %v482
        %v515 = vmul.f32 %v483, %v483
        %v516 = vmul.f32 %v484, %v484
        %v517 = vadd.f32 %v485, %v486
        %518 = vadd.xlane.f32.xlu0 %v517
        %v519 = vpop.xlane.xlu0 %518
        %v520 = vadd.f32 %v487, %v488
        %521 = vadd.xlane.f32.xlu0 %v520
        %v522 = vpop.xlane.xlu0 %521
        %v523 = vadd.f32 %v489, %v490
        %524 = vadd.xlane.f32.xlu0 %v523
        %v525 = vpop.xlane.xlu0 %524
        %v526 = vadd.f32 %v491, %v492
        %527 = vadd.xlane.f32.xlu0 %v526
        %v528 = vpop.xlane.xlu0 %527
        %v529 = vadd.f32 %v493, %v494
        %530 = vadd.xlane.f32.xlu0 %v529
        %v531 = vpop.xlane.xlu0 %530
        %v532 = vadd.f32 %v495, %v496
        %533 = vadd.xlane.f32.xlu0 %v532
        %v534 = vpop.xlane.xlu0 %533
        %v535 = vadd.f32 %v497, %v498
        %536 = vadd.xlane.f32.xlu0 %v535
        %v537 = vpop.xlane.xlu0 %536
        %v538 = vadd.f32 %v499, %v500
        %539 = vadd.xlane.f32.xlu0 %v538
        %v540 = vpop.xlane.xlu0 %539
        %v541 = vadd.f32 %v501, %v502
        %542 = vadd.xlane.f32.xlu0 %v541
        %v543 = vpop.xlane.xlu0 %542
        %v544 = vadd.f32 %v503, %v504
        %545 = vadd.xlane.f32.xlu0 %v544
        %v546 = vpop.xlane.xlu0 %545
        %v547 = vadd.f32 %v505, %v506
        %548 = vadd.xlane.f32.xlu0 %v547
        %v549 = vpop.xlane.xlu0 %548
        %v550 = vadd.f32 %v507, %v508
        %551 = vadd.xlane.f32.xlu0 %v550
        %v552 = vpop.xlane.xlu0 %551
        %v553 = vadd.f32 %v509, %v510
        %554 = vadd.xlane.f32.xlu0 %v553
        %v555 = vpop.xlane.xlu0 %554
        %v556 = vadd.f32 %v511, %v512
        %557 = vadd.xlane.f32.xlu0 %v556
        %v558 = vpop.xlane.xlu0 %557
        %v559 = vadd.f32 %v513, %v514
        %560 = vadd.xlane.f32.xlu0 %v559
        %v561 = vpop.xlane.xlu0 %560
        %v562 = vadd.f32 %v515, %v516
        %563 = vadd.xlane.f32.xlu0 %v562
        %v564 = vpop.xlane.xlu0 %563
        %v565 = vmul.f32 %v519, %v436
        %v566 = vmul.f32 %v522, %v436
        %v567 = vmul.f32 %v525, %v436
        %v568 = vmul.f32 %v528, %v436
        %v569 = vmul.f32 %v531, %v436
        %v570 = vmul.f32 %v534, %v436
        %v571 = vmul.f32 %v537, %v436
        %v572 = vmul.f32 %v540, %v436
        %v573 = vmul.f32 %v543, %v436
        %v574 = vmul.f32 %v546, %v436
        %v575 = vmul.f32 %v549, %v436
        %v576 = vmul.f32 %v552, %v436
        %v577 = vmul.f32 %v555, %v436
        %v578 = vmul.f32 %v558, %v436
        %v579 = vmul.f32 %v561, %v436
        %v580 = vmul.f32 %v564, %v436
        %v581 = vadd.f32 %v565, 1e-05
        %v582 = vadd.f32 %v566, 1e-05
        %v583 = vadd.f32 %v567, 1e-05
        %v584 = vadd.f32 %v568, 1e-05
        %v585 = vadd.f32 %v569, 1e-05
        %v586 = vadd.f32 %v570, 1e-05
        %v587 = vadd.f32 %v571, 1e-05
        %v588 = vadd.f32 %v572, 1e-05
        %v589 = vadd.f32 %v573, 1e-05
        %v590 = vadd.f32 %v574, 1e-05
        %v591 = vadd.f32 %v575, 1e-05
        %v592 = vadd.f32 %v576, 1e-05
        %v593 = vadd.f32 %v577, 1e-05
        %v594 = vadd.f32 %v578, 1e-05
        %v595 = vadd.f32 %v579, 1e-05
        %v596 = vadd.f32 %v580, 1e-05
        %v597 = vrsqrt.pop %v581
        %v598 = vrsqrt.pop %v582
        %v599 = vrsqrt.pop %v583
        %v600 = vrsqrt.pop %v584
        %v601 = vrsqrt.pop %v585
        %v602 = vrsqrt.pop %v586
        %v603 = vrsqrt.pop %v587
        %v604 = vrsqrt.pop %v588
        %v605 = vrsqrt.pop %v589
        %v606 = vrsqrt.pop %v590
        %v607 = vrsqrt.pop %v591
        %v608 = vrsqrt.pop %v592
        %v609 = vrsqrt.pop %v593
        %v610 = vrsqrt.pop %v594
        %v611 = vrsqrt.pop %v595
        %v612 = vrsqrt.pop %v596
        %v613 = vmul.f32 %v453, %v597
        %v614 = vmul.f32 %v454, %v597
        %v615 = vmul.f32 %v455, %v598
        %v616 = vmul.f32 %v456, %v598
        %v617 = vmul.f32 %v457, %v599
        %v618 = vmul.f32 %v458, %v599
        %v619 = vmul.f32 %v459, %v600
        %v620 = vmul.f32 %v460, %v600
        %v621 = vmul.f32 %v461, %v601
        %v622 = vmul.f32 %v462, %v601
        %v623 = vmul.f32 %v463, %v602
        %v624 = vmul.f32 %v464, %v602
        %v625 = vmul.f32 %v465, %v603
        %v626 = vmul.f32 %v466, %v603
        %v627 = vmul.f32 %v467, %v604
        %v628 = vmul.f32 %v468, %v604
        %v629 = vmul.f32 %v469, %v605
        %v630 = vmul.f32 %v470, %v605
        %v631 = vmul.f32 %v471, %v606
        %v632 = vmul.f32 %v472, %v606
        %v633 = vmul.f32 %v473, %v607
        %v634 = vmul.f32 %v474, %v607
        %v635 = vmul.f32 %v475, %v608
        %v636 = vmul.f32 %v476, %v608
        %v637 = vmul.f32 %v477, %v609
        %v638 = vmul.f32 %v478, %v609
        %v639 = vmul.f32 %v479, %v610
        %v640 = vmul.f32 %v480, %v610
        %v641 = vmul.f32 %v481, %v611
        %v642 = vmul.f32 %v482, %v611
        %v643 = vmul.f32 %v483, %v612
        %v644 = vmul.f32 %v484, %v612
        %v646 = vlaneseq
        %v647 = vshrl.u32 %v646, 7
        %v648 = vsub.s32 0, %v647
        %v649 = vrot.slane %v386, %v648
        %v650 = vlaneseq
        %v651 = vshrl.u32 %v650, 7
        %v652 = vsub.s32 1, %v651
        %v653 = vrot.slane %v386, %v652
        %v656 = vmul.f32 %v613, %v649
        %v657 = vmul.f32 %v614, %v653
        %v658 = vmul.f32 %v615, %v649
        %v659 = vmul.f32 %v616, %v653
        %v660 = vmul.f32 %v617, %v649
        %v661 = vmul.f32 %v618, %v653
        %v662 = vmul.f32 %v619, %v649
        %v663 = vmul.f32 %v620, %v653
        %v664 = vmul.f32 %v621, %v649
        %v665 = vmul.f32 %v622, %v653
        %v666 = vmul.f32 %v623, %v649
        %v667 = vmul.f32 %v624, %v653
        %v668 = vmul.f32 %v625, %v649
        %v669 = vmul.f32 %v626, %v653
        %v670 = vmul.f32 %v627, %v649
        %v671 = vmul.f32 %v628, %v653
        %v672 = vmul.f32 %v629, %v649
        %v673 = vmul.f32 %v630, %v653
        %v674 = vmul.f32 %v631, %v649
        %v675 = vmul.f32 %v632, %v653
        %v676 = vmul.f32 %v633, %v649
        %v677 = vmul.f32 %v634, %v653
        %v678 = vmul.f32 %v635, %v649
        %v679 = vmul.f32 %v636, %v653
        %v680 = vmul.f32 %v637, %v649
        %v681 = vmul.f32 %v638, %v653
        %v682 = vmul.f32 %v639, %v649
        %v683 = vmul.f32 %v640, %v653
        %v684 = vmul.f32 %v641, %v649
        %v685 = vmul.f32 %v642, %v653
        %v686 = vmul.f32 %v643, %v649
        %v687 = vmul.f32 %v644, %v653
        %v689 = vlaneseq
        %v690 = vshrl.u32 %v689, 7
        %v691 = vsub.s32 0, %v690
        %v692 = vrot.slane %v387, %v691
        %v693 = vlaneseq
        %v694 = vshrl.u32 %v693, 7
        %v695 = vsub.s32 1, %v694
        %v696 = vrot.slane %v387, %v695
        %v699 = vadd.f32 %v656, %v692
        %v700 = vadd.f32 %v657, %v696
        %v701 = vadd.f32 %v658, %v692
        %v702 = vadd.f32 %v659, %v696
        %v703 = vadd.f32 %v660, %v692
        %v704 = vadd.f32 %v661, %v696
        %v705 = vadd.f32 %v662, %v692
        %v706 = vadd.f32 %v663, %v696
        %v707 = vadd.f32 %v664, %v692
        %v708 = vadd.f32 %v665, %v696
        %v709 = vadd.f32 %v666, %v692
        %v710 = vadd.f32 %v667, %v696
        %v711 = vadd.f32 %v668, %v692
        %v712 = vadd.f32 %v669, %v696
        %v713 = vadd.f32 %v670, %v692
        %v714 = vadd.f32 %v671, %v696
        %v715 = vadd.f32 %v672, %v692
        %v716 = vadd.f32 %v673, %v696
        %v717 = vadd.f32 %v674, %v692
        %v718 = vadd.f32 %v675, %v696
        %v719 = vadd.f32 %v676, %v692
        %v720 = vadd.f32 %v677, %v696
        %v721 = vadd.f32 %v678, %v692
        %v722 = vadd.f32 %v679, %v696
        %v723 = vadd.f32 %v680, %v692
        %v724 = vadd.f32 %v681, %v696
        %v725 = vadd.f32 %v682, %v692
        %v726 = vadd.f32 %v683, %v696
        %v727 = vadd.f32 %v684, %v692
        %v728 = vadd.f32 %v685, %v696
        %v729 = vadd.f32 %v686, %v692
        %v730 = vadd.f32 %v687, %v696
        %v731 = vld [vmem:[#allocation10] sm:$0xff]
        %v732 = vld [vmem:[#allocation10 + $0x8] sm:$0xff]
        %v733 = vld [vmem:[#allocation10 + $0x10] sm:$0xff]
        %v734 = vld [vmem:[#allocation10 + $0x18] sm:$0xff]
        %v735 = vld [vmem:[#allocation10 + $0x20] sm:$0xff]
        %v736 = vld [vmem:[#allocation10 + $0x28] sm:$0xff]
        %v737 = vld [vmem:[#allocation10 + $0x30] sm:$0xff]
        %v738 = vld [vmem:[#allocation10 + $0x38] sm:$0xff]
        %v739 = vld [vmem:[#allocation10 + $0x40] sm:$0xff]
        %v740 = vld [vmem:[#allocation10 + $0x48] sm:$0xff]
        %v741 = vld [vmem:[#allocation10 + $0x50] sm:$0xff]
        %v742 = vld [vmem:[#allocation10 + $0x58] sm:$0xff]
        %v743 = vld [vmem:[#allocation10 + $0x60] sm:$0xff]
        %v744 = vld [vmem:[#allocation10 + $0x68] sm:$0xff]
        %v745 = vld [vmem:[#allocation10 + $0x70] sm:$0xff]
        %v746 = vld [vmem:[#allocation10 + $0x78] sm:$0xff]
        %v747 = vld [vmem:[#allocation10 + $0x80] sm:$0xff]
        %v748 = vld [vmem:[#allocation10 + $0x88] sm:$0xff]
        %v749 = vld [vmem:[#allocation10 + $0x90] sm:$0xff]
        %v750 = vld [vmem:[#allocation10 + $0x98] sm:$0xff]
        %v751 = vld [vmem:[#allocation10 + $0xa0] sm:$0xff]
        %v752 = vld [vmem:[#allocation10 + $0xa8] sm:$0xff]
        %v753 = vld [vmem:[#allocation10 + $0xb0] sm:$0xff]
        %v754 = vld [vmem:[#allocation10 + $0xb8] sm:$0xff]
        %v755 = vld [vmem:[#allocation10 + $0xc0] sm:$0xff]
        %v756 = vld [vmem:[#allocation10 + $0xc8] sm:$0xff]
        %v757 = vld [vmem:[#allocation10 + $0xd0] sm:$0xff]
        %v758 = vld [vmem:[#allocation10 + $0xd8] sm:$0xff]
        %v759 = vld [vmem:[#allocation10 + $0xe0] sm:$0xff]
        %v760 = vld [vmem:[#allocation10 + $0xe8] sm:$0xff]
        %v761 = vld [vmem:[#allocation10 + $0xf0] sm:$0xff]
        %v762 = vld [vmem:[#allocation10 + $0xf8] sm:$0xff]
        %v763 = vld [vmem:[#allocation10 + $0x100] sm:$0xff]
        %v764 = vld [vmem:[#allocation10 + $0x108] sm:$0xff]
        %v765 = vld [vmem:[#allocation10 + $0x110] sm:$0xff]
        %v766 = vld [vmem:[#allocation10 + $0x118] sm:$0xff]
        %v767 = vld [vmem:[#allocation10 + $0x120] sm:$0xff]
        %v768 = vld [vmem:[#allocation10 + $0x128] sm:$0xff]
        %v769 = vld [vmem:[#allocation10 + $0x130] sm:$0xff]
        %v770 = vld [vmem:[#allocation10 + $0x138] sm:$0xff]
        %v771 = vld [vmem:[#allocation10 + $0x140] sm:$0xff]
        %v772 = vld [vmem:[#allocation10 + $0x148] sm:$0xff]
        %v773 = vld [vmem:[#allocation10 + $0x150] sm:$0xff]
        %v774 = vld [vmem:[#allocation10 + $0x158] sm:$0xff]
        %v775 = vld [vmem:[#allocation10 + $0x160] sm:$0xff]
        %v776 = vld [vmem:[#allocation10 + $0x168] sm:$0xff]
        %v777 = vld [vmem:[#allocation10 + $0x170] sm:$0xff]
        %v778 = vld [vmem:[#allocation10 + $0x178] sm:$0xff]
        %v779 = vld [vmem:[#allocation10 + $0x180] sm:$0xff]
        %v780 = vld [vmem:[#allocation10 + $0x188] sm:$0xff]
        %v781 = vld [vmem:[#allocation10 + $0x190] sm:$0xff]
        %v782 = vld [vmem:[#allocation10 + $0x198] sm:$0xff]
        %v783 = vld [vmem:[#allocation10 + $0x1a0] sm:$0xff]
        %v784 = vld [vmem:[#allocation10 + $0x1a8] sm:$0xff]
        %v785 = vld [vmem:[#allocation10 + $0x1b0] sm:$0xff]
        %v786 = vld [vmem:[#allocation10 + $0x1b8] sm:$0xff]
        %v787 = vld [vmem:[#allocation10 + $0x1c0] sm:$0xff]
        %v788 = vld [vmem:[#allocation10 + $0x1c8] sm:$0xff]
        %v789 = vld [vmem:[#allocation10 + $0x1d0] sm:$0xff]
        %v790 = vld [vmem:[#allocation10 + $0x1d8] sm:$0xff]
        %v791 = vld [vmem:[#allocation10 + $0x1e0] sm:$0xff]
        %v792 = vld [vmem:[#allocation10 + $0x1e8] sm:$0xff]
        %v793 = vld [vmem:[#allocation10 + $0x1f0] sm:$0xff]
        %v794 = vld [vmem:[#allocation10 + $0x1f8] sm:$0xff]
        %795 = vmatprep.subr.mxu0 %v762
        %796 = vmatpush1.msra.mxu0 %v761
        %797 = vmatprep.subr.mxu0 %v760
        %798 = vmatpush1.msra.mxu0 %v759
        %799 = vmatprep.subr.mxu0 %v758
        %800 = vmatpush1.msra.mxu0 %v757
        %801 = vmatprep.subr.mxu0 %v756
        %802 = vmatpush1.msra.mxu0 %v755
        %803 = vmatprep.subr.mxu0 %v754
        %804 = vmatpush1.msra.mxu0 %v753
        %805 = vmatprep.subr.mxu0 %v752
        %806 = vmatpush1.msra.mxu0 %v751
        %807 = vmatprep.subr.mxu0 %v750
        %808 = vmatpush1.msra.mxu0 %v749
        %809 = vmatprep.subr.mxu0 %v748
        %810 = vmatpush1.msra.mxu0 %v747
        %811 = vmatprep.subr.mxu0 %v746
        %812 = vmatpush1.msra.mxu0 %v745
        %813 = vmatprep.subr.mxu0 %v744
        %814 = vmatpush1.msra.mxu0 %v743
        %815 = vmatprep.subr.mxu0 %v742
        %816 = vmatpush1.msra.mxu0 %v741
        %817 = vmatprep.subr.mxu0 %v740
        %818 = vmatpush1.msra.mxu0 %v739
        %819 = vmatprep.subr.mxu0 %v738
        %820 = vmatpush1.msra.mxu0 %v737
        %821 = vmatprep.subr.mxu0 %v736
        %822 = vmatpush1.msra.mxu0 %v735
        %823 = vmatprep.subr.mxu0 %v734
        %824 = vmatpush1.msra.mxu0 %v733
        %825 = vmatprep.subr.mxu0 %v732
        %826 = vmatpush1.msra.mxu0 %v731
        %827 = vmatprep.subr.mxu0 %v794
        %828 = vmatpush2.msra.mxu0 %v793
        %829 = vmatprep.subr.mxu0 %v792
        %830 = vmatpush2.msra.mxu0 %v791
        %831 = vmatprep.subr.mxu0 %v790
        %832 = vmatpush2.msra.mxu0 %v789
        %833 = vmatprep.subr.mxu0 %v788
        %834 = vmatpush2.msra.mxu0 %v787
        %835 = vmatprep.subr.mxu0 %v786
        %836 = vmatpush2.msra.mxu0 %v785
        %837 = vmatprep.subr.mxu0 %v784
        %838 = vmatpush2.msra.mxu0 %v783
        %839 = vmatprep.subr.mxu0 %v782
        %840 = vmatpush2.msra.mxu0 %v781
        %841 = vmatprep.subr.mxu0 %v780
        %842 = vmatpush2.msra.mxu0 %v779
        %843 = vmatprep.subr.mxu0 %v778
        %844 = vmatpush2.msra.mxu0 %v777
        %845 = vmatprep.subr.mxu0 %v776
        %846 = vmatpush2.msra.mxu0 %v775
        %847 = vmatprep.subr.mxu0 %v774
        %848 = vmatpush2.msra.mxu0 %v773
        %849 = vmatprep.subr.mxu0 %v772
        %850 = vmatpush2.msra.mxu0 %v771
        %851 = vmatprep.subr.mxu0 %v770
        %852 = vmatpush2.msra.mxu0 %v769
        %853 = vmatprep.subr.mxu0 %v768
        %854 = vmatpush2.msra.mxu0 %v767
        %855 = vmatprep.subr.mxu0 %v766
        %856 = vmatpush2.msra.mxu0 %v765
        %857 = vmatprep.subr.mxu0 %v764
        %858 = vmatpush2.msra.mxu0 %v763
        %859 = vmatprep.mubr.f32.mxu0 %v700
        %860 = vmatmul.mubr.f32.gmra.mxu0 %v699
        %v861 = vpop.f32.mrf.mxu0
        %v862 = vadd.f32 0.0, %v861
        %v863 = vpop.f32.mrf.mxu0
        %v864 = vadd.f32 0.0, %v863
        %865 = vmatprep.mubr.f32.mxu0 %v702
        %866 = vmatmul.mubr.f32.gmra.mxu0 %v701
        %v867 = vpop.f32.mrf.mxu0
        %v868 = vadd.f32 0.0, %v867
        %v869 = vpop.f32.mrf.mxu0
        %v870 = vadd.f32 0.0, %v869
        %871 = vmatprep.mubr.f32.mxu0 %v704
        %872 = vmatmul.mubr.f32.gmra.mxu0 %v703
        %v873 = vpop.f32.mrf.mxu0
        %v874 = vadd.f32 0.0, %v873
        %v875 = vpop.f32.mrf.mxu0
        %v876 = vadd.f32 0.0, %v875
        %877 = vmatprep.mubr.f32.mxu0 %v706
        %878 = vmatmul.mubr.f32.gmra.mxu0 %v705
        %v879 = vpop.f32.mrf.mxu0
        %v880 = vadd.f32 0.0, %v879
        %v881 = vpop.f32.mrf.mxu0
        %v882 = vadd.f32 0.0, %v881
        %883 = vmatprep.mubr.f32.mxu0 %v708
        %884 = vmatmul.mubr.f32.gmra.mxu0 %v707
        %v885 = vpop.f32.mrf.mxu0
        %v886 = vadd.f32 0.0, %v885
        %v887 = vpop.f32.mrf.mxu0
        %v888 = vadd.f32 0.0, %v887
        %889 = vmatprep.mubr.f32.mxu0 %v710
        %890 = vmatmul.mubr.f32.gmra.mxu0 %v709
        %v891 = vpop.f32.mrf.mxu0
        %v892 = vadd.f32 0.0, %v891
        %v893 = vpop.f32.mrf.mxu0
        %v894 = vadd.f32 0.0, %v893
        %895 = vmatprep.mubr.f32.mxu0 %v712
        %896 = vmatmul.mubr.f32.gmra.mxu0 %v711
        %v897 = vpop.f32.mrf.mxu0
        %v898 = vadd.f32 0.0, %v897
        %v899 = vpop.f32.mrf.mxu0
        %v900 = vadd.f32 0.0, %v899
        %901 = vmatprep.mubr.f32.mxu0 %v714
        %902 = vmatmul.mubr.f32.gmra.mxu0 %v713
        %v903 = vpop.f32.mrf.mxu0
        %v904 = vadd.f32 0.0, %v903
        %v905 = vpop.f32.mrf.mxu0
        %v906 = vadd.f32 0.0, %v905
        %907 = vmatprep.mubr.f32.mxu0 %v716
        %908 = vmatmul.mubr.f32.gmra.mxu0 %v715
        %v909 = vpop.f32.mrf.mxu0
        %v910 = vadd.f32 0.0, %v909
        %v911 = vpop.f32.mrf.mxu0
        %v912 = vadd.f32 0.0, %v911
        %913 = vmatprep.mubr.f32.mxu0 %v718
        %914 = vmatmul.mubr.f32.gmra.mxu0 %v717
        %v915 = vpop.f32.mrf.mxu0
        %v916 = vadd.f32 0.0, %v915
        %v917 = vpop.f32.mrf.mxu0
        %v918 = vadd.f32 0.0, %v917
        %919 = vmatprep.mubr.f32.mxu0 %v720
        %920 = vmatmul.mubr.f32.gmra.mxu0 %v719
        %v921 = vpop.f32.mrf.mxu0
        %v922 = vadd.f32 0.0, %v921
        %v923 = vpop.f32.mrf.mxu0
        %v924 = vadd.f32 0.0, %v923
        %925 = vmatprep.mubr.f32.mxu0 %v722
        %926 = vmatmul.mubr.f32.gmra.mxu0 %v721
        %v927 = vpop.f32.mrf.mxu0
        %v928 = vadd.f32 0.0, %v927
        %v929 = vpop.f32.mrf.mxu0
        %v930 = vadd.f32 0.0, %v929
        %931 = vmatprep.mubr.f32.mxu0 %v724
        %932 = vmatmul.mubr.f32.gmra.mxu0 %v723
        %v933 = vpop.f32.mrf.mxu0
        %v934 = vadd.f32 0.0, %v933
        %v935 = vpop.f32.mrf.mxu0
        %v936 = vadd.f32 0.0, %v935
        %937 = vmatprep.mubr.f32.mxu0 %v726
        %938 = vmatmul.mubr.f32.gmra.mxu0 %v725
        %v939 = vpop.f32.mrf.mxu0
        %v940 = vadd.f32 0.0, %v939
        %v941 = vpop.f32.mrf.mxu0
        %v942 = vadd.f32 0.0, %v941
        %943 = vmatprep.mubr.f32.mxu0 %v728
        %944 = vmatmul.mubr.f32.gmra.mxu0 %v727
        %v945 = vpop.f32.mrf.mxu0
        %v946 = vadd.f32 0.0, %v945
        %v947 = vpop.f32.mrf.mxu0
        %v948 = vadd.f32 0.0, %v947
        %949 = vmatprep.mubr.f32.mxu0 %v730
        %950 = vmatmul.mubr.f32.gmra.mxu0 %v729
        %v951 = vpop.f32.mrf.mxu0
        %v952 = vadd.f32 0.0, %v951
        %v953 = vpop.f32.mrf.mxu0
        %v954 = vadd.f32 0.0, %v953
        %955 = vdwg.mxu0
        %956 = vxpose.xlu0.b32.start [1/16] %v862, 128
        %957 = vxpose.xlu0.b32.cont [2/16] %v868, 128
        %958 = vxpose.xlu0.b32.cont [3/16] %v874, 128
        %959 = vxpose.xlu0.b32.cont [4/16] %v880, 128
        %960 = vxpose.xlu0.b32.cont [5/16] %v886, 128
        %961 = vxpose.xlu0.b32.cont [6/16] %v892, 128
        %962 = vxpose.xlu0.b32.cont [7/16] %v898, 128
        %963 = vxpose.xlu0.b32.cont [8/16] %v904, 128
        %964 = vxpose.xlu0.b32.cont [9/16] %v910, 128
        %965 = vxpose.xlu0.b32.cont [10/16] %v916, 128
        %966 = vxpose.xlu0.b32.cont [11/16] %v922, 128
        %967 = vxpose.xlu0.b32.cont [12/16] %v928, 128
        %968 = vxpose.xlu0.b32.cont [13/16] %v934, 128
        %969 = vxpose.xlu0.b32.cont [14/16] %v940, 128
        %970 = vxpose.xlu0.b32.cont [15/16] %v946, 128
        %971 = vxpose.xlu0.b32.end [16/16] %v952, 128
        %v972 = vpop.trf.xlu0
        %v973 = vpop.trf.xlu0
        %v974 = vpop.trf.xlu0
        %v975 = vpop.trf.xlu0
        %v976 = vpop.trf.xlu0
        %v977 = vpop.trf.xlu0
        %v978 = vpop.trf.xlu0
        %v979 = vpop.trf.xlu0
        %v980 = vpop.trf.xlu0
        %v981 = vpop.trf.xlu0
        %v982 = vpop.trf.xlu0
        %v983 = vpop.trf.xlu0
        %v984 = vpop.trf.xlu0
        %v985 = vpop.trf.xlu0
        %v986 = vpop.trf.xlu0
        %v987 = vpop.trf.xlu0
        %988 = vxpose.xlu0.b32.start [1/16] %v864, 128
        %989 = vxpose.xlu0.b32.cont [2/16] %v870, 128
        %990 = vxpose.xlu0.b32.cont [3/16] %v876, 128
        %991 = vxpose.xlu0.b32.cont [4/16] %v882, 128
        %992 = vxpose.xlu0.b32.cont [5/16] %v888, 128
        %993 = vxpose.xlu0.b32.cont [6/16] %v894, 128
        %994 = vxpose.xlu0.b32.cont [7/16] %v900, 128
        %995 = vxpose.xlu0.b32.cont [8/16] %v906, 128
        %996 = vxpose.xlu0.b32.cont [9/16] %v912, 128
        %997 = vxpose.xlu0.b32.cont [10/16] %v918, 128
        %998 = vxpose.xlu0.b32.cont [11/16] %v924, 128
        %999 = vxpose.xlu0.b32.cont [12/16] %v930, 128
        %1000 = vxpose.xlu0.b32.cont [13/16] %v936, 128
        %1001 = vxpose.xlu0.b32.cont [14/16] %v942, 128
        %1002 = vxpose.xlu0.b32.cont [15/16] %v948, 128
        %1003 = vxpose.xlu0.b32.end [16/16] %v954, 128
        %v1004 = vpop.trf.xlu0
        %v1005 = vpop.trf.xlu0
        %v1006 = vpop.trf.xlu0
        %v1007 = vpop.trf.xlu0
        %v1008 = vpop.trf.xlu0
        %v1009 = vpop.trf.xlu0
        %v1010 = vpop.trf.xlu0
        %v1011 = vpop.trf.xlu0
        %v1012 = vpop.trf.xlu0
        %v1013 = vpop.trf.xlu0
        %v1014 = vpop.trf.xlu0
        %v1015 = vpop.trf.xlu0
        %v1016 = vpop.trf.xlu0
        %v1017 = vpop.trf.xlu0
        %v1018 = vpop.trf.xlu0
        %v1019 = vpop.trf.xlu0
        %1020 = vst [vmem:[#allocation3] sm:$0xff] %v972
        %1021 = vst [vmem:[#allocation3 + $0x8] sm:$0xff] %v973
        %1022 = vst [vmem:[#allocation3 + $0x10] sm:$0xff] %v974
        %1023 = vst [vmem:[#allocation3 + $0x18] sm:$0xff] %v975
        %1024 = vst [vmem:[#allocation3 + $0x20] sm:$0xff] %v976
        %1025 = vst [vmem:[#allocation3 + $0x28] sm:$0xff] %v977
        %1026 = vst [vmem:[#allocation3 + $0x30] sm:$0xff] %v978
        %1027 = vst [vmem:[#allocation3 + $0x38] sm:$0xff] %v979
        %1028 = vst [vmem:[#allocation3 + $0x40] sm:$0xff] %v980
        %1029 = vst [vmem:[#allocation3 + $0x48] sm:$0xff] %v981
        %1030 = vst [vmem:[#allocation3 + $0x50] sm:$0xff] %v982
        %1031 = vst [vmem:[#allocation3 + $0x58] sm:$0xff] %v983
        %1032 = vst [vmem:[#allocation3 + $0x60] sm:$0xff] %v984
        %1033 = vst [vmem:[#allocation3 + $0x68] sm:$0xff] %v985
        %1034 = vst [vmem:[#allocation3 + $0x70] sm:$0xff] %v986
        %1035 = vst [vmem:[#allocation3 + $0x78] sm:$0xff] %v987
        %1036 = vst [vmem:[#allocation3 + $0x80] sm:$0xff] %v1004
        %1037 = vst [vmem:[#allocation3 + $0x88] sm:$0xff] %v1005
        %1038 = vst [vmem:[#allocation3 + $0x90] sm:$0xff] %v1006
        %1039 = vst [vmem:[#allocation3 + $0x98] sm:$0xff] %v1007
        %1040 = vst [vmem:[#allocation3 + $0xa0] sm:$0xff] %v1008
        %1041 = vst [vmem:[#allocation3 + $0xa8] sm:$0xff] %v1009
        %1042 = vst [vmem:[#allocation3 + $0xb0] sm:$0xff] %v1010
        %1043 = vst [vmem:[#allocation3 + $0xb8] sm:$0xff] %v1011
        %1044 = vst [vmem:[#allocation3 + $0xc0] sm:$0xff] %v1012
        %1045 = vst [vmem:[#allocation3 + $0xc8] sm:$0xff] %v1013
        %1046 = vst [vmem:[#allocation3 + $0xd0] sm:$0xff] %v1014
        %1047 = vst [vmem:[#allocation3 + $0xd8] sm:$0xff] %v1015
        %1048 = vst [vmem:[#allocation3 + $0xe0] sm:$0xff] %v1016
        %1049 = vst [vmem:[#allocation3 + $0xe8] sm:$0xff] %v1017
        %1050 = vst [vmem:[#allocation3 + $0xf0] sm:$0xff] %v1018
        %1051 = vst [vmem:[#allocation3 + $0xf8] sm:$0xff] %v1019
        %v1052 = vld [vmem:[#allocation3] sm:$0xff]
        %v1053 = vld [vmem:[#allocation3 + $0x8] sm:$0xff]
        %v1054 = vld [vmem:[#allocation3 + $0x10] sm:$0xff]
        %v1055 = vld [vmem:[#allocation3 + $0x18] sm:$0xff]
        %1056 = vst [vmem:[%s345] sm:$0xff] %v1052
        %1057 = vst [vmem:[%s345 + $0x8] sm:$0xff] %v1053
        %1058 = vst [vmem:[%s345 + $0x10] sm:$0xff] %v1054
        %1059 = vst [vmem:[%s345 + $0x18] sm:$0xff] %v1055
        %v1060 = vld [vmem:[#allocation3 + $0x20] sm:$0xff]
        %v1061 = vld [vmem:[#allocation3 + $0x28] sm:$0xff]
        %v1062 = vld [vmem:[#allocation3 + $0x30] sm:$0xff]
        %v1063 = vld [vmem:[#allocation3 + $0x38] sm:$0xff]
        %s1064 = scalar_lea.vmem %s345, 32 [#allocation13]
        %1065 = vst [vmem:[%s1064] sm:$0xff] %v1060
        %1066 = vst [vmem:[%s1064 + $0x8] sm:$0xff] %v1061
        %1067 = vst [vmem:[%s1064 + $0x10] sm:$0xff] %v1062
        %1068 = vst [vmem:[%s1064 + $0x18] sm:$0xff] %v1063
        %v1069 = vld [vmem:[#allocation3 + $0x40] sm:$0xff]
        %v1070 = vld [vmem:[#allocation3 + $0x48] sm:$0xff]
        %v1071 = vld [vmem:[#allocation3 + $0x50] sm:$0xff]
        %v1072 = vld [vmem:[#allocation3 + $0x58] sm:$0xff]
        %s1073 = scalar_lea.vmem %s345, 64 [#allocation13]
        %1074 = vst [vmem:[%s1073] sm:$0xff] %v1069
        %1075 = vst [vmem:[%s1073 + $0x8] sm:$0xff] %v1070
        %1076 = vst [vmem:[%s1073 + $0x10] sm:$0xff] %v1071
        %1077 = vst [vmem:[%s1073 + $0x18] sm:$0xff] %v1072
        %v1078 = vld [vmem:[#allocation3 + $0x60] sm:$0xff]
        %v1079 = vld [vmem:[#allocation3 + $0x68] sm:$0xff]
        %v1080 = vld [vmem:[#allocation3 + $0x70] sm:$0xff]
        %v1081 = vld [vmem:[#allocation3 + $0x78] sm:$0xff]
        %s1082 = scalar_lea.vmem %s345, 96 [#allocation13]
        %1083 = vst [vmem:[%s1082] sm:$0xff] %v1078
        %1084 = vst [vmem:[%s1082 + $0x8] sm:$0xff] %v1079
        %1085 = vst [vmem:[%s1082 + $0x10] sm:$0xff] %v1080
        %1086 = vst [vmem:[%s1082 + $0x18] sm:$0xff] %v1081
        %v1087 = vld [vmem:[#allocation3 + $0x80] sm:$0xff]
        %v1088 = vld [vmem:[#allocation3 + $0x88] sm:$0xff]
        %v1089 = vld [vmem:[#allocation3 + $0x90] sm:$0xff]
        %v1090 = vld [vmem:[#allocation3 + $0x98] sm:$0xff]
        %s1091 = scalar_lea.vmem %s345, 128 [#allocation13]
        %1092 = vst [vmem:[%s1091] sm:$0xff] %v1087
        %1093 = vst [vmem:[%s1091 + $0x8] sm:$0xff] %v1088
        %1094 = vst [vmem:[%s1091 + $0x10] sm:$0xff] %v1089
        %1095 = vst [vmem:[%s1091 + $0x18] sm:$0xff] %v1090
        %v1096 = vld [vmem:[#allocation3 + $0xa0] sm:$0xff]
        %v1097 = vld [vmem:[#allocation3 + $0xa8] sm:$0xff]
        %v1098 = vld [vmem:[#allocation3 + $0xb0] sm:$0xff]
        %v1099 = vld [vmem:[#allocation3 + $0xb8] sm:$0xff]
        %s1100 = scalar_lea.vmem %s345, 160 [#allocation13]
        %1101 = vst [vmem:[%s1100] sm:$0xff] %v1096
        %1102 = vst [vmem:[%s1100 + $0x8] sm:$0xff] %v1097
        %1103 = vst [vmem:[%s1100 + $0x10] sm:$0xff] %v1098
        %1104 = vst [vmem:[%s1100 + $0x18] sm:$0xff] %v1099
        %v1105 = vld [vmem:[#allocation3 + $0xc0] sm:$0xff]
        %v1106 = vld [vmem:[#allocation3 + $0xc8] sm:$0xff]
        %v1107 = vld [vmem:[#allocation3 + $0xd0] sm:$0xff]
        %v1108 = vld [vmem:[#allocation3 + $0xd8] sm:$0xff]
        %s1109 = scalar_lea.vmem %s345, 192 [#allocation13]
        %1110 = vst [vmem:[%s1109] sm:$0xff] %v1105
        %1111 = vst [vmem:[%s1109 + $0x8] sm:$0xff] %v1106
        %1112 = vst [vmem:[%s1109 + $0x10] sm:$0xff] %v1107
        %1113 = vst [vmem:[%s1109 + $0x18] sm:$0xff] %v1108
        %v1114 = vld [vmem:[#allocation3 + $0xe0] sm:$0xff]
        %v1115 = vld [vmem:[#allocation3 + $0xe8] sm:$0xff]
        %v1116 = vld [vmem:[#allocation3 + $0xf0] sm:$0xff]
        %v1117 = vld [vmem:[#allocation3 + $0xf8] sm:$0xff]
        %s1118 = scalar_lea.vmem %s345, 224 [#allocation13]
        %1119 = vst [vmem:[%s1118] sm:$0xff] %v1114
        %1120 = vst [vmem:[%s1118 + $0x8] sm:$0xff] %v1115
        %1121 = vst [vmem:[%s1118 + $0x10] sm:$0xff] %v1116
        %1122 = vst [vmem:[%s1118 + $0x18] sm:$0xff] %v1117
        %v1123 = vld [vmem:[#allocation12] sm:$0xff]
        %v1124 = vld [vmem:[#allocation12 + $0x8] sm:$0xff]
        %v1125 = vld [vmem:[#allocation12 + $0x10] sm:$0xff]
        %v1126 = vld [vmem:[#allocation12 + $0x18] sm:$0xff]
        %v1127 = vld [vmem:[#allocation12 + $0x20] sm:$0xff]
        %v1128 = vld [vmem:[#allocation12 + $0x28] sm:$0xff]
        %v1129 = vld [vmem:[#allocation12 + $0x30] sm:$0xff]
        %v1130 = vld [vmem:[#allocation12 + $0x38] sm:$0xff]
        %v1131 = vld [vmem:[#allocation12 + $0x40] sm:$0xff]
        %v1132 = vld [vmem:[#allocation12 + $0x48] sm:$0xff]
        %v1133 = vld [vmem:[#allocation12 + $0x50] sm:$0xff]
        %v1134 = vld [vmem:[#allocation12 + $0x58] sm:$0xff]
        %v1135 = vld [vmem:[#allocation12 + $0x60] sm:$0xff]
        %v1136 = vld [vmem:[#allocation12 + $0x68] sm:$0xff]
        %v1137 = vld [vmem:[#allocation12 + $0x70] sm:$0xff]
        %v1138 = vld [vmem:[#allocation12 + $0x78] sm:$0xff]
        %v1139 = vld [vmem:[#allocation12 + $0x80] sm:$0xff]
        %v1140 = vld [vmem:[#allocation12 + $0x88] sm:$0xff]
        %v1141 = vld [vmem:[#allocation12 + $0x90] sm:$0xff]
        %v1142 = vld [vmem:[#allocation12 + $0x98] sm:$0xff]
        %v1143 = vld [vmem:[#allocation12 + $0xa0] sm:$0xff]
        %v1144 = vld [vmem:[#allocation12 + $0xa8] sm:$0xff]
        %v1145 = vld [vmem:[#allocation12 + $0xb0] sm:$0xff]
        %v1146 = vld [vmem:[#allocation12 + $0xb8] sm:$0xff]
        %v1147 = vld [vmem:[#allocation12 + $0xc0] sm:$0xff]
        %v1148 = vld [vmem:[#allocation12 + $0xc8] sm:$0xff]
        %v1149 = vld [vmem:[#allocation12 + $0xd0] sm:$0xff]
        %v1150 = vld [vmem:[#allocation12 + $0xd8] sm:$0xff]
        %v1151 = vld [vmem:[#allocation12 + $0xe0] sm:$0xff]
        %v1152 = vld [vmem:[#allocation12 + $0xe8] sm:$0xff]
        %v1153 = vld [vmem:[#allocation12 + $0xf0] sm:$0xff]
        %v1154 = vld [vmem:[#allocation12 + $0xf8] sm:$0xff]
        %v1155 = vld [vmem:[#allocation12 + $0x100] sm:$0xff]
        %v1156 = vld [vmem:[#allocation12 + $0x108] sm:$0xff]
        %v1157 = vld [vmem:[#allocation12 + $0x110] sm:$0xff]
        %v1158 = vld [vmem:[#allocation12 + $0x118] sm:$0xff]
        %v1159 = vld [vmem:[#allocation12 + $0x120] sm:$0xff]
        %v1160 = vld [vmem:[#allocation12 + $0x128] sm:$0xff]
        %v1161 = vld [vmem:[#allocation12 + $0x130] sm:$0xff]
        %v1162 = vld [vmem:[#allocation12 + $0x138] sm:$0xff]
        %v1163 = vld [vmem:[#allocation12 + $0x140] sm:$0xff]
        %v1164 = vld [vmem:[#allocation12 + $0x148] sm:$0xff]
        %v1165 = vld [vmem:[#allocation12 + $0x150] sm:$0xff]
        %v1166 = vld [vmem:[#allocation12 + $0x158] sm:$0xff]
        %v1167 = vld [vmem:[#allocation12 + $0x160] sm:$0xff]
        %v1168 = vld [vmem:[#allocation12 + $0x168] sm:$0xff]
        %v1169 = vld [vmem:[#allocation12 + $0x170] sm:$0xff]
        %v1170 = vld [vmem:[#allocation12 + $0x178] sm:$0xff]
        %v1171 = vld [vmem:[#allocation12 + $0x180] sm:$0xff]
        %v1172 = vld [vmem:[#allocation12 + $0x188] sm:$0xff]
        %v1173 = vld [vmem:[#allocation12 + $0x190] sm:$0xff]
        %v1174 = vld [vmem:[#allocation12 + $0x198] sm:$0xff]
        %v1175 = vld [vmem:[#allocation12 + $0x1a0] sm:$0xff]
        %v1176 = vld [vmem:[#allocation12 + $0x1a8] sm:$0xff]
        %v1177 = vld [vmem:[#allocation12 + $0x1b0] sm:$0xff]
        %v1178 = vld [vmem:[#allocation12 + $0x1b8] sm:$0xff]
        %v1179 = vld [vmem:[#allocation12 + $0x1c0] sm:$0xff]
        %v1180 = vld [vmem:[#allocation12 + $0x1c8] sm:$0xff]
        %v1181 = vld [vmem:[#allocation12 + $0x1d0] sm:$0xff]
        %v1182 = vld [vmem:[#allocation12 + $0x1d8] sm:$0xff]
        %v1183 = vld [vmem:[#allocation12 + $0x1e0] sm:$0xff]
        %v1184 = vld [vmem:[#allocation12 + $0x1e8] sm:$0xff]
        %v1185 = vld [vmem:[#allocation12 + $0x1f0] sm:$0xff]
        %v1186 = vld [vmem:[#allocation12 + $0x1f8] sm:$0xff]
        %1187 = vmatprep.subr.mxu0 %v1154
        %1188 = vmatpush1.msra.mxu0 %v1153
        %1189 = vmatprep.subr.mxu0 %v1152
        %1190 = vmatpush1.msra.mxu0 %v1151
        %1191 = vmatprep.subr.mxu0 %v1150
        %1192 = vmatpush1.msra.mxu0 %v1149
        %1193 = vmatprep.subr.mxu0 %v1148
        %1194 = vmatpush1.msra.mxu0 %v1147
        %1195 = vmatprep.subr.mxu0 %v1146
        %1196 = vmatpush1.msra.mxu0 %v1145
        %1197 = vmatprep.subr.mxu0 %v1144
        %1198 = vmatpush1.msra.mxu0 %v1143
        %1199 = vmatprep.subr.mxu0 %v1142
        %1200 = vmatpush1.msra.mxu0 %v1141
        %1201 = vmatprep.subr.mxu0 %v1140
        %1202 = vmatpush1.msra.mxu0 %v1139
        %1203 = vmatprep.subr.mxu0 %v1138
        %1204 = vmatpush1.msra.mxu0 %v1137
        %1205 = vmatprep.subr.mxu0 %v1136
        %1206 = vmatpush1.msra.mxu0 %v1135
        %1207 = vmatprep.subr.mxu0 %v1134
        %1208 = vmatpush1.msra.mxu0 %v1133
        %1209 = vmatprep.subr.mxu0 %v1132
        %1210 = vmatpush1.msra.mxu0 %v1131
        %1211 = vmatprep.subr.mxu0 %v1130
        %1212 = vmatpush1.msra.mxu0 %v1129
        %1213 = vmatprep.subr.mxu0 %v1128
        %1214 = vmatpush1.msra.mxu0 %v1127
        %1215 = vmatprep.subr.mxu0 %v1126
        %1216 = vmatpush1.msra.mxu0 %v1125
        %1217 = vmatprep.subr.mxu0 %v1124
        %1218 = vmatpush1.msra.mxu0 %v1123
        %1219 = vmatprep.subr.mxu0 %v1186
        %1220 = vmatpush2.msra.mxu0 %v1185
        %1221 = vmatprep.subr.mxu0 %v1184
        %1222 = vmatpush2.msra.mxu0 %v1183
        %1223 = vmatprep.subr.mxu0 %v1182
        %1224 = vmatpush2.msra.mxu0 %v1181
        %1225 = vmatprep.subr.mxu0 %v1180
        %1226 = vmatpush2.msra.mxu0 %v1179
        %1227 = vmatprep.subr.mxu0 %v1178
        %1228 = vmatpush2.msra.mxu0 %v1177
        %1229 = vmatprep.subr.mxu0 %v1176
        %1230 = vmatpush2.msra.mxu0 %v1175
        %1231 = vmatprep.subr.mxu0 %v1174
        %1232 = vmatpush2.msra.mxu0 %v1173
        %1233 = vmatprep.subr.mxu0 %v1172
        %1234 = vmatpush2.msra.mxu0 %v1171
        %1235 = vmatprep.subr.mxu0 %v1170
        %1236 = vmatpush2.msra.mxu0 %v1169
        %1237 = vmatprep.subr.mxu0 %v1168
        %1238 = vmatpush2.msra.mxu0 %v1167
        %1239 = vmatprep.subr.mxu0 %v1166
        %1240 = vmatpush2.msra.mxu0 %v1165
        %1241 = vmatprep.subr.mxu0 %v1164
        %1242 = vmatpush2.msra.mxu0 %v1163
        %1243 = vmatprep.subr.mxu0 %v1162
        %1244 = vmatpush2.msra.mxu0 %v1161
        %1245 = vmatprep.subr.mxu0 %v1160
        %1246 = vmatpush2.msra.mxu0 %v1159
        %1247 = vmatprep.subr.mxu0 %v1158
        %1248 = vmatpush2.msra.mxu0 %v1157
        %1249 = vmatprep.subr.mxu0 %v1156
        %1250 = vmatpush2.msra.mxu0 %v1155
        %1251 = vmatprep.mubr.f32.mxu0 %v700
        %1252 = vmatmul.mubr.f32.gmra.mxu0 %v699
        %v1253 = vpop.f32.mrf.mxu0
        %v1254 = vadd.f32 0.0, %v1253
        %v1255 = vpop.f32.mrf.mxu0
        %v1256 = vadd.f32 0.0, %v1255
        %1257 = vmatprep.mubr.f32.mxu0 %v702
        %1258 = vmatmul.mubr.f32.gmra.mxu0 %v701
        %v1259 = vpop.f32.mrf.mxu0
        %v1260 = vadd.f32 0.0, %v1259
        %v1261 = vpop.f32.mrf.mxu0
        %v1262 = vadd.f32 0.0, %v1261
        %1263 = vmatprep.mubr.f32.mxu0 %v704
        %1264 = vmatmul.mubr.f32.gmra.mxu0 %v703
        %v1265 = vpop.f32.mrf.mxu0
        %v1266 = vadd.f32 0.0, %v1265
        %v1267 = vpop.f32.mrf.mxu0
        %v1268 = vadd.f32 0.0, %v1267
        %1269 = vmatprep.mubr.f32.mxu0 %v706
        %1270 = vmatmul.mubr.f32.gmra.mxu0 %v705
        %v1271 = vpop.f32.mrf.mxu0
        %v1272 = vadd.f32 0.0, %v1271
        %v1273 = vpop.f32.mrf.mxu0
        %v1274 = vadd.f32 0.0, %v1273
        %1275 = vmatprep.mubr.f32.mxu0 %v708
        %1276 = vmatmul.mubr.f32.gmra.mxu0 %v707
        %v1277 = vpop.f32.mrf.mxu0
        %v1278 = vadd.f32 0.0, %v1277
        %v1279 = vpop.f32.mrf.mxu0
        %v1280 = vadd.f32 0.0, %v1279
        %1281 = vmatprep.mubr.f32.mxu0 %v710
        %1282 = vmatmul.mubr.f32.gmra.mxu0 %v709
        %v1283 = vpop.f32.mrf.mxu0
        %v1284 = vadd.f32 0.0, %v1283
        %v1285 = vpop.f32.mrf.mxu0
        %v1286 = vadd.f32 0.0, %v1285
        %1287 = vmatprep.mubr.f32.mxu0 %v712
        %1288 = vmatmul.mubr.f32.gmra.mxu0 %v711
        %v1289 = vpop.f32.mrf.mxu0
        %v1290 = vadd.f32 0.0, %v1289
        %v1291 = vpop.f32.mrf.mxu0
        %v1292 = vadd.f32 0.0, %v1291
        %1293 = vmatprep.mubr.f32.mxu0 %v714
        %1294 = vmatmul.mubr.f32.gmra.mxu0 %v713
        %v1295 = vpop.f32.mrf.mxu0
        %v1296 = vadd.f32 0.0, %v1295
        %v1297 = vpop.f32.mrf.mxu0
        %v1298 = vadd.f32 0.0, %v1297
        %1299 = vmatprep.mubr.f32.mxu0 %v716
        %1300 = vmatmul.mubr.f32.gmra.mxu0 %v715
        %v1301 = vpop.f32.mrf.mxu0
        %v1302 = vadd.f32 0.0, %v1301
        %v1303 = vpop.f32.mrf.mxu0
        %v1304 = vadd.f32 0.0, %v1303
        %1305 = vmatprep.mubr.f32.mxu0 %v718
        %1306 = vmatmul.mubr.f32.gmra.mxu0 %v717
        %v1307 = vpop.f32.mrf.mxu0
        %v1308 = vadd.f32 0.0, %v1307
        %v1309 = vpop.f32.mrf.mxu0
        %v1310 = vadd.f32 0.0, %v1309
        %1311 = vmatprep.mubr.f32.mxu0 %v720
        %1312 = vmatmul.mubr.f32.gmra.mxu0 %v719
        %v1313 = vpop.f32.mrf.mxu0
        %v1314 = vadd.f32 0.0, %v1313
        %v1315 = vpop.f32.mrf.mxu0
        %v1316 = vadd.f32 0.0, %v1315
        %1317 = vmatprep.mubr.f32.mxu0 %v722
        %1318 = vmatmul.mubr.f32.gmra.mxu0 %v721
        %v1319 = vpop.f32.mrf.mxu0
        %v1320 = vadd.f32 0.0, %v1319
        %v1321 = vpop.f32.mrf.mxu0
        %v1322 = vadd.f32 0.0, %v1321
        %1323 = vmatprep.mubr.f32.mxu0 %v724
        %1324 = vmatmul.mubr.f32.gmra.mxu0 %v723
        %v1325 = vpop.f32.mrf.mxu0
        %v1326 = vadd.f32 0.0, %v1325
        %v1327 = vpop.f32.mrf.mxu0
        %v1328 = vadd.f32 0.0, %v1327
        %1329 = vmatprep.mubr.f32.mxu0 %v726
        %1330 = vmatmul.mubr.f32.gmra.mxu0 %v725
        %v1331 = vpop.f32.mrf.mxu0
        %v1332 = vadd.f32 0.0, %v1331
        %v1333 = vpop.f32.mrf.mxu0
        %v1334 = vadd.f32 0.0, %v1333
        %1335 = vmatprep.mubr.f32.mxu0 %v728
        %1336 = vmatmul.mubr.f32.gmra.mxu0 %v727
        %v1337 = vpop.f32.mrf.mxu0
        %v1338 = vadd.f32 0.0, %v1337
        %v1339 = vpop.f32.mrf.mxu0
        %v1340 = vadd.f32 0.0, %v1339
        %1341 = vmatprep.mubr.f32.mxu0 %v730
        %1342 = vmatmul.mubr.f32.gmra.mxu0 %v729
        %v1343 = vpop.f32.mrf.mxu0
        %v1344 = vadd.f32 0.0, %v1343
        %v1345 = vpop.f32.mrf.mxu0
        %v1346 = vadd.f32 0.0, %v1345
        %1347 = vdwg.mxu0
        %1348 = vst [vmem:[#allocation2] sm:$0xff] %v1254
        %1349 = vst [vmem:[#allocation2 + $0x8] sm:$0xff] %v1256
        %1350 = vst [vmem:[#allocation2 + $0x10] sm:$0xff] %v1260
        %1351 = vst [vmem:[#allocation2 + $0x18] sm:$0xff] %v1262
        %1352 = vst [vmem:[#allocation2 + $0x20] sm:$0xff] %v1266
        %1353 = vst [vmem:[#allocation2 + $0x28] sm:$0xff] %v1268
        %1354 = vst [vmem:[#allocation2 + $0x30] sm:$0xff] %v1272
        %1355 = vst [vmem:[#allocation2 + $0x38] sm:$0xff] %v1274
        %1356 = vst [vmem:[#allocation2 + $0x40] sm:$0xff] %v1278
        %1357 = vst [vmem:[#allocation2 + $0x48] sm:$0xff] %v1280
        %1358 = vst [vmem:[#allocation2 + $0x50] sm:$0xff] %v1284
        %1359 = vst [vmem:[#allocation2 + $0x58] sm:$0xff] %v1286
        %1360 = vst [vmem:[#allocation2 + $0x60] sm:$0xff] %v1290
        %1361 = vst [vmem:[#allocation2 + $0x68] sm:$0xff] %v1292
        %1362 = vst [vmem:[#allocation2 + $0x70] sm:$0xff] %v1296
        %1363 = vst [vmem:[#allocation2 + $0x78] sm:$0xff] %v1298
        %1364 = vst [vmem:[#allocation2 + $0x80] sm:$0xff] %v1302
        %1365 = vst [vmem:[#allocation2 + $0x88] sm:$0xff] %v1304
        %1366 = vst [vmem:[#allocation2 + $0x90] sm:$0xff] %v1308
        %1367 = vst [vmem:[#allocation2 + $0x98] sm:$0xff] %v1310
        %1368 = vst [vmem:[#allocation2 + $0xa0] sm:$0xff] %v1314
        %1369 = vst [vmem:[#allocation2 + $0xa8] sm:$0xff] %v1316
        %1370 = vst [vmem:[#allocation2 + $0xb0] sm:$0xff] %v1320
        %1371 = vst [vmem:[#allocation2 + $0xb8] sm:$0xff] %v1322
        %1372 = vst [vmem:[#allocation2 + $0xc0] sm:$0xff] %v1326
        %1373 = vst [vmem:[#allocation2 + $0xc8] sm:$0xff] %v1328
        %1374 = vst [vmem:[#allocation2 + $0xd0] sm:$0xff] %v1332
        %1375 = vst [vmem:[#allocation2 + $0xd8] sm:$0xff] %v1334
        %1376 = vst [vmem:[#allocation2 + $0xe0] sm:$0xff] %v1338
        %1377 = vst [vmem:[#allocation2 + $0xe8] sm:$0xff] %v1340
        %1378 = vst [vmem:[#allocation2 + $0xf0] sm:$0xff] %v1344
        %1379 = vst [vmem:[#allocation2 + $0xf8] sm:$0xff] %v1346
        %v1380 = vld [vmem:[#allocation2] sm:$0xff]
        %v1381 = vld [vmem:[#allocation2 + $0x10] sm:$0xff]
        %v1382 = vld [vmem:[#allocation2 + $0x20] sm:$0xff]
        %v1383 = vld [vmem:[#allocation2 + $0x30] sm:$0xff]
        %v1384 = vld [vmem:[#allocation2 + $0x40] sm:$0xff]
        %v1385 = vld [vmem:[#allocation2 + $0x50] sm:$0xff]
        %v1386 = vld [vmem:[#allocation2 + $0x60] sm:$0xff]
        %v1387 = vld [vmem:[#allocation2 + $0x70] sm:$0xff]
        %v1388 = vld [vmem:[#allocation2 + $0x80] sm:$0xff]
        %v1389 = vld [vmem:[#allocation2 + $0x90] sm:$0xff]
        %v1390 = vld [vmem:[#allocation2 + $0xa0] sm:$0xff]
        %v1391 = vld [vmem:[#allocation2 + $0xb0] sm:$0xff]
        %v1392 = vld [vmem:[#allocation2 + $0xc0] sm:$0xff]
        %v1393 = vld [vmem:[#allocation2 + $0xd0] sm:$0xff]
        %v1394 = vld [vmem:[#allocation2 + $0xe0] sm:$0xff]
        %v1395 = vld [vmem:[#allocation2 + $0xf0] sm:$0xff]
        %vm1396 = vcmask 261120
        %1397 = vst.msk [vmem:[%s351] sm:$0xff] %vm1396, %v1380
        %1398 = vst.msk [vmem:[%s351 + $0x8] sm:$0xff] %vm1396, %v1381
        %1399 = vst.msk [vmem:[%s351 + $0x10] sm:$0xff] %vm1396, %v1382
        %1400 = vst.msk [vmem:[%s351 + $0x18] sm:$0xff] %vm1396, %v1383
        %1401 = vst.msk [vmem:[%s351 + $0x20] sm:$0xff] %vm1396, %v1384
        %1402 = vst.msk [vmem:[%s351 + $0x28] sm:$0xff] %vm1396, %v1385
        %1403 = vst.msk [vmem:[%s351 + $0x30] sm:$0xff] %vm1396, %v1386
        %1404 = vst.msk [vmem:[%s351 + $0x38] sm:$0xff] %vm1396, %v1387
        %1405 = vst.msk [vmem:[%s351 + $0x40] sm:$0xff] %vm1396, %v1388
        %1406 = vst.msk [vmem:[%s351 + $0x48] sm:$0xff] %vm1396, %v1389
        %1407 = vst.msk [vmem:[%s351 + $0x50] sm:$0xff] %vm1396, %v1390
        %1408 = vst.msk [vmem:[%s351 + $0x58] sm:$0xff] %vm1396, %v1391
        %1409 = vst.msk [vmem:[%s351 + $0x60] sm:$0xff] %vm1396, %v1392
        %1410 = vst.msk [vmem:[%s351 + $0x68] sm:$0xff] %vm1396, %v1393
        %1411 = vst.msk [vmem:[%s351 + $0x70] sm:$0xff] %vm1396, %v1394
        %1412 = vst.msk [vmem:[%s351 + $0x78] sm:$0xff] %vm1396, %v1395
        %v1413 = vld [vmem:[#allocation2] sm:$0xff]
        %v1414 = vld [vmem:[#allocation2 + $0x10] sm:$0xff]
        %v1415 = vld [vmem:[#allocation2 + $0x20] sm:$0xff]
        %v1416 = vld [vmem:[#allocation2 + $0x30] sm:$0xff]
        %v1417 = vld [vmem:[#allocation2 + $0x40] sm:$0xff]
        %v1418 = vld [vmem:[#allocation2 + $0x50] sm:$0xff]
        %v1419 = vld [vmem:[#allocation2 + $0x60] sm:$0xff]
        %v1420 = vld [vmem:[#allocation2 + $0x70] sm:$0xff]
        %v1421 = vld [vmem:[#allocation2 + $0x80] sm:$0xff]
        %v1422 = vld [vmem:[#allocation2 + $0x90] sm:$0xff]
        %v1423 = vld [vmem:[#allocation2 + $0xa0] sm:$0xff]
        %v1424 = vld [vmem:[#allocation2 + $0xb0] sm:$0xff]
        %v1425 = vld [vmem:[#allocation2 + $0xc0] sm:$0xff]
        %v1426 = vld [vmem:[#allocation2 + $0xd0] sm:$0xff]
        %v1427 = vld [vmem:[#allocation2 + $0xe0] sm:$0xff]
        %v1428 = vld [vmem:[#allocation2 + $0xf0] sm:$0xff]
        %1445 = vrot.lane.b32.xlu0 %v1413, 96
        %v1446 = vpop.permute.xlu0 %1445
        %1447 = vrot.lane.b32.xlu0 %v1414, 96
        %v1448 = vpop.permute.xlu0 %1447
        %1449 = vrot.lane.b32.xlu0 %v1415, 96
        %v1450 = vpop.permute.xlu0 %1449
        %1451 = vrot.lane.b32.xlu0 %v1416, 96
        %v1452 = vpop.permute.xlu0 %1451
        %1453 = vrot.lane.b32.xlu0 %v1417, 96
        %v1454 = vpop.permute.xlu0 %1453
        %1455 = vrot.lane.b32.xlu0 %v1418, 96
        %v1456 = vpop.permute.xlu0 %1455
        %1457 = vrot.lane.b32.xlu0 %v1419, 96
        %v1458 = vpop.permute.xlu0 %1457
        %1459 = vrot.lane.b32.xlu0 %v1420, 96
        %v1460 = vpop.permute.xlu0 %1459
        %1461 = vrot.lane.b32.xlu0 %v1421, 96
        %v1462 = vpop.permute.xlu0 %1461
        %1463 = vrot.lane.b32.xlu0 %v1422, 96
        %v1464 = vpop.permute.xlu0 %1463
        %1465 = vrot.lane.b32.xlu0 %v1423, 96
        %v1466 = vpop.permute.xlu0 %1465
        %1467 = vrot.lane.b32.xlu0 %v1424, 96
        %v1468 = vpop.permute.xlu0 %1467
        %1469 = vrot.lane.b32.xlu0 %v1425, 96
        %v1470 = vpop.permute.xlu0 %1469
        %1471 = vrot.lane.b32.xlu0 %v1426, 96
        %v1472 = vpop.permute.xlu0 %1471
        %1473 = vrot.lane.b32.xlu0 %v1427, 96
        %v1474 = vpop.permute.xlu0 %1473
        %1475 = vrot.lane.b32.xlu0 %v1428, 96
        %v1476 = vpop.permute.xlu0 %1475
        %s1493 = scalar_lea.vmem %s351, 128 [#allocation14]
        %1494 = vst.msk [vmem:[%s1493] sm:$0xff] %vm1396, %v1446
        %1495 = vst.msk [vmem:[%s1493 + $0x8] sm:$0xff] %vm1396, %v1448
        %1496 = vst.msk [vmem:[%s1493 + $0x10] sm:$0xff] %vm1396, %v1450
        %1497 = vst.msk [vmem:[%s1493 + $0x18] sm:$0xff] %vm1396, %v1452
        %1498 = vst.msk [vmem:[%s1493 + $0x20] sm:$0xff] %vm1396, %v1454
        %1499 = vst.msk [vmem:[%s1493 + $0x28] sm:$0xff] %vm1396, %v1456
        %1500 = vst.msk [vmem:[%s1493 + $0x30] sm:$0xff] %vm1396, %v1458
        %1501 = vst.msk [vmem:[%s1493 + $0x38] sm:$0xff] %vm1396, %v1460
        %1502 = vst.msk [vmem:[%s1493 + $0x40] sm:$0xff] %vm1396, %v1462
        %1503 = vst.msk [vmem:[%s1493 + $0x48] sm:$0xff] %vm1396, %v1464
        %1504 = vst.msk [vmem:[%s1493 + $0x50] sm:$0xff] %vm1396, %v1466
        %1505 = vst.msk [vmem:[%s1493 + $0x58] sm:$0xff] %vm1396, %v1468
        %1506 = vst.msk [vmem:[%s1493 + $0x60] sm:$0xff] %vm1396, %v1470
        %1507 = vst.msk [vmem:[%s1493 + $0x68] sm:$0xff] %vm1396, %v1472
        %1508 = vst.msk [vmem:[%s1493 + $0x70] sm:$0xff] %vm1396, %v1474
        %1509 = vst.msk [vmem:[%s1493 + $0x78] sm:$0xff] %vm1396, %v1476
        %v1510 = vld [vmem:[#allocation2] sm:$0xff]
        %v1511 = vld [vmem:[#allocation2 + $0x10] sm:$0xff]
        %v1512 = vld [vmem:[#allocation2 + $0x20] sm:$0xff]
        %v1513 = vld [vmem:[#allocation2 + $0x30] sm:$0xff]
        %v1514 = vld [vmem:[#allocation2 + $0x40] sm:$0xff]
        %v1515 = vld [vmem:[#allocation2 + $0x50] sm:$0xff]
        %v1516 = vld [vmem:[#allocation2 + $0x60] sm:$0xff]
        %v1517 = vld [vmem:[#allocation2 + $0x70] sm:$0xff]
        %v1518 = vld [vmem:[#allocation2 + $0x80] sm:$0xff]
        %v1519 = vld [vmem:[#allocation2 + $0x90] sm:$0xff]
        %v1520 = vld [vmem:[#allocation2 + $0xa0] sm:$0xff]
        %v1521 = vld [vmem:[#allocation2 + $0xb0] sm:$0xff]
        %v1522 = vld [vmem:[#allocation2 + $0xc0] sm:$0xff]
        %v1523 = vld [vmem:[#allocation2 + $0xd0] sm:$0xff]
        %v1524 = vld [vmem:[#allocation2 + $0xe0] sm:$0xff]
        %v1525 = vld [vmem:[#allocation2 + $0xf0] sm:$0xff]
        %1542 = vrot.lane.b32.xlu0 %v1510, 64
        %v1543 = vpop.permute.xlu0 %1542
        %1544 = vrot.lane.b32.xlu0 %v1511, 64
        %v1545 = vpop.permute.xlu0 %1544
        %1546 = vrot.lane.b32.xlu0 %v1512, 64
        %v1547 = vpop.permute.xlu0 %1546
        %1548 = vrot.lane.b32.xlu0 %v1513, 64
        %v1549 = vpop.permute.xlu0 %1548
        %1550 = vrot.lane.b32.xlu0 %v1514, 64
        %v1551 = vpop.permute.xlu0 %1550
        %1552 = vrot.lane.b32.xlu0 %v1515, 64
        %v1553 = vpop.permute.xlu0 %1552
        %1554 = vrot.lane.b32.xlu0 %v1516, 64
        %v1555 = vpop.permute.xlu0 %1554
        %1556 = vrot.lane.b32.xlu0 %v1517, 64
        %v1557 = vpop.permute.xlu0 %1556
        %1558 = vrot.lane.b32.xlu0 %v1518, 64
        %v1559 = vpop.permute.xlu0 %1558
        %1560 = vrot.lane.b32.xlu0 %v1519, 64
        %v1561 = vpop.permute.xlu0 %1560
        %1562 = vrot.lane.b32.xlu0 %v1520, 64
        %v1563 = vpop.permute.xlu0 %1562
        %1564 = vrot.lane.b32.xlu0 %v1521, 64
        %v1565 = vpop.permute.xlu0 %1564
        %1566 = vrot.lane.b32.xlu0 %v1522, 64
        %v1567 = vpop.permute.xlu0 %1566
        %1568 = vrot.lane.b32.xlu0 %v1523, 64
        %v1569 = vpop.permute.xlu0 %1568
        %1570 = vrot.lane.b32.xlu0 %v1524, 64
        %v1571 = vpop.permute.xlu0 %1570
        %1572 = vrot.lane.b32.xlu0 %v1525, 64
        %v1573 = vpop.permute.xlu0 %1572
        %s1590 = scalar_lea.vmem %s351, 256 [#allocation14]
        %1591 = vst.msk [vmem:[%s1590] sm:$0xff] %vm1396, %v1543
        %1592 = vst.msk [vmem:[%s1590 + $0x8] sm:$0xff] %vm1396, %v1545
        %1593 = vst.msk [vmem:[%s1590 + $0x10] sm:$0xff] %vm1396, %v1547
        %1594 = vst.msk [vmem:[%s1590 + $0x18] sm:$0xff] %vm1396, %v1549
        %1595 = vst.msk [vmem:[%s1590 + $0x20] sm:$0xff] %vm1396, %v1551
        %1596 = vst.msk [vmem:[%s1590 + $0x28] sm:$0xff] %vm1396, %v1553
        %1597 = vst.msk [vmem:[%s1590 + $0x30] sm:$0xff] %vm1396, %v1555
        %1598 = vst.msk [vmem:[%s1590 + $0x38] sm:$0xff] %vm1396, %v1557
        %1599 = vst.msk [vmem:[%s1590 + $0x40] sm:$0xff] %vm1396, %v1559
        %1600 = vst.msk [vmem:[%s1590 + $0x48] sm:$0xff] %vm1396, %v1561
        %1601 = vst.msk [vmem:[%s1590 + $0x50] sm:$0xff] %vm1396, %v1563
        %1602 = vst.msk [vmem:[%s1590 + $0x58] sm:$0xff] %vm1396, %v1565
        %1603 = vst.msk [vmem:[%s1590 + $0x60] sm:$0xff] %vm1396, %v1567
        %1604 = vst.msk [vmem:[%s1590 + $0x68] sm:$0xff] %vm1396, %v1569
        %1605 = vst.msk [vmem:[%s1590 + $0x70] sm:$0xff] %vm1396, %v1571
        %1606 = vst.msk [vmem:[%s1590 + $0x78] sm:$0xff] %vm1396, %v1573
        %v1607 = vld [vmem:[#allocation2] sm:$0xff]
        %v1608 = vld [vmem:[#allocation2 + $0x10] sm:$0xff]
        %v1609 = vld [vmem:[#allocation2 + $0x20] sm:$0xff]
        %v1610 = vld [vmem:[#allocation2 + $0x30] sm:$0xff]
        %v1611 = vld [vmem:[#allocation2 + $0x40] sm:$0xff]
        %v1612 = vld [vmem:[#allocation2 + $0x50] sm:$0xff]
        %v1613 = vld [vmem:[#allocation2 + $0x60] sm:$0xff]
        %v1614 = vld [vmem:[#allocation2 + $0x70] sm:$0xff]
        %v1615 = vld [vmem:[#allocation2 + $0x80] sm:$0xff]
        %v1616 = vld [vmem:[#allocation2 + $0x90] sm:$0xff]
        %v1617 = vld [vmem:[#allocation2 + $0xa0] sm:$0xff]
        %v1618 = vld [vmem:[#allocation2 + $0xb0] sm:$0xff]
        %v1619 = vld [vmem:[#allocation2 + $0xc0] sm:$0xff]
        %v1620 = vld [vmem:[#allocation2 + $0xd0] sm:$0xff]
        %v1621 = vld [vmem:[#allocation2 + $0xe0] sm:$0xff]
        %v1622 = vld [vmem:[#allocation2 + $0xf0] sm:$0xff]
        %1639 = vrot.lane.b32.xlu0 %v1607, 32
        %v1640 = vpop.permute.xlu0 %1639
        %1641 = vrot.lane.b32.xlu0 %v1608, 32
        %v1642 = vpop.permute.xlu0 %1641
        %1643 = vrot.lane.b32.xlu0 %v1609, 32
        %v1644 = vpop.permute.xlu0 %1643
        %1645 = vrot.lane.b32.xlu0 %v1610, 32
        %v1646 = vpop.permute.xlu0 %1645
        %1647 = vrot.lane.b32.xlu0 %v1611, 32
        %v1648 = vpop.permute.xlu0 %1647
        %1649 = vrot.lane.b32.xlu0 %v1612, 32
        %v1650 = vpop.permute.xlu0 %1649
        %1651 = vrot.lane.b32.xlu0 %v1613, 32
        %v1652 = vpop.permute.xlu0 %1651
        %1653 = vrot.lane.b32.xlu0 %v1614, 32
        %v1654 = vpop.permute.xlu0 %1653
        %1655 = vrot.lane.b32.xlu0 %v1615, 32
        %v1656 = vpop.permute.xlu0 %1655
        %1657 = vrot.lane.b32.xlu0 %v1616, 32
        %v1658 = vpop.permute.xlu0 %1657
        %1659 = vrot.lane.b32.xlu0 %v1617, 32
        %v1660 = vpop.permute.xlu0 %1659
        %1661 = vrot.lane.b32.xlu0 %v1618, 32
        %v1662 = vpop.permute.xlu0 %1661
        %1663 = vrot.lane.b32.xlu0 %v1619, 32
        %v1664 = vpop.permute.xlu0 %1663
        %1665 = vrot.lane.b32.xlu0 %v1620, 32
        %v1666 = vpop.permute.xlu0 %1665
        %1667 = vrot.lane.b32.xlu0 %v1621, 32
        %v1668 = vpop.permute.xlu0 %1667
        %1669 = vrot.lane.b32.xlu0 %v1622, 32
        %v1670 = vpop.permute.xlu0 %1669
        %s1687 = scalar_lea.vmem %s351, 384 [#allocation14]
        %1688 = vst.msk [vmem:[%s1687] sm:$0xff] %vm1396, %v1640
        %1689 = vst.msk [vmem:[%s1687 + $0x8] sm:$0xff] %vm1396, %v1642
        %1690 = vst.msk [vmem:[%s1687 + $0x10] sm:$0xff] %vm1396, %v1644
        %1691 = vst.msk [vmem:[%s1687 + $0x18] sm:$0xff] %vm1396, %v1646
        %1692 = vst.msk [vmem:[%s1687 + $0x20] sm:$0xff] %vm1396, %v1648
        %1693 = vst.msk [vmem:[%s1687 + $0x28] sm:$0xff] %vm1396, %v1650
        %1694 = vst.msk [vmem:[%s1687 + $0x30] sm:$0xff] %vm1396, %v1652
        %1695 = vst.msk [vmem:[%s1687 + $0x38] sm:$0xff] %vm1396, %v1654
        %1696 = vst.msk [vmem:[%s1687 + $0x40] sm:$0xff] %vm1396, %v1656
        %1697 = vst.msk [vmem:[%s1687 + $0x48] sm:$0xff] %vm1396, %v1658
        %1698 = vst.msk [vmem:[%s1687 + $0x50] sm:$0xff] %vm1396, %v1660
        %1699 = vst.msk [vmem:[%s1687 + $0x58] sm:$0xff] %vm1396, %v1662
        %1700 = vst.msk [vmem:[%s1687 + $0x60] sm:$0xff] %vm1396, %v1664
        %1701 = vst.msk [vmem:[%s1687 + $0x68] sm:$0xff] %vm1396, %v1666
        %1702 = vst.msk [vmem:[%s1687 + $0x70] sm:$0xff] %vm1396, %v1668
        %1703 = vst.msk [vmem:[%s1687 + $0x78] sm:$0xff] %vm1396, %v1670
        %v1704 = vld [vmem:[#allocation2 + $0x8] sm:$0xff]
        %v1705 = vld [vmem:[#allocation2 + $0x18] sm:$0xff]
        %v1706 = vld [vmem:[#allocation2 + $0x28] sm:$0xff]
        %v1707 = vld [vmem:[#allocation2 + $0x38] sm:$0xff]
        %v1708 = vld [vmem:[#allocation2 + $0x48] sm:$0xff]
        %v1709 = vld [vmem:[#allocation2 + $0x58] sm:$0xff]
        %v1710 = vld [vmem:[#allocation2 + $0x68] sm:$0xff]
        %v1711 = vld [vmem:[#allocation2 + $0x78] sm:$0xff]
        %v1712 = vld [vmem:[#allocation2 + $0x88] sm:$0xff]
        %v1713 = vld [vmem:[#allocation2 + $0x98] sm:$0xff]
        %v1714 = vld [vmem:[#allocation2 + $0xa8] sm:$0xff]
        %v1715 = vld [vmem:[#allocation2 + $0xb8] sm:$0xff]
        %v1716 = vld [vmem:[#allocation2 + $0xc8] sm:$0xff]
        %v1717 = vld [vmem:[#allocation2 + $0xd8] sm:$0xff]
        %v1718 = vld [vmem:[#allocation2 + $0xe8] sm:$0xff]
        %v1719 = vld [vmem:[#allocation2 + $0xf8] sm:$0xff]
        %s1720 = scalar_lea.vmem %s351, 512 [#allocation14]
        %1721 = vst.msk [vmem:[%s1720] sm:$0xff] %vm1396, %v1704
        %1722 = vst.msk [vmem:[%s1720 + $0x8] sm:$0xff] %vm1396, %v1705
        %1723 = vst.msk [vmem:[%s1720 + $0x10] sm:$0xff] %vm1396, %v1706
        %1724 = vst.msk [vmem:[%s1720 + $0x18] sm:$0xff] %vm1396, %v1707
        %1725 = vst.msk [vmem:[%s1720 + $0x20] sm:$0xff] %vm1396, %v1708
        %1726 = vst.msk [vmem:[%s1720 + $0x28] sm:$0xff] %vm1396, %v1709
        %1727 = vst.msk [vmem:[%s1720 + $0x30] sm:$0xff] %vm1396, %v1710
        %1728 = vst.msk [vmem:[%s1720 + $0x38] sm:$0xff] %vm1396, %v1711
        %1729 = vst.msk [vmem:[%s1720 + $0x40] sm:$0xff] %vm1396, %v1712
        %1730 = vst.msk [vmem:[%s1720 + $0x48] sm:$0xff] %vm1396, %v1713
        %1731 = vst.msk [vmem:[%s1720 + $0x50] sm:$0xff] %vm1396, %v1714
        %1732 = vst.msk [vmem:[%s1720 + $0x58] sm:$0xff] %vm1396, %v1715
        %1733 = vst.msk [vmem:[%s1720 + $0x60] sm:$0xff] %vm1396, %v1716
        %1734 = vst.msk [vmem:[%s1720 + $0x68] sm:$0xff] %vm1396, %v1717
        %1735 = vst.msk [vmem:[%s1720 + $0x70] sm:$0xff] %vm1396, %v1718
        %1736 = vst.msk [vmem:[%s1720 + $0x78] sm:$0xff] %vm1396, %v1719
        %v1737 = vld [vmem:[#allocation2 + $0x8] sm:$0xff]
        %v1738 = vld [vmem:[#allocation2 + $0x18] sm:$0xff]
        %v1739 = vld [vmem:[#allocation2 + $0x28] sm:$0xff]
        %v1740 = vld [vmem:[#allocation2 + $0x38] sm:$0xff]
        %v1741 = vld [vmem:[#allocation2 + $0x48] sm:$0xff]
        %v1742 = vld [vmem:[#allocation2 + $0x58] sm:$0xff]
        %v1743 = vld [vmem:[#allocation2 + $0x68] sm:$0xff]
        %v1744 = vld [vmem:[#allocation2 + $0x78] sm:$0xff]
        %v1745 = vld [vmem:[#allocation2 + $0x88] sm:$0xff]
        %v1746 = vld [vmem:[#allocation2 + $0x98] sm:$0xff]
        %v1747 = vld [vmem:[#allocation2 + $0xa8] sm:$0xff]
        %v1748 = vld [vmem:[#allocation2 + $0xb8] sm:$0xff]
        %v1749 = vld [vmem:[#allocation2 + $0xc8] sm:$0xff]
        %v1750 = vld [vmem:[#allocation2 + $0xd8] sm:$0xff]
        %v1751 = vld [vmem:[#allocation2 + $0xe8] sm:$0xff]
        %v1752 = vld [vmem:[#allocation2 + $0xf8] sm:$0xff]
        %1769 = vrot.lane.b32.xlu0 %v1737, 96
        %v1770 = vpop.permute.xlu0 %1769
        %1771 = vrot.lane.b32.xlu0 %v1738, 96
        %v1772 = vpop.permute.xlu0 %1771
        %1773 = vrot.lane.b32.xlu0 %v1739, 96
        %v1774 = vpop.permute.xlu0 %1773
        %1775 = vrot.lane.b32.xlu0 %v1740, 96
        %v1776 = vpop.permute.xlu0 %1775
        %1777 = vrot.lane.b32.xlu0 %v1741, 96
        %v1778 = vpop.permute.xlu0 %1777
        %1779 = vrot.lane.b32.xlu0 %v1742, 96
        %v1780 = vpop.permute.xlu0 %1779
        %1781 = vrot.lane.b32.xlu0 %v1743, 96
        %v1782 = vpop.permute.xlu0 %1781
        %1783 = vrot.lane.b32.xlu0 %v1744, 96
        %v1784 = vpop.permute.xlu0 %1783
        %1785 = vrot.lane.b32.xlu0 %v1745, 96
        %v1786 = vpop.permute.xlu0 %1785
        %1787 = vrot.lane.b32.xlu0 %v1746, 96
        %v1788 = vpop.permute.xlu0 %1787
        %1789 = vrot.lane.b32.xlu0 %v1747, 96
        %v1790 = vpop.permute.xlu0 %1789
        %1791 = vrot.lane.b32.xlu0 %v1748, 96
        %v1792 = vpop.permute.xlu0 %1791
        %1793 = vrot.lane.b32.xlu0 %v1749, 96
        %v1794 = vpop.permute.xlu0 %1793
        %1795 = vrot.lane.b32.xlu0 %v1750, 96
        %v1796 = vpop.permute.xlu0 %1795
        %1797 = vrot.lane.b32.xlu0 %v1751, 96
        %v1798 = vpop.permute.xlu0 %1797
        %1799 = vrot.lane.b32.xlu0 %v1752, 96
        %v1800 = vpop.permute.xlu0 %1799
        %s1817 = scalar_lea.vmem %s351, 640 [#allocation14]
        %1818 = vst.msk [vmem:[%s1817] sm:$0xff] %vm1396, %v1770
        %1819 = vst.msk [vmem:[%s1817 + $0x8] sm:$0xff] %vm1396, %v1772
        %1820 = vst.msk [vmem:[%s1817 + $0x10] sm:$0xff] %vm1396, %v1774
        %1821 = vst.msk [vmem:[%s1817 + $0x18] sm:$0xff] %vm1396, %v1776
        %1822 = vst.msk [vmem:[%s1817 + $0x20] sm:$0xff] %vm1396, %v1778
        %1823 = vst.msk [vmem:[%s1817 + $0x28] sm:$0xff] %vm1396, %v1780
        %1824 = vst.msk [vmem:[%s1817 + $0x30] sm:$0xff] %vm1396, %v1782
        %1825 = vst.msk [vmem:[%s1817 + $0x38] sm:$0xff] %vm1396, %v1784
        %1826 = vst.msk [vmem:[%s1817 + $0x40] sm:$0xff] %vm1396, %v1786
        %1827 = vst.msk [vmem:[%s1817 + $0x48] sm:$0xff] %vm1396, %v1788
        %1828 = vst.msk [vmem:[%s1817 + $0x50] sm:$0xff] %vm1396, %v1790
        %1829 = vst.msk [vmem:[%s1817 + $0x58] sm:$0xff] %vm1396, %v1792
        %1830 = vst.msk [vmem:[%s1817 + $0x60] sm:$0xff] %vm1396, %v1794
        %1831 = vst.msk [vmem:[%s1817 + $0x68] sm:$0xff] %vm1396, %v1796
        %1832 = vst.msk [vmem:[%s1817 + $0x70] sm:$0xff] %vm1396, %v1798
        %1833 = vst.msk [vmem:[%s1817 + $0x78] sm:$0xff] %vm1396, %v1800
        %v1834 = vld [vmem:[#allocation2 + $0x8] sm:$0xff]
        %v1835 = vld [vmem:[#allocation2 + $0x18] sm:$0xff]
        %v1836 = vld [vmem:[#allocation2 + $0x28] sm:$0xff]
        %v1837 = vld [vmem:[#allocation2 + $0x38] sm:$0xff]
        %v1838 = vld [vmem:[#allocation2 + $0x48] sm:$0xff]
        %v1839 = vld [vmem:[#allocation2 + $0x58] sm:$0xff]
        %v1840 = vld [vmem:[#allocation2 + $0x68] sm:$0xff]
        %v1841 = vld [vmem:[#allocation2 + $0x78] sm:$0xff]
        %v1842 = vld [vmem:[#allocation2 + $0x88] sm:$0xff]
        %v1843 = vld [vmem:[#allocation2 + $0x98] sm:$0xff]
        %v1844 = vld [vmem:[#allocation2 + $0xa8] sm:$0xff]
        %v1845 = vld [vmem:[#allocation2 + $0xb8] sm:$0xff]
        %v1846 = vld [vmem:[#allocation2 + $0xc8] sm:$0xff]
        %v1847 = vld [vmem:[#allocation2 + $0xd8] sm:$0xff]
        %v1848 = vld [vmem:[#allocation2 + $0xe8] sm:$0xff]
        %v1849 = vld [vmem:[#allocation2 + $0xf8] sm:$0xff]
        %1866 = vrot.lane.b32.xlu0 %v1834, 64
        %v1867 = vpop.permute.xlu0 %1866
        %1868 = vrot.lane.b32.xlu0 %v1835, 64
        %v1869 = vpop.permute.xlu0 %1868
        %1870 = vrot.lane.b32.xlu0 %v1836, 64
        %v1871 = vpop.permute.xlu0 %1870
        %1872 = vrot.lane.b32.xlu0 %v1837, 64
        %v1873 = vpop.permute.xlu0 %1872
        %1874 = vrot.lane.b32.xlu0 %v1838, 64
        %v1875 = vpop.permute.xlu0 %1874
        %1876 = vrot.lane.b32.xlu0 %v1839, 64
        %v1877 = vpop.permute.xlu0 %1876
        %1878 = vrot.lane.b32.xlu0 %v1840, 64
        %v1879 = vpop.permute.xlu0 %1878
        %1880 = vrot.lane.b32.xlu0 %v1841, 64
        %v1881 = vpop.permute.xlu0 %1880
        %1882 = vrot.lane.b32.xlu0 %v1842, 64
        %v1883 = vpop.permute.xlu0 %1882
        %1884 = vrot.lane.b32.xlu0 %v1843, 64
        %v1885 = vpop.permute.xlu0 %1884
        %1886 = vrot.lane.b32.xlu0 %v1844, 64
        %v1887 = vpop.permute.xlu0 %1886
        %1888 = vrot.lane.b32.xlu0 %v1845, 64
        %v1889 = vpop.permute.xlu0 %1888
        %1890 = vrot.lane.b32.xlu0 %v1846, 64
        %v1891 = vpop.permute.xlu0 %1890
        %1892 = vrot.lane.b32.xlu0 %v1847, 64
        %v1893 = vpop.permute.xlu0 %1892
        %1894 = vrot.lane.b32.xlu0 %v1848, 64
        %v1895 = vpop.permute.xlu0 %1894
        %1896 = vrot.lane.b32.xlu0 %v1849, 64
        %v1897 = vpop.permute.xlu0 %1896
        %s1914 = scalar_lea.vmem %s351, 768 [#allocation14]
        %1915 = vst.msk [vmem:[%s1914] sm:$0xff] %vm1396, %v1867
        %1916 = vst.msk [vmem:[%s1914 + $0x8] sm:$0xff] %vm1396, %v1869
        %1917 = vst.msk [vmem:[%s1914 + $0x10] sm:$0xff] %vm1396, %v1871
        %1918 = vst.msk [vmem:[%s1914 + $0x18] sm:$0xff] %vm1396, %v1873
        %1919 = vst.msk [vmem:[%s1914 + $0x20] sm:$0xff] %vm1396, %v1875
        %1920 = vst.msk [vmem:[%s1914 + $0x28] sm:$0xff] %vm1396, %v1877
        %1921 = vst.msk [vmem:[%s1914 + $0x30] sm:$0xff] %vm1396, %v1879
        %1922 = vst.msk [vmem:[%s1914 + $0x38] sm:$0xff] %vm1396, %v1881
        %1923 = vst.msk [vmem:[%s1914 + $0x40] sm:$0xff] %vm1396, %v1883
        %1924 = vst.msk [vmem:[%s1914 + $0x48] sm:$0xff] %vm1396, %v1885
        %1925 = vst.msk [vmem:[%s1914 + $0x50] sm:$0xff] %vm1396, %v1887
        %1926 = vst.msk [vmem:[%s1914 + $0x58] sm:$0xff] %vm1396, %v1889
        %1927 = vst.msk [vmem:[%s1914 + $0x60] sm:$0xff] %vm1396, %v1891
        %1928 = vst.msk [vmem:[%s1914 + $0x68] sm:$0xff] %vm1396, %v1893
        %1929 = vst.msk [vmem:[%s1914 + $0x70] sm:$0xff] %vm1396, %v1895
        %1930 = vst.msk [vmem:[%s1914 + $0x78] sm:$0xff] %vm1396, %v1897
        %v1931 = vld [vmem:[#allocation2 + $0x8] sm:$0xff]
        %v1932 = vld [vmem:[#allocation2 + $0x18] sm:$0xff]
        %v1933 = vld [vmem:[#allocation2 + $0x28] sm:$0xff]
        %v1934 = vld [vmem:[#allocation2 + $0x38] sm:$0xff]
        %v1935 = vld [vmem:[#allocation2 + $0x48] sm:$0xff]
        %v1936 = vld [vmem:[#allocation2 + $0x58] sm:$0xff]
        %v1937 = vld [vmem:[#allocation2 + $0x68] sm:$0xff]
        %v1938 = vld [vmem:[#allocation2 + $0x78] sm:$0xff]
        %v1939 = vld [vmem:[#allocation2 + $0x88] sm:$0xff]
        %v1940 = vld [vmem:[#allocation2 + $0x98] sm:$0xff]
        %v1941 = vld [vmem:[#allocation2 + $0xa8] sm:$0xff]
        %v1942 = vld [vmem:[#allocation2 + $0xb8] sm:$0xff]
        %v1943 = vld [vmem:[#allocation2 + $0xc8] sm:$0xff]
        %v1944 = vld [vmem:[#allocation2 + $0xd8] sm:$0xff]
        %v1945 = vld [vmem:[#allocation2 + $0xe8] sm:$0xff]
        %v1946 = vld [vmem:[#allocation2 + $0xf8] sm:$0xff]
        %1963 = vrot.lane.b32.xlu0 %v1931, 32
        %v1964 = vpop.permute.xlu0 %1963
        %1965 = vrot.lane.b32.xlu0 %v1932, 32
        %v1966 = vpop.permute.xlu0 %1965
        %1967 = vrot.lane.b32.xlu0 %v1933, 32
        %v1968 = vpop.permute.xlu0 %1967
        %1969 = vrot.lane.b32.xlu0 %v1934, 32
        %v1970 = vpop.permute.xlu0 %1969
        %1971 = vrot.lane.b32.xlu0 %v1935, 32
        %v1972 = vpop.permute.xlu0 %1971
        %1973 = vrot.lane.b32.xlu0 %v1936, 32
        %v1974 = vpop.permute.xlu0 %1973
        %1975 = vrot.lane.b32.xlu0 %v1937, 32
        %v1976 = vpop.permute.xlu0 %1975
        %1977 = vrot.lane.b32.xlu0 %v1938, 32
        %v1978 = vpop.permute.xlu0 %1977
        %1979 = vrot.lane.b32.xlu0 %v1939, 32
        %v1980 = vpop.permute.xlu0 %1979
        %1981 = vrot.lane.b32.xlu0 %v1940, 32
        %v1982 = vpop.permute.xlu0 %1981
        %1983 = vrot.lane.b32.xlu0 %v1941, 32
        %v1984 = vpop.permute.xlu0 %1983
        %1985 = vrot.lane.b32.xlu0 %v1942, 32
        %v1986 = vpop.permute.xlu0 %1985
        %1987 = vrot.lane.b32.xlu0 %v1943, 32
        %v1988 = vpop.permute.xlu0 %1987
        %1989 = vrot.lane.b32.xlu0 %v1944, 32
        %v1990 = vpop.permute.xlu0 %1989
        %1991 = vrot.lane.b32.xlu0 %v1945, 32
        %v1992 = vpop.permute.xlu0 %1991
        %1993 = vrot.lane.b32.xlu0 %v1946, 32
        %v1994 = vpop.permute.xlu0 %1993
        %s2011 = scalar_lea.vmem %s351, 896 [#allocation14]
        %2012 = vst.msk [vmem:[%s2011] sm:$0xff] %vm1396, %v1964
        %2013 = vst.msk [vmem:[%s2011 + $0x8] sm:$0xff] %vm1396, %v1966
        %2014 = vst.msk [vmem:[%s2011 + $0x10] sm:$0xff] %vm1396, %v1968
        %2015 = vst.msk [vmem:[%s2011 + $0x18] sm:$0xff] %vm1396, %v1970
        %2016 = vst.msk [vmem:[%s2011 + $0x20] sm:$0xff] %vm1396, %v1972
        %2017 = vst.msk [vmem:[%s2011 + $0x28] sm:$0xff] %vm1396, %v1974
        %2018 = vst.msk [vmem:[%s2011 + $0x30] sm:$0xff] %vm1396, %v1976
        %2019 = vst.msk [vmem:[%s2011 + $0x38] sm:$0xff] %vm1396, %v1978
        %2020 = vst.msk [vmem:[%s2011 + $0x40] sm:$0xff] %vm1396, %v1980
        %2021 = vst.msk [vmem:[%s2011 + $0x48] sm:$0xff] %vm1396, %v1982
        %2022 = vst.msk [vmem:[%s2011 + $0x50] sm:$0xff] %vm1396, %v1984
        %2023 = vst.msk [vmem:[%s2011 + $0x58] sm:$0xff] %vm1396, %v1986
        %2024 = vst.msk [vmem:[%s2011 + $0x60] sm:$0xff] %vm1396, %v1988
        %2025 = vst.msk [vmem:[%s2011 + $0x68] sm:$0xff] %vm1396, %v1990
        %2026 = vst.msk [vmem:[%s2011 + $0x70] sm:$0xff] %vm1396, %v1992
        %2027 = vst.msk [vmem:[%s2011 + $0x78] sm:$0xff] %vm1396, %v1994
        %s2028 = sand.u32 %s160, 1
        %s2029 = scalar_lea.sflag [#allocation6], %s2028
        %s2030 = sand.u32 %s160, 1
        %s2031 = smul.addr %s2030, 256
        %s2032 = scalar_lea.vmem [#allocation13], %s2031
        %s2033 = sand.u32 %s188, 1
        %s2034 = sand.u32 %s188, 1
        %s2035 = smul.addr %s2034, 1024
        %s2036 = scalar_lea.vmem [#allocation14], %s2035
        // Predicated region
        $region61: #{tpu_custom_call.1} parent=39 // pred_check
          %p2037 = pneg %p170
        $region62: #{tpu_custom_call.1} parent=39 // pred_check_branch
          %2039 = sbr.rel (%p2037) target = $region64
        $region63: #{tpu_custom_call.1} parent=39 // pred_region
          %s2041 = ssub.s32 4096, 4096
          %2042 = vsyncadd %s2029, %s2041
          %s2043 = smul.addr %s30, 64
          %s2044 = sadd.s32 %s31, %s2043
          %s2045 = smul.addr %s2044, 128
          %s2046 = scalar_lea.hbm %s5, %s2045
          %s2047 = sshll.u32 %s2032, 4
          %s2048 = int_to_ptr.vmem [resolvable:$true] %s2047
          %2053 = dma.vmem_to_hbm [thread:$0]  %s2048, 4096, %s2046, %s2029, 128, 256, 8
        $region64: #{tpu_custom_call.1} parent=39 // pred_fallthru
          _
        // Predicated region
        $region65: #{tpu_custom_call.1} parent=39 // pred_check
          %p2054 = pneg %p198
        $region66: #{tpu_custom_call.1} parent=39 // pred_check_branch
          %2056 = sbr.rel (%p2054) target = $region68
        $region67: #{tpu_custom_call.1} parent=39 // pred_region
          %s2057 = smul.u32 16, %s31
          %s2058 = smul.addr %s30, 256
          %s2059 = sadd.s32 %s2057, %s2058
          %s2060 = smul.addr %s2059, 8
          %s2061 = scalar_lea.vmem %s6, %s2060
          // Predicated region
          $region69: #{tpu_custom_call.1} parent=67 // pred_check
            _
          $region70: #{tpu_custom_call.1} parent=67 // pred_check_branch
            %2063 = sbr.rel (0) target = $region72
          $region71: #{tpu_custom_call.1} parent=67 // pred_region
            // Predicated region
            $region73: #{tpu_custom_call.1} parent=71 // pred_check
              _
            $region74: #{tpu_custom_call.1} parent=71 // pred_check_branch
              %2065 = sbr.rel (0) target = $region76
            $region75: #{tpu_custom_call.1} parent=71 // pred_region
              // Predicated region
              $region88: #{tpu_custom_call.1} parent=75 // pred_check
                _
              $region89: #{tpu_custom_call.1} parent=75 // pred_check_branch
                %2335 = sbr.rel (0) target = $region91
              $region90: #{tpu_custom_call.1} parent=75 // pred_region
                loop: start=0, step=1, limit=1
                $region92: #{tpu_custom_call.1} parent=90 // loop_pre_header
                  _
                $region93: #{tpu_custom_call.1} parent=90 // loop_header
                  %s2337 = sphi 0, %s2341
                  %p2338 = scmp.ge.s32.totalorder %s2337, 1
                  %s2342 = sphi %s2036, %s2036
                  %s2343 = sphi %s2061, %s2061
                $region94: #{tpu_custom_call.1} parent=90 // loop_header_branch
                  %2340 = sbr.rel (%p2338) target = $region98
                $region95: #{tpu_custom_call.1} parent=90 // loop_body
                  %v2344 = vld [vmem:[%s2342] sm:$0xff]
                  %2345 = vst [vmem:[%s2343] sm:$0xff] %v2344
                  %v2346 = vld [vmem:[%s2342 + $0x8] sm:$0xff]
                  %2347 = vst [vmem:[%s2343 + $0x8] sm:$0xff] %v2346
                  %v2348 = vld [vmem:[%s2342 + $0x10] sm:$0xff]
                  %2349 = vst [vmem:[%s2343 + $0x10] sm:$0xff] %v2348
                  %v2350 = vld [vmem:[%s2342 + $0x18] sm:$0xff]
                  %2351 = vst [vmem:[%s2343 + $0x18] sm:$0xff] %v2350
                  %v2352 = vld [vmem:[%s2342 + $0x20] sm:$0xff]
                  %2353 = vst [vmem:[%s2343 + $0x20] sm:$0xff] %v2352
                  %v2354 = vld [vmem:[%s2342 + $0x28] sm:$0xff]
                  %2355 = vst [vmem:[%s2343 + $0x28] sm:$0xff] %v2354
                  %v2356 = vld [vmem:[%s2342 + $0x30] sm:$0xff]
                  %2357 = vst [vmem:[%s2343 + $0x30] sm:$0xff] %v2356
                  %v2358 = vld [vmem:[%s2342 + $0x38] sm:$0xff]
                  %2359 = vst [vmem:[%s2343 + $0x38] sm:$0xff] %v2358
                  %v2360 = vld [vmem:[%s2342 + $0x40] sm:$0xff]
                  %2361 = vst [vmem:[%s2343 + $0x40] sm:$0xff] %v2360
                  %v2362 = vld [vmem:[%s2342 + $0x48] sm:$0xff]
                  %2363 = vst [vmem:[%s2343 + $0x48] sm:$0xff] %v2362
                  %v2364 = vld [vmem:[%s2342 + $0x50] sm:$0xff]
                  %2365 = vst [vmem:[%s2343 + $0x50] sm:$0xff] %v2364
                  %v2366 = vld [vmem:[%s2342 + $0x58] sm:$0xff]
                  %2367 = vst [vmem:[%s2343 + $0x58] sm:$0xff] %v2366
                  %v2368 = vld [vmem:[%s2342 + $0x60] sm:$0xff]
                  %2369 = vst [vmem:[%s2343 + $0x60] sm:$0xff] %v2368
                  %v2370 = vld [vmem:[%s2342 + $0x68] sm:$0xff]
                  %2371 = vst [vmem:[%s2343 + $0x68] sm:$0xff] %v2370
                  %v2372 = vld [vmem:[%s2342 + $0x70] sm:$0xff]
                  %2373 = vst [vmem:[%s2343 + $0x70] sm:$0xff] %v2372
                  %v2374 = vld [vmem:[%s2342 + $0x78] sm:$0xff]
                  %2375 = vst [vmem:[%s2343 + $0x78] sm:$0xff] %v2374
                  %v2376 = vld [vmem:[%s2342 + $0x80] sm:$0xff]
                  %2377 = vst [vmem:[%s2343 + $0x100] sm:$0xff] %v2376
                  %v2378 = vld [vmem:[%s2342 + $0x88] sm:$0xff]
                  %2379 = vst [vmem:[%s2343 + $0x108] sm:$0xff] %v2378
                  %v2380 = vld [vmem:[%s2342 + $0x90] sm:$0xff]
                  %2381 = vst [vmem:[%s2343 + $0x110] sm:$0xff] %v2380
                  %v2382 = vld [vmem:[%s2342 + $0x98] sm:$0xff]
                  %2383 = vst [vmem:[%s2343 + $0x118] sm:$0xff] %v2382
                  %v2384 = vld [vmem:[%s2342 + $0xa0] sm:$0xff]
                  %2385 = vst [vmem:[%s2343 + $0x120] sm:$0xff] %v2384
                  %v2386 = vld [vmem:[%s2342 + $0xa8] sm:$0xff]
                  %2387 = vst [vmem:[%s2343 + $0x128] sm:$0xff] %v2386
                  %v2388 = vld [vmem:[%s2342 + $0xb0] sm:$0xff]
                  %2389 = vst [vmem:[%s2343 + $0x130] sm:$0xff] %v2388
                  %v2390 = vld [vmem:[%s2342 + $0xb8] sm:$0xff]
                  %2391 = vst [vmem:[%s2343 + $0x138] sm:$0xff] %v2390
                  %v2392 = vld [vmem:[%s2342 + $0xc0] sm:$0xff]
                  %2393 = vst [vmem:[%s2343 + $0x140] sm:$0xff] %v2392
                  %v2394 = vld [vmem:[%s2342 + $0xc8] sm:$0xff]
                  %2395 = vst [vmem:[%s2343 + $0x148] sm:$0xff] %v2394
                  %v2396 = vld [vmem:[%s2342 + $0xd0] sm:$0xff]
                  %2397 = vst [vmem:[%s2343 + $0x150] sm:$0xff] %v2396
                  %v2398 = vld [vmem:[%s2342 + $0xd8] sm:$0xff]
                  %2399 = vst [vmem:[%s2343 + $0x158] sm:$0xff] %v2398
                  %v2400 = vld [vmem:[%s2342 + $0xe0] sm:$0xff]
                  %2401 = vst [vmem:[%s2343 + $0x160] sm:$0xff] %v2400
                  %v2402 = vld [vmem:[%s2342 + $0xe8] sm:$0xff]
                  %2403 = vst [vmem:[%s2343 + $0x168] sm:$0xff] %v2402
                  %v2404 = vld [vmem:[%s2342 + $0xf0] sm:$0xff]
                  %2405 = vst [vmem:[%s2343 + $0x170] sm:$0xff] %v2404
                  %v2406 = vld [vmem:[%s2342 + $0xf8] sm:$0xff]
                  %2407 = vst [vmem:[%s2343 + $0x178] sm:$0xff] %v2406
                  %v2408 = vld [vmem:[%s2342 + $0x100] sm:$0xff]
                  %2409 = vst [vmem:[%s2343 + $0x200] sm:$0xff] %v2408
                  %v2410 = vld [vmem:[%s2342 + $0x108] sm:$0xff]
                  %2411 = vst [vmem:[%s2343 + $0x208] sm:$0xff] %v2410
                  %v2412 = vld [vmem:[%s2342 + $0x110] sm:$0xff]
                  %2413 = vst [vmem:[%s2343 + $0x210] sm:$0xff] %v2412
                  %v2414 = vld [vmem:[%s2342 + $0x118] sm:$0xff]
                  %2415 = vst [vmem:[%s2343 + $0x218] sm:$0xff] %v2414
                  %v2416 = vld [vmem:[%s2342 + $0x120] sm:$0xff]
                  %2417 = vst [vmem:[%s2343 + $0x220] sm:$0xff] %v2416
                  %v2418 = vld [vmem:[%s2342 + $0x128] sm:$0xff]
                  %2419 = vst [vmem:[%s2343 + $0x228] sm:$0xff] %v2418
                  %v2420 = vld [vmem:[%s2342 + $0x130] sm:$0xff]
                  %2421 = vst [vmem:[%s2343 + $0x230] sm:$0xff] %v2420
                  %v2422 = vld [vmem:[%s2342 + $0x138] sm:$0xff]
                  %2423 = vst [vmem:[%s2343 + $0x238] sm:$0xff] %v2422
                  %v2424 = vld [vmem:[%s2342 + $0x140] sm:$0xff]
                  %2425 = vst [vmem:[%s2343 + $0x240] sm:$0xff] %v2424
                  %v2426 = vld [vmem:[%s2342 + $0x148] sm:$0xff]
                  %2427 = vst [vmem:[%s2343 + $0x248] sm:$0xff] %v2426
                  %v2428 = vld [vmem:[%s2342 + $0x150] sm:$0xff]
                  %2429 = vst [vmem:[%s2343 + $0x250] sm:$0xff] %v2428
                  %v2430 = vld [vmem:[%s2342 + $0x158] sm:$0xff]
                  %2431 = vst [vmem:[%s2343 + $0x258] sm:$0xff] %v2430
                  %v2432 = vld [vmem:[%s2342 + $0x160] sm:$0xff]
                  %2433 = vst [vmem:[%s2343 + $0x260] sm:$0xff] %v2432
                  %v2434 = vld [vmem:[%s2342 + $0x168] sm:$0xff]
                  %2435 = vst [vmem:[%s2343 + $0x268] sm:$0xff] %v2434
                  %v2436 = vld [vmem:[%s2342 + $0x170] sm:$0xff]
                  %2437 = vst [vmem:[%s2343 + $0x270] sm:$0xff] %v2436
                  %v2438 = vld [vmem:[%s2342 + $0x178] sm:$0xff]
                  %2439 = vst [vmem:[%s2343 + $0x278] sm:$0xff] %v2438
                  %v2440 = vld [vmem:[%s2342 + $0x180] sm:$0xff]
                  %2441 = vst [vmem:[%s2343 + $0x300] sm:$0xff] %v2440
                  %v2442 = vld [vmem:[%s2342 + $0x188] sm:$0xff]
                  %2443 = vst [vmem:[%s2343 + $0x308] sm:$0xff] %v2442
                  %v2444 = vld [vmem:[%s2342 + $0x190] sm:$0xff]
                  %2445 = vst [vmem:[%s2343 + $0x310] sm:$0xff] %v2444
                  %v2446 = vld [vmem:[%s2342 + $0x198] sm:$0xff]
                  %2447 = vst [vmem:[%s2343 + $0x318] sm:$0xff] %v2446
                  %v2448 = vld [vmem:[%s2342 + $0x1a0] sm:$0xff]
                  %2449 = vst [vmem:[%s2343 + $0x320] sm:$0xff] %v2448
                  %v2450 = vld [vmem:[%s2342 + $0x1a8] sm:$0xff]
                  %2451 = vst [vmem:[%s2343 + $0x328] sm:$0xff] %v2450
                  %v2452 = vld [vmem:[%s2342 + $0x1b0] sm:$0xff]
                  %2453 = vst [vmem:[%s2343 + $0x330] sm:$0xff] %v2452
                  %v2454 = vld [vmem:[%s2342 + $0x1b8] sm:$0xff]
                  %2455 = vst [vmem:[%s2343 + $0x338] sm:$0xff] %v2454
                  %v2456 = vld [vmem:[%s2342 + $0x1c0] sm:$0xff]
                  %2457 = vst [vmem:[%s2343 + $0x340] sm:$0xff] %v2456
                  %v2458 = vld [vmem:[%s2342 + $0x1c8] sm:$0xff]
                  %2459 = vst [vmem:[%s2343 + $0x348] sm:$0xff] %v2458
                  %v2460 = vld [vmem:[%s2342 + $0x1d0] sm:$0xff]
                  %2461 = vst [vmem:[%s2343 + $0x350] sm:$0xff] %v2460
                  %v2462 = vld [vmem:[%s2342 + $0x1d8] sm:$0xff]
                  %2463 = vst [vmem:[%s2343 + $0x358] sm:$0xff] %v2462
                  %v2464 = vld [vmem:[%s2342 + $0x1e0] sm:$0xff]
                  %2465 = vst [vmem:[%s2343 + $0x360] sm:$0xff] %v2464
                  %v2466 = vld [vmem:[%s2342 + $0x1e8] sm:$0xff]
                  %2467 = vst [vmem:[%s2343 + $0x368] sm:$0xff] %v2466
                  %v2468 = vld [vmem:[%s2342 + $0x1f0] sm:$0xff]
                  %2469 = vst [vmem:[%s2343 + $0x370] sm:$0xff] %v2468
                  %v2470 = vld [vmem:[%s2342 + $0x1f8] sm:$0xff]
                  %2471 = vst [vmem:[%s2343 + $0x378] sm:$0xff] %v2470
                  %v2472 = vld [vmem:[%s2342 + $0x200] sm:$0xff]
                  %2473 = vst [vmem:[%s2343 + $0x400] sm:$0xff] %v2472
                  %v2474 = vld [vmem:[%s2342 + $0x208] sm:$0xff]
                  %2475 = vst [vmem:[%s2343 + $0x408] sm:$0xff] %v2474
                  %v2476 = vld [vmem:[%s2342 + $0x210] sm:$0xff]
                  %2477 = vst [vmem:[%s2343 + $0x410] sm:$0xff] %v2476
                  %v2478 = vld [vmem:[%s2342 + $0x218] sm:$0xff]
                  %2479 = vst [vmem:[%s2343 + $0x418] sm:$0xff] %v2478
                  %v2480 = vld [vmem:[%s2342 + $0x220] sm:$0xff]
                  %2481 = vst [vmem:[%s2343 + $0x420] sm:$0xff] %v2480
                  %v2482 = vld [vmem:[%s2342 + $0x228] sm:$0xff]
                  %2483 = vst [vmem:[%s2343 + $0x428] sm:$0xff] %v2482
                  %v2484 = vld [vmem:[%s2342 + $0x230] sm:$0xff]
                  %2485 = vst [vmem:[%s2343 + $0x430] sm:$0xff] %v2484
                  %v2486 = vld [vmem:[%s2342 + $0x238] sm:$0xff]
                  %2487 = vst [vmem:[%s2343 + $0x438] sm:$0xff] %v2486
                  %v2488 = vld [vmem:[%s2342 + $0x240] sm:$0xff]
                  %2489 = vst [vmem:[%s2343 + $0x440] sm:$0xff] %v2488
                  %v2490 = vld [vmem:[%s2342 + $0x248] sm:$0xff]
                  %2491 = vst [vmem:[%s2343 + $0x448] sm:$0xff] %v2490
                  %v2492 = vld [vmem:[%s2342 + $0x250] sm:$0xff]
                  %2493 = vst [vmem:[%s2343 + $0x450] sm:$0xff] %v2492
                  %v2494 = vld [vmem:[%s2342 + $0x258] sm:$0xff]
                  %2495 = vst [vmem:[%s2343 + $0x458] sm:$0xff] %v2494
                  %v2496 = vld [vmem:[%s2342 + $0x260] sm:$0xff]
                  %2497 = vst [vmem:[%s2343 + $0x460] sm:$0xff] %v2496
                  %v2498 = vld [vmem:[%s2342 + $0x268] sm:$0xff]
                  %2499 = vst [vmem:[%s2343 + $0x468] sm:$0xff] %v2498
                  %v2500 = vld [vmem:[%s2342 + $0x270] sm:$0xff]
                  %2501 = vst [vmem:[%s2343 + $0x470] sm:$0xff] %v2500
                  %v2502 = vld [vmem:[%s2342 + $0x278] sm:$0xff]
                  %2503 = vst [vmem:[%s2343 + $0x478] sm:$0xff] %v2502
                  %v2504 = vld [vmem:[%s2342 + $0x280] sm:$0xff]
                  %2505 = vst [vmem:[%s2343 + $0x500] sm:$0xff] %v2504
                  %v2506 = vld [vmem:[%s2342 + $0x288] sm:$0xff]
                  %2507 = vst [vmem:[%s2343 + $0x508] sm:$0xff] %v2506
                  %v2508 = vld [vmem:[%s2342 + $0x290] sm:$0xff]
                  %2509 = vst [vmem:[%s2343 + $0x510] sm:$0xff] %v2508
                  %v2510 = vld [vmem:[%s2342 + $0x298] sm:$0xff]
                  %2511 = vst [vmem:[%s2343 + $0x518] sm:$0xff] %v2510
                  %v2512 = vld [vmem:[%s2342 + $0x2a0] sm:$0xff]
                  %2513 = vst [vmem:[%s2343 + $0x520] sm:$0xff] %v2512
                  %v2514 = vld [vmem:[%s2342 + $0x2a8] sm:$0xff]
                  %2515 = vst [vmem:[%s2343 + $0x528] sm:$0xff] %v2514
                  %v2516 = vld [vmem:[%s2342 + $0x2b0] sm:$0xff]
                  %2517 = vst [vmem:[%s2343 + $0x530] sm:$0xff] %v2516
                  %v2518 = vld [vmem:[%s2342 + $0x2b8] sm:$0xff]
                  %2519 = vst [vmem:[%s2343 + $0x538] sm:$0xff] %v2518
                  %v2520 = vld [vmem:[%s2342 + $0x2c0] sm:$0xff]
                  %2521 = vst [vmem:[%s2343 + $0x540] sm:$0xff] %v2520
                  %v2522 = vld [vmem:[%s2342 + $0x2c8] sm:$0xff]
                  %2523 = vst [vmem:[%s2343 + $0x548] sm:$0xff] %v2522
                  %v2524 = vld [vmem:[%s2342 + $0x2d0] sm:$0xff]
                  %2525 = vst [vmem:[%s2343 + $0x550] sm:$0xff] %v2524
                  %v2526 = vld [vmem:[%s2342 + $0x2d8] sm:$0xff]
                  %2527 = vst [vmem:[%s2343 + $0x558] sm:$0xff] %v2526
                  %v2528 = vld [vmem:[%s2342 + $0x2e0] sm:$0xff]
                  %2529 = vst [vmem:[%s2343 + $0x560] sm:$0xff] %v2528
                  %v2530 = vld [vmem:[%s2342 + $0x2e8] sm:$0xff]
                  %2531 = vst [vmem:[%s2343 + $0x568] sm:$0xff] %v2530
                  %v2532 = vld [vmem:[%s2342 + $0x2f0] sm:$0xff]
                  %2533 = vst [vmem:[%s2343 + $0x570] sm:$0xff] %v2532
                  %v2534 = vld [vmem:[%s2342 + $0x2f8] sm:$0xff]
                  %2535 = vst [vmem:[%s2343 + $0x578] sm:$0xff] %v2534
                  %v2536 = vld [vmem:[%s2342 + $0x300] sm:$0xff]
                  %2537 = vst [vmem:[%s2343 + $0x600] sm:$0xff] %v2536
                  %v2538 = vld [vmem:[%s2342 + $0x308] sm:$0xff]
                  %2539 = vst [vmem:[%s2343 + $0x608] sm:$0xff] %v2538
                  %v2540 = vld [vmem:[%s2342 + $0x310] sm:$0xff]
                  %2541 = vst [vmem:[%s2343 + $0x610] sm:$0xff] %v2540
                  %v2542 = vld [vmem:[%s2342 + $0x318] sm:$0xff]
                  %2543 = vst [vmem:[%s2343 + $0x618] sm:$0xff] %v2542
                  %v2544 = vld [vmem:[%s2342 + $0x320] sm:$0xff]
                  %2545 = vst [vmem:[%s2343 + $0x620] sm:$0xff] %v2544
                  %v2546 = vld [vmem:[%s2342 + $0x328] sm:$0xff]
                  %2547 = vst [vmem:[%s2343 + $0x628] sm:$0xff] %v2546
                  %v2548 = vld [vmem:[%s2342 + $0x330] sm:$0xff]
                  %2549 = vst [vmem:[%s2343 + $0x630] sm:$0xff] %v2548
                  %v2550 = vld [vmem:[%s2342 + $0x338] sm:$0xff]
                  %2551 = vst [vmem:[%s2343 + $0x638] sm:$0xff] %v2550
                  %v2552 = vld [vmem:[%s2342 + $0x340] sm:$0xff]
                  %2553 = vst [vmem:[%s2343 + $0x640] sm:$0xff] %v2552
                  %v2554 = vld [vmem:[%s2342 + $0x348] sm:$0xff]
                  %2555 = vst [vmem:[%s2343 + $0x648] sm:$0xff] %v2554
                  %v2556 = vld [vmem:[%s2342 + $0x350] sm:$0xff]
                  %2557 = vst [vmem:[%s2343 + $0x650] sm:$0xff] %v2556
                  %v2558 = vld [vmem:[%s2342 + $0x358] sm:$0xff]
                  %2559 = vst [vmem:[%s2343 + $0x658] sm:$0xff] %v2558
                  %v2560 = vld [vmem:[%s2342 + $0x360] sm:$0xff]
                  %2561 = vst [vmem:[%s2343 + $0x660] sm:$0xff] %v2560
                  %v2562 = vld [vmem:[%s2342 + $0x368] sm:$0xff]
                  %2563 = vst [vmem:[%s2343 + $0x668] sm:$0xff] %v2562
                  %v2564 = vld [vmem:[%s2342 + $0x370] sm:$0xff]
                  %2565 = vst [vmem:[%s2343 + $0x670] sm:$0xff] %v2564
                  %v2566 = vld [vmem:[%s2342 + $0x378] sm:$0xff]
                  %2567 = vst [vmem:[%s2343 + $0x678] sm:$0xff] %v2566
                  %v2568 = vld [vmem:[%s2342 + $0x380] sm:$0xff]
                  %2569 = vst [vmem:[%s2343 + $0x700] sm:$0xff] %v2568
                  %v2570 = vld [vmem:[%s2342 + $0x388] sm:$0xff]
                  %2571 = vst [vmem:[%s2343 + $0x708] sm:$0xff] %v2570
                  %v2572 = vld [vmem:[%s2342 + $0x390] sm:$0xff]
                  %2573 = vst [vmem:[%s2343 + $0x710] sm:$0xff] %v2572
                  %v2574 = vld [vmem:[%s2342 + $0x398] sm:$0xff]
                  %2575 = vst [vmem:[%s2343 + $0x718] sm:$0xff] %v2574
                  %v2576 = vld [vmem:[%s2342 + $0x3a0] sm:$0xff]
                  %2577 = vst [vmem:[%s2343 + $0x720] sm:$0xff] %v2576
                  %v2578 = vld [vmem:[%s2342 + $0x3a8] sm:$0xff]
                  %2579 = vst [vmem:[%s2343 + $0x728] sm:$0xff] %v2578
                  %v2580 = vld [vmem:[%s2342 + $0x3b0] sm:$0xff]
                  %2581 = vst [vmem:[%s2343 + $0x730] sm:$0xff] %v2580
                  %v2582 = vld [vmem:[%s2342 + $0x3b8] sm:$0xff]
                  %2583 = vst [vmem:[%s2343 + $0x738] sm:$0xff] %v2582
                  %v2584 = vld [vmem:[%s2342 + $0x3c0] sm:$0xff]
                  %2585 = vst [vmem:[%s2343 + $0x740] sm:$0xff] %v2584
                  %v2586 = vld [vmem:[%s2342 + $0x3c8] sm:$0xff]
                  %2587 = vst [vmem:[%s2343 + $0x748] sm:$0xff] %v2586
                  %v2588 = vld [vmem:[%s2342 + $0x3d0] sm:$0xff]
                  %2589 = vst [vmem:[%s2343 + $0x750] sm:$0xff] %v2588
                  %v2590 = vld [vmem:[%s2342 + $0x3d8] sm:$0xff]
                  %2591 = vst [vmem:[%s2343 + $0x758] sm:$0xff] %v2590
                  %v2592 = vld [vmem:[%s2342 + $0x3e0] sm:$0xff]
                  %2593 = vst [vmem:[%s2343 + $0x760] sm:$0xff] %v2592
                  %v2594 = vld [vmem:[%s2342 + $0x3e8] sm:$0xff]
                  %2595 = vst [vmem:[%s2343 + $0x768] sm:$0xff] %v2594
                  %v2596 = vld [vmem:[%s2342 + $0x3f0] sm:$0xff]
                  %2597 = vst [vmem:[%s2343 + $0x770] sm:$0xff] %v2596
                  %v2598 = vld [vmem:[%s2342 + $0x3f8] sm:$0xff]
                  %2599 = vst [vmem:[%s2343 + $0x778] sm:$0xff] %v2598
                $region96: #{tpu_custom_call.1} parent=90 // loop_footer
                  %s2341 = sadd.s32 1, %s2337
                $region97: #{tpu_custom_call.1} parent=90 // loop_footer_branch
                  %2336 = sbr.rel target = $region93
                $region98: #{tpu_custom_call.1} parent=90 // loop_exit
                  _
              $region91: #{tpu_custom_call.1} parent=75 // pred_fallthru
                _
              // Predicated region
              $region99: #{tpu_custom_call.1} parent=75 // pred_check
                _
              $region100: #{tpu_custom_call.1} parent=75 // pred_check_branch
                %2601 = sbr.rel target = $region102
              $region101: #{tpu_custom_call.1} parent=75 // pred_region
                _
              $region102: #{tpu_custom_call.1} parent=75 // pred_fallthru
                _
            $region76: #{tpu_custom_call.1} parent=71 // pred_fallthru
              _
            // Predicated region
            $region77: #{tpu_custom_call.1} parent=71 // pred_check
              _
            $region78: #{tpu_custom_call.1} parent=71 // pred_check_branch
              %2067 = sbr.rel target = $region80
            $region79: #{tpu_custom_call.1} parent=71 // pred_region
              %s2069 = ssub.s32 256, 1
              loop: start=0, step=1, limit=1
              $region81: #{tpu_custom_call.1} parent=79 // loop_pre_header
                _
              $region82: #{tpu_custom_call.1} parent=79 // loop_header
                %s2071 = sphi 0, %s2075
                %p2072 = scmp.ge.s32.totalorder %s2071, 1
                %s2076 = sphi %s2036, %s2036
                %s2077 = sphi %s2061, %s2061
              $region83: #{tpu_custom_call.1} parent=79 // loop_header_branch
                %2074 = sbr.rel (%p2072) target = $region87
              $region84: #{tpu_custom_call.1} parent=79 // loop_body
                %v2078 = vld [vmem:[%s2076] sm:%s2069]
                %2079 = vst [vmem:[%s2077] sm:%s2069] %v2078
                %v2080 = vld [vmem:[%s2076 + $0x8] sm:%s2069]
                %2081 = vst [vmem:[%s2077 + $0x8] sm:%s2069] %v2080
                %v2082 = vld [vmem:[%s2076 + $0x10] sm:%s2069]
                %2083 = vst [vmem:[%s2077 + $0x10] sm:%s2069] %v2082
                %v2084 = vld [vmem:[%s2076 + $0x18] sm:%s2069]
                %2085 = vst [vmem:[%s2077 + $0x18] sm:%s2069] %v2084
                %v2086 = vld [vmem:[%s2076 + $0x20] sm:%s2069]
                %2087 = vst [vmem:[%s2077 + $0x20] sm:%s2069] %v2086
                %v2088 = vld [vmem:[%s2076 + $0x28] sm:%s2069]
                %2089 = vst [vmem:[%s2077 + $0x28] sm:%s2069] %v2088
                %v2090 = vld [vmem:[%s2076 + $0x30] sm:%s2069]
                %2091 = vst [vmem:[%s2077 + $0x30] sm:%s2069] %v2090
                %v2092 = vld [vmem:[%s2076 + $0x38] sm:%s2069]
                %2093 = vst [vmem:[%s2077 + $0x38] sm:%s2069] %v2092
                %v2094 = vld [vmem:[%s2076 + $0x40] sm:%s2069]
                %2095 = vst [vmem:[%s2077 + $0x40] sm:%s2069] %v2094
                %v2096 = vld [vmem:[%s2076 + $0x48] sm:%s2069]
                %2097 = vst [vmem:[%s2077 + $0x48] sm:%s2069] %v2096
                %v2098 = vld [vmem:[%s2076 + $0x50] sm:%s2069]
                %2099 = vst [vmem:[%s2077 + $0x50] sm:%s2069] %v2098
                %v2100 = vld [vmem:[%s2076 + $0x58] sm:%s2069]
                %2101 = vst [vmem:[%s2077 + $0x58] sm:%s2069] %v2100
                %v2102 = vld [vmem:[%s2076 + $0x60] sm:%s2069]
                %2103 = vst [vmem:[%s2077 + $0x60] sm:%s2069] %v2102
                %v2104 = vld [vmem:[%s2076 + $0x68] sm:%s2069]
                %2105 = vst [vmem:[%s2077 + $0x68] sm:%s2069] %v2104
                %v2106 = vld [vmem:[%s2076 + $0x70] sm:%s2069]
                %2107 = vst [vmem:[%s2077 + $0x70] sm:%s2069] %v2106
                %v2108 = vld [vmem:[%s2076 + $0x78] sm:%s2069]
                %2109 = vst [vmem:[%s2077 + $0x78] sm:%s2069] %v2108
                %v2110 = vld [vmem:[%s2076 + $0x80] sm:%s2069]
                %2111 = vst [vmem:[%s2077 + $0x100] sm:%s2069] %v2110
                %v2112 = vld [vmem:[%s2076 + $0x88] sm:%s2069]
                %2113 = vst [vmem:[%s2077 + $0x108] sm:%s2069] %v2112
                %v2114 = vld [vmem:[%s2076 + $0x90] sm:%s2069]
                %2115 = vst [vmem:[%s2077 + $0x110] sm:%s2069] %v2114
                %v2116 = vld [vmem:[%s2076 + $0x98] sm:%s2069]
                %2117 = vst [vmem:[%s2077 + $0x118] sm:%s2069] %v2116
                %v2118 = vld [vmem:[%s2076 + $0xa0] sm:%s2069]
                %2119 = vst [vmem:[%s2077 + $0x120] sm:%s2069] %v2118
                %v2120 = vld [vmem:[%s2076 + $0xa8] sm:%s2069]
                %2121 = vst [vmem:[%s2077 + $0x128] sm:%s2069] %v2120
                %v2122 = vld [vmem:[%s2076 + $0xb0] sm:%s2069]
                %2123 = vst [vmem:[%s2077 + $0x130] sm:%s2069] %v2122
                %v2124 = vld [vmem:[%s2076 + $0xb8] sm:%s2069]
                %2125 = vst [vmem:[%s2077 + $0x138] sm:%s2069] %v2124
                %v2126 = vld [vmem:[%s2076 + $0xc0] sm:%s2069]
                %2127 = vst [vmem:[%s2077 + $0x140] sm:%s2069] %v2126
                %v2128 = vld [vmem:[%s2076 + $0xc8] sm:%s2069]
                %2129 = vst [vmem:[%s2077 + $0x148] sm:%s2069] %v2128
                %v2130 = vld [vmem:[%s2076 + $0xd0] sm:%s2069]
                %2131 = vst [vmem:[%s2077 + $0x150] sm:%s2069] %v2130
                %v2132 = vld [vmem:[%s2076 + $0xd8] sm:%s2069]
                %2133 = vst [vmem:[%s2077 + $0x158] sm:%s2069] %v2132
                %v2134 = vld [vmem:[%s2076 + $0xe0] sm:%s2069]
                %2135 = vst [vmem:[%s2077 + $0x160] sm:%s2069] %v2134
                %v2136 = vld [vmem:[%s2076 + $0xe8] sm:%s2069]
                %2137 = vst [vmem:[%s2077 + $0x168] sm:%s2069] %v2136
                %v2138 = vld [vmem:[%s2076 + $0xf0] sm:%s2069]
                %2139 = vst [vmem:[%s2077 + $0x170] sm:%s2069] %v2138
                %v2140 = vld [vmem:[%s2076 + $0xf8] sm:%s2069]
                %2141 = vst [vmem:[%s2077 + $0x178] sm:%s2069] %v2140
                %v2142 = vld [vmem:[%s2076 + $0x100] sm:%s2069]
                %2143 = vst [vmem:[%s2077 + $0x200] sm:%s2069] %v2142
                %v2144 = vld [vmem:[%s2076 + $0x108] sm:%s2069]
                %2145 = vst [vmem:[%s2077 + $0x208] sm:%s2069] %v2144
                %v2146 = vld [vmem:[%s2076 + $0x110] sm:%s2069]
                %2147 = vst [vmem:[%s2077 + $0x210] sm:%s2069] %v2146
                %v2148 = vld [vmem:[%s2076 + $0x118] sm:%s2069]
                %2149 = vst [vmem:[%s2077 + $0x218] sm:%s2069] %v2148
                %v2150 = vld [vmem:[%s2076 + $0x120] sm:%s2069]
                %2151 = vst [vmem:[%s2077 + $0x220] sm:%s2069] %v2150
                %v2152 = vld [vmem:[%s2076 + $0x128] sm:%s2069]
                %2153 = vst [vmem:[%s2077 + $0x228] sm:%s2069] %v2152
                %v2154 = vld [vmem:[%s2076 + $0x130] sm:%s2069]
                %2155 = vst [vmem:[%s2077 + $0x230] sm:%s2069] %v2154
                %v2156 = vld [vmem:[%s2076 + $0x138] sm:%s2069]
                %2157 = vst [vmem:[%s2077 + $0x238] sm:%s2069] %v2156
                %v2158 = vld [vmem:[%s2076 + $0x140] sm:%s2069]
                %2159 = vst [vmem:[%s2077 + $0x240] sm:%s2069] %v2158
                %v2160 = vld [vmem:[%s2076 + $0x148] sm:%s2069]
                %2161 = vst [vmem:[%s2077 + $0x248] sm:%s2069] %v2160
                %v2162 = vld [vmem:[%s2076 + $0x150] sm:%s2069]
                %2163 = vst [vmem:[%s2077 + $0x250] sm:%s2069] %v2162
                %v2164 = vld [vmem:[%s2076 + $0x158] sm:%s2069]
                %2165 = vst [vmem:[%s2077 + $0x258] sm:%s2069] %v2164
                %v2166 = vld [vmem:[%s2076 + $0x160] sm:%s2069]
                %2167 = vst [vmem:[%s2077 + $0x260] sm:%s2069] %v2166
                %v2168 = vld [vmem:[%s2076 + $0x168] sm:%s2069]
                %2169 = vst [vmem:[%s2077 + $0x268] sm:%s2069] %v2168
                %v2170 = vld [vmem:[%s2076 + $0x170] sm:%s2069]
                %2171 = vst [vmem:[%s2077 + $0x270] sm:%s2069] %v2170
                %v2172 = vld [vmem:[%s2076 + $0x178] sm:%s2069]
                %2173 = vst [vmem:[%s2077 + $0x278] sm:%s2069] %v2172
                %v2174 = vld [vmem:[%s2076 + $0x180] sm:%s2069]
                %2175 = vst [vmem:[%s2077 + $0x300] sm:%s2069] %v2174
                %v2176 = vld [vmem:[%s2076 + $0x188] sm:%s2069]
                %2177 = vst [vmem:[%s2077 + $0x308] sm:%s2069] %v2176
                %v2178 = vld [vmem:[%s2076 + $0x190] sm:%s2069]
                %2179 = vst [vmem:[%s2077 + $0x310] sm:%s2069] %v2178
                %v2180 = vld [vmem:[%s2076 + $0x198] sm:%s2069]
                %2181 = vst [vmem:[%s2077 + $0x318] sm:%s2069] %v2180
                %v2182 = vld [vmem:[%s2076 + $0x1a0] sm:%s2069]
                %2183 = vst [vmem:[%s2077 + $0x320] sm:%s2069] %v2182
                %v2184 = vld [vmem:[%s2076 + $0x1a8] sm:%s2069]
                %2185 = vst [vmem:[%s2077 + $0x328] sm:%s2069] %v2184
                %v2186 = vld [vmem:[%s2076 + $0x1b0] sm:%s2069]
                %2187 = vst [vmem:[%s2077 + $0x330] sm:%s2069] %v2186
                %v2188 = vld [vmem:[%s2076 + $0x1b8] sm:%s2069]
                %2189 = vst [vmem:[%s2077 + $0x338] sm:%s2069] %v2188
                %v2190 = vld [vmem:[%s2076 + $0x1c0] sm:%s2069]
                %2191 = vst [vmem:[%s2077 + $0x340] sm:%s2069] %v2190
                %v2192 = vld [vmem:[%s2076 + $0x1c8] sm:%s2069]
                %2193 = vst [vmem:[%s2077 + $0x348] sm:%s2069] %v2192
                %v2194 = vld [vmem:[%s2076 + $0x1d0] sm:%s2069]
                %2195 = vst [vmem:[%s2077 + $0x350] sm:%s2069] %v2194
                %v2196 = vld [vmem:[%s2076 + $0x1d8] sm:%s2069]
                %2197 = vst [vmem:[%s2077 + $0x358] sm:%s2069] %v2196
                %v2198 = vld [vmem:[%s2076 + $0x1e0] sm:%s2069]
                %2199 = vst [vmem:[%s2077 + $0x360] sm:%s2069] %v2198
                %v2200 = vld [vmem:[%s2076 + $0x1e8] sm:%s2069]
                %2201 = vst [vmem:[%s2077 + $0x368] sm:%s2069] %v2200
                %v2202 = vld [vmem:[%s2076 + $0x1f0] sm:%s2069]
                %2203 = vst [vmem:[%s2077 + $0x370] sm:%s2069] %v2202
                %v2204 = vld [vmem:[%s2076 + $0x1f8] sm:%s2069]
                %2205 = vst [vmem:[%s2077 + $0x378] sm:%s2069] %v2204
                %v2206 = vld [vmem:[%s2076 + $0x200] sm:%s2069]
                %2207 = vst [vmem:[%s2077 + $0x400] sm:%s2069] %v2206
                %v2208 = vld [vmem:[%s2076 + $0x208] sm:%s2069]
                %2209 = vst [vmem:[%s2077 + $0x408] sm:%s2069] %v2208
                %v2210 = vld [vmem:[%s2076 + $0x210] sm:%s2069]
                %2211 = vst [vmem:[%s2077 + $0x410] sm:%s2069] %v2210
                %v2212 = vld [vmem:[%s2076 + $0x218] sm:%s2069]
                %2213 = vst [vmem:[%s2077 + $0x418] sm:%s2069] %v2212
                %v2214 = vld [vmem:[%s2076 + $0x220] sm:%s2069]
                %2215 = vst [vmem:[%s2077 + $0x420] sm:%s2069] %v2214
                %v2216 = vld [vmem:[%s2076 + $0x228] sm:%s2069]
                %2217 = vst [vmem:[%s2077 + $0x428] sm:%s2069] %v2216
                %v2218 = vld [vmem:[%s2076 + $0x230] sm:%s2069]
                %2219 = vst [vmem:[%s2077 + $0x430] sm:%s2069] %v2218
                %v2220 = vld [vmem:[%s2076 + $0x238] sm:%s2069]
                %2221 = vst [vmem:[%s2077 + $0x438] sm:%s2069] %v2220
                %v2222 = vld [vmem:[%s2076 + $0x240] sm:%s2069]
                %2223 = vst [vmem:[%s2077 + $0x440] sm:%s2069] %v2222
                %v2224 = vld [vmem:[%s2076 + $0x248] sm:%s2069]
                %2225 = vst [vmem:[%s2077 + $0x448] sm:%s2069] %v2224
                %v2226 = vld [vmem:[%s2076 + $0x250] sm:%s2069]
                %2227 = vst [vmem:[%s2077 + $0x450] sm:%s2069] %v2226
                %v2228 = vld [vmem:[%s2076 + $0x258] sm:%s2069]
                %2229 = vst [vmem:[%s2077 + $0x458] sm:%s2069] %v2228
                %v2230 = vld [vmem:[%s2076 + $0x260] sm:%s2069]
                %2231 = vst [vmem:[%s2077 + $0x460] sm:%s2069] %v2230
                %v2232 = vld [vmem:[%s2076 + $0x268] sm:%s2069]
                %2233 = vst [vmem:[%s2077 + $0x468] sm:%s2069] %v2232
                %v2234 = vld [vmem:[%s2076 + $0x270] sm:%s2069]
                %2235 = vst [vmem:[%s2077 + $0x470] sm:%s2069] %v2234
                %v2236 = vld [vmem:[%s2076 + $0x278] sm:%s2069]
                %2237 = vst [vmem:[%s2077 + $0x478] sm:%s2069] %v2236
                %v2238 = vld [vmem:[%s2076 + $0x280] sm:%s2069]
                %2239 = vst [vmem:[%s2077 + $0x500] sm:%s2069] %v2238
                %v2240 = vld [vmem:[%s2076 + $0x288] sm:%s2069]
                %2241 = vst [vmem:[%s2077 + $0x508] sm:%s2069] %v2240
                %v2242 = vld [vmem:[%s2076 + $0x290] sm:%s2069]
                %2243 = vst [vmem:[%s2077 + $0x510] sm:%s2069] %v2242
                %v2244 = vld [vmem:[%s2076 + $0x298] sm:%s2069]
                %2245 = vst [vmem:[%s2077 + $0x518] sm:%s2069] %v2244
                %v2246 = vld [vmem:[%s2076 + $0x2a0] sm:%s2069]
                %2247 = vst [vmem:[%s2077 + $0x520] sm:%s2069] %v2246
                %v2248 = vld [vmem:[%s2076 + $0x2a8] sm:%s2069]
                %2249 = vst [vmem:[%s2077 + $0x528] sm:%s2069] %v2248
                %v2250 = vld [vmem:[%s2076 + $0x2b0] sm:%s2069]
                %2251 = vst [vmem:[%s2077 + $0x530] sm:%s2069] %v2250
                %v2252 = vld [vmem:[%s2076 + $0x2b8] sm:%s2069]
                %2253 = vst [vmem:[%s2077 + $0x538] sm:%s2069] %v2252
                %v2254 = vld [vmem:[%s2076 + $0x2c0] sm:%s2069]
                %2255 = vst [vmem:[%s2077 + $0x540] sm:%s2069] %v2254
                %v2256 = vld [vmem:[%s2076 + $0x2c8] sm:%s2069]
                %2257 = vst [vmem:[%s2077 + $0x548] sm:%s2069] %v2256
                %v2258 = vld [vmem:[%s2076 + $0x2d0] sm:%s2069]
                %2259 = vst [vmem:[%s2077 + $0x550] sm:%s2069] %v2258
                %v2260 = vld [vmem:[%s2076 + $0x2d8] sm:%s2069]
                %2261 = vst [vmem:[%s2077 + $0x558] sm:%s2069] %v2260
                %v2262 = vld [vmem:[%s2076 + $0x2e0] sm:%s2069]
                %2263 = vst [vmem:[%s2077 + $0x560] sm:%s2069] %v2262
                %v2264 = vld [vmem:[%s2076 + $0x2e8] sm:%s2069]
                %2265 = vst [vmem:[%s2077 + $0x568] sm:%s2069] %v2264
                %v2266 = vld [vmem:[%s2076 + $0x2f0] sm:%s2069]
                %2267 = vst [vmem:[%s2077 + $0x570] sm:%s2069] %v2266
                %v2268 = vld [vmem:[%s2076 + $0x2f8] sm:%s2069]
                %2269 = vst [vmem:[%s2077 + $0x578] sm:%s2069] %v2268
                %v2270 = vld [vmem:[%s2076 + $0x300] sm:%s2069]
                %2271 = vst [vmem:[%s2077 + $0x600] sm:%s2069] %v2270
                %v2272 = vld [vmem:[%s2076 + $0x308] sm:%s2069]
                %2273 = vst [vmem:[%s2077 + $0x608] sm:%s2069] %v2272
                %v2274 = vld [vmem:[%s2076 + $0x310] sm:%s2069]
                %2275 = vst [vmem:[%s2077 + $0x610] sm:%s2069] %v2274
                %v2276 = vld [vmem:[%s2076 + $0x318] sm:%s2069]
                %2277 = vst [vmem:[%s2077 + $0x618] sm:%s2069] %v2276
                %v2278 = vld [vmem:[%s2076 + $0x320] sm:%s2069]
                %2279 = vst [vmem:[%s2077 + $0x620] sm:%s2069] %v2278
                %v2280 = vld [vmem:[%s2076 + $0x328] sm:%s2069]
                %2281 = vst [vmem:[%s2077 + $0x628] sm:%s2069] %v2280
                %v2282 = vld [vmem:[%s2076 + $0x330] sm:%s2069]
                %2283 = vst [vmem:[%s2077 + $0x630] sm:%s2069] %v2282
                %v2284 = vld [vmem:[%s2076 + $0x338] sm:%s2069]
                %2285 = vst [vmem:[%s2077 + $0x638] sm:%s2069] %v2284
                %v2286 = vld [vmem:[%s2076 + $0x340] sm:%s2069]
                %2287 = vst [vmem:[%s2077 + $0x640] sm:%s2069] %v2286
                %v2288 = vld [vmem:[%s2076 + $0x348] sm:%s2069]
                %2289 = vst [vmem:[%s2077 + $0x648] sm:%s2069] %v2288
                %v2290 = vld [vmem:[%s2076 + $0x350] sm:%s2069]
                %2291 = vst [vmem:[%s2077 + $0x650] sm:%s2069] %v2290
                %v2292 = vld [vmem:[%s2076 + $0x358] sm:%s2069]
                %2293 = vst [vmem:[%s2077 + $0x658] sm:%s2069] %v2292
                %v2294 = vld [vmem:[%s2076 + $0x360] sm:%s2069]
                %2295 = vst [vmem:[%s2077 + $0x660] sm:%s2069] %v2294
                %v2296 = vld [vmem:[%s2076 + $0x368] sm:%s2069]
                %2297 = vst [vmem:[%s2077 + $0x668] sm:%s2069] %v2296
                %v2298 = vld [vmem:[%s2076 + $0x370] sm:%s2069]
                %2299 = vst [vmem:[%s2077 + $0x670] sm:%s2069] %v2298
                %v2300 = vld [vmem:[%s2076 + $0x378] sm:%s2069]
                %2301 = vst [vmem:[%s2077 + $0x678] sm:%s2069] %v2300
                %v2302 = vld [vmem:[%s2076 + $0x380] sm:%s2069]
                %2303 = vst [vmem:[%s2077 + $0x700] sm:%s2069] %v2302
                %v2304 = vld [vmem:[%s2076 + $0x388] sm:%s2069]
                %2305 = vst [vmem:[%s2077 + $0x708] sm:%s2069] %v2304
                %v2306 = vld [vmem:[%s2076 + $0x390] sm:%s2069]
                %2307 = vst [vmem:[%s2077 + $0x710] sm:%s2069] %v2306
                %v2308 = vld [vmem:[%s2076 + $0x398] sm:%s2069]
                %2309 = vst [vmem:[%s2077 + $0x718] sm:%s2069] %v2308
                %v2310 = vld [vmem:[%s2076 + $0x3a0] sm:%s2069]
                %2311 = vst [vmem:[%s2077 + $0x720] sm:%s2069] %v2310
                %v2312 = vld [vmem:[%s2076 + $0x3a8] sm:%s2069]
                %2313 = vst [vmem:[%s2077 + $0x728] sm:%s2069] %v2312
                %v2314 = vld [vmem:[%s2076 + $0x3b0] sm:%s2069]
                %2315 = vst [vmem:[%s2077 + $0x730] sm:%s2069] %v2314
                %v2316 = vld [vmem:[%s2076 + $0x3b8] sm:%s2069]
                %2317 = vst [vmem:[%s2077 + $0x738] sm:%s2069] %v2316
                %v2318 = vld [vmem:[%s2076 + $0x3c0] sm:%s2069]
                %2319 = vst [vmem:[%s2077 + $0x740] sm:%s2069] %v2318
                %v2320 = vld [vmem:[%s2076 + $0x3c8] sm:%s2069]
                %2321 = vst [vmem:[%s2077 + $0x748] sm:%s2069] %v2320
                %v2322 = vld [vmem:[%s2076 + $0x3d0] sm:%s2069]
                %2323 = vst [vmem:[%s2077 + $0x750] sm:%s2069] %v2322
                %v2324 = vld [vmem:[%s2076 + $0x3d8] sm:%s2069]
                %2325 = vst [vmem:[%s2077 + $0x758] sm:%s2069] %v2324
                %v2326 = vld [vmem:[%s2076 + $0x3e0] sm:%s2069]
                %2327 = vst [vmem:[%s2077 + $0x760] sm:%s2069] %v2326
                %v2328 = vld [vmem:[%s2076 + $0x3e8] sm:%s2069]
                %2329 = vst [vmem:[%s2077 + $0x768] sm:%s2069] %v2328
                %v2330 = vld [vmem:[%s2076 + $0x3f0] sm:%s2069]
                %2331 = vst [vmem:[%s2077 + $0x770] sm:%s2069] %v2330
                %v2332 = vld [vmem:[%s2076 + $0x3f8] sm:%s2069]
                %2333 = vst [vmem:[%s2077 + $0x778] sm:%s2069] %v2332
              $region85: #{tpu_custom_call.1} parent=79 // loop_footer
                %s2075 = sadd.s32 1, %s2071
              $region86: #{tpu_custom_call.1} parent=79 // loop_footer_branch
                %2070 = sbr.rel target = $region82
              $region87: #{tpu_custom_call.1} parent=79 // loop_exit
                _
            $region80: #{tpu_custom_call.1} parent=71 // pred_fallthru
              _
          $region72: #{tpu_custom_call.1} parent=67 // pred_fallthru
            _
          %2602 = vnop
        $region68: #{tpu_custom_call.1} parent=39 // pred_fallthru
          _
      $region40: #{tpu_custom_call.1} parent=5 // pred_fallthru
        _
      %p2603 = scmp.le.s32.totalorder 2, %s21
      // Predicated region
      $region103: #{tpu_custom_call.1} parent=5 // pred_check
        %p2604 = pneg %p2603
      $region104: #{tpu_custom_call.1} parent=5 // pred_check_branch
        %2606 = sbr.rel (%p2604) target = $region106
      $region105: #{tpu_custom_call.1} parent=5 // pred_region
        %s2607 = ssub.s32 %s21, 2
        // Predicated region
        $region107: #{tpu_custom_call.1} parent=105 // pred_check
          %p2608 = pneg %p176
        $region108: #{tpu_custom_call.1} parent=105 // pred_check_branch
          %2610 = sbr.rel (%p2608) target = $region110
        $region109: #{tpu_custom_call.1} parent=105 // pred_region
          %s2611 = sand.u32 %s161, 1
          %s2612 = scalar_lea.sflag [#allocation6], %s2611
          %s2613 = sand.u32 %s161, 1
          %s2614 = smul.addr %s2613, 256
          %s2615 = scalar_lea.vmem [#allocation13], %s2614
          %2616 = dma.done %s2612, 4096
        $region110: #{tpu_custom_call.1} parent=105 // pred_fallthru
          _
        // Predicated region
        $region111: #{tpu_custom_call.1} parent=105 // pred_check
          %p2617 = pneg %p204
        $region112: #{tpu_custom_call.1} parent=105 // pred_check_branch
          %2619 = sbr.rel (%p2617) target = $region114
        $region113: #{tpu_custom_call.1} parent=105 // pred_region
          %s2620 = sand.u32 %s189, 1
          %s2621 = sand.u32 %s189, 1
          %s2622 = smul.addr %s2621, 1024
          %s2623 = scalar_lea.vmem [#allocation14], %s2622
        $region114: #{tpu_custom_call.1} parent=105 // pred_fallthru
          _
      $region106: #{tpu_custom_call.1} parent=5 // pred_fallthru
        _
    $region6: #{tpu_custom_call.1} parent=1 // loop_footer
      %s25 = sadd.s32 1, %s21
    $region7: #{tpu_custom_call.1} parent=1 // loop_footer_branch
      %20 = sbr.rel target = $region3
    $region8: #{tpu_custom_call.1} parent=1 // loop_exit
      _
    %2624 = vsyncpa [#allocation5], 1
    %s2625 = scalar_lea.sflag [#allocation5], 1
    %2626 = vsyncpa %s2625, 1
    %2627 = vsyncpa [#allocation8], 1
    %2628 = vsyncpa [#allocation11], 1
    %2629 = vsyncpa [#allocation6], 1
    %s2630 = scalar_lea.sflag [#allocation6], 1
    %2631 = vsyncpa %s2630, 1

// kernel: tpu_custom_call.1
$region0: #{tpu_custom_call.1}
  #allocation0 [shape = 'u32[]', space=smem, size = 0x4, offset = 0x4, fixed_abs, tag = 'smem constant byte address 0x4 - core index']
  #allocation1 [shape = 'u32[144,128]{1,0:T(1,128)}', space=vmem, size = 0x12000, scoped, tag = 'internal scratch']
  #allocation2 [shape = 'f32[128,256]{1,0:T(8,128)}', space=vmem, size = 0x20000, scoped, tag = 'scratch operand']
  #allocation3 [shape = 'f32[256,128]{1,0:T(8,128)}', space=vmem, size = 0x20000, scoped, tag = 'scratch operand']
  %s0 = inlined_call_operand.hbm [shape: f32[2,256,256], index: 0, kind: input, shape index: {}]
  %s1 = inlined_call_operand.hbm [shape: f32[1,256], index: 1, kind: input, shape index: {}]
  %s2 = inlined_call_operand.hbm [shape: f32[1,256], index: 2, kind: input, shape index: {}]
  %s3 = inlined_call_operand.hbm [shape: f32[256,256], index: 3, kind: input, shape index: {}]
  %s4 = inlined_call_operand.hbm [shape: f32[256,256], index: 4, kind: input, shape index: {}]
  %s5 = inlined_call_operand.hbm [shape: f32[2,8,32,256], index: 5, kind: output, shape index: {0}]
  %s6 = inlined_call_operand.vmem [shape: f32[2,8,256,32], index: 6, kind: output, shape index: {1}]
  %7 = xla_tuple %s5, %s6
  %s8 = sld [smem:[#allocation0]]
  $region115: #{tpu_custom_call.1} parent=0
    _
  %s10 = ssub.s32 1, %s8
  %s11 = scalar_select 0, %s10, %s8
  $region1: #{tpu_custom_call.1} parent=0
    #allocation4 [shape = 'u8[262144]{0}', space=vmem, size = 0x40000, scoped, tag = 'input window, operand 0']
    #allocation5 [shape = 's32[2]{0}', space=sflag, size = 0x8, scoped, tag = 'scoped memory for tpu_custom_call.1']
    #allocation6 [shape = 's32[2]{0}', space=sflag, size = 0x8, scoped, tag = 'scoped memory for tpu_custom_call.1']
    #allocation7 [shape = 'u8[1024]{0}', space=vmem, size = 0x400, scoped, tag = 'input window, operand 1, single buffered']
    #allocation8 [shape = 's32[1]{0}', space=sflag, size = 0x4, scoped, tag = 'scoped memory for tpu_custom_call.1']
    #allocation9 [shape = 'u8[1024]{0}', space=vmem, size = 0x400, scoped, tag = 'input window, operand 2, single buffered']
    #allocation10 [shape = 'u8[262144]{0}', space=vmem, size = 0x40000, scoped, tag = 'input window, operand 3, single buffered']
    #allocation11 [shape = 's32[1]{0}', space=sflag, size = 0x4, scoped, tag = 'scoped memory for tpu_custom_call.1']
    #allocation12 [shape = 'u8[262144]{0}', space=vmem, size = 0x40000, scoped, tag = 'input window, operand 4, single buffered']
    #allocation13 [shape = 'u8[262144]{0}', space=vmem, size = 0x40000, scoped, tag = 'output window, operand 0']
    #allocation14 [shape = 'u8[1048576]{0}', space=vmem, size = 0x100000, scoped, tag = 'output window, operand 1']
    %12 = vsyncpa [#allocation5], 0
    %s13 = scalar_lea.sflag [#allocation5], 1
    %14 = vsyncpa %s13, 0
    %15 = vsyncpa [#allocation8], 0
    %16 = vsyncpa [#allocation11], 0
    %17 = vsyncpa [#allocation6], 0
    %s18 = scalar_lea.sflag [#allocation6], 1
    %19 = vsyncpa %s18, 0
    loop: start=0, step=1, limit=6
    $region2: #{tpu_custom_call.1} parent=1 // loop_pre_header
      _
    $region3: #{tpu_custom_call.1} parent=1 // loop_header
      %s21 = sphi 0, %s25
      %p22 = scmp.ge.s32.totalorder %s21, 6
      %s28 = sphi 0, %s40
      %s29 = sphi 0, %s36
      %s30 = sphi 0, %s28
      %s31 = sphi 0, %s29
      %s32 = sphi 0, %s30
      %s33 = sphi 0, %s31
      %s45 = sphi 0, %s47
      %s48 = sphi 0, %s45
      %s49 = sphi 0, %s48
      %s65 = sphi 0, %s49
      %s69 = sphi 0, %s69
      %s71 = sphi 0, %s69
      %s72 = sphi 0, %s71
      %s86 = sphi 0, %s72
      %s90 = sphi 0, %s90
      %s92 = sphi 0, %s90
      %s93 = sphi 0, %s92
      %s107 = sphi 0, %s93
      %s111 = sphi 0, %s111
      %s113 = sphi 0, %s111
      %s114 = sphi 0, %s113
      %s128 = sphi 0, %s114
      %s132 = sphi 0, %s132
      %s134 = sphi 0, %s132
      %s135 = sphi 0, %s134
      %s149 = sphi 0, %s135
      %s157 = sphi 0, %s159
      %s160 = sphi 0, %s157
      %s161 = sphi 0, %s160
      %s177 = sphi 0, %s161
      %s185 = sphi 0, %s187
      %s188 = sphi 0, %s185
      %s189 = sphi 0, %s188
      %s205 = sphi 0, %s189
    $region4: #{tpu_custom_call.1} parent=1 // loop_header_branch
      %24 = sbr.rel (%p22) target = $region8
    $region5: #{tpu_custom_call.1} parent=1 // loop_body
      %s26 = ssub.s32 %s21, 1
      %s27 = ssub.s32 %s21, 2
      %s34 = sadd.s32 1, %s29
      %p35 = scmp.ge.s32.totalorder %s34, 2
      %s36 = scalar_select %p35, 0, %s34
      %s37 = sadd.s32 1, %s28
      %s38 = scalar_select %p35, %s37, %s28
      %p39 = scmp.ge.s32.totalorder %s38, 2
      %s40 = scalar_select %p39, 0, %s38
      %s41 = ssub.s32 %s28, %s40
      %s42 = ssub.s32 %s29, %s36
      %s43 = sor.u32 %s41, %s42
      %p44 = scmp.eq.s32.totalorder %s43, 0
      %s46 = sadd.s32 %s45, 1
      %s47 = scalar_select %p44, %s45, %s46
      %p50 = pneg %p44
      %p51 = scmp.eq.s32.totalorder %s21, 3
      %p52 = por %p50, %p51
      %p53 = scmp.ne.s32.totalorder %s45, %s48
      %p54 = scmp.eq.s32.totalorder %s21, 0
      %p55 = por %p53, %p54
      %p56 = scmp.ne.s32.totalorder %s45, %s48
      %p57 = scmp.eq.s32.totalorder %s26, 3
      %p58 = por %p56, %p57
      %p59 = scmp.ne.s32.totalorder %s48, %s49
      %p60 = scmp.eq.s32.totalorder %s26, 0
      %p61 = por %p59, %p60
      %p62 = scmp.ne.s32.totalorder %s48, %s49
      %p63 = scmp.eq.s32.totalorder %s27, 3
      %p64 = por %p62, %p63
      %p66 = scmp.ne.s32.totalorder %s49, %s65
      %p67 = scmp.eq.s32.totalorder %s27, 0
      %p68 = por %p66, %p67
      %s70 = sadd.s32 %s69, 1
      %p73 = scmp.eq.s32.totalorder %s21, 3
      %p74 = scmp.ne.s32.totalorder %s69, %s71
      %p75 = scmp.eq.s32.totalorder %s21, 0
      %p76 = por %p74, %p75
      %p77 = scmp.ne.s32.totalorder %s69, %s71
      %p78 = scmp.eq.s32.totalorder %s26, 3
      %p79 = por %p77, %p78
      %p80 = scmp.ne.s32.totalorder %s71, %s72
      %p81 = scmp.eq.s32.totalorder %s26, 0
      %p82 = por %p80, %p81
      %p83 = scmp.ne.s32.totalorder %s71, %s72
      %p84 = scmp.eq.s32.totalorder %s27, 3
      %p85 = por %p83, %p84
      %p87 = scmp.ne.s32.totalorder %s72, %s86
      %p88 = scmp.eq.s32.totalorder %s27, 0
      %p89 = por %p87, %p88
      %s91 = sadd.s32 %s90, 1
      %p94 = scmp.eq.s32.totalorder %s21, 3
      %p95 = scmp.ne.s32.totalorder %s90, %s92
      %p96 = scmp.eq.s32.totalorder %s21, 0
      %p97 = por %p95, %p96
      %p98 = scmp.ne.s32.totalorder %s90, %s92
      %p99 = scmp.eq.s32.totalorder %s26, 3
      %p100 = por %p98, %p99
      %p101 = scmp.ne.s32.totalorder %s92, %s93
      %p102 = scmp.eq.s32.totalorder %s26, 0
      %p103 = por %p101, %p102
      %p104 = scmp.ne.s32.totalorder %s92, %s93
      %p105 = scmp.eq.s32.totalorder %s27, 3
      %p106 = por %p104, %p105
      %p108 = scmp.ne.s32.totalorder %s93, %s107
      %p109 = scmp.eq.s32.totalorder %s27, 0
      %p110 = por %p108, %p109
      %s112 = sadd.s32 %s111, 1
      %p115 = scmp.eq.s32.totalorder %s21, 3
      %p116 = scmp.ne.s32.totalorder %s111, %s113
      %p117 = scmp.eq.s32.totalorder %s21, 0
      %p118 = por %p116, %p117
      %p119 = scmp.ne.s32.totalorder %s111, %s113
      %p120 = scmp.eq.s32.totalorder %s26, 3
      %p121 = por %p119, %p120
      %p122 = scmp.ne.s32.totalorder %s113, %s114
      %p123 = scmp.eq.s32.totalorder %s26, 0
      %p124 = por %p122, %p123
      %p125 = scmp.ne.s32.totalorder %s113, %s114
      %p126 = scmp.eq.s32.totalorder %s27, 3
      %p127 = por %p125, %p126
      %p129 = scmp.ne.s32.totalorder %s114, %s128
      %p130 = scmp.eq.s32.totalorder %s27, 0
      %p131 = por %p129, %p130
      %s133 = sadd.s32 %s132, 1
      %p136 = scmp.eq.s32.totalorder %s21, 3
      %p137 = scmp.ne.s32.totalorder %s132, %s134
      %p138 = scmp.eq.s32.totalorder %s21, 0
      %p139 = por %p137, %p138
      %p140 = scmp.ne.s32.totalorder %s132, %s134
      %p141 = scmp.eq.s32.totalorder %s26, 3
      %p142 = por %p140, %p141
      %p143 = scmp.ne.s32.totalorder %s134, %s135
      %p144 = scmp.eq.s32.totalorder %s26, 0
      %p145 = por %p143, %p144
      %p146 = scmp.ne.s32.totalorder %s134, %s135
      %p147 = scmp.eq.s32.totalorder %s27, 3
      %p148 = por %p146, %p147
      %p150 = scmp.ne.s32.totalorder %s135, %s149
      %p151 = scmp.eq.s32.totalorder %s27, 0
      %p152 = por %p150, %p151
      %s153 = ssub.s32 %s28, %s40
      %s154 = ssub.s32 %s29, %s36
      %s155 = sor.u32 %s153, %s154
      %p156 = scmp.eq.s32.totalorder %s155, 0
      %s158 = sadd.s32 %s157, 1
      %s159 = scalar_select %p156, %s157, %s158
      %p162 = pneg %p156
      %p163 = scmp.eq.s32.totalorder %s21, 3
      %p164 = por %p162, %p163
      %p165 = scmp.ne.s32.totalorder %s157, %s160
      %p166 = scmp.eq.s32.totalorder %s21, 0
      %p167 = por %p165, %p166
      %p168 = scmp.ne.s32.totalorder %s157, %s160
      %p169 = scmp.eq.s32.totalorder %s26, 3
      %p170 = por %p168, %p169
      %p171 = scmp.ne.s32.totalorder %s160, %s161
      %p172 = scmp.eq.s32.totalorder %s26, 0
      %p173 = por %p171, %p172
      %p174 = scmp.ne.s32.totalorder %s160, %s161
      %p175 = scmp.eq.s32.totalorder %s27, 3
      %p176 = por %p174, %p175
      %p178 = scmp.ne.s32.totalorder %s161, %s177
      %p179 = scmp.eq.s32.totalorder %s27, 0
      %p180 = por %p178, %p179
      %s181 = ssub.s32 %s28, %s40
      %s182 = ssub.s32 %s29, %s36
      %s183 = sor.u32 %s181, %s182
      %p184 = scmp.eq.s32.totalorder %s183, 0
      %s186 = sadd.s32 %s185, 1
      %s187 = scalar_select %p184, %s185, %s186
      %p190 = pneg %p184
      %p191 = scmp.eq.s32.totalorder %s21, 3
      %p192 = por %p190, %p191
      %p193 = scmp.ne.s32.totalorder %s185, %s188
      %p194 = scmp.eq.s32.totalorder %s21, 0
      %p195 = por %p193, %p194
      %p196 = scmp.ne.s32.totalorder %s185, %s188
      %p197 = scmp.eq.s32.totalorder %s26, 3
      %p198 = por %p196, %p197
      %p199 = scmp.ne.s32.totalorder %s188, %s189
      %p200 = scmp.eq.s32.totalorder %s26, 0
      %p201 = por %p199, %p200
      %p202 = scmp.ne.s32.totalorder %s188, %s189
      %p203 = scmp.eq.s32.totalorder %s27, 3
      %p204 = por %p202, %p203
      %p206 = scmp.ne.s32.totalorder %s189, %s205
      %p207 = scmp.eq.s32.totalorder %s27, 0
      %p208 = por %p206, %p207
      %p209 = scmp.le.s32.totalorder 1, %s21
      %p210 = scmp.lt.s32.totalorder %s21, 5
      %p211 = pnand %p209, %p210
      %p212 = pneg %p211
      // Predicated region
      $region9: #{tpu_custom_call.1} parent=5 // pred_check
        _
      $region10: #{tpu_custom_call.1} parent=5 // pred_check_branch
        %214 = sbr.rel (%p211) target = $region12
      $region11: #{tpu_custom_call.1} parent=5 // pred_region
        %s215 = ssub.s32 %s21, 1
        // Predicated region
        $region13: #{tpu_custom_call.1} parent=11 // pred_check
          %p216 = pneg %p82
        $region14: #{tpu_custom_call.1} parent=11 // pred_check_branch
          %218 = sbr.rel (%p216) target = $region16
        $region15: #{tpu_custom_call.1} parent=11 // pred_region
          %s220 = ssub.s32 32, 32
          %221 = vsyncadd [#allocation8], %s220
          %s223 = sshll.u32 [#allocation7], 4
          %s224 = int_to_ptr.vmem [resolvable:$true] %s223
          %226 = dma.hbm_to_vmem [thread:$0]  %s1, 32, %s224, [#allocation8]
        $region16: #{tpu_custom_call.1} parent=11 // pred_fallthru
          _
        // Predicated region
        $region17: #{tpu_custom_call.1} parent=11 // pred_check
          %p227 = pneg %p103
        $region18: #{tpu_custom_call.1} parent=11 // pred_check_branch
          %229 = sbr.rel (%p227) target = $region20
        $region19: #{tpu_custom_call.1} parent=11 // pred_region
          %s231 = ssub.s32 32, 32
          %232 = vsyncadd [#allocation8], %s231
          %s234 = sshll.u32 [#allocation9], 4
          %s235 = int_to_ptr.vmem [resolvable:$true] %s234
          %237 = dma.hbm_to_vmem [thread:$0]  %s2, 32, %s235, [#allocation8]
        $region20: #{tpu_custom_call.1} parent=11 // pred_fallthru
          _
        // Predicated region
        $region21: #{tpu_custom_call.1} parent=11 // pred_check
          %p238 = pneg %p124
        $region22: #{tpu_custom_call.1} parent=11 // pred_check_branch
          %240 = sbr.rel (%p238) target = $region24
        $region23: #{tpu_custom_call.1} parent=11 // pred_region
          %s242 = ssub.s32 8192, 8192
          %243 = vsyncadd [#allocation11], %s242
          %s244 = sshll.u32 [#allocation10], 4
          %s245 = int_to_ptr.vmem [resolvable:$true] %s244
          %250 = dma.hbm_to_vmem [thread:$0]  %s3, 8192, %s245, [#allocation11], 256, 256, 16
        $region24: #{tpu_custom_call.1} parent=11 // pred_fallthru
          _
        // Predicated region
        $region25: #{tpu_custom_call.1} parent=11 // pred_check
          %p251 = pneg %p145
        $region26: #{tpu_custom_call.1} parent=11 // pred_check_branch
          %253 = sbr.rel (%p251) target = $region28
        $region27: #{tpu_custom_call.1} parent=11 // pred_region
          %s255 = ssub.s32 8192, 8192
          %256 = vsyncadd [#allocation11], %s255
          %s257 = sshll.u32 [#allocation12], 4
          %s258 = int_to_ptr.vmem [resolvable:$true] %s257
          %263 = dma.hbm_to_vmem [thread:$0]  %s4, 8192, %s258, [#allocation11], 256, 256, 16
        $region28: #{tpu_custom_call.1} parent=11 // pred_fallthru
          _
      $region12: #{tpu_custom_call.1} parent=5 // pred_fallthru
        _
      %p264 = scmp.lt.s32.totalorder %s21, 4
      // Predicated region
      $region29: #{tpu_custom_call.1} parent=5 // pred_check
        %p265 = pneg %p264
      $region30: #{tpu_custom_call.1} parent=5 // pred_check_branch
        %267 = sbr.rel (%p265) target = $region32
      $region31: #{tpu_custom_call.1} parent=5 // pred_region
        // Predicated region
        $region33: #{tpu_custom_call.1} parent=31 // pred_check
          %p268 = pneg %p55
        $region34: #{tpu_custom_call.1} parent=31 // pred_check_branch
          %270 = sbr.rel (%p268) target = $region36
        $region35: #{tpu_custom_call.1} parent=31 // pred_region
          %s271 = sand.u32 %s45, 1
          %s272 = scalar_lea.sflag [#allocation5], %s271
          %s273 = sand.u32 %s45, 1
          %s274 = smul.addr %s273, 256
          %s275 = scalar_lea.vmem [#allocation4], %s274
          %s276 = smul.u32 16, %s29
          %s278 = ssub.s32 4096, 4096
          %279 = vsyncadd %s272, %s278
          %s280 = smul.addr %s276, 2
          %s281 = smul.addr %s28, 64
          %s282 = sadd.s32 %s280, %s281
          %s283 = smul.addr %s282, 128
          %s284 = scalar_lea.hbm %s0, %s283
          %s285 = sshll.u32 %s275, 4
          %s286 = int_to_ptr.vmem [resolvable:$true] %s285
          %291 = dma.hbm_to_vmem [thread:$0]  %s284, 4096, %s286, %s272, 256, 256, 16
        $region36: #{tpu_custom_call.1} parent=31 // pred_fallthru
          _
      $region32: #{tpu_custom_call.1} parent=5 // pred_fallthru
        _
      %p292 = scmp.le.s32.totalorder 1, %s21
      %p293 = scmp.lt.s32.totalorder %s21, 5
      %p294 = pnand %p292, %p293
      %p295 = pneg %p294
      // Predicated region
      $region37: #{tpu_custom_call.1} parent=5 // pred_check
        _
      $region38: #{tpu_custom_call.1} parent=5 // pred_check_branch
        %297 = sbr.rel (%p294) target = $region40
      $region39: #{tpu_custom_call.1} parent=5 // pred_region
        %s298 = ssub.s32 %s21, 1
        %s299 = sand.u32 %s48, 1
        %s300 = scalar_lea.sflag [#allocation5], %s299
        %s301 = sand.u32 %s48, 1
        %s302 = smul.addr %s301, 256
        %s303 = scalar_lea.vmem [#allocation4], %s302
        // Predicated region
        $region41: #{tpu_custom_call.1} parent=39 // pred_check
          %p304 = pneg %p61
        $region42: #{tpu_custom_call.1} parent=39 // pred_check_branch
          %306 = sbr.rel (%p304) target = $region44
        $region43: #{tpu_custom_call.1} parent=39 // pred_region
          %307 = dma.done %s300, 4096
        $region44: #{tpu_custom_call.1} parent=39 // pred_fallthru
          _
        // Predicated region
        $region45: #{tpu_custom_call.1} parent=39 // pred_check
          %p308 = pneg %p82
        $region46: #{tpu_custom_call.1} parent=39 // pred_check_branch
          %310 = sbr.rel (%p308) target = $region48
        $region47: #{tpu_custom_call.1} parent=39 // pred_region
          %311 = dma.done [#allocation8], 32
        $region48: #{tpu_custom_call.1} parent=39 // pred_fallthru
          _
        // Predicated region
        $region49: #{tpu_custom_call.1} parent=39 // pred_check
          %p312 = pneg %p103
        $region50: #{tpu_custom_call.1} parent=39 // pred_check_branch
          %314 = sbr.rel (%p312) target = $region52
        $region51: #{tpu_custom_call.1} parent=39 // pred_region
          %315 = dma.done [#allocation8], 32
        $region52: #{tpu_custom_call.1} parent=39 // pred_fallthru
          _
        // Predicated region
        $region53: #{tpu_custom_call.1} parent=39 // pred_check
          %p316 = pneg %p124
        $region54: #{tpu_custom_call.1} parent=39 // pred_check_branch
          %318 = sbr.rel (%p316) target = $region56
        $region55: #{tpu_custom_call.1} parent=39 // pred_region
          %319 = dma.done [#allocation11], 8192
        $region56: #{tpu_custom_call.1} parent=39 // pred_fallthru
          _
        // Predicated region
        $region57: #{tpu_custom_call.1} parent=39 // pred_check
          %p320 = pneg %p145
        $region58: #{tpu_custom_call.1} parent=39 // pred_check_branch
          %322 = sbr.rel (%p320) target = $region60
        $region59: #{tpu_custom_call.1} parent=39 // pred_region
          %323 = dma.done [#allocation11], 8192
        $region60: #{tpu_custom_call.1} parent=39 // pred_fallthru
          _
        %s324 = sand.u32 %s48, 1
        %s325 = scalar_lea.sflag [#allocation5], %s324
        %s326 = sand.u32 %s48, 1
        %s327 = smul.addr %s326, 256
        %s328 = scalar_lea.vmem [#allocation4], %s327
        %p329 = pneg %p61
        %p330 = pneg %p58
        %p331 = pneg %p82
        %p332 = pneg %p79
        %p333 = pneg %p103
        %p334 = pneg %p100
        %p335 = pneg %p124
        %p336 = pneg %p121
        %p337 = pneg %p145
        %p338 = pneg %p142
        %p339 = pneg %p173
        %p340 = pneg %p170
        %s341 = sand.u32 %s160, 1
        %s342 = scalar_lea.sflag [#allocation6], %s341
        %s343 = sand.u32 %s160, 1
        %s344 = smul.addr %s343, 256
        %s345 = scalar_lea.vmem [#allocation13], %s344
        %p346 = pneg %p201
        %p347 = pneg %p198
        %s348 = sand.u32 %s188, 1
        %s349 = sand.u32 %s188, 1
        %s350 = smul.addr %s349, 1024
        %s351 = scalar_lea.vmem [#allocation14], %s350
        %s352 = smul.u32 16, %s31
        %s353 = smul.u32 16, %s31
        %v354 = vld [vmem:[%s303] sm:$0xff]
        %v355 = vld [vmem:[%s303 + $0x8] sm:$0xff]
        %v356 = vld [vmem:[%s303 + $0x10] sm:$0xff]
        %v357 = vld [vmem:[%s303 + $0x18] sm:$0xff]
        %v358 = vld [vmem:[%s303 + $0x20] sm:$0xff]
        %v359 = vld [vmem:[%s303 + $0x28] sm:$0xff]
        %v360 = vld [vmem:[%s303 + $0x30] sm:$0xff]
        %v361 = vld [vmem:[%s303 + $0x38] sm:$0xff]
        %v362 = vld [vmem:[%s303 + $0x40] sm:$0xff]
        %v363 = vld [vmem:[%s303 + $0x48] sm:$0xff]
        %v364 = vld [vmem:[%s303 + $0x50] sm:$0xff]
        %v365 = vld [vmem:[%s303 + $0x58] sm:$0xff]
        %v366 = vld [vmem:[%s303 + $0x60] sm:$0xff]
        %v367 = vld [vmem:[%s303 + $0x68] sm:$0xff]
        %v368 = vld [vmem:[%s303 + $0x70] sm:$0xff]
        %v369 = vld [vmem:[%s303 + $0x78] sm:$0xff]
        %v370 = vld [vmem:[%s303 + $0x80] sm:$0xff]
        %v371 = vld [vmem:[%s303 + $0x88] sm:$0xff]
        %v372 = vld [vmem:[%s303 + $0x90] sm:$0xff]
        %v373 = vld [vmem:[%s303 + $0x98] sm:$0xff]
        %v374 = vld [vmem:[%s303 + $0xa0] sm:$0xff]
        %v375 = vld [vmem:[%s303 + $0xa8] sm:$0xff]
        %v376 = vld [vmem:[%s303 + $0xb0] sm:$0xff]
        %v377 = vld [vmem:[%s303 + $0xb8] sm:$0xff]
        %v378 = vld [vmem:[%s303 + $0xc0] sm:$0xff]
        %v379 = vld [vmem:[%s303 + $0xc8] sm:$0xff]
        %v380 = vld [vmem:[%s303 + $0xd0] sm:$0xff]
        %v381 = vld [vmem:[%s303 + $0xd8] sm:$0xff]
        %v382 = vld [vmem:[%s303 + $0xe0] sm:$0xff]
        %v383 = vld [vmem:[%s303 + $0xe8] sm:$0xff]
        %v384 = vld [vmem:[%s303 + $0xf0] sm:$0xff]
        %v385 = vld [vmem:[%s303 + $0xf8] sm:$0xff]
        %v386 = vld [vmem:[#allocation7] sm:$0x3]
        %v387 = vld [vmem:[#allocation9] sm:$0x3]
        %v388 = vadd.f32 %v354, %v355
        %389 = vadd.xlane.f32.xlu0 %v388
        %v390 = vpop.xlane.xlu0 %389
        %v391 = vadd.f32 %v356, %v357
        %392 = vadd.xlane.f32.xlu0 %v391
        %v393 = vpop.xlane.xlu0 %392
        %v394 = vadd.f32 %v358, %v359
        %395 = vadd.xlane.f32.xlu0 %v394
        %v396 = vpop.xlane.xlu0 %395
        %v397 = vadd.f32 %v360, %v361
        %398 = vadd.xlane.f32.xlu0 %v397
        %v399 = vpop.xlane.xlu0 %398
        %v400 = vadd.f32 %v362, %v363
        %401 = vadd.xlane.f32.xlu0 %v400
        %v402 = vpop.xlane.xlu0 %401
        %v403 = vadd.f32 %v364, %v365
        %404 = vadd.xlane.f32.xlu0 %v403
        %v405 = vpop.xlane.xlu0 %404
        %v406 = vadd.f32 %v366, %v367
        %407 = vadd.xlane.f32.xlu0 %v406
        %v408 = vpop.xlane.xlu0 %407
        %v409 = vadd.f32 %v368, %v369
        %410 = vadd.xlane.f32.xlu0 %v409
        %v411 = vpop.xlane.xlu0 %410
        %v412 = vadd.f32 %v370, %v371
        %413 = vadd.xlane.f32.xlu0 %v412
        %v414 = vpop.xlane.xlu0 %413
        %v415 = vadd.f32 %v372, %v373
        %416 = vadd.xlane.f32.xlu0 %v415
        %v417 = vpop.xlane.xlu0 %416
        %v418 = vadd.f32 %v374, %v375
        %419 = vadd.xlane.f32.xlu0 %v418
        %v420 = vpop.xlane.xlu0 %419
        %v421 = vadd.f32 %v376, %v377
        %422 = vadd.xlane.f32.xlu0 %v421
        %v423 = vpop.xlane.xlu0 %422
        %v424 = vadd.f32 %v378, %v379
        %425 = vadd.xlane.f32.xlu0 %v424
        %v426 = vpop.xlane.xlu0 %425
        %v427 = vadd.f32 %v380, %v381
        %428 = vadd.xlane.f32.xlu0 %v427
        %v429 = vpop.xlane.xlu0 %428
        %v430 = vadd.f32 %v382, %v383
        %431 = vadd.xlane.f32.xlu0 %v430
        %v432 = vpop.xlane.xlu0 %431
        %v433 = vadd.f32 %v384, %v385
        %434 = vadd.xlane.f32.xlu0 %v433
        %v435 = vpop.xlane.xlu0 %434
        %v436 = vrcp.pop 256.0
        %v437 = vmul.f32 %v390, %v436
        %v438 = vmul.f32 %v393, %v436
        %v439 = vmul.f32 %v396, %v436
        %v440 = vmul.f32 %v399, %v436
        %v441 = vmul.f32 %v402, %v436
        %v442 = vmul.f32 %v405, %v436
        %v443 = vmul.f32 %v408, %v436
        %v444 = vmul.f32 %v411, %v436
        %v445 = vmul.f32 %v414, %v436
        %v446 = vmul.f32 %v417, %v436
        %v447 = vmul.f32 %v420, %v436
        %v448 = vmul.f32 %v423, %v436
        %v449 = vmul.f32 %v426, %v436
        %v450 = vmul.f32 %v429, %v436
        %v451 = vmul.f32 %v432, %v436
        %v452 = vmul.f32 %v435, %v436
        %v453 = vsub.f32 %v354, %v437
        %v454 = vsub.f32 %v355, %v437
        %v455 = vsub.f32 %v356, %v438
        %v456 = vsub.f32 %v357, %v438
        %v457 = vsub.f32 %v358, %v439
        %v458 = vsub.f32 %v359, %v439
        %v459 = vsub.f32 %v360, %v440
        %v460 = vsub.f32 %v361, %v440
        %v461 = vsub.f32 %v362, %v441
        %v462 = vsub.f32 %v363, %v441
        %v463 = vsub.f32 %v364, %v442
        %v464 = vsub.f32 %v365, %v442
        %v465 = vsub.f32 %v366, %v443
        %v466 = vsub.f32 %v367, %v443
        %v467 = vsub.f32 %v368, %v444
        %v468 = vsub.f32 %v369, %v444
        %v469 = vsub.f32 %v370, %v445
        %v470 = vsub.f32 %v371, %v445
        %v471 = vsub.f32 %v372, %v446
        %v472 = vsub.f32 %v373, %v446
        %v473 = vsub.f32 %v374, %v447
        %v474 = vsub.f32 %v375, %v447
        %v475 = vsub.f32 %v376, %v448
        %v476 = vsub.f32 %v377, %v448
        %v477 = vsub.f32 %v378, %v449
        %v478 = vsub.f32 %v379, %v449
        %v479 = vsub.f32 %v380, %v450
        %v480 = vsub.f32 %v381, %v450
        %v481 = vsub.f32 %v382, %v451
        %v482 = vsub.f32 %v383, %v451
        %v483 = vsub.f32 %v384, %v452
        %v484 = vsub.f32 %v385, %v452
        %v485 = vmul.f32 %v453, %v453
        %v486 = vmul.f32 %v454, %v454
        %v487 = vmul.f32 %v455, %v455
        %v488 = vmul.f32 %v456, %v456
        %v489 = vmul.f32 %v457, %v457
        %v490 = vmul.f32 %v458, %v458
        %v491 = vmul.f32 %v459, %v459
        %v492 = vmul.f32 %v460, %v460
        %v493 = vmul.f32 %v461, %v461
        %v494 = vmul.f32 %v462, %v462
        %v495 = vmul.f32 %v463, %v463
        %v496 = vmul.f32 %v464, %v464
        %v497 = vmul.f32 %v465, %v465
        %v498 = vmul.f32 %v466, %v466
        %v499 = vmul.f32 %v467, %v467
        %v500 = vmul.f32 %v468, %v468
        %v501 = vmul.f32 %v469, %v469
        %v502 = vmul.f32 %v470, %v470
        %v503 = vmul.f32 %v471, %v471
        %v504 = vmul.f32 %v472, %v472
        %v505 = vmul.f32 %v473, %v473
        %v506 = vmul.f32 %v474, %v474
        %v507 = vmul.f32 %v475, %v475
        %v508 = vmul.f32 %v476, %v476
        %v509 = vmul.f32 %v477, %v477
        %v510 = vmul.f32 %v478, %v478
        %v511 = vmul.f32 %v479, %v479
        %v512 = vmul.f32 %v480, %v480
        %v513 = vmul.f32 %v481, %v481
        %v514 = vmul.f32 %v482, %v482
        %v515 = vmul.f32 %v483, %v483
        %v516 = vmul.f32 %v484, %v484
        %v517 = vadd.f32 %v485, %v486
        %518 = vadd.xlane.f32.xlu0 %v517
        %v519 = vpop.xlane.xlu0 %518
        %v520 = vadd.f32 %v487, %v488
        %521 = vadd.xlane.f32.xlu0 %v520
        %v522 = vpop.xlane.xlu0 %521
        %v523 = vadd.f32 %v489, %v490
        %524 = vadd.xlane.f32.xlu0 %v523
        %v525 = vpop.xlane.xlu0 %524
        %v526 = vadd.f32 %v491, %v492
        %527 = vadd.xlane.f32.xlu0 %v526
        %v528 = vpop.xlane.xlu0 %527
        %v529 = vadd.f32 %v493, %v494
        %530 = vadd.xlane.f32.xlu0 %v529
        %v531 = vpop.xlane.xlu0 %530
        %v532 = vadd.f32 %v495, %v496
        %533 = vadd.xlane.f32.xlu0 %v532
        %v534 = vpop.xlane.xlu0 %533
        %v535 = vadd.f32 %v497, %v498
        %536 = vadd.xlane.f32.xlu0 %v535
        %v537 = vpop.xlane.xlu0 %536
        %v538 = vadd.f32 %v499, %v500
        %539 = vadd.xlane.f32.xlu0 %v538
        %v540 = vpop.xlane.xlu0 %539
        %v541 = vadd.f32 %v501, %v502
        %542 = vadd.xlane.f32.xlu0 %v541
        %v543 = vpop.xlane.xlu0 %542
        %v544 = vadd.f32 %v503, %v504
        %545 = vadd.xlane.f32.xlu0 %v544
        %v546 = vpop.xlane.xlu0 %545
        %v547 = vadd.f32 %v505, %v506
        %548 = vadd.xlane.f32.xlu0 %v547
        %v549 = vpop.xlane.xlu0 %548
        %v550 = vadd.f32 %v507, %v508
        %551 = vadd.xlane.f32.xlu0 %v550
        %v552 = vpop.xlane.xlu0 %551
        %v553 = vadd.f32 %v509, %v510
        %554 = vadd.xlane.f32.xlu0 %v553
        %v555 = vpop.xlane.xlu0 %554
        %v556 = vadd.f32 %v511, %v512
        %557 = vadd.xlane.f32.xlu0 %v556
        %v558 = vpop.xlane.xlu0 %557
        %v559 = vadd.f32 %v513, %v514
        %560 = vadd.xlane.f32.xlu0 %v559
        %v561 = vpop.xlane.xlu0 %560
        %v562 = vadd.f32 %v515, %v516
        %563 = vadd.xlane.f32.xlu0 %v562
        %v564 = vpop.xlane.xlu0 %563
        %v565 = vmul.f32 %v519, %v436
        %v566 = vmul.f32 %v522, %v436
        %v567 = vmul.f32 %v525, %v436
        %v568 = vmul.f32 %v528, %v436
        %v569 = vmul.f32 %v531, %v436
        %v570 = vmul.f32 %v534, %v436
        %v571 = vmul.f32 %v537, %v436
        %v572 = vmul.f32 %v540, %v436
        %v573 = vmul.f32 %v543, %v436
        %v574 = vmul.f32 %v546, %v436
        %v575 = vmul.f32 %v549, %v436
        %v576 = vmul.f32 %v552, %v436
        %v577 = vmul.f32 %v555, %v436
        %v578 = vmul.f32 %v558, %v436
        %v579 = vmul.f32 %v561, %v436
        %v580 = vmul.f32 %v564, %v436
        %v581 = vadd.f32 %v565, 1e-05
        %v582 = vadd.f32 %v566, 1e-05
        %v583 = vadd.f32 %v567, 1e-05
        %v584 = vadd.f32 %v568, 1e-05
        %v585 = vadd.f32 %v569, 1e-05
        %v586 = vadd.f32 %v570, 1e-05
        %v587 = vadd.f32 %v571, 1e-05
        %v588 = vadd.f32 %v572, 1e-05
        %v589 = vadd.f32 %v573, 1e-05
        %v590 = vadd.f32 %v574, 1e-05
        %v591 = vadd.f32 %v575, 1e-05
        %v592 = vadd.f32 %v576, 1e-05
        %v593 = vadd.f32 %v577, 1e-05
        %v594 = vadd.f32 %v578, 1e-05
        %v595 = vadd.f32 %v579, 1e-05
        %v596 = vadd.f32 %v580, 1e-05
        %v597 = vrsqrt.pop %v581
        %v598 = vrsqrt.pop %v582
        %v599 = vrsqrt.pop %v583
        %v600 = vrsqrt.pop %v584
        %v601 = vrsqrt.pop %v585
        %v602 = vrsqrt.pop %v586
        %v603 = vrsqrt.pop %v587
        %v604 = vrsqrt.pop %v588
        %v605 = vrsqrt.pop %v589
        %v606 = vrsqrt.pop %v590
        %v607 = vrsqrt.pop %v591
        %v608 = vrsqrt.pop %v592
        %v609 = vrsqrt.pop %v593
        %v610 = vrsqrt.pop %v594
        %v611 = vrsqrt.pop %v595
        %v612 = vrsqrt.pop %v596
        %v613 = vmul.f32 %v453, %v597
        %v614 = vmul.f32 %v454, %v597
        %v615 = vmul.f32 %v455, %v598
        %v616 = vmul.f32 %v456, %v598
        %v617 = vmul.f32 %v457, %v599
        %v618 = vmul.f32 %v458, %v599
        %v619 = vmul.f32 %v459, %v600
        %v620 = vmul.f32 %v460, %v600
        %v621 = vmul.f32 %v461, %v601
        %v622 = vmul.f32 %v462, %v601
        %v623 = vmul.f32 %v463, %v602
        %v624 = vmul.f32 %v464, %v602
        %v625 = vmul.f32 %v465, %v603
        %v626 = vmul.f32 %v466, %v603
        %v627 = vmul.f32 %v467, %v604
        %v628 = vmul.f32 %v468, %v604
        %v629 = vmul.f32 %v469, %v605
        %v630 = vmul.f32 %v470, %v605
        %v631 = vmul.f32 %v471, %v606
        %v632 = vmul.f32 %v472, %v606
        %v633 = vmul.f32 %v473, %v607
        %v634 = vmul.f32 %v474, %v607
        %v635 = vmul.f32 %v475, %v608
        %v636 = vmul.f32 %v476, %v608
        %v637 = vmul.f32 %v477, %v609
        %v638 = vmul.f32 %v478, %v609
        %v639 = vmul.f32 %v479, %v610
        %v640 = vmul.f32 %v480, %v610
        %v641 = vmul.f32 %v481, %v611
        %v642 = vmul.f32 %v482, %v611
        %v643 = vmul.f32 %v483, %v612
        %v644 = vmul.f32 %v484, %v612
        %v646 = vlaneseq
        %v647 = vshrl.u32 %v646, 7
        %v648 = vsub.s32 0, %v647
        %v649 = vrot.slane %v386, %v648
        %v650 = vlaneseq
        %v651 = vshrl.u32 %v650, 7
        %v652 = vsub.s32 1, %v651
        %v653 = vrot.slane %v386, %v652
        %v656 = vmul.f32 %v613, %v649
        %v657 = vmul.f32 %v614, %v653
        %v658 = vmul.f32 %v615, %v649
        %v659 = vmul.f32 %v616, %v653
        %v660 = vmul.f32 %v617, %v649
        %v661 = vmul.f32 %v618, %v653
        %v662 = vmul.f32 %v619, %v649
        %v663 = vmul.f32 %v620, %v653
        %v664 = vmul.f32 %v621, %v649
        %v665 = vmul.f32 %v622, %v653
        %v666 = vmul.f32 %v623, %v649
        %v667 = vmul.f32 %v624, %v653
        %v668 = vmul.f32 %v625, %v649
        %v669 = vmul.f32 %v626, %v653
        %v670 = vmul.f32 %v627, %v649
        %v671 = vmul.f32 %v628, %v653
        %v672 = vmul.f32 %v629, %v649
        %v673 = vmul.f32 %v630, %v653
        %v674 = vmul.f32 %v631, %v649
        %v675 = vmul.f32 %v632, %v653
        %v676 = vmul.f32 %v633, %v649
        %v677 = vmul.f32 %v634, %v653
        %v678 = vmul.f32 %v635, %v649
        %v679 = vmul.f32 %v636, %v653
        %v680 = vmul.f32 %v637, %v649
        %v681 = vmul.f32 %v638, %v653
        %v682 = vmul.f32 %v639, %v649
        %v683 = vmul.f32 %v640, %v653
        %v684 = vmul.f32 %v641, %v649
        %v685 = vmul.f32 %v642, %v653
        %v686 = vmul.f32 %v643, %v649
        %v687 = vmul.f32 %v644, %v653
        %v689 = vlaneseq
        %v690 = vshrl.u32 %v689, 7
        %v691 = vsub.s32 0, %v690
        %v692 = vrot.slane %v387, %v691
        %v693 = vlaneseq
        %v694 = vshrl.u32 %v693, 7
        %v695 = vsub.s32 1, %v694
        %v696 = vrot.slane %v387, %v695
        %v699 = vadd.f32 %v656, %v692
        %v700 = vadd.f32 %v657, %v696
        %v701 = vadd.f32 %v658, %v692
        %v702 = vadd.f32 %v659, %v696
        %v703 = vadd.f32 %v660, %v692
        %v704 = vadd.f32 %v661, %v696
        %v705 = vadd.f32 %v662, %v692
        %v706 = vadd.f32 %v663, %v696
        %v707 = vadd.f32 %v664, %v692
        %v708 = vadd.f32 %v665, %v696
        %v709 = vadd.f32 %v666, %v692
        %v710 = vadd.f32 %v667, %v696
        %v711 = vadd.f32 %v668, %v692
        %v712 = vadd.f32 %v669, %v696
        %v713 = vadd.f32 %v670, %v692
        %v714 = vadd.f32 %v671, %v696
        %v715 = vadd.f32 %v672, %v692
        %v716 = vadd.f32 %v673, %v696
        %v717 = vadd.f32 %v674, %v692
        %v718 = vadd.f32 %v675, %v696
        %v719 = vadd.f32 %v676, %v692
        %v720 = vadd.f32 %v677, %v696
        %v721 = vadd.f32 %v678, %v692
        %v722 = vadd.f32 %v679, %v696
        %v723 = vadd.f32 %v680, %v692
        %v724 = vadd.f32 %v681, %v696
        %v725 = vadd.f32 %v682, %v692
        %v726 = vadd.f32 %v683, %v696
        %v727 = vadd.f32 %v684, %v692
        %v728 = vadd.f32 %v685, %v696
        %v729 = vadd.f32 %v686, %v692
        %v730 = vadd.f32 %v687, %v696
        %v731 = vld [vmem:[#allocation10] sm:$0xff]
        %v732 = vld [vmem:[#allocation10 + $0x8] sm:$0xff]
        %v733 = vld [vmem:[#allocation10 + $0x10] sm:$0xff]
        %v734 = vld [vmem:[#allocation10 + $0x18] sm:$0xff]
        %v735 = vld [vmem:[#allocation10 + $0x20] sm:$0xff]
        %v736 = vld [vmem:[#allocation10 + $0x28] sm:$0xff]
        %v737 = vld [vmem:[#allocation10 + $0x30] sm:$0xff]
        %v738 = vld [vmem:[#allocation10 + $0x38] sm:$0xff]
        %v739 = vld [vmem:[#allocation10 + $0x40] sm:$0xff]
        %v740 = vld [vmem:[#allocation10 + $0x48] sm:$0xff]
        %v741 = vld [vmem:[#allocation10 + $0x50] sm:$0xff]
        %v742 = vld [vmem:[#allocation10 + $0x58] sm:$0xff]
        %v743 = vld [vmem:[#allocation10 + $0x60] sm:$0xff]
        %v744 = vld [vmem:[#allocation10 + $0x68] sm:$0xff]
        %v745 = vld [vmem:[#allocation10 + $0x70] sm:$0xff]
        %v746 = vld [vmem:[#allocation10 + $0x78] sm:$0xff]
        %v747 = vld [vmem:[#allocation10 + $0x80] sm:$0xff]
        %v748 = vld [vmem:[#allocation10 + $0x88] sm:$0xff]
        %v749 = vld [vmem:[#allocation10 + $0x90] sm:$0xff]
        %v750 = vld [vmem:[#allocation10 + $0x98] sm:$0xff]
        %v751 = vld [vmem:[#allocation10 + $0xa0] sm:$0xff]
        %v752 = vld [vmem:[#allocation10 + $0xa8] sm:$0xff]
        %v753 = vld [vmem:[#allocation10 + $0xb0] sm:$0xff]
        %v754 = vld [vmem:[#allocation10 + $0xb8] sm:$0xff]
        %v755 = vld [vmem:[#allocation10 + $0xc0] sm:$0xff]
        %v756 = vld [vmem:[#allocation10 + $0xc8] sm:$0xff]
        %v757 = vld [vmem:[#allocation10 + $0xd0] sm:$0xff]
        %v758 = vld [vmem:[#allocation10 + $0xd8] sm:$0xff]
        %v759 = vld [vmem:[#allocation10 + $0xe0] sm:$0xff]
        %v760 = vld [vmem:[#allocation10 + $0xe8] sm:$0xff]
        %v761 = vld [vmem:[#allocation10 + $0xf0] sm:$0xff]
        %v762 = vld [vmem:[#allocation10 + $0xf8] sm:$0xff]
        %v763 = vld [vmem:[#allocation10 + $0x100] sm:$0xff]
        %v764 = vld [vmem:[#allocation10 + $0x108] sm:$0xff]
        %v765 = vld [vmem:[#allocation10 + $0x110] sm:$0xff]
        %v766 = vld [vmem:[#allocation10 + $0x118] sm:$0xff]
        %v767 = vld [vmem:[#allocation10 + $0x120] sm:$0xff]
        %v768 = vld [vmem:[#allocation10 + $0x128] sm:$0xff]
        %v769 = vld [vmem:[#allocation10 + $0x130] sm:$0xff]
        %v770 = vld [vmem:[#allocation10 + $0x138] sm:$0xff]
        %v771 = vld [vmem:[#allocation10 + $0x140] sm:$0xff]
        %v772 = vld [vmem:[#allocation10 + $0x148] sm:$0xff]
        %v773 = vld [vmem:[#allocation10 + $0x150] sm:$0xff]
        %v774 = vld [vmem:[#allocation10 + $0x158] sm:$0xff]
        %v775 = vld [vmem:[#allocation10 + $0x160] sm:$0xff]
        %v776 = vld [vmem:[#allocation10 + $0x168] sm:$0xff]
        %v777 = vld [vmem:[#allocation10 + $0x170] sm:$0xff]
        %v778 = vld [vmem:[#allocation10 + $0x178] sm:$0xff]
        %v779 = vld [vmem:[#allocation10 + $0x180] sm:$0xff]
        %v780 = vld [vmem:[#allocation10 + $0x188] sm:$0xff]
        %v781 = vld [vmem:[#allocation10 + $0x190] sm:$0xff]
        %v782 = vld [vmem:[#allocation10 + $0x198] sm:$0xff]
        %v783 = vld [vmem:[#allocation10 + $0x1a0] sm:$0xff]
        %v784 = vld [vmem:[#allocation10 + $0x1a8] sm:$0xff]
        %v785 = vld [vmem:[#allocation10 + $0x1b0] sm:$0xff]
        %v786 = vld [vmem:[#allocation10 + $0x1b8] sm:$0xff]
        %v787 = vld [vmem:[#allocation10 + $0x1c0] sm:$0xff]
        %v788 = vld [vmem:[#allocation10 + $0x1c8] sm:$0xff]
        %v789 = vld [vmem:[#allocation10 + $0x1d0] sm:$0xff]
        %v790 = vld [vmem:[#allocation10 + $0x1d8] sm:$0xff]
        %v791 = vld [vmem:[#allocation10 + $0x1e0] sm:$0xff]
        %v792 = vld [vmem:[#allocation10 + $0x1e8] sm:$0xff]
        %v793 = vld [vmem:[#allocation10 + $0x1f0] sm:$0xff]
        %v794 = vld [vmem:[#allocation10 + $0x1f8] sm:$0xff]
        %795 = vmatprep.subr.mxu0 %v762
        %796 = vmatpush1.msra.mxu0 %v761
        %797 = vmatprep.subr.mxu0 %v760
        %798 = vmatpush1.msra.mxu0 %v759
        %799 = vmatprep.subr.mxu0 %v758
        %800 = vmatpush1.msra.mxu0 %v757
        %801 = vmatprep.subr.mxu0 %v756
        %802 = vmatpush1.msra.mxu0 %v755
        %803 = vmatprep.subr.mxu0 %v754
        %804 = vmatpush1.msra.mxu0 %v753
        %805 = vmatprep.subr.mxu0 %v752
        %806 = vmatpush1.msra.mxu0 %v751
        %807 = vmatprep.subr.mxu0 %v750
        %808 = vmatpush1.msra.mxu0 %v749
        %809 = vmatprep.subr.mxu0 %v748
        %810 = vmatpush1.msra.mxu0 %v747
        %811 = vmatprep.subr.mxu0 %v746
        %812 = vmatpush1.msra.mxu0 %v745
        %813 = vmatprep.subr.mxu0 %v744
        %814 = vmatpush1.msra.mxu0 %v743
        %815 = vmatprep.subr.mxu0 %v742
        %816 = vmatpush1.msra.mxu0 %v741
        %817 = vmatprep.subr.mxu0 %v740
        %818 = vmatpush1.msra.mxu0 %v739
        %819 = vmatprep.subr.mxu0 %v738
        %820 = vmatpush1.msra.mxu0 %v737
        %821 = vmatprep.subr.mxu0 %v736
        %822 = vmatpush1.msra.mxu0 %v735
        %823 = vmatprep.subr.mxu0 %v734
        %824 = vmatpush1.msra.mxu0 %v733
        %825 = vmatprep.subr.mxu0 %v732
        %826 = vmatpush1.msra.mxu0 %v731
        %827 = vmatprep.subr.mxu0 %v794
        %828 = vmatpush2.msra.mxu0 %v793
        %829 = vmatprep.subr.mxu0 %v792
        %830 = vmatpush2.msra.mxu0 %v791
        %831 = vmatprep.subr.mxu0 %v790
        %832 = vmatpush2.msra.mxu0 %v789
        %833 = vmatprep.subr.mxu0 %v788
        %834 = vmatpush2.msra.mxu0 %v787
        %835 = vmatprep.subr.mxu0 %v786
        %836 = vmatpush2.msra.mxu0 %v785
        %837 = vmatprep.subr.mxu0 %v784
        %838 = vmatpush2.msra.mxu0 %v783
        %839 = vmatprep.subr.mxu0 %v782
        %840 = vmatpush2.msra.mxu0 %v781
        %841 = vmatprep.subr.mxu0 %v780
        %842 = vmatpush2.msra.mxu0 %v779
        %843 = vmatprep.subr.mxu0 %v778
        %844 = vmatpush2.msra.mxu0 %v777
        %845 = vmatprep.subr.mxu0 %v776
        %846 = vmatpush2.msra.mxu0 %v775
        %847 = vmatprep.subr.mxu0 %v774
        %848 = vmatpush2.msra.mxu0 %v773
        %849 = vmatprep.subr.mxu0 %v772
        %850 = vmatpush2.msra.mxu0 %v771
        %851 = vmatprep.subr.mxu0 %v770
        %852 = vmatpush2.msra.mxu0 %v769
        %853 = vmatprep.subr.mxu0 %v768
        %854 = vmatpush2.msra.mxu0 %v767
        %855 = vmatprep.subr.mxu0 %v766
        %856 = vmatpush2.msra.mxu0 %v765
        %857 = vmatprep.subr.mxu0 %v764
        %858 = vmatpush2.msra.mxu0 %v763
        %859 = vmatprep.mubr.f32.mxu0 %v700
        %860 = vmatmul.mubr.f32.gmra.mxu0 %v699
        %v861 = vpop.f32.mrf.mxu0
        %v862 = vadd.f32 0.0, %v861
        %v863 = vpop.f32.mrf.mxu0
        %v864 = vadd.f32 0.0, %v863
        %865 = vmatprep.mubr.f32.mxu0 %v702
        %866 = vmatmul.mubr.f32.gmra.mxu0 %v701
        %v867 = vpop.f32.mrf.mxu0
        %v868 = vadd.f32 0.0, %v867
        %v869 = vpop.f32.mrf.mxu0
        %v870 = vadd.f32 0.0, %v869
        %871 = vmatprep.mubr.f32.mxu0 %v704
        %872 = vmatmul.mubr.f32.gmra.mxu0 %v703
        %v873 = vpop.f32.mrf.mxu0
        %v874 = vadd.f32 0.0, %v873
        %v875 = vpop.f32.mrf.mxu0
        %v876 = vadd.f32 0.0, %v875
        %877 = vmatprep.mubr.f32.mxu0 %v706
        %878 = vmatmul.mubr.f32.gmra.mxu0 %v705
        %v879 = vpop.f32.mrf.mxu0
        %v880 = vadd.f32 0.0, %v879
        %v881 = vpop.f32.mrf.mxu0
        %v882 = vadd.f32 0.0, %v881
        %883 = vmatprep.mubr.f32.mxu0 %v708
        %884 = vmatmul.mubr.f32.gmra.mxu0 %v707
        %v885 = vpop.f32.mrf.mxu0
        %v886 = vadd.f32 0.0, %v885
        %v887 = vpop.f32.mrf.mxu0
        %v888 = vadd.f32 0.0, %v887
        %889 = vmatprep.mubr.f32.mxu0 %v710
        %890 = vmatmul.mubr.f32.gmra.mxu0 %v709
        %v891 = vpop.f32.mrf.mxu0
        %v892 = vadd.f32 0.0, %v891
        %v893 = vpop.f32.mrf.mxu0
        %v894 = vadd.f32 0.0, %v893
        %895 = vmatprep.mubr.f32.mxu0 %v712
        %896 = vmatmul.mubr.f32.gmra.mxu0 %v711
        %v897 = vpop.f32.mrf.mxu0
        %v898 = vadd.f32 0.0, %v897
        %v899 = vpop.f32.mrf.mxu0
        %v900 = vadd.f32 0.0, %v899
        %901 = vmatprep.mubr.f32.mxu0 %v714
        %902 = vmatmul.mubr.f32.gmra.mxu0 %v713
        %v903 = vpop.f32.mrf.mxu0
        %v904 = vadd.f32 0.0, %v903
        %v905 = vpop.f32.mrf.mxu0
        %v906 = vadd.f32 0.0, %v905
        %907 = vmatprep.mubr.f32.mxu0 %v716
        %908 = vmatmul.mubr.f32.gmra.mxu0 %v715
        %v909 = vpop.f32.mrf.mxu0
        %v910 = vadd.f32 0.0, %v909
        %v911 = vpop.f32.mrf.mxu0
        %v912 = vadd.f32 0.0, %v911
        %913 = vmatprep.mubr.f32.mxu0 %v718
        %914 = vmatmul.mubr.f32.gmra.mxu0 %v717
        %v915 = vpop.f32.mrf.mxu0
        %v916 = vadd.f32 0.0, %v915
        %v917 = vpop.f32.mrf.mxu0
        %v918 = vadd.f32 0.0, %v917
        %919 = vmatprep.mubr.f32.mxu0 %v720
        %920 = vmatmul.mubr.f32.gmra.mxu0 %v719
        %v921 = vpop.f32.mrf.mxu0
        %v922 = vadd.f32 0.0, %v921
        %v923 = vpop.f32.mrf.mxu0
        %v924 = vadd.f32 0.0, %v923
        %925 = vmatprep.mubr.f32.mxu0 %v722
        %926 = vmatmul.mubr.f32.gmra.mxu0 %v721
        %v927 = vpop.f32.mrf.mxu0
        %v928 = vadd.f32 0.0, %v927
        %v929 = vpop.f32.mrf.mxu0
        %v930 = vadd.f32 0.0, %v929
        %931 = vmatprep.mubr.f32.mxu0 %v724
        %932 = vmatmul.mubr.f32.gmra.mxu0 %v723
        %v933 = vpop.f32.mrf.mxu0
        %v934 = vadd.f32 0.0, %v933
        %v935 = vpop.f32.mrf.mxu0
        %v936 = vadd.f32 0.0, %v935
        %937 = vmatprep.mubr.f32.mxu0 %v726
        %938 = vmatmul.mubr.f32.gmra.mxu0 %v725
        %v939 = vpop.f32.mrf.mxu0
        %v940 = vadd.f32 0.0, %v939
        %v941 = vpop.f32.mrf.mxu0
        %v942 = vadd.f32 0.0, %v941
        %943 = vmatprep.mubr.f32.mxu0 %v728
        %944 = vmatmul.mubr.f32.gmra.mxu0 %v727
        %v945 = vpop.f32.mrf.mxu0
        %v946 = vadd.f32 0.0, %v945
        %v947 = vpop.f32.mrf.mxu0
        %v948 = vadd.f32 0.0, %v947
        %949 = vmatprep.mubr.f32.mxu0 %v730
        %950 = vmatmul.mubr.f32.gmra.mxu0 %v729
        %v951 = vpop.f32.mrf.mxu0
        %v952 = vadd.f32 0.0, %v951
        %v953 = vpop.f32.mrf.mxu0
        %v954 = vadd.f32 0.0, %v953
        %955 = vdwg.mxu0
        %956 = vxpose.xlu0.b32.start [1/16] %v862, 128
        %957 = vxpose.xlu0.b32.cont [2/16] %v868, 128
        %958 = vxpose.xlu0.b32.cont [3/16] %v874, 128
        %959 = vxpose.xlu0.b32.cont [4/16] %v880, 128
        %960 = vxpose.xlu0.b32.cont [5/16] %v886, 128
        %961 = vxpose.xlu0.b32.cont [6/16] %v892, 128
        %962 = vxpose.xlu0.b32.cont [7/16] %v898, 128
        %963 = vxpose.xlu0.b32.cont [8/16] %v904, 128
        %964 = vxpose.xlu0.b32.cont [9/16] %v910, 128
        %965 = vxpose.xlu0.b32.cont [10/16] %v916, 128
        %966 = vxpose.xlu0.b32.cont [11/16] %v922, 128
        %967 = vxpose.xlu0.b32.cont [12/16] %v928, 128
        %968 = vxpose.xlu0.b32.cont [13/16] %v934, 128
        %969 = vxpose.xlu0.b32.cont [14/16] %v940, 128
        %970 = vxpose.xlu0.b32.cont [15/16] %v946, 128
        %971 = vxpose.xlu0.b32.end [16/16] %v952, 128
        %v972 = vpop.trf.xlu0
        %v973 = vpop.trf.xlu0
        %v974 = vpop.trf.xlu0
        %v975 = vpop.trf.xlu0
        %v976 = vpop.trf.xlu0
        %v977 = vpop.trf.xlu0
        %v978 = vpop.trf.xlu0
        %v979 = vpop.trf.xlu0
        %v980 = vpop.trf.xlu0
        %v981 = vpop.trf.xlu0
        %v982 = vpop.trf.xlu0
        %v983 = vpop.trf.xlu0
        %v984 = vpop.trf.xlu0
        %v985 = vpop.trf.xlu0
        %v986 = vpop.trf.xlu0
        %v987 = vpop.trf.xlu0
        %988 = vxpose.xlu0.b32.start [1/16] %v864, 128
        %989 = vxpose.xlu0.b32.cont [2/16] %v870, 128
        %990 = vxpose.xlu0.b32.cont [3/16] %v876, 128
        %991 = vxpose.xlu0.b32.cont [4/16] %v882, 128
        %992 = vxpose.xlu0.b32.cont [5/16] %v888, 128
        %993 = vxpose.xlu0.b32.cont [6/16] %v894, 128
        %994 = vxpose.xlu0.b32.cont [7/16] %v900, 128
        %995 = vxpose.xlu0.b32.cont [8/16] %v906, 128
        %996 = vxpose.xlu0.b32.cont [9/16] %v912, 128
        %997 = vxpose.xlu0.b32.cont [10/16] %v918, 128
        %998 = vxpose.xlu0.b32.cont [11/16] %v924, 128
        %999 = vxpose.xlu0.b32.cont [12/16] %v930, 128
        %1000 = vxpose.xlu0.b32.cont [13/16] %v936, 128
        %1001 = vxpose.xlu0.b32.cont [14/16] %v942, 128
        %1002 = vxpose.xlu0.b32.cont [15/16] %v948, 128
        %1003 = vxpose.xlu0.b32.end [16/16] %v954, 128
        %v1004 = vpop.trf.xlu0
        %v1005 = vpop.trf.xlu0
        %v1006 = vpop.trf.xlu0
        %v1007 = vpop.trf.xlu0
        %v1008 = vpop.trf.xlu0
        %v1009 = vpop.trf.xlu0
        %v1010 = vpop.trf.xlu0
        %v1011 = vpop.trf.xlu0
        %v1012 = vpop.trf.xlu0
        %v1013 = vpop.trf.xlu0
        %v1014 = vpop.trf.xlu0
        %v1015 = vpop.trf.xlu0
        %v1016 = vpop.trf.xlu0
        %v1017 = vpop.trf.xlu0
        %v1018 = vpop.trf.xlu0
        %v1019 = vpop.trf.xlu0
        %1020 = vst [vmem:[#allocation3] sm:$0xff] %v972
        %1021 = vst [vmem:[#allocation3 + $0x8] sm:$0xff] %v973
        %1022 = vst [vmem:[#allocation3 + $0x10] sm:$0xff] %v974
        %1023 = vst [vmem:[#allocation3 + $0x18] sm:$0xff] %v975
        %1024 = vst [vmem:[#allocation3 + $0x20] sm:$0xff] %v976
        %1025 = vst [vmem:[#allocation3 + $0x28] sm:$0xff] %v977
        %1026 = vst [vmem:[#allocation3 + $0x30] sm:$0xff] %v978
        %1027 = vst [vmem:[#allocation3 + $0x38] sm:$0xff] %v979
        %1028 = vst [vmem:[#allocation3 + $0x40] sm:$0xff] %v980
        %1029 = vst [vmem:[#allocation3 + $0x48] sm:$0xff] %v981
        %1030 = vst [vmem:[#allocation3 + $0x50] sm:$0xff] %v982
        %1031 = vst [vmem:[#allocation3 + $0x58] sm:$0xff] %v983
        %1032 = vst [vmem:[#allocation3 + $0x60] sm:$0xff] %v984
        %1033 = vst [vmem:[#allocation3 + $0x68] sm:$0xff] %v985
        %1034 = vst [vmem:[#allocation3 + $0x70] sm:$0xff] %v986
        %1035 = vst [vmem:[#allocation3 + $0x78] sm:$0xff] %v987
        %1036 = vst [vmem:[#allocation3 + $0x80] sm:$0xff] %v1004
        %1037 = vst [vmem:[#allocation3 + $0x88] sm:$0xff] %v1005
        %1038 = vst [vmem:[#allocation3 + $0x90] sm:$0xff] %v1006
        %1039 = vst [vmem:[#allocation3 + $0x98] sm:$0xff] %v1007
        %1040 = vst [vmem:[#allocation3 + $0xa0] sm:$0xff] %v1008
        %1041 = vst [vmem:[#allocation3 + $0xa8] sm:$0xff] %v1009
        %1042 = vst [vmem:[#allocation3 + $0xb0] sm:$0xff] %v1010
        %1043 = vst [vmem:[#allocation3 + $0xb8] sm:$0xff] %v1011
        %1044 = vst [vmem:[#allocation3 + $0xc0] sm:$0xff] %v1012
        %1045 = vst [vmem:[#allocation3 + $0xc8] sm:$0xff] %v1013
        %1046 = vst [vmem:[#allocation3 + $0xd0] sm:$0xff] %v1014
        %1047 = vst [vmem:[#allocation3 + $0xd8] sm:$0xff] %v1015
        %1048 = vst [vmem:[#allocation3 + $0xe0] sm:$0xff] %v1016
        %1049 = vst [vmem:[#allocation3 + $0xe8] sm:$0xff] %v1017
        %1050 = vst [vmem:[#allocation3 + $0xf0] sm:$0xff] %v1018
        %1051 = vst [vmem:[#allocation3 + $0xf8] sm:$0xff] %v1019
        %v1052 = vld [vmem:[#allocation3] sm:$0xff]
        %v1053 = vld [vmem:[#allocation3 + $0x8] sm:$0xff]
        %v1054 = vld [vmem:[#allocation3 + $0x10] sm:$0xff]
        %v1055 = vld [vmem:[#allocation3 + $0x18] sm:$0xff]
        %1056 = vst [vmem:[%s345] sm:$0xff] %v1052
        %1057 = vst [vmem:[%s345 + $0x8] sm:$0xff] %v1053
        %1058 = vst [vmem:[%s345 + $0x10] sm:$0xff] %v1054
        %1059 = vst [vmem:[%s345 + $0x18] sm:$0xff] %v1055
        %v1060 = vld [vmem:[#allocation3 + $0x20] sm:$0xff]
        %v1061 = vld [vmem:[#allocation3 + $0x28] sm:$0xff]
        %v1062 = vld [vmem:[#allocation3 + $0x30] sm:$0xff]
        %v1063 = vld [vmem:[#allocation3 + $0x38] sm:$0xff]
        %s1064 = scalar_lea.vmem %s345, 32 [#allocation13]
        %1065 = vst [vmem:[%s1064] sm:$0xff] %v1060
        %1066 = vst [vmem:[%s1064 + $0x8] sm:$0xff] %v1061
        %1067 = vst [vmem:[%s1064 + $0x10] sm:$0xff] %v1062
        %1068 = vst [vmem:[%s1064 + $0x18] sm:$0xff] %v1063
        %v1069 = vld [vmem:[#allocation3 + $0x40] sm:$0xff]
        %v1070 = vld [vmem:[#allocation3 + $0x48] sm:$0xff]
        %v1071 = vld [vmem:[#allocation3 + $0x50] sm:$0xff]
        %v1072 = vld [vmem:[#allocation3 + $0x58] sm:$0xff]
        %s1073 = scalar_lea.vmem %s345, 64 [#allocation13]
        %1074 = vst [vmem:[%s1073] sm:$0xff] %v1069
        %1075 = vst [vmem:[%s1073 + $0x8] sm:$0xff] %v1070
        %1076 = vst [vmem:[%s1073 + $0x10] sm:$0xff] %v1071
        %1077 = vst [vmem:[%s1073 + $0x18] sm:$0xff] %v1072
        %v1078 = vld [vmem:[#allocation3 + $0x60] sm:$0xff]
        %v1079 = vld [vmem:[#allocation3 + $0x68] sm:$0xff]
        %v1080 = vld [vmem:[#allocation3 + $0x70] sm:$0xff]
        %v1081 = vld [vmem:[#allocation3 + $0x78] sm:$0xff]
        %s1082 = scalar_lea.vmem %s345, 96 [#allocation13]
        %1083 = vst [vmem:[%s1082] sm:$0xff] %v1078
        %1084 = vst [vmem:[%s1082 + $0x8] sm:$0xff] %v1079
        %1085 = vst [vmem:[%s1082 + $0x10] sm:$0xff] %v1080
        %1086 = vst [vmem:[%s1082 + $0x18] sm:$0xff] %v1081
        %v1087 = vld [vmem:[#allocation3 + $0x80] sm:$0xff]
        %v1088 = vld [vmem:[#allocation3 + $0x88] sm:$0xff]
        %v1089 = vld [vmem:[#allocation3 + $0x90] sm:$0xff]
        %v1090 = vld [vmem:[#allocation3 + $0x98] sm:$0xff]
        %s1091 = scalar_lea.vmem %s345, 128 [#allocation13]
        %1092 = vst [vmem:[%s1091] sm:$0xff] %v1087
        %1093 = vst [vmem:[%s1091 + $0x8] sm:$0xff] %v1088
        %1094 = vst [vmem:[%s1091 + $0x10] sm:$0xff] %v1089
        %1095 = vst [vmem:[%s1091 + $0x18] sm:$0xff] %v1090
        %v1096 = vld [vmem:[#allocation3 + $0xa0] sm:$0xff]
        %v1097 = vld [vmem:[#allocation3 + $0xa8] sm:$0xff]
        %v1098 = vld [vmem:[#allocation3 + $0xb0] sm:$0xff]
        %v1099 = vld [vmem:[#allocation3 + $0xb8] sm:$0xff]
        %s1100 = scalar_lea.vmem %s345, 160 [#allocation13]
        %1101 = vst [vmem:[%s1100] sm:$0xff] %v1096
        %1102 = vst [vmem:[%s1100 + $0x8] sm:$0xff] %v1097
        %1103 = vst [vmem:[%s1100 + $0x10] sm:$0xff] %v1098
        %1104 = vst [vmem:[%s1100 + $0x18] sm:$0xff] %v1099
        %v1105 = vld [vmem:[#allocation3 + $0xc0] sm:$0xff]
        %v1106 = vld [vmem:[#allocation3 + $0xc8] sm:$0xff]
        %v1107 = vld [vmem:[#allocation3 + $0xd0] sm:$0xff]
        %v1108 = vld [vmem:[#allocation3 + $0xd8] sm:$0xff]
        %s1109 = scalar_lea.vmem %s345, 192 [#allocation13]
        %1110 = vst [vmem:[%s1109] sm:$0xff] %v1105
        %1111 = vst [vmem:[%s1109 + $0x8] sm:$0xff] %v1106
        %1112 = vst [vmem:[%s1109 + $0x10] sm:$0xff] %v1107
        %1113 = vst [vmem:[%s1109 + $0x18] sm:$0xff] %v1108
        %v1114 = vld [vmem:[#allocation3 + $0xe0] sm:$0xff]
        %v1115 = vld [vmem:[#allocation3 + $0xe8] sm:$0xff]
        %v1116 = vld [vmem:[#allocation3 + $0xf0] sm:$0xff]
        %v1117 = vld [vmem:[#allocation3 + $0xf8] sm:$0xff]
        %s1118 = scalar_lea.vmem %s345, 224 [#allocation13]
        %1119 = vst [vmem:[%s1118] sm:$0xff] %v1114
        %1120 = vst [vmem:[%s1118 + $0x8] sm:$0xff] %v1115
        %1121 = vst [vmem:[%s1118 + $0x10] sm:$0xff] %v1116
        %1122 = vst [vmem:[%s1118 + $0x18] sm:$0xff] %v1117
        %v1123 = vld [vmem:[#allocation12] sm:$0xff]
        %v1124 = vld [vmem:[#allocation12 + $0x8] sm:$0xff]
        %v1125 = vld [vmem:[#allocation12 + $0x10] sm:$0xff]
        %v1126 = vld [vmem:[#allocation12 + $0x18] sm:$0xff]
        %v1127 = vld [vmem:[#allocation12 + $0x20] sm:$0xff]
        %v1128 = vld [vmem:[#allocation12 + $0x28] sm:$0xff]
        %v1129 = vld [vmem:[#allocation12 + $0x30] sm:$0xff]
        %v1130 = vld [vmem:[#allocation12 + $0x38] sm:$0xff]
        %v1131 = vld [vmem:[#allocation12 + $0x40] sm:$0xff]
        %v1132 = vld [vmem:[#allocation12 + $0x48] sm:$0xff]
        %v1133 = vld [vmem:[#allocation12 + $0x50] sm:$0xff]
        %v1134 = vld [vmem:[#allocation12 + $0x58] sm:$0xff]
        %v1135 = vld [vmem:[#allocation12 + $0x60] sm:$0xff]
        %v1136 = vld [vmem:[#allocation12 + $0x68] sm:$0xff]
        %v1137 = vld [vmem:[#allocation12 + $0x70] sm:$0xff]
        %v1138 = vld [vmem:[#allocation12 + $0x78] sm:$0xff]
        %v1139 = vld [vmem:[#allocation12 + $0x80] sm:$0xff]
        %v1140 = vld [vmem:[#allocation12 + $0x88] sm:$0xff]
        %v1141 = vld [vmem:[#allocation12 + $0x90] sm:$0xff]
        %v1142 = vld [vmem:[#allocation12 + $0x98] sm:$0xff]
        %v1143 = vld [vmem:[#allocation12 + $0xa0] sm:$0xff]
        %v1144 = vld [vmem:[#allocation12 + $0xa8] sm:$0xff]
        %v1145 = vld [vmem:[#allocation12 + $0xb0] sm:$0xff]
        %v1146 = vld [vmem:[#allocation12 + $0xb8] sm:$0xff]
        %v1147 = vld [vmem:[#allocation12 + $0xc0] sm:$0xff]
        %v1148 = vld [vmem:[#allocation12 + $0xc8] sm:$0xff]
        %v1149 = vld [vmem:[#allocation12 + $0xd0] sm:$0xff]
        %v1150 = vld [vmem:[#allocation12 + $0xd8] sm:$0xff]
        %v1151 = vld [vmem:[#allocation12 + $0xe0] sm:$0xff]
        %v1152 = vld [vmem:[#allocation12 + $0xe8] sm:$0xff]
        %v1153 = vld [vmem:[#allocation12 + $0xf0] sm:$0xff]
        %v1154 = vld [vmem:[#allocation12 + $0xf8] sm:$0xff]
        %v1155 = vld [vmem:[#allocation12 + $0x100] sm:$0xff]
        %v1156 = vld [vmem:[#allocation12 + $0x108] sm:$0xff]
        %v1157 = vld [vmem:[#allocation12 + $0x110] sm:$0xff]
        %v1158 = vld [vmem:[#allocation12 + $0x118] sm:$0xff]
        %v1159 = vld [vmem:[#allocation12 + $0x120] sm:$0xff]
        %v1160 = vld [vmem:[#allocation12 + $0x128] sm:$0xff]
        %v1161 = vld [vmem:[#allocation12 + $0x130] sm:$0xff]
        %v1162 = vld [vmem:[#allocation12 + $0x138] sm:$0xff]
        %v1163 = vld [vmem:[#allocation12 + $0x140] sm:$0xff]
        %v1164 = vld [vmem:[#allocation12 + $0x148] sm:$0xff]
        %v1165 = vld [vmem:[#allocation12 + $0x150] sm:$0xff]
        %v1166 = vld [vmem:[#allocation12 + $0x158] sm:$0xff]
        %v1167 = vld [vmem:[#allocation12 + $0x160] sm:$0xff]
        %v1168 = vld [vmem:[#allocation12 + $0x168] sm:$0xff]
        %v1169 = vld [vmem:[#allocation12 + $0x170] sm:$0xff]
        %v1170 = vld [vmem:[#allocation12 + $0x178] sm:$0xff]
        %v1171 = vld [vmem:[#allocation12 + $0x180] sm:$0xff]
        %v1172 = vld [vmem:[#allocation12 + $0x188] sm:$0xff]
        %v1173 = vld [vmem:[#allocation12 + $0x190] sm:$0xff]
        %v1174 = vld [vmem:[#allocation12 + $0x198] sm:$0xff]
        %v1175 = vld [vmem:[#allocation12 + $0x1a0] sm:$0xff]
        %v1176 = vld [vmem:[#allocation12 + $0x1a8] sm:$0xff]
        %v1177 = vld [vmem:[#allocation12 + $0x1b0] sm:$0xff]
        %v1178 = vld [vmem:[#allocation12 + $0x1b8] sm:$0xff]
        %v1179 = vld [vmem:[#allocation12 + $0x1c0] sm:$0xff]
        %v1180 = vld [vmem:[#allocation12 + $0x1c8] sm:$0xff]
        %v1181 = vld [vmem:[#allocation12 + $0x1d0] sm:$0xff]
        %v1182 = vld [vmem:[#allocation12 + $0x1d8] sm:$0xff]
        %v1183 = vld [vmem:[#allocation12 + $0x1e0] sm:$0xff]
        %v1184 = vld [vmem:[#allocation12 + $0x1e8] sm:$0xff]
        %v1185 = vld [vmem:[#allocation12 + $0x1f0] sm:$0xff]
        %v1186 = vld [vmem:[#allocation12 + $0x1f8] sm:$0xff]
        %1187 = vmatprep.subr.mxu0 %v1154
        %1188 = vmatpush1.msra.mxu0 %v1153
        %1189 = vmatprep.subr.mxu0 %v1152
        %1190 = vmatpush1.msra.mxu0 %v1151
        %1191 = vmatprep.subr.mxu0 %v1150
        %1192 = vmatpush1.msra.mxu0 %v1149
        %1193 = vmatprep.subr.mxu0 %v1148
        %1194 = vmatpush1.msra.mxu0 %v1147
        %1195 = vmatprep.subr.mxu0 %v1146
        %1196 = vmatpush1.msra.mxu0 %v1145
        %1197 = vmatprep.subr.mxu0 %v1144
        %1198 = vmatpush1.msra.mxu0 %v1143
        %1199 = vmatprep.subr.mxu0 %v1142
        %1200 = vmatpush1.msra.mxu0 %v1141
        %1201 = vmatprep.subr.mxu0 %v1140
        %1202 = vmatpush1.msra.mxu0 %v1139
        %1203 = vmatprep.subr.mxu0 %v1138
        %1204 = vmatpush1.msra.mxu0 %v1137
        %1205 = vmatprep.subr.mxu0 %v1136
        %1206 = vmatpush1.msra.mxu0 %v1135
        %1207 = vmatprep.subr.mxu0 %v1134
        %1208 = vmatpush1.msra.mxu0 %v1133
        %1209 = vmatprep.subr.mxu0 %v1132
        %1210 = vmatpush1.msra.mxu0 %v1131
        %1211 = vmatprep.subr.mxu0 %v1130
        %1212 = vmatpush1.msra.mxu0 %v1129
        %1213 = vmatprep.subr.mxu0 %v1128
        %1214 = vmatpush1.msra.mxu0 %v1127
        %1215 = vmatprep.subr.mxu0 %v1126
        %1216 = vmatpush1.msra.mxu0 %v1125
        %1217 = vmatprep.subr.mxu0 %v1124
        %1218 = vmatpush1.msra.mxu0 %v1123
        %1219 = vmatprep.subr.mxu0 %v1186
        %1220 = vmatpush2.msra.mxu0 %v1185
        %1221 = vmatprep.subr.mxu0 %v1184
        %1222 = vmatpush2.msra.mxu0 %v1183
        %1223 = vmatprep.subr.mxu0 %v1182
        %1224 = vmatpush2.msra.mxu0 %v1181
        %1225 = vmatprep.subr.mxu0 %v1180
        %1226 = vmatpush2.msra.mxu0 %v1179
        %1227 = vmatprep.subr.mxu0 %v1178
        %1228 = vmatpush2.msra.mxu0 %v1177
        %1229 = vmatprep.subr.mxu0 %v1176
        %1230 = vmatpush2.msra.mxu0 %v1175
        %1231 = vmatprep.subr.mxu0 %v1174
        %1232 = vmatpush2.msra.mxu0 %v1173
        %1233 = vmatprep.subr.mxu0 %v1172
        %1234 = vmatpush2.msra.mxu0 %v1171
        %1235 = vmatprep.subr.mxu0 %v1170
        %1236 = vmatpush2.msra.mxu0 %v1169
        %1237 = vmatprep.subr.mxu0 %v1168
        %1238 = vmatpush2.msra.mxu0 %v1167
        %1239 = vmatprep.subr.mxu0 %v1166
        %1240 = vmatpush2.msra.mxu0 %v1165
        %1241 = vmatprep.subr.mxu0 %v1164
        %1242 = vmatpush2.msra.mxu0 %v1163
        %1243 = vmatprep.subr.mxu0 %v1162
        %1244 = vmatpush2.msra.mxu0 %v1161
        %1245 = vmatprep.subr.mxu0 %v1160
        %1246 = vmatpush2.msra.mxu0 %v1159
        %1247 = vmatprep.subr.mxu0 %v1158
        %1248 = vmatpush2.msra.mxu0 %v1157
        %1249 = vmatprep.subr.mxu0 %v1156
        %1250 = vmatpush2.msra.mxu0 %v1155
        %1251 = vmatprep.mubr.f32.mxu0 %v700
        %1252 = vmatmul.mubr.f32.gmra.mxu0 %v699
        %v1253 = vpop.f32.mrf.mxu0
        %v1254 = vadd.f32 0.0, %v1253
        %v1255 = vpop.f32.mrf.mxu0
        %v1256 = vadd.f32 0.0, %v1255
        %1257 = vmatprep.mubr.f32.mxu0 %v702
        %1258 = vmatmul.mubr.f32.gmra.mxu0 %v701
        %v1259 = vpop.f32.mrf.mxu0
        %v1260 = vadd.f32 0.0, %v1259
        %v1261 = vpop.f32.mrf.mxu0
        %v1262 = vadd.f32 0.0, %v1261
        %1263 = vmatprep.mubr.f32.mxu0 %v704
        %1264 = vmatmul.mubr.f32.gmra.mxu0 %v703
        %v1265 = vpop.f32.mrf.mxu0
        %v1266 = vadd.f32 0.0, %v1265
        %v1267 = vpop.f32.mrf.mxu0
        %v1268 = vadd.f32 0.0, %v1267
        %1269 = vmatprep.mubr.f32.mxu0 %v706
        %1270 = vmatmul.mubr.f32.gmra.mxu0 %v705
        %v1271 = vpop.f32.mrf.mxu0
        %v1272 = vadd.f32 0.0, %v1271
        %v1273 = vpop.f32.mrf.mxu0
        %v1274 = vadd.f32 0.0, %v1273
        %1275 = vmatprep.mubr.f32.mxu0 %v708
        %1276 = vmatmul.mubr.f32.gmra.mxu0 %v707
        %v1277 = vpop.f32.mrf.mxu0
        %v1278 = vadd.f32 0.0, %v1277
        %v1279 = vpop.f32.mrf.mxu0
        %v1280 = vadd.f32 0.0, %v1279
        %1281 = vmatprep.mubr.f32.mxu0 %v710
        %1282 = vmatmul.mubr.f32.gmra.mxu0 %v709
        %v1283 = vpop.f32.mrf.mxu0
        %v1284 = vadd.f32 0.0, %v1283
        %v1285 = vpop.f32.mrf.mxu0
        %v1286 = vadd.f32 0.0, %v1285
        %1287 = vmatprep.mubr.f32.mxu0 %v712
        %1288 = vmatmul.mubr.f32.gmra.mxu0 %v711
        %v1289 = vpop.f32.mrf.mxu0
        %v1290 = vadd.f32 0.0, %v1289
        %v1291 = vpop.f32.mrf.mxu0
        %v1292 = vadd.f32 0.0, %v1291
        %1293 = vmatprep.mubr.f32.mxu0 %v714
        %1294 = vmatmul.mubr.f32.gmra.mxu0 %v713
        %v1295 = vpop.f32.mrf.mxu0
        %v1296 = vadd.f32 0.0, %v1295
        %v1297 = vpop.f32.mrf.mxu0
        %v1298 = vadd.f32 0.0, %v1297
        %1299 = vmatprep.mubr.f32.mxu0 %v716
        %1300 = vmatmul.mubr.f32.gmra.mxu0 %v715
        %v1301 = vpop.f32.mrf.mxu0
        %v1302 = vadd.f32 0.0, %v1301
        %v1303 = vpop.f32.mrf.mxu0
        %v1304 = vadd.f32 0.0, %v1303
        %1305 = vmatprep.mubr.f32.mxu0 %v718
        %1306 = vmatmul.mubr.f32.gmra.mxu0 %v717
        %v1307 = vpop.f32.mrf.mxu0
        %v1308 = vadd.f32 0.0, %v1307
        %v1309 = vpop.f32.mrf.mxu0
        %v1310 = vadd.f32 0.0, %v1309
        %1311 = vmatprep.mubr.f32.mxu0 %v720
        %1312 = vmatmul.mubr.f32.gmra.mxu0 %v719
        %v1313 = vpop.f32.mrf.mxu0
        %v1314 = vadd.f32 0.0, %v1313
        %v1315 = vpop.f32.mrf.mxu0
        %v1316 = vadd.f32 0.0, %v1315
        %1317 = vmatprep.mubr.f32.mxu0 %v722
        %1318 = vmatmul.mubr.f32.gmra.mxu0 %v721
        %v1319 = vpop.f32.mrf.mxu0
        %v1320 = vadd.f32 0.0, %v1319
        %v1321 = vpop.f32.mrf.mxu0
        %v1322 = vadd.f32 0.0, %v1321
        %1323 = vmatprep.mubr.f32.mxu0 %v724
        %1324 = vmatmul.mubr.f32.gmra.mxu0 %v723
        %v1325 = vpop.f32.mrf.mxu0
        %v1326 = vadd.f32 0.0, %v1325
        %v1327 = vpop.f32.mrf.mxu0
        %v1328 = vadd.f32 0.0, %v1327
        %1329 = vmatprep.mubr.f32.mxu0 %v726
        %1330 = vmatmul.mubr.f32.gmra.mxu0 %v725
        %v1331 = vpop.f32.mrf.mxu0
        %v1332 = vadd.f32 0.0, %v1331
        %v1333 = vpop.f32.mrf.mxu0
        %v1334 = vadd.f32 0.0, %v1333
        %1335 = vmatprep.mubr.f32.mxu0 %v728
        %1336 = vmatmul.mubr.f32.gmra.mxu0 %v727
        %v1337 = vpop.f32.mrf.mxu0
        %v1338 = vadd.f32 0.0, %v1337
        %v1339 = vpop.f32.mrf.mxu0
        %v1340 = vadd.f32 0.0, %v1339
        %1341 = vmatprep.mubr.f32.mxu0 %v730
        %1342 = vmatmul.mubr.f32.gmra.mxu0 %v729
        %v1343 = vpop.f32.mrf.mxu0
        %v1344 = vadd.f32 0.0, %v1343
        %v1345 = vpop.f32.mrf.mxu0
        %v1346 = vadd.f32 0.0, %v1345
        %1347 = vdwg.mxu0
        %1348 = vst [vmem:[#allocation2] sm:$0xff] %v1254
        %1349 = vst [vmem:[#allocation2 + $0x8] sm:$0xff] %v1256
        %1350 = vst [vmem:[#allocation2 + $0x10] sm:$0xff] %v1260
        %1351 = vst [vmem:[#allocation2 + $0x18] sm:$0xff] %v1262
        %1352 = vst [vmem:[#allocation2 + $0x20] sm:$0xff] %v1266
        %1353 = vst [vmem:[#allocation2 + $0x28] sm:$0xff] %v1268
        %1354 = vst [vmem:[#allocation2 + $0x30] sm:$0xff] %v1272
        %1355 = vst [vmem:[#allocation2 + $0x38] sm:$0xff] %v1274
        %1356 = vst [vmem:[#allocation2 + $0x40] sm:$0xff] %v1278
        %1357 = vst [vmem:[#allocation2 + $0x48] sm:$0xff] %v1280
        %1358 = vst [vmem:[#allocation2 + $0x50] sm:$0xff] %v1284
        %1359 = vst [vmem:[#allocation2 + $0x58] sm:$0xff] %v1286
        %1360 = vst [vmem:[#allocation2 + $0x60] sm:$0xff] %v1290
        %1361 = vst [vmem:[#allocation2 + $0x68] sm:$0xff] %v1292
        %1362 = vst [vmem:[#allocation2 + $0x70] sm:$0xff] %v1296
        %1363 = vst [vmem:[#allocation2 + $0x78] sm:$0xff] %v1298
        %1364 = vst [vmem:[#allocation2 + $0x80] sm:$0xff] %v1302
        %1365 = vst [vmem:[#allocation2 + $0x88] sm:$0xff] %v1304
        %1366 = vst [vmem:[#allocation2 + $0x90] sm:$0xff] %v1308
        %1367 = vst [vmem:[#allocation2 + $0x98] sm:$0xff] %v1310
        %1368 = vst [vmem:[#allocation2 + $0xa0] sm:$0xff] %v1314
        %1369 = vst [vmem:[#allocation2 + $0xa8] sm:$0xff] %v1316
        %1370 = vst [vmem:[#allocation2 + $0xb0] sm:$0xff] %v1320
        %1371 = vst [vmem:[#allocation2 + $0xb8] sm:$0xff] %v1322
        %1372 = vst [vmem:[#allocation2 + $0xc0] sm:$0xff] %v1326
        %1373 = vst [vmem:[#allocation2 + $0xc8] sm:$0xff] %v1328
        %1374 = vst [vmem:[#allocation2 + $0xd0] sm:$0xff] %v1332
        %1375 = vst [vmem:[#allocation2 + $0xd8] sm:$0xff] %v1334
        %1376 = vst [vmem:[#allocation2 + $0xe0] sm:$0xff] %v1338
        %1377 = vst [vmem:[#allocation2 + $0xe8] sm:$0xff] %v1340
        %1378 = vst [vmem:[#allocation2 + $0xf0] sm:$0xff] %v1344
        %1379 = vst [vmem:[#allocation2 + $0xf8] sm:$0xff] %v1346
        %v1380 = vld [vmem:[#allocation2] sm:$0xff]
        %v1381 = vld [vmem:[#allocation2 + $0x10] sm:$0xff]
        %v1382 = vld [vmem:[#allocation2 + $0x20] sm:$0xff]
        %v1383 = vld [vmem:[#allocation2 + $0x30] sm:$0xff]
        %v1384 = vld [vmem:[#allocation2 + $0x40] sm:$0xff]
        %v1385 = vld [vmem:[#allocation2 + $0x50] sm:$0xff]
        %v1386 = vld [vmem:[#allocation2 + $0x60] sm:$0xff]
        %v1387 = vld [vmem:[#allocation2 + $0x70] sm:$0xff]
        %v1388 = vld [vmem:[#allocation2 + $0x80] sm:$0xff]
        %v1389 = vld [vmem:[#allocation2 + $0x90] sm:$0xff]
        %v1390 = vld [vmem:[#allocation2 + $0xa0] sm:$0xff]
        %v1391 = vld [vmem:[#allocation2 + $0xb0] sm:$0xff]
        %v1392 = vld [vmem:[#allocation2 + $0xc0] sm:$0xff]
        %v1393 = vld [vmem:[#allocation2 + $0xd0] sm:$0xff]
        %v1394 = vld [vmem:[#allocation2 + $0xe0] sm:$0xff]
        %v1395 = vld [vmem:[#allocation2 + $0xf0] sm:$0xff]
        %vm1396 = vcmask 261120
        %1397 = vst.msk [vmem:[%s351] sm:$0xff] %vm1396, %v1380
        %1398 = vst.msk [vmem:[%s351 + $0x8] sm:$0xff] %vm1396, %v1381
        %1399 = vst.msk [vmem:[%s351 + $0x10] sm:$0xff] %vm1396, %v1382
        %1400 = vst.msk [vmem:[%s351 + $0x18] sm:$0xff] %vm1396, %v1383
        %1401 = vst.msk [vmem:[%s351 + $0x20] sm:$0xff] %vm1396, %v1384
        %1402 = vst.msk [vmem:[%s351 + $0x28] sm:$0xff] %vm1396, %v1385
        %1403 = vst.msk [vmem:[%s351 + $0x30] sm:$0xff] %vm1396, %v1386
        %1404 = vst.msk [vmem:[%s351 + $0x38] sm:$0xff] %vm1396, %v1387
        %1405 = vst.msk [vmem:[%s351 + $0x40] sm:$0xff] %vm1396, %v1388
        %1406 = vst.msk [vmem:[%s351 + $0x48] sm:$0xff] %vm1396, %v1389
        %1407 = vst.msk [vmem:[%s351 + $0x50] sm:$0xff] %vm1396, %v1390
        %1408 = vst.msk [vmem:[%s351 + $0x58] sm:$0xff] %vm1396, %v1391
        %1409 = vst.msk [vmem:[%s351 + $0x60] sm:$0xff] %vm1396, %v1392
        %1410 = vst.msk [vmem:[%s351 + $0x68] sm:$0xff] %vm1396, %v1393
        %1411 = vst.msk [vmem:[%s351 + $0x70] sm:$0xff] %vm1396, %v1394
        %1412 = vst.msk [vmem:[%s351 + $0x78] sm:$0xff] %vm1396, %v1395
        %v1413 = vld [vmem:[#allocation2] sm:$0xff]
        %v1414 = vld [vmem:[#allocation2 + $0x10] sm:$0xff]
        %v1415 = vld [vmem:[#allocation2 + $0x20] sm:$0xff]
        %v1416 = vld [vmem:[#allocation2 + $0x30] sm:$0xff]
        %v1417 = vld [vmem:[#allocation2 + $0x40] sm:$0xff]
        %v1418 = vld [vmem:[#allocation2 + $0x50] sm:$0xff]
        %v1419 = vld [vmem:[#allocation2 + $0x60] sm:$0xff]
        %v1420 = vld [vmem:[#allocation2 + $0x70] sm:$0xff]
        %v1421 = vld [vmem:[#allocation2 + $0x80] sm:$0xff]
        %v1422 = vld [vmem:[#allocation2 + $0x90] sm:$0xff]
        %v1423 = vld [vmem:[#allocation2 + $0xa0] sm:$0xff]
        %v1424 = vld [vmem:[#allocation2 + $0xb0] sm:$0xff]
        %v1425 = vld [vmem:[#allocation2 + $0xc0] sm:$0xff]
        %v1426 = vld [vmem:[#allocation2 + $0xd0] sm:$0xff]
        %v1427 = vld [vmem:[#allocation2 + $0xe0] sm:$0xff]
        %v1428 = vld [vmem:[#allocation2 + $0xf0] sm:$0xff]
        %1445 = vrot.lane.b32.xlu0 %v1413, 96
        %v1446 = vpop.permute.xlu0 %1445
        %1447 = vrot.lane.b32.xlu0 %v1414, 96
        %v1448 = vpop.permute.xlu0 %1447
        %1449 = vrot.lane.b32.xlu0 %v1415, 96
        %v1450 = vpop.permute.xlu0 %1449
        %1451 = vrot.lane.b32.xlu0 %v1416, 96
        %v1452 = vpop.permute.xlu0 %1451
        %1453 = vrot.lane.b32.xlu0 %v1417, 96
        %v1454 = vpop.permute.xlu0 %1453
        %1455 = vrot.lane.b32.xlu0 %v1418, 96
        %v1456 = vpop.permute.xlu0 %1455
        %1457 = vrot.lane.b32.xlu0 %v1419, 96
        %v1458 = vpop.permute.xlu0 %1457
        %1459 = vrot.lane.b32.xlu0 %v1420, 96
        %v1460 = vpop.permute.xlu0 %1459
        %1461 = vrot.lane.b32.xlu0 %v1421, 96
        %v1462 = vpop.permute.xlu0 %1461
        %1463 = vrot.lane.b32.xlu0 %v1422, 96
        %v1464 = vpop.permute.xlu0 %1463
        %1465 = vrot.lane.b32.xlu0 %v1423, 96
        %v1466 = vpop.permute.xlu0 %1465
        %1467 = vrot.lane.b32.xlu0 %v1424, 96
        %v1468 = vpop.permute.xlu0 %1467
        %1469 = vrot.lane.b32.xlu0 %v1425, 96
        %v1470 = vpop.permute.xlu0 %1469
        %1471 = vrot.lane.b32.xlu0 %v1426, 96
        %v1472 = vpop.permute.xlu0 %1471
        %1473 = vrot.lane.b32.xlu0 %v1427, 96
        %v1474 = vpop.permute.xlu0 %1473
        %1475 = vrot.lane.b32.xlu0 %v1428, 96
        %v1476 = vpop.permute.xlu0 %1475
        %s1493 = scalar_lea.vmem %s351, 128 [#allocation14]
        %1494 = vst.msk [vmem:[%s1493] sm:$0xff] %vm1396, %v1446
        %1495 = vst.msk [vmem:[%s1493 + $0x8] sm:$0xff] %vm1396, %v1448
        %1496 = vst.msk [vmem:[%s1493 + $0x10] sm:$0xff] %vm1396, %v1450
        %1497 = vst.msk [vmem:[%s1493 + $0x18] sm:$0xff] %vm1396, %v1452
        %1498 = vst.msk [vmem:[%s1493 + $0x20] sm:$0xff] %vm1396, %v1454
        %1499 = vst.msk [vmem:[%s1493 + $0x28] sm:$0xff] %vm1396, %v1456
        %1500 = vst.msk [vmem:[%s1493 + $0x30] sm:$0xff] %vm1396, %v1458
        %1501 = vst.msk [vmem:[%s1493 + $0x38] sm:$0xff] %vm1396, %v1460
        %1502 = vst.msk [vmem:[%s1493 + $0x40] sm:$0xff] %vm1396, %v1462
        %1503 = vst.msk [vmem:[%s1493 + $0x48] sm:$0xff] %vm1396, %v1464
        %1504 = vst.msk [vmem:[%s1493 + $0x50] sm:$0xff] %vm1396, %v1466
        %1505 = vst.msk [vmem:[%s1493 + $0x58] sm:$0xff] %vm1396, %v1468
        %1506 = vst.msk [vmem:[%s1493 + $0x60] sm:$0xff] %vm1396, %v1470
        %1507 = vst.msk [vmem:[%s1493 + $0x68] sm:$0xff] %vm1396, %v1472
        %1508 = vst.msk [vmem:[%s1493 + $0x70] sm:$0xff] %vm1396, %v1474
        %1509 = vst.msk [vmem:[%s1493 + $0x78] sm:$0xff] %vm1396, %v1476
        %v1510 = vld [vmem:[#allocation2] sm:$0xff]
        %v1511 = vld [vmem:[#allocation2 + $0x10] sm:$0xff]
        %v1512 = vld [vmem:[#allocation2 + $0x20] sm:$0xff]
        %v1513 = vld [vmem:[#allocation2 + $0x30] sm:$0xff]
        %v1514 = vld [vmem:[#allocation2 + $0x40] sm:$0xff]
        %v1515 = vld [vmem:[#allocation2 + $0x50] sm:$0xff]
        %v1516 = vld [vmem:[#allocation2 + $0x60] sm:$0xff]
        %v1517 = vld [vmem:[#allocation2 + $0x70] sm:$0xff]
        %v1518 = vld [vmem:[#allocation2 + $0x80] sm:$0xff]
        %v1519 = vld [vmem:[#allocation2 + $0x90] sm:$0xff]
        %v1520 = vld [vmem:[#allocation2 + $0xa0] sm:$0xff]
        %v1521 = vld [vmem:[#allocation2 + $0xb0] sm:$0xff]
        %v1522 = vld [vmem:[#allocation2 + $0xc0] sm:$0xff]
        %v1523 = vld [vmem:[#allocation2 + $0xd0] sm:$0xff]
        %v1524 = vld [vmem:[#allocation2 + $0xe0] sm:$0xff]
        %v1525 = vld [vmem:[#allocation2 + $0xf0] sm:$0xff]
        %1542 = vrot.lane.b32.xlu0 %v1510, 64
        %v1543 = vpop.permute.xlu0 %1542
        %1544 = vrot.lane.b32.xlu0 %v1511, 64
        %v1545 = vpop.permute.xlu0 %1544
        %1546 = vrot.lane.b32.xlu0 %v1512, 64
        %v1547 = vpop.permute.xlu0 %1546
        %1548 = vrot.lane.b32.xlu0 %v1513, 64
        %v1549 = vpop.permute.xlu0 %1548
        %1550 = vrot.lane.b32.xlu0 %v1514, 64
        %v1551 = vpop.permute.xlu0 %1550
        %1552 = vrot.lane.b32.xlu0 %v1515, 64
        %v1553 = vpop.permute.xlu0 %1552
        %1554 = vrot.lane.b32.xlu0 %v1516, 64
        %v1555 = vpop.permute.xlu0 %1554
        %1556 = vrot.lane.b32.xlu0 %v1517, 64
        %v1557 = vpop.permute.xlu0 %1556
        %1558 = vrot.lane.b32.xlu0 %v1518, 64
        %v1559 = vpop.permute.xlu0 %1558
        %1560 = vrot.lane.b32.xlu0 %v1519, 64
        %v1561 = vpop.permute.xlu0 %1560
        %1562 = vrot.lane.b32.xlu0 %v1520, 64
        %v1563 = vpop.permute.xlu0 %1562
        %1564 = vrot.lane.b32.xlu0 %v1521, 64
        %v1565 = vpop.permute.xlu0 %1564
        %1566 = vrot.lane.b32.xlu0 %v1522, 64
        %v1567 = vpop.permute.xlu0 %1566
        %1568 = vrot.lane.b32.xlu0 %v1523, 64
        %v1569 = vpop.permute.xlu0 %1568
        %1570 = vrot.lane.b32.xlu0 %v1524, 64
        %v1571 = vpop.permute.xlu0 %1570
        %1572 = vrot.lane.b32.xlu0 %v1525, 64
        %v1573 = vpop.permute.xlu0 %1572
        %s1590 = scalar_lea.vmem %s351, 256 [#allocation14]
        %1591 = vst.msk [vmem:[%s1590] sm:$0xff] %vm1396, %v1543
        %1592 = vst.msk [vmem:[%s1590 + $0x8] sm:$0xff] %vm1396, %v1545
        %1593 = vst.msk [vmem:[%s1590 + $0x10] sm:$0xff] %vm1396, %v1547
        %1594 = vst.msk [vmem:[%s1590 + $0x18] sm:$0xff] %vm1396, %v1549
        %1595 = vst.msk [vmem:[%s1590 + $0x20] sm:$0xff] %vm1396, %v1551
        %1596 = vst.msk [vmem:[%s1590 + $0x28] sm:$0xff] %vm1396, %v1553
        %1597 = vst.msk [vmem:[%s1590 + $0x30] sm:$0xff] %vm1396, %v1555
        %1598 = vst.msk [vmem:[%s1590 + $0x38] sm:$0xff] %vm1396, %v1557
        %1599 = vst.msk [vmem:[%s1590 + $0x40] sm:$0xff] %vm1396, %v1559
        %1600 = vst.msk [vmem:[%s1590 + $0x48] sm:$0xff] %vm1396, %v1561
        %1601 = vst.msk [vmem:[%s1590 + $0x50] sm:$0xff] %vm1396, %v1563
        %1602 = vst.msk [vmem:[%s1590 + $0x58] sm:$0xff] %vm1396, %v1565
        %1603 = vst.msk [vmem:[%s1590 + $0x60] sm:$0xff] %vm1396, %v1567
        %1604 = vst.msk [vmem:[%s1590 + $0x68] sm:$0xff] %vm1396, %v1569
        %1605 = vst.msk [vmem:[%s1590 + $0x70] sm:$0xff] %vm1396, %v1571
        %1606 = vst.msk [vmem:[%s1590 + $0x78] sm:$0xff] %vm1396, %v1573
        %v1607 = vld [vmem:[#allocation2] sm:$0xff]
        %v1608 = vld [vmem:[#allocation2 + $0x10] sm:$0xff]
        %v1609 = vld [vmem:[#allocation2 + $0x20] sm:$0xff]
        %v1610 = vld [vmem:[#allocation2 + $0x30] sm:$0xff]
        %v1611 = vld [vmem:[#allocation2 + $0x40] sm:$0xff]
        %v1612 = vld [vmem:[#allocation2 + $0x50] sm:$0xff]
        %v1613 = vld [vmem:[#allocation2 + $0x60] sm:$0xff]
        %v1614 = vld [vmem:[#allocation2 + $0x70] sm:$0xff]
        %v1615 = vld [vmem:[#allocation2 + $0x80] sm:$0xff]
        %v1616 = vld [vmem:[#allocation2 + $0x90] sm:$0xff]
        %v1617 = vld [vmem:[#allocation2 + $0xa0] sm:$0xff]
        %v1618 = vld [vmem:[#allocation2 + $0xb0] sm:$0xff]
        %v1619 = vld [vmem:[#allocation2 + $0xc0] sm:$0xff]
        %v1620 = vld [vmem:[#allocation2 + $0xd0] sm:$0xff]
        %v1621 = vld [vmem:[#allocation2 + $0xe0] sm:$0xff]
        %v1622 = vld [vmem:[#allocation2 + $0xf0] sm:$0xff]
        %1639 = vrot.lane.b32.xlu0 %v1607, 32
        %v1640 = vpop.permute.xlu0 %1639
        %1641 = vrot.lane.b32.xlu0 %v1608, 32
        %v1642 = vpop.permute.xlu0 %1641
        %1643 = vrot.lane.b32.xlu0 %v1609, 32
        %v1644 = vpop.permute.xlu0 %1643
        %1645 = vrot.lane.b32.xlu0 %v1610, 32
        %v1646 = vpop.permute.xlu0 %1645
        %1647 = vrot.lane.b32.xlu0 %v1611, 32
        %v1648 = vpop.permute.xlu0 %1647
        %1649 = vrot.lane.b32.xlu0 %v1612, 32
        %v1650 = vpop.permute.xlu0 %1649
        %1651 = vrot.lane.b32.xlu0 %v1613, 32
        %v1652 = vpop.permute.xlu0 %1651
        %1653 = vrot.lane.b32.xlu0 %v1614, 32
        %v1654 = vpop.permute.xlu0 %1653
        %1655 = vrot.lane.b32.xlu0 %v1615, 32
        %v1656 = vpop.permute.xlu0 %1655
        %1657 = vrot.lane.b32.xlu0 %v1616, 32
        %v1658 = vpop.permute.xlu0 %1657
        %1659 = vrot.lane.b32.xlu0 %v1617, 32
        %v1660 = vpop.permute.xlu0 %1659
        %1661 = vrot.lane.b32.xlu0 %v1618, 32
        %v1662 = vpop.permute.xlu0 %1661
        %1663 = vrot.lane.b32.xlu0 %v1619, 32
        %v1664 = vpop.permute.xlu0 %1663
        %1665 = vrot.lane.b32.xlu0 %v1620, 32
        %v1666 = vpop.permute.xlu0 %1665
        %1667 = vrot.lane.b32.xlu0 %v1621, 32
        %v1668 = vpop.permute.xlu0 %1667
        %1669 = vrot.lane.b32.xlu0 %v1622, 32
        %v1670 = vpop.permute.xlu0 %1669
        %s1687 = scalar_lea.vmem %s351, 384 [#allocation14]
        %1688 = vst.msk [vmem:[%s1687] sm:$0xff] %vm1396, %v1640
        %1689 = vst.msk [vmem:[%s1687 + $0x8] sm:$0xff] %vm1396, %v1642
        %1690 = vst.msk [vmem:[%s1687 + $0x10] sm:$0xff] %vm1396, %v1644
        %1691 = vst.msk [vmem:[%s1687 + $0x18] sm:$0xff] %vm1396, %v1646
        %1692 = vst.msk [vmem:[%s1687 + $0x20] sm:$0xff] %vm1396, %v1648
        %1693 = vst.msk [vmem:[%s1687 + $0x28] sm:$0xff] %vm1396, %v1650
        %1694 = vst.msk [vmem:[%s1687 + $0x30] sm:$0xff] %vm1396, %v1652
        %1695 = vst.msk [vmem:[%s1687 + $0x38] sm:$0xff] %vm1396, %v1654
        %1696 = vst.msk [vmem:[%s1687 + $0x40] sm:$0xff] %vm1396, %v1656
        %1697 = vst.msk [vmem:[%s1687 + $0x48] sm:$0xff] %vm1396, %v1658
        %1698 = vst.msk [vmem:[%s1687 + $0x50] sm:$0xff] %vm1396, %v1660
        %1699 = vst.msk [vmem:[%s1687 + $0x58] sm:$0xff] %vm1396, %v1662
        %1700 = vst.msk [vmem:[%s1687 + $0x60] sm:$0xff] %vm1396, %v1664
        %1701 = vst.msk [vmem:[%s1687 + $0x68] sm:$0xff] %vm1396, %v1666
        %1702 = vst.msk [vmem:[%s1687 + $0x70] sm:$0xff] %vm1396, %v1668
        %1703 = vst.msk [vmem:[%s1687 + $0x78] sm:$0xff] %vm1396, %v1670
        %v1704 = vld [vmem:[#allocation2 + $0x8] sm:$0xff]
        %v1705 = vld [vmem:[#allocation2 + $0x18] sm:$0xff]
        %v1706 = vld [vmem:[#allocation2 + $0x28] sm:$0xff]
        %v1707 = vld [vmem:[#allocation2 + $0x38] sm:$0xff]
        %v1708 = vld [vmem:[#allocation2 + $0x48] sm:$0xff]
        %v1709 = vld [vmem:[#allocation2 + $0x58] sm:$0xff]
        %v1710 = vld [vmem:[#allocation2 + $0x68] sm:$0xff]
        %v1711 = vld [vmem:[#allocation2 + $0x78] sm:$0xff]
        %v1712 = vld [vmem:[#allocation2 + $0x88] sm:$0xff]
        %v1713 = vld [vmem:[#allocation2 + $0x98] sm:$0xff]
        %v1714 = vld [vmem:[#allocation2 + $0xa8] sm:$0xff]
        %v1715 = vld [vmem:[#allocation2 + $0xb8] sm:$0xff]
        %v1716 = vld [vmem:[#allocation2 + $0xc8] sm:$0xff]
        %v1717 = vld [vmem:[#allocation2 + $0xd8] sm:$0xff]
        %v1718 = vld [vmem:[#allocation2 + $0xe8] sm:$0xff]
        %v1719 = vld [vmem:[#allocation2 + $0xf8] sm:$0xff]
        %s1720 = scalar_lea.vmem %s351, 512 [#allocation14]
        %1721 = vst.msk [vmem:[%s1720] sm:$0xff] %vm1396, %v1704
        %1722 = vst.msk [vmem:[%s1720 + $0x8] sm:$0xff] %vm1396, %v1705
        %1723 = vst.msk [vmem:[%s1720 + $0x10] sm:$0xff] %vm1396, %v1706
        %1724 = vst.msk [vmem:[%s1720 + $0x18] sm:$0xff] %vm1396, %v1707
        %1725 = vst.msk [vmem:[%s1720 + $0x20] sm:$0xff] %vm1396, %v1708
        %1726 = vst.msk [vmem:[%s1720 + $0x28] sm:$0xff] %vm1396, %v1709
        %1727 = vst.msk [vmem:[%s1720 + $0x30] sm:$0xff] %vm1396, %v1710
        %1728 = vst.msk [vmem:[%s1720 + $0x38] sm:$0xff] %vm1396, %v1711
        %1729 = vst.msk [vmem:[%s1720 + $0x40] sm:$0xff] %vm1396, %v1712
        %1730 = vst.msk [vmem:[%s1720 + $0x48] sm:$0xff] %vm1396, %v1713
        %1731 = vst.msk [vmem:[%s1720 + $0x50] sm:$0xff] %vm1396, %v1714
        %1732 = vst.msk [vmem:[%s1720 + $0x58] sm:$0xff] %vm1396, %v1715
        %1733 = vst.msk [vmem:[%s1720 + $0x60] sm:$0xff] %vm1396, %v1716
        %1734 = vst.msk [vmem:[%s1720 + $0x68] sm:$0xff] %vm1396, %v1717
        %1735 = vst.msk [vmem:[%s1720 + $0x70] sm:$0xff] %vm1396, %v1718
        %1736 = vst.msk [vmem:[%s1720 + $0x78] sm:$0xff] %vm1396, %v1719
        %v1737 = vld [vmem:[#allocation2 + $0x8] sm:$0xff]
        %v1738 = vld [vmem:[#allocation2 + $0x18] sm:$0xff]
        %v1739 = vld [vmem:[#allocation2 + $0x28] sm:$0xff]
        %v1740 = vld [vmem:[#allocation2 + $0x38] sm:$0xff]
        %v1741 = vld [vmem:[#allocation2 + $0x48] sm:$0xff]
        %v1742 = vld [vmem:[#allocation2 + $0x58] sm:$0xff]
        %v1743 = vld [vmem:[#allocation2 + $0x68] sm:$0xff]
        %v1744 = vld [vmem:[#allocation2 + $0x78] sm:$0xff]
        %v1745 = vld [vmem:[#allocation2 + $0x88] sm:$0xff]
        %v1746 = vld [vmem:[#allocation2 + $0x98] sm:$0xff]
        %v1747 = vld [vmem:[#allocation2 + $0xa8] sm:$0xff]
        %v1748 = vld [vmem:[#allocation2 + $0xb8] sm:$0xff]
        %v1749 = vld [vmem:[#allocation2 + $0xc8] sm:$0xff]
        %v1750 = vld [vmem:[#allocation2 + $0xd8] sm:$0xff]
        %v1751 = vld [vmem:[#allocation2 + $0xe8] sm:$0xff]
        %v1752 = vld [vmem:[#allocation2 + $0xf8] sm:$0xff]
        %1769 = vrot.lane.b32.xlu0 %v1737, 96
        %v1770 = vpop.permute.xlu0 %1769
        %1771 = vrot.lane.b32.xlu0 %v1738, 96
        %v1772 = vpop.permute.xlu0 %1771
        %1773 = vrot.lane.b32.xlu0 %v1739, 96
        %v1774 = vpop.permute.xlu0 %1773
        %1775 = vrot.lane.b32.xlu0 %v1740, 96
        %v1776 = vpop.permute.xlu0 %1775
        %1777 = vrot.lane.b32.xlu0 %v1741, 96
        %v1778 = vpop.permute.xlu0 %1777
        %1779 = vrot.lane.b32.xlu0 %v1742, 96
        %v1780 = vpop.permute.xlu0 %1779
        %1781 = vrot.lane.b32.xlu0 %v1743, 96
        %v1782 = vpop.permute.xlu0 %1781
        %1783 = vrot.lane.b32.xlu0 %v1744, 96
        %v1784 = vpop.permute.xlu0 %1783
        %1785 = vrot.lane.b32.xlu0 %v1745, 96
        %v1786 = vpop.permute.xlu0 %1785
        %1787 = vrot.lane.b32.xlu0 %v1746, 96
        %v1788 = vpop.permute.xlu0 %1787
        %1789 = vrot.lane.b32.xlu0 %v1747, 96
        %v1790 = vpop.permute.xlu0 %1789
        %1791 = vrot.lane.b32.xlu0 %v1748, 96
        %v1792 = vpop.permute.xlu0 %1791
        %1793 = vrot.lane.b32.xlu0 %v1749, 96
        %v1794 = vpop.permute.xlu0 %1793
        %1795 = vrot.lane.b32.xlu0 %v1750, 96
        %v1796 = vpop.permute.xlu0 %1795
        %1797 = vrot.lane.b32.xlu0 %v1751, 96
        %v1798 = vpop.permute.xlu0 %1797
        %1799 = vrot.lane.b32.xlu0 %v1752, 96
        %v1800 = vpop.permute.xlu0 %1799
        %s1817 = scalar_lea.vmem %s351, 640 [#allocation14]
        %1818 = vst.msk [vmem:[%s1817] sm:$0xff] %vm1396, %v1770
        %1819 = vst.msk [vmem:[%s1817 + $0x8] sm:$0xff] %vm1396, %v1772
        %1820 = vst.msk [vmem:[%s1817 + $0x10] sm:$0xff] %vm1396, %v1774
        %1821 = vst.msk [vmem:[%s1817 + $0x18] sm:$0xff] %vm1396, %v1776
        %1822 = vst.msk [vmem:[%s1817 + $0x20] sm:$0xff] %vm1396, %v1778
        %1823 = vst.msk [vmem:[%s1817 + $0x28] sm:$0xff] %vm1396, %v1780
        %1824 = vst.msk [vmem:[%s1817 + $0x30] sm:$0xff] %vm1396, %v1782
        %1825 = vst.msk [vmem:[%s1817 + $0x38] sm:$0xff] %vm1396, %v1784
        %1826 = vst.msk [vmem:[%s1817 + $0x40] sm:$0xff] %vm1396, %v1786
        %1827 = vst.msk [vmem:[%s1817 + $0x48] sm:$0xff] %vm1396, %v1788
        %1828 = vst.msk [vmem:[%s1817 + $0x50] sm:$0xff] %vm1396, %v1790
        %1829 = vst.msk [vmem:[%s1817 + $0x58] sm:$0xff] %vm1396, %v1792
        %1830 = vst.msk [vmem:[%s1817 + $0x60] sm:$0xff] %vm1396, %v1794
        %1831 = vst.msk [vmem:[%s1817 + $0x68] sm:$0xff] %vm1396, %v1796
        %1832 = vst.msk [vmem:[%s1817 + $0x70] sm:$0xff] %vm1396, %v1798
        %1833 = vst.msk [vmem:[%s1817 + $0x78] sm:$0xff] %vm1396, %v1800
        %v1834 = vld [vmem:[#allocation2 + $0x8] sm:$0xff]
        %v1835 = vld [vmem:[#allocation2 + $0x18] sm:$0xff]
        %v1836 = vld [vmem:[#allocation2 + $0x28] sm:$0xff]
        %v1837 = vld [vmem:[#allocation2 + $0x38] sm:$0xff]
        %v1838 = vld [vmem:[#allocation2 + $0x48] sm:$0xff]
        %v1839 = vld [vmem:[#allocation2 + $0x58] sm:$0xff]
        %v1840 = vld [vmem:[#allocation2 + $0x68] sm:$0xff]
        %v1841 = vld [vmem:[#allocation2 + $0x78] sm:$0xff]
        %v1842 = vld [vmem:[#allocation2 + $0x88] sm:$0xff]
        %v1843 = vld [vmem:[#allocation2 + $0x98] sm:$0xff]
        %v1844 = vld [vmem:[#allocation2 + $0xa8] sm:$0xff]
        %v1845 = vld [vmem:[#allocation2 + $0xb8] sm:$0xff]
        %v1846 = vld [vmem:[#allocation2 + $0xc8] sm:$0xff]
        %v1847 = vld [vmem:[#allocation2 + $0xd8] sm:$0xff]
        %v1848 = vld [vmem:[#allocation2 + $0xe8] sm:$0xff]
        %v1849 = vld [vmem:[#allocation2 + $0xf8] sm:$0xff]
        %1866 = vrot.lane.b32.xlu0 %v1834, 64
        %v1867 = vpop.permute.xlu0 %1866
        %1868 = vrot.lane.b32.xlu0 %v1835, 64
        %v1869 = vpop.permute.xlu0 %1868
        %1870 = vrot.lane.b32.xlu0 %v1836, 64
        %v1871 = vpop.permute.xlu0 %1870
        %1872 = vrot.lane.b32.xlu0 %v1837, 64
        %v1873 = vpop.permute.xlu0 %1872
        %1874 = vrot.lane.b32.xlu0 %v1838, 64
        %v1875 = vpop.permute.xlu0 %1874
        %1876 = vrot.lane.b32.xlu0 %v1839, 64
        %v1877 = vpop.permute.xlu0 %1876
        %1878 = vrot.lane.b32.xlu0 %v1840, 64
        %v1879 = vpop.permute.xlu0 %1878
        %1880 = vrot.lane.b32.xlu0 %v1841, 64
        %v1881 = vpop.permute.xlu0 %1880
        %1882 = vrot.lane.b32.xlu0 %v1842, 64
        %v1883 = vpop.permute.xlu0 %1882
        %1884 = vrot.lane.b32.xlu0 %v1843, 64
        %v1885 = vpop.permute.xlu0 %1884
        %1886 = vrot.lane.b32.xlu0 %v1844, 64
        %v1887 = vpop.permute.xlu0 %1886
        %1888 = vrot.lane.b32.xlu0 %v1845, 64
        %v1889 = vpop.permute.xlu0 %1888
        %1890 = vrot.lane.b32.xlu0 %v1846, 64
        %v1891 = vpop.permute.xlu0 %1890
        %1892 = vrot.lane.b32.xlu0 %v1847, 64
        %v1893 = vpop.permute.xlu0 %1892
        %1894 = vrot.lane.b32.xlu0 %v1848, 64
        %v1895 = vpop.permute.xlu0 %1894
        %1896 = vrot.lane.b32.xlu0 %v1849, 64
        %v1897 = vpop.permute.xlu0 %1896
        %s1914 = scalar_lea.vmem %s351, 768 [#allocation14]
        %1915 = vst.msk [vmem:[%s1914] sm:$0xff] %vm1396, %v1867
        %1916 = vst.msk [vmem:[%s1914 + $0x8] sm:$0xff] %vm1396, %v1869
        %1917 = vst.msk [vmem:[%s1914 + $0x10] sm:$0xff] %vm1396, %v1871
        %1918 = vst.msk [vmem:[%s1914 + $0x18] sm:$0xff] %vm1396, %v1873
        %1919 = vst.msk [vmem:[%s1914 + $0x20] sm:$0xff] %vm1396, %v1875
        %1920 = vst.msk [vmem:[%s1914 + $0x28] sm:$0xff] %vm1396, %v1877
        %1921 = vst.msk [vmem:[%s1914 + $0x30] sm:$0xff] %vm1396, %v1879
        %1922 = vst.msk [vmem:[%s1914 + $0x38] sm:$0xff] %vm1396, %v1881
        %1923 = vst.msk [vmem:[%s1914 + $0x40] sm:$0xff] %vm1396, %v1883
        %1924 = vst.msk [vmem:[%s1914 + $0x48] sm:$0xff] %vm1396, %v1885
        %1925 = vst.msk [vmem:[%s1914 + $0x50] sm:$0xff] %vm1396, %v1887
        %1926 = vst.msk [vmem:[%s1914 + $0x58] sm:$0xff] %vm1396, %v1889
        %1927 = vst.msk [vmem:[%s1914 + $0x60] sm:$0xff] %vm1396, %v1891
        %1928 = vst.msk [vmem:[%s1914 + $0x68] sm:$0xff] %vm1396, %v1893
        %1929 = vst.msk [vmem:[%s1914 + $0x70] sm:$0xff] %vm1396, %v1895
        %1930 = vst.msk [vmem:[%s1914 + $0x78] sm:$0xff] %vm1396, %v1897
        %v1931 = vld [vmem:[#allocation2 + $0x8] sm:$0xff]
        %v1932 = vld [vmem:[#allocation2 + $0x18] sm:$0xff]
        %v1933 = vld [vmem:[#allocation2 + $0x28] sm:$0xff]
        %v1934 = vld [vmem:[#allocation2 + $0x38] sm:$0xff]
        %v1935 = vld [vmem:[#allocation2 + $0x48] sm:$0xff]
        %v1936 = vld [vmem:[#allocation2 + $0x58] sm:$0xff]
        %v1937 = vld [vmem:[#allocation2 + $0x68] sm:$0xff]
        %v1938 = vld [vmem:[#allocation2 + $0x78] sm:$0xff]
        %v1939 = vld [vmem:[#allocation2 + $0x88] sm:$0xff]
        %v1940 = vld [vmem:[#allocation2 + $0x98] sm:$0xff]
        %v1941 = vld [vmem:[#allocation2 + $0xa8] sm:$0xff]
        %v1942 = vld [vmem:[#allocation2 + $0xb8] sm:$0xff]
        %v1943 = vld [vmem:[#allocation2 + $0xc8] sm:$0xff]
        %v1944 = vld [vmem:[#allocation2 + $0xd8] sm:$0xff]
        %v1945 = vld [vmem:[#allocation2 + $0xe8] sm:$0xff]
        %v1946 = vld [vmem:[#allocation2 + $0xf8] sm:$0xff]
        %1963 = vrot.lane.b32.xlu0 %v1931, 32
        %v1964 = vpop.permute.xlu0 %1963
        %1965 = vrot.lane.b32.xlu0 %v1932, 32
        %v1966 = vpop.permute.xlu0 %1965
        %1967 = vrot.lane.b32.xlu0 %v1933, 32
        %v1968 = vpop.permute.xlu0 %1967
        %1969 = vrot.lane.b32.xlu0 %v1934, 32
        %v1970 = vpop.permute.xlu0 %1969
        %1971 = vrot.lane.b32.xlu0 %v1935, 32
        %v1972 = vpop.permute.xlu0 %1971
        %1973 = vrot.lane.b32.xlu0 %v1936, 32
        %v1974 = vpop.permute.xlu0 %1973
        %1975 = vrot.lane.b32.xlu0 %v1937, 32
        %v1976 = vpop.permute.xlu0 %1975
        %1977 = vrot.lane.b32.xlu0 %v1938, 32
        %v1978 = vpop.permute.xlu0 %1977
        %1979 = vrot.lane.b32.xlu0 %v1939, 32
        %v1980 = vpop.permute.xlu0 %1979
        %1981 = vrot.lane.b32.xlu0 %v1940, 32
        %v1982 = vpop.permute.xlu0 %1981
        %1983 = vrot.lane.b32.xlu0 %v1941, 32
        %v1984 = vpop.permute.xlu0 %1983
        %1985 = vrot.lane.b32.xlu0 %v1942, 32
        %v1986 = vpop.permute.xlu0 %1985
        %1987 = vrot.lane.b32.xlu0 %v1943, 32
        %v1988 = vpop.permute.xlu0 %1987
        %1989 = vrot.lane.b32.xlu0 %v1944, 32
        %v1990 = vpop.permute.xlu0 %1989
        %1991 = vrot.lane.b32.xlu0 %v1945, 32
        %v1992 = vpop.permute.xlu0 %1991
        %1993 = vrot.lane.b32.xlu0 %v1946, 32
        %v1994 = vpop.permute.xlu0 %1993
        %s2011 = scalar_lea.vmem %s351, 896 [#allocation14]
        %2012 = vst.msk [vmem:[%s2011] sm:$0xff] %vm1396, %v1964
        %2013 = vst.msk [vmem:[%s2011 + $0x8] sm:$0xff] %vm1396, %v1966
        %2014 = vst.msk [vmem:[%s2011 + $0x10] sm:$0xff] %vm1396, %v1968
        %2015 = vst.msk [vmem:[%s2011 + $0x18] sm:$0xff] %vm1396, %v1970
        %2016 = vst.msk [vmem:[%s2011 + $0x20] sm:$0xff] %vm1396, %v1972
        %2017 = vst.msk [vmem:[%s2011 + $0x28] sm:$0xff] %vm1396, %v1974
        %2018 = vst.msk [vmem:[%s2011 + $0x30] sm:$0xff] %vm1396, %v1976
        %2019 = vst.msk [vmem:[%s2011 + $0x38] sm:$0xff] %vm1396, %v1978
        %2020 = vst.msk [vmem:[%s2011 + $0x40] sm:$0xff] %vm1396, %v1980
        %2021 = vst.msk [vmem:[%s2011 + $0x48] sm:$0xff] %vm1396, %v1982
        %2022 = vst.msk [vmem:[%s2011 + $0x50] sm:$0xff] %vm1396, %v1984
        %2023 = vst.msk [vmem:[%s2011 + $0x58] sm:$0xff] %vm1396, %v1986
        %2024 = vst.msk [vmem:[%s2011 + $0x60] sm:$0xff] %vm1396, %v1988
        %2025 = vst.msk [vmem:[%s2011 + $0x68] sm:$0xff] %vm1396, %v1990
        %2026 = vst.msk [vmem:[%s2011 + $0x70] sm:$0xff] %vm1396, %v1992
        %2027 = vst.msk [vmem:[%s2011 + $0x78] sm:$0xff] %vm1396, %v1994
        %s2028 = sand.u32 %s160, 1
        %s2029 = scalar_lea.sflag [#allocation6], %s2028
        %s2030 = sand.u32 %s160, 1
        %s2031 = smul.addr %s2030, 256
        %s2032 = scalar_lea.vmem [#allocation13], %s2031
        %s2033 = sand.u32 %s188, 1
        %s2034 = sand.u32 %s188, 1
        %s2035 = smul.addr %s2034, 1024
        %s2036 = scalar_lea.vmem [#allocation14], %s2035
        // Predicated region
        $region61: #{tpu_custom_call.1} parent=39 // pred_check
          %p2037 = pneg %p170
        $region62: #{tpu_custom_call.1} parent=39 // pred_check_branch
          %2039 = sbr.rel (%p2037) target = $region64
        $region63: #{tpu_custom_call.1} parent=39 // pred_region
          %s2041 = ssub.s32 4096, 4096
          %2042 = vsyncadd %s2029, %s2041
          %s2043 = smul.addr %s30, 64
          %s2044 = sadd.s32 %s31, %s2043
          %s2045 = smul.addr %s2044, 128
          %s2046 = scalar_lea.hbm %s5, %s2045
          %s2047 = sshll.u32 %s2032, 4
          %s2048 = int_to_ptr.vmem [resolvable:$true] %s2047
          %2053 = dma.vmem_to_hbm [thread:$0]  %s2048, 4096, %s2046, %s2029, 128, 256, 8
        $region64: #{tpu_custom_call.1} parent=39 // pred_fallthru
          _
        // Predicated region
        $region65: #{tpu_custom_call.1} parent=39 // pred_check
          %p2054 = pneg %p198
        $region66: #{tpu_custom_call.1} parent=39 // pred_check_branch
          %2056 = sbr.rel (%p2054) target = $region68
        $region67: #{tpu_custom_call.1} parent=39 // pred_region
          %s2057 = smul.u32 16, %s31
          %s2058 = smul.addr %s30, 256
          %s2059 = sadd.s32 %s2057, %s2058
          %s2060 = smul.addr %s2059, 8
          %s2061 = scalar_lea.vmem %s6, %s2060
          // Predicated region
          $region69: #{tpu_custom_call.1} parent=67 // pred_check
            _
          $region70: #{tpu_custom_call.1} parent=67 // pred_check_branch
            %2063 = sbr.rel (0) target = $region72
          $region71: #{tpu_custom_call.1} parent=67 // pred_region
            // Predicated region
            $region73: #{tpu_custom_call.1} parent=71 // pred_check
              _
            $region74: #{tpu_custom_call.1} parent=71 // pred_check_branch
              %2065 = sbr.rel (0) target = $region76
            $region75: #{tpu_custom_call.1} parent=71 // pred_region
              // Predicated region
              $region88: #{tpu_custom_call.1} parent=75 // pred_check
                _
              $region89: #{tpu_custom_call.1} parent=75 // pred_check_branch
                %2335 = sbr.rel (0) target = $region91
              $region90: #{tpu_custom_call.1} parent=75 // pred_region
                loop: start=0, step=1, limit=1
                $region92: #{tpu_custom_call.1} parent=90 // loop_pre_header
                  _
                $region93: #{tpu_custom_call.1} parent=90 // loop_header
                  %s2337 = sphi 0, %s2341
                  %p2338 = scmp.ge.s32.totalorder %s2337, 1
                  %s2342 = sphi %s2036, %s2036
                  %s2343 = sphi %s2061, %s2061
                $region94: #{tpu_custom_call.1} parent=90 // loop_header_branch
                  %2340 = sbr.rel (%p2338) target = $region98
                $region95: #{tpu_custom_call.1} parent=90 // loop_body
                  %v2344 = vld [vmem:[%s2342] sm:$0xff]
                  %2345 = vst [vmem:[%s2343] sm:$0xff] %v2344
                  %v2346 = vld [vmem:[%s2342 + $0x8] sm:$0xff]
                  %2347 = vst [vmem:[%s2343 + $0x8] sm:$0xff] %v2346
                  %v2348 = vld [vmem:[%s2342 + $0x10] sm:$0xff]
                  %2349 = vst [vmem:[%s2343 + $0x10] sm:$0xff] %v2348
                  %v2350 = vld [vmem:[%s2342 + $0x18] sm:$0xff]
                  %2351 = vst [vmem:[%s2343 + $0x18] sm:$0xff] %v2350
                  %v2352 = vld [vmem:[%s2342 + $0x20] sm:$0xff]
                  %2353 = vst [vmem:[%s2343 + $0x20] sm:$0xff] %v2352
                  %v2354 = vld [vmem:[%s2342 + $0x28] sm:$0xff]
                  %2355 = vst [vmem:[%s2343 + $0x28] sm:$0xff] %v2354
                  %v2356 = vld [vmem:[%s2342 + $0x30] sm:$0xff]
                  %2357 = vst [vmem:[%s2343 + $0x30] sm:$0xff] %v2356
                  %v2358 = vld [vmem:[%s2342 + $0x38] sm:$0xff]
                  %2359 = vst [vmem:[%s2343 + $0x38] sm:$0xff] %v2358
                  %v2360 = vld [vmem:[%s2342 + $0x40] sm:$0xff]
                  %2361 = vst [vmem:[%s2343 + $0x40] sm:$0xff] %v2360
                  %v2362 = vld [vmem:[%s2342 + $0x48] sm:$0xff]
                  %2363 = vst [vmem:[%s2343 + $0x48] sm:$0xff] %v2362
                  %v2364 = vld [vmem:[%s2342 + $0x50] sm:$0xff]
                  %2365 = vst [vmem:[%s2343 + $0x50] sm:$0xff] %v2364
                  %v2366 = vld [vmem:[%s2342 + $0x58] sm:$0xff]
                  %2367 = vst [vmem:[%s2343 + $0x58] sm:$0xff] %v2366
                  %v2368 = vld [vmem:[%s2342 + $0x60] sm:$0xff]
                  %2369 = vst [vmem:[%s2343 + $0x60] sm:$0xff] %v2368
                  %v2370 = vld [vmem:[%s2342 + $0x68] sm:$0xff]
                  %2371 = vst [vmem:[%s2343 + $0x68] sm:$0xff] %v2370
                  %v2372 = vld [vmem:[%s2342 + $0x70] sm:$0xff]
                  %2373 = vst [vmem:[%s2343 + $0x70] sm:$0xff] %v2372
                  %v2374 = vld [vmem:[%s2342 + $0x78] sm:$0xff]
                  %2375 = vst [vmem:[%s2343 + $0x78] sm:$0xff] %v2374
                  %v2376 = vld [vmem:[%s2342 + $0x80] sm:$0xff]
                  %2377 = vst [vmem:[%s2343 + $0x100] sm:$0xff] %v2376
                  %v2378 = vld [vmem:[%s2342 + $0x88] sm:$0xff]
                  %2379 = vst [vmem:[%s2343 + $0x108] sm:$0xff] %v2378
                  %v2380 = vld [vmem:[%s2342 + $0x90] sm:$0xff]
                  %2381 = vst [vmem:[%s2343 + $0x110] sm:$0xff] %v2380
                  %v2382 = vld [vmem:[%s2342 + $0x98] sm:$0xff]
                  %2383 = vst [vmem:[%s2343 + $0x118] sm:$0xff] %v2382
                  %v2384 = vld [vmem:[%s2342 + $0xa0] sm:$0xff]
                  %2385 = vst [vmem:[%s2343 + $0x120] sm:$0xff] %v2384
                  %v2386 = vld [vmem:[%s2342 + $0xa8] sm:$0xff]
                  %2387 = vst [vmem:[%s2343 + $0x128] sm:$0xff] %v2386
                  %v2388 = vld [vmem:[%s2342 + $0xb0] sm:$0xff]
                  %2389 = vst [vmem:[%s2343 + $0x130] sm:$0xff] %v2388
                  %v2390 = vld [vmem:[%s2342 + $0xb8] sm:$0xff]
                  %2391 = vst [vmem:[%s2343 + $0x138] sm:$0xff] %v2390
                  %v2392 = vld [vmem:[%s2342 + $0xc0] sm:$0xff]
                  %2393 = vst [vmem:[%s2343 + $0x140] sm:$0xff] %v2392
                  %v2394 = vld [vmem:[%s2342 + $0xc8] sm:$0xff]
                  %2395 = vst [vmem:[%s2343 + $0x148] sm:$0xff] %v2394
                  %v2396 = vld [vmem:[%s2342 + $0xd0] sm:$0xff]
                  %2397 = vst [vmem:[%s2343 + $0x150] sm:$0xff] %v2396
                  %v2398 = vld [vmem:[%s2342 + $0xd8] sm:$0xff]
                  %2399 = vst [vmem:[%s2343 + $0x158] sm:$0xff] %v2398
                  %v2400 = vld [vmem:[%s2342 + $0xe0] sm:$0xff]
                  %2401 = vst [vmem:[%s2343 + $0x160] sm:$0xff] %v2400
                  %v2402 = vld [vmem:[%s2342 + $0xe8] sm:$0xff]
                  %2403 = vst [vmem:[%s2343 + $0x168] sm:$0xff] %v2402
                  %v2404 = vld [vmem:[%s2342 + $0xf0] sm:$0xff]
                  %2405 = vst [vmem:[%s2343 + $0x170] sm:$0xff] %v2404
                  %v2406 = vld [vmem:[%s2342 + $0xf8] sm:$0xff]
                  %2407 = vst [vmem:[%s2343 + $0x178] sm:$0xff] %v2406
                  %v2408 = vld [vmem:[%s2342 + $0x100] sm:$0xff]
                  %2409 = vst [vmem:[%s2343 + $0x200] sm:$0xff] %v2408
                  %v2410 = vld [vmem:[%s2342 + $0x108] sm:$0xff]
                  %2411 = vst [vmem:[%s2343 + $0x208] sm:$0xff] %v2410
                  %v2412 = vld [vmem:[%s2342 + $0x110] sm:$0xff]
                  %2413 = vst [vmem:[%s2343 + $0x210] sm:$0xff] %v2412
                  %v2414 = vld [vmem:[%s2342 + $0x118] sm:$0xff]
                  %2415 = vst [vmem:[%s2343 + $0x218] sm:$0xff] %v2414
                  %v2416 = vld [vmem:[%s2342 + $0x120] sm:$0xff]
                  %2417 = vst [vmem:[%s2343 + $0x220] sm:$0xff] %v2416
                  %v2418 = vld [vmem:[%s2342 + $0x128] sm:$0xff]
                  %2419 = vst [vmem:[%s2343 + $0x228] sm:$0xff] %v2418
                  %v2420 = vld [vmem:[%s2342 + $0x130] sm:$0xff]
                  %2421 = vst [vmem:[%s2343 + $0x230] sm:$0xff] %v2420
                  %v2422 = vld [vmem:[%s2342 + $0x138] sm:$0xff]
                  %2423 = vst [vmem:[%s2343 + $0x238] sm:$0xff] %v2422
                  %v2424 = vld [vmem:[%s2342 + $0x140] sm:$0xff]
                  %2425 = vst [vmem:[%s2343 + $0x240] sm:$0xff] %v2424
                  %v2426 = vld [vmem:[%s2342 + $0x148] sm:$0xff]
                  %2427 = vst [vmem:[%s2343 + $0x248] sm:$0xff] %v2426
                  %v2428 = vld [vmem:[%s2342 + $0x150] sm:$0xff]
                  %2429 = vst [vmem:[%s2343 + $0x250] sm:$0xff] %v2428
                  %v2430 = vld [vmem:[%s2342 + $0x158] sm:$0xff]
                  %2431 = vst [vmem:[%s2343 + $0x258] sm:$0xff] %v2430
                  %v2432 = vld [vmem:[%s2342 + $0x160] sm:$0xff]
                  %2433 = vst [vmem:[%s2343 + $0x260] sm:$0xff] %v2432
                  %v2434 = vld [vmem:[%s2342 + $0x168] sm:$0xff]
                  %2435 = vst [vmem:[%s2343 + $0x268] sm:$0xff] %v2434
                  %v2436 = vld [vmem:[%s2342 + $0x170] sm:$0xff]
                  %2437 = vst [vmem:[%s2343 + $0x270] sm:$0xff] %v2436
                  %v2438 = vld [vmem:[%s2342 + $0x178] sm:$0xff]
                  %2439 = vst [vmem:[%s2343 + $0x278] sm:$0xff] %v2438
                  %v2440 = vld [vmem:[%s2342 + $0x180] sm:$0xff]
                  %2441 = vst [vmem:[%s2343 + $0x300] sm:$0xff] %v2440
                  %v2442 = vld [vmem:[%s2342 + $0x188] sm:$0xff]
                  %2443 = vst [vmem:[%s2343 + $0x308] sm:$0xff] %v2442
                  %v2444 = vld [vmem:[%s2342 + $0x190] sm:$0xff]
                  %2445 = vst [vmem:[%s2343 + $0x310] sm:$0xff] %v2444
                  %v2446 = vld [vmem:[%s2342 + $0x198] sm:$0xff]
                  %2447 = vst [vmem:[%s2343 + $0x318] sm:$0xff] %v2446
                  %v2448 = vld [vmem:[%s2342 + $0x1a0] sm:$0xff]
                  %2449 = vst [vmem:[%s2343 + $0x320] sm:$0xff] %v2448
                  %v2450 = vld [vmem:[%s2342 + $0x1a8] sm:$0xff]
                  %2451 = vst [vmem:[%s2343 + $0x328] sm:$0xff] %v2450
                  %v2452 = vld [vmem:[%s2342 + $0x1b0] sm:$0xff]
                  %2453 = vst [vmem:[%s2343 + $0x330] sm:$0xff] %v2452
                  %v2454 = vld [vmem:[%s2342 + $0x1b8] sm:$0xff]
                  %2455 = vst [vmem:[%s2343 + $0x338] sm:$0xff] %v2454
                  %v2456 = vld [vmem:[%s2342 + $0x1c0] sm:$0xff]
                  %2457 = vst [vmem:[%s2343 + $0x340] sm:$0xff] %v2456
                  %v2458 = vld [vmem:[%s2342 + $0x1c8] sm:$0xff]
                  %2459 = vst [vmem:[%s2343 + $0x348] sm:$0xff] %v2458
                  %v2460 = vld [vmem:[%s2342 + $0x1d0] sm:$0xff]
                  %2461 = vst [vmem:[%s2343 + $0x350] sm:$0xff] %v2460
                  %v2462 = vld [vmem:[%s2342 + $0x1d8] sm:$0xff]
                  %2463 = vst [vmem:[%s2343 + $0x358] sm:$0xff] %v2462
                  %v2464 = vld [vmem:[%s2342 + $0x1e0] sm:$0xff]
                  %2465 = vst [vmem:[%s2343 + $0x360] sm:$0xff] %v2464
                  %v2466 = vld [vmem:[%s2342 + $0x1e8] sm:$0xff]
                  %2467 = vst [vmem:[%s2343 + $0x368] sm:$0xff] %v2466
                  %v2468 = vld [vmem:[%s2342 + $0x1f0] sm:$0xff]
                  %2469 = vst [vmem:[%s2343 + $0x370] sm:$0xff] %v2468
                  %v2470 = vld [vmem:[%s2342 + $0x1f8] sm:$0xff]
                  %2471 = vst [vmem:[%s2343 + $0x378] sm:$0xff] %v2470
                  %v2472 = vld [vmem:[%s2342 + $0x200] sm:$0xff]
                  %2473 = vst [vmem:[%s2343 + $0x400] sm:$0xff] %v2472
                  %v2474 = vld [vmem:[%s2342 + $0x208] sm:$0xff]
                  %2475 = vst [vmem:[%s2343 + $0x408] sm:$0xff] %v2474
                  %v2476 = vld [vmem:[%s2342 + $0x210] sm:$0xff]
                  %2477 = vst [vmem:[%s2343 + $0x410] sm:$0xff] %v2476
                  %v2478 = vld [vmem:[%s2342 + $0x218] sm:$0xff]
                  %2479 = vst [vmem:[%s2343 + $0x418] sm:$0xff] %v2478
                  %v2480 = vld [vmem:[%s2342 + $0x220] sm:$0xff]
                  %2481 = vst [vmem:[%s2343 + $0x420] sm:$0xff] %v2480
                  %v2482 = vld [vmem:[%s2342 + $0x228] sm:$0xff]
                  %2483 = vst [vmem:[%s2343 + $0x428] sm:$0xff] %v2482
                  %v2484 = vld [vmem:[%s2342 + $0x230] sm:$0xff]
                  %2485 = vst [vmem:[%s2343 + $0x430] sm:$0xff] %v2484
                  %v2486 = vld [vmem:[%s2342 + $0x238] sm:$0xff]
                  %2487 = vst [vmem:[%s2343 + $0x438] sm:$0xff] %v2486
                  %v2488 = vld [vmem:[%s2342 + $0x240] sm:$0xff]
                  %2489 = vst [vmem:[%s2343 + $0x440] sm:$0xff] %v2488
                  %v2490 = vld [vmem:[%s2342 + $0x248] sm:$0xff]
                  %2491 = vst [vmem:[%s2343 + $0x448] sm:$0xff] %v2490
                  %v2492 = vld [vmem:[%s2342 + $0x250] sm:$0xff]
                  %2493 = vst [vmem:[%s2343 + $0x450] sm:$0xff] %v2492
                  %v2494 = vld [vmem:[%s2342 + $0x258] sm:$0xff]
                  %2495 = vst [vmem:[%s2343 + $0x458] sm:$0xff] %v2494
                  %v2496 = vld [vmem:[%s2342 + $0x260] sm:$0xff]
                  %2497 = vst [vmem:[%s2343 + $0x460] sm:$0xff] %v2496
                  %v2498 = vld [vmem:[%s2342 + $0x268] sm:$0xff]
                  %2499 = vst [vmem:[%s2343 + $0x468] sm:$0xff] %v2498
                  %v2500 = vld [vmem:[%s2342 + $0x270] sm:$0xff]
                  %2501 = vst [vmem:[%s2343 + $0x470] sm:$0xff] %v2500
                  %v2502 = vld [vmem:[%s2342 + $0x278] sm:$0xff]
                  %2503 = vst [vmem:[%s2343 + $0x478] sm:$0xff] %v2502
                  %v2504 = vld [vmem:[%s2342 + $0x280] sm:$0xff]
                  %2505 = vst [vmem:[%s2343 + $0x500] sm:$0xff] %v2504
                  %v2506 = vld [vmem:[%s2342 + $0x288] sm:$0xff]
                  %2507 = vst [vmem:[%s2343 + $0x508] sm:$0xff] %v2506
                  %v2508 = vld [vmem:[%s2342 + $0x290] sm:$0xff]
                  %2509 = vst [vmem:[%s2343 + $0x510] sm:$0xff] %v2508
                  %v2510 = vld [vmem:[%s2342 + $0x298] sm:$0xff]
                  %2511 = vst [vmem:[%s2343 + $0x518] sm:$0xff] %v2510
                  %v2512 = vld [vmem:[%s2342 + $0x2a0] sm:$0xff]
                  %2513 = vst [vmem:[%s2343 + $0x520] sm:$0xff] %v2512
                  %v2514 = vld [vmem:[%s2342 + $0x2a8] sm:$0xff]
                  %2515 = vst [vmem:[%s2343 + $0x528] sm:$0xff] %v2514
                  %v2516 = vld [vmem:[%s2342 + $0x2b0] sm:$0xff]
                  %2517 = vst [vmem:[%s2343 + $0x530] sm:$0xff] %v2516
                  %v2518 = vld [vmem:[%s2342 + $0x2b8] sm:$0xff]
                  %2519 = vst [vmem:[%s2343 + $0x538] sm:$0xff] %v2518
                  %v2520 = vld [vmem:[%s2342 + $0x2c0] sm:$0xff]
                  %2521 = vst [vmem:[%s2343 + $0x540] sm:$0xff] %v2520
                  %v2522 = vld [vmem:[%s2342 + $0x2c8] sm:$0xff]
                  %2523 = vst [vmem:[%s2343 + $0x548] sm:$0xff] %v2522
                  %v2524 = vld [vmem:[%s2342 + $0x2d0] sm:$0xff]
                  %2525 = vst [vmem:[%s2343 + $0x550] sm:$0xff] %v2524
                  %v2526 = vld [vmem:[%s2342 + $0x2d8] sm:$0xff]
                  %2527 = vst [vmem:[%s2343 + $0x558] sm:$0xff] %v2526
                  %v2528 = vld [vmem:[%s2342 + $0x2e0] sm:$0xff]
                  %2529 = vst [vmem:[%s2343 + $0x560] sm:$0xff] %v2528
                  %v2530 = vld [vmem:[%s2342 + $0x2e8] sm:$0xff]
                  %2531 = vst [vmem:[%s2343 + $0x568] sm:$0xff] %v2530
                  %v2532 = vld [vmem:[%s2342 + $0x2f0] sm:$0xff]
                  %2533 = vst [vmem:[%s2343 + $0x570] sm:$0xff] %v2532
                  %v2534 = vld [vmem:[%s2342 + $0x2f8] sm:$0xff]
                  %2535 = vst [vmem:[%s2343 + $0x578] sm:$0xff] %v2534
                  %v2536 = vld [vmem:[%s2342 + $0x300] sm:$0xff]
                  %2537 = vst [vmem:[%s2343 + $0x600] sm:$0xff] %v2536
                  %v2538 = vld [vmem:[%s2342 + $0x308] sm:$0xff]
                  %2539 = vst [vmem:[%s2343 + $0x608] sm:$0xff] %v2538
                  %v2540 = vld [vmem:[%s2342 + $0x310] sm:$0xff]
                  %2541 = vst [vmem:[%s2343 + $0x610] sm:$0xff] %v2540
                  %v2542 = vld [vmem:[%s2342 + $0x318] sm:$0xff]
                  %2543 = vst [vmem:[%s2343 + $0x618] sm:$0xff] %v2542
                  %v2544 = vld [vmem:[%s2342 + $0x320] sm:$0xff]
                  %2545 = vst [vmem:[%s2343 + $0x620] sm:$0xff] %v2544
                  %v2546 = vld [vmem:[%s2342 + $0x328] sm:$0xff]
                  %2547 = vst [vmem:[%s2343 + $0x628] sm:$0xff] %v2546
                  %v2548 = vld [vmem:[%s2342 + $0x330] sm:$0xff]
                  %2549 = vst [vmem:[%s2343 + $0x630] sm:$0xff] %v2548
                  %v2550 = vld [vmem:[%s2342 + $0x338] sm:$0xff]
                  %2551 = vst [vmem:[%s2343 + $0x638] sm:$0xff] %v2550
                  %v2552 = vld [vmem:[%s2342 + $0x340] sm:$0xff]
                  %2553 = vst [vmem:[%s2343 + $0x640] sm:$0xff] %v2552
                  %v2554 = vld [vmem:[%s2342 + $0x348] sm:$0xff]
                  %2555 = vst [vmem:[%s2343 + $0x648] sm:$0xff] %v2554
                  %v2556 = vld [vmem:[%s2342 + $0x350] sm:$0xff]
                  %2557 = vst [vmem:[%s2343 + $0x650] sm:$0xff] %v2556
                  %v2558 = vld [vmem:[%s2342 + $0x358] sm:$0xff]
                  %2559 = vst [vmem:[%s2343 + $0x658] sm:$0xff] %v2558
                  %v2560 = vld [vmem:[%s2342 + $0x360] sm:$0xff]
                  %2561 = vst [vmem:[%s2343 + $0x660] sm:$0xff] %v2560
                  %v2562 = vld [vmem:[%s2342 + $0x368] sm:$0xff]
                  %2563 = vst [vmem:[%s2343 + $0x668] sm:$0xff] %v2562
                  %v2564 = vld [vmem:[%s2342 + $0x370] sm:$0xff]
                  %2565 = vst [vmem:[%s2343 + $0x670] sm:$0xff] %v2564
                  %v2566 = vld [vmem:[%s2342 + $0x378] sm:$0xff]
                  %2567 = vst [vmem:[%s2343 + $0x678] sm:$0xff] %v2566
                  %v2568 = vld [vmem:[%s2342 + $0x380] sm:$0xff]
                  %2569 = vst [vmem:[%s2343 + $0x700] sm:$0xff] %v2568
                  %v2570 = vld [vmem:[%s2342 + $0x388] sm:$0xff]
                  %2571 = vst [vmem:[%s2343 + $0x708] sm:$0xff] %v2570
                  %v2572 = vld [vmem:[%s2342 + $0x390] sm:$0xff]
                  %2573 = vst [vmem:[%s2343 + $0x710] sm:$0xff] %v2572
                  %v2574 = vld [vmem:[%s2342 + $0x398] sm:$0xff]
                  %2575 = vst [vmem:[%s2343 + $0x718] sm:$0xff] %v2574
                  %v2576 = vld [vmem:[%s2342 + $0x3a0] sm:$0xff]
                  %2577 = vst [vmem:[%s2343 + $0x720] sm:$0xff] %v2576
                  %v2578 = vld [vmem:[%s2342 + $0x3a8] sm:$0xff]
                  %2579 = vst [vmem:[%s2343 + $0x728] sm:$0xff] %v2578
                  %v2580 = vld [vmem:[%s2342 + $0x3b0] sm:$0xff]
                  %2581 = vst [vmem:[%s2343 + $0x730] sm:$0xff] %v2580
                  %v2582 = vld [vmem:[%s2342 + $0x3b8] sm:$0xff]
                  %2583 = vst [vmem:[%s2343 + $0x738] sm:$0xff] %v2582
                  %v2584 = vld [vmem:[%s2342 + $0x3c0] sm:$0xff]
                  %2585 = vst [vmem:[%s2343 + $0x740] sm:$0xff] %v2584
                  %v2586 = vld [vmem:[%s2342 + $0x3c8] sm:$0xff]
                  %2587 = vst [vmem:[%s2343 + $0x748] sm:$0xff] %v2586
                  %v2588 = vld [vmem:[%s2342 + $0x3d0] sm:$0xff]
                  %2589 = vst [vmem:[%s2343 + $0x750] sm:$0xff] %v2588
                  %v2590 = vld [vmem:[%s2342 + $0x3d8] sm:$0xff]
                  %2591 = vst [vmem:[%s2343 + $0x758] sm:$0xff] %v2590
                  %v2592 = vld [vmem:[%s2342 + $0x3e0] sm:$0xff]
                  %2593 = vst [vmem:[%s2343 + $0x760] sm:$0xff] %v2592
                  %v2594 = vld [vmem:[%s2342 + $0x3e8] sm:$0xff]
                  %2595 = vst [vmem:[%s2343 + $0x768] sm:$0xff] %v2594
                  %v2596 = vld [vmem:[%s2342 + $0x3f0] sm:$0xff]
                  %2597 = vst [vmem:[%s2343 + $0x770] sm:$0xff] %v2596
                  %v2598 = vld [vmem:[%s2342 + $0x3f8] sm:$0xff]
                  %2599 = vst [vmem:[%s2343 + $0x778] sm:$0xff] %v2598
                $region96: #{tpu_custom_call.1} parent=90 // loop_footer
                  %s2341 = sadd.s32 1, %s2337
                $region97: #{tpu_custom_call.1} parent=90 // loop_footer_branch
                  %2336 = sbr.rel target = $region93
                $region98: #{tpu_custom_call.1} parent=90 // loop_exit
                  _
              $region91: #{tpu_custom_call.1} parent=75 // pred_fallthru
                _
              // Predicated region
              $region99: #{tpu_custom_call.1} parent=75 // pred_check
                _
              $region100: #{tpu_custom_call.1} parent=75 // pred_check_branch
                %2601 = sbr.rel target = $region102
              $region101: #{tpu_custom_call.1} parent=75 // pred_region
                _
              $region102: #{tpu_custom_call.1} parent=75 // pred_fallthru
                _
            $region76: #{tpu_custom_call.1} parent=71 // pred_fallthru
              _
            // Predicated region
            $region77: #{tpu_custom_call.1} parent=71 // pred_check
              _
            $region78: #{tpu_custom_call.1} parent=71 // pred_check_branch
              %2067 = sbr.rel target = $region80
            $region79: #{tpu_custom_call.1} parent=71 // pred_region
              %s2069 = ssub.s32 256, 1
              loop: start=0, step=1, limit=1
              $region81: #{tpu_custom_call.1} parent=79 // loop_pre_header
                _
              $region82: #{tpu_custom_call.1} parent=79 // loop_header
                %s2071 = sphi 0, %s2075
                %p2072 = scmp.ge.s32.totalorder %s2071, 1
                %s2076 = sphi %s2036, %s2036
                %s2077 = sphi %s2061, %s2061
              $region83: #{tpu_custom_call.1} parent=79 // loop_header_branch
                %2074 = sbr.rel (%p2072) target = $region87
              $region84: #{tpu_custom_call.1} parent=79 // loop_body
                %v2078 = vld [vmem:[%s2076] sm:%s2069]
                %2079 = vst [vmem:[%s2077] sm:%s2069] %v2078
                %v2080 = vld [vmem:[%s2076 + $0x8] sm:%s2069]
                %2081 = vst [vmem:[%s2077 + $0x8] sm:%s2069] %v2080
                %v2082 = vld [vmem:[%s2076 + $0x10] sm:%s2069]
                %2083 = vst [vmem:[%s2077 + $0x10] sm:%s2069] %v2082
                %v2084 = vld [vmem:[%s2076 + $0x18] sm:%s2069]
                %2085 = vst [vmem:[%s2077 + $0x18] sm:%s2069] %v2084
                %v2086 = vld [vmem:[%s2076 + $0x20] sm:%s2069]
                %2087 = vst [vmem:[%s2077 + $0x20] sm:%s2069] %v2086
                %v2088 = vld [vmem:[%s2076 + $0x28] sm:%s2069]
                %2089 = vst [vmem:[%s2077 + $0x28] sm:%s2069] %v2088
                %v2090 = vld [vmem:[%s2076 + $0x30] sm:%s2069]
                %2091 = vst [vmem:[%s2077 + $0x30] sm:%s2069] %v2090
                %v2092 = vld [vmem:[%s2076 + $0x38] sm:%s2069]
                %2093 = vst [vmem:[%s2077 + $0x38] sm:%s2069] %v2092
                %v2094 = vld [vmem:[%s2076 + $0x40] sm:%s2069]
                %2095 = vst [vmem:[%s2077 + $0x40] sm:%s2069] %v2094
                %v2096 = vld [vmem:[%s2076 + $0x48] sm:%s2069]
                %2097 = vst [vmem:[%s2077 + $0x48] sm:%s2069] %v2096
                %v2098 = vld [vmem:[%s2076 + $0x50] sm:%s2069]
                %2099 = vst [vmem:[%s2077 + $0x50] sm:%s2069] %v2098
                %v2100 = vld [vmem:[%s2076 + $0x58] sm:%s2069]
                %2101 = vst [vmem:[%s2077 + $0x58] sm:%s2069] %v2100
                %v2102 = vld [vmem:[%s2076 + $0x60] sm:%s2069]
                %2103 = vst [vmem:[%s2077 + $0x60] sm:%s2069] %v2102
                %v2104 = vld [vmem:[%s2076 + $0x68] sm:%s2069]
                %2105 = vst [vmem:[%s2077 + $0x68] sm:%s2069] %v2104
                %v2106 = vld [vmem:[%s2076 + $0x70] sm:%s2069]
                %2107 = vst [vmem:[%s2077 + $0x70] sm:%s2069] %v2106
                %v2108 = vld [vmem:[%s2076 + $0x78] sm:%s2069]
                %2109 = vst [vmem:[%s2077 + $0x78] sm:%s2069] %v2108
                %v2110 = vld [vmem:[%s2076 + $0x80] sm:%s2069]
                %2111 = vst [vmem:[%s2077 + $0x100] sm:%s2069] %v2110
                %v2112 = vld [vmem:[%s2076 + $0x88] sm:%s2069]
                %2113 = vst [vmem:[%s2077 + $0x108] sm:%s2069] %v2112
                %v2114 = vld [vmem:[%s2076 + $0x90] sm:%s2069]
                %2115 = vst [vmem:[%s2077 + $0x110] sm:%s2069] %v2114
                %v2116 = vld [vmem:[%s2076 + $0x98] sm:%s2069]
                %2117 = vst [vmem:[%s2077 + $0x118] sm:%s2069] %v2116
                %v2118 = vld [vmem:[%s2076 + $0xa0] sm:%s2069]
                %2119 = vst [vmem:[%s2077 + $0x120] sm:%s2069] %v2118
                %v2120 = vld [vmem:[%s2076 + $0xa8] sm:%s2069]
                %2121 = vst [vmem:[%s2077 + $0x128] sm:%s2069] %v2120
                %v2122 = vld [vmem:[%s2076 + $0xb0] sm:%s2069]
                %2123 = vst [vmem:[%s2077 + $0x130] sm:%s2069] %v2122
                %v2124 = vld [vmem:[%s2076 + $0xb8] sm:%s2069]
                %2125 = vst [vmem:[%s2077 + $0x138] sm:%s2069] %v2124
                %v2126 = vld [vmem:[%s2076 + $0xc0] sm:%s2069]
                %2127 = vst [vmem:[%s2077 + $0x140] sm:%s2069] %v2126
                %v2128 = vld [vmem:[%s2076 + $0xc8] sm:%s2069]
                %2129 = vst [vmem:[%s2077 + $0x148] sm:%s2069] %v2128
                %v2130 = vld [vmem:[%s2076 + $0xd0] sm:%s2069]
                %2131 = vst [vmem:[%s2077 + $0x150] sm:%s2069] %v2130
                %v2132 = vld [vmem:[%s2076 + $0xd8] sm:%s2069]
                %2133 = vst [vmem:[%s2077 + $0x158] sm:%s2069] %v2132
                %v2134 = vld [vmem:[%s2076 + $0xe0] sm:%s2069]
                %2135 = vst [vmem:[%s2077 + $0x160] sm:%s2069] %v2134
                %v2136 = vld [vmem:[%s2076 + $0xe8] sm:%s2069]
                %2137 = vst [vmem:[%s2077 + $0x168] sm:%s2069] %v2136
                %v2138 = vld [vmem:[%s2076 + $0xf0] sm:%s2069]
                %2139 = vst [vmem:[%s2077 + $0x170] sm:%s2069] %v2138
                %v2140 = vld [vmem:[%s2076 + $0xf8] sm:%s2069]
                %2141 = vst [vmem:[%s2077 + $0x178] sm:%s2069] %v2140
                %v2142 = vld [vmem:[%s2076 + $0x100] sm:%s2069]
                %2143 = vst [vmem:[%s2077 + $0x200] sm:%s2069] %v2142
                %v2144 = vld [vmem:[%s2076 + $0x108] sm:%s2069]
                %2145 = vst [vmem:[%s2077 + $0x208] sm:%s2069] %v2144
                %v2146 = vld [vmem:[%s2076 + $0x110] sm:%s2069]
                %2147 = vst [vmem:[%s2077 + $0x210] sm:%s2069] %v2146
                %v2148 = vld [vmem:[%s2076 + $0x118] sm:%s2069]
                %2149 = vst [vmem:[%s2077 + $0x218] sm:%s2069] %v2148
                %v2150 = vld [vmem:[%s2076 + $0x120] sm:%s2069]
                %2151 = vst [vmem:[%s2077 + $0x220] sm:%s2069] %v2150
                %v2152 = vld [vmem:[%s2076 + $0x128] sm:%s2069]
                %2153 = vst [vmem:[%s2077 + $0x228] sm:%s2069] %v2152
                %v2154 = vld [vmem:[%s2076 + $0x130] sm:%s2069]
                %2155 = vst [vmem:[%s2077 + $0x230] sm:%s2069] %v2154
                %v2156 = vld [vmem:[%s2076 + $0x138] sm:%s2069]
                %2157 = vst [vmem:[%s2077 + $0x238] sm:%s2069] %v2156
                %v2158 = vld [vmem:[%s2076 + $0x140] sm:%s2069]
                %2159 = vst [vmem:[%s2077 + $0x240] sm:%s2069] %v2158
                %v2160 = vld [vmem:[%s2076 + $0x148] sm:%s2069]
                %2161 = vst [vmem:[%s2077 + $0x248] sm:%s2069] %v2160
                %v2162 = vld [vmem:[%s2076 + $0x150] sm:%s2069]
                %2163 = vst [vmem:[%s2077 + $0x250] sm:%s2069] %v2162
                %v2164 = vld [vmem:[%s2076 + $0x158] sm:%s2069]
                %2165 = vst [vmem:[%s2077 + $0x258] sm:%s2069] %v2164
                %v2166 = vld [vmem:[%s2076 + $0x160] sm:%s2069]
                %2167 = vst [vmem:[%s2077 + $0x260] sm:%s2069] %v2166
                %v2168 = vld [vmem:[%s2076 + $0x168] sm:%s2069]
                %2169 = vst [vmem:[%s2077 + $0x268] sm:%s2069] %v2168
                %v2170 = vld [vmem:[%s2076 + $0x170] sm:%s2069]
                %2171 = vst [vmem:[%s2077 + $0x270] sm:%s2069] %v2170
                %v2172 = vld [vmem:[%s2076 + $0x178] sm:%s2069]
                %2173 = vst [vmem:[%s2077 + $0x278] sm:%s2069] %v2172
                %v2174 = vld [vmem:[%s2076 + $0x180] sm:%s2069]
                %2175 = vst [vmem:[%s2077 + $0x300] sm:%s2069] %v2174
                %v2176 = vld [vmem:[%s2076 + $0x188] sm:%s2069]
                %2177 = vst [vmem:[%s2077 + $0x308] sm:%s2069] %v2176
                %v2178 = vld [vmem:[%s2076 + $0x190] sm:%s2069]
                %2179 = vst [vmem:[%s2077 + $0x310] sm:%s2069] %v2178
                %v2180 = vld [vmem:[%s2076 + $0x198] sm:%s2069]
                %2181 = vst [vmem:[%s2077 + $0x318] sm:%s2069] %v2180
                %v2182 = vld [vmem:[%s2076 + $0x1a0] sm:%s2069]
                %2183 = vst [vmem:[%s2077 + $0x320] sm:%s2069] %v2182
                %v2184 = vld [vmem:[%s2076 + $0x1a8] sm:%s2069]
                %2185 = vst [vmem:[%s2077 + $0x328] sm:%s2069] %v2184
                %v2186 = vld [vmem:[%s2076 + $0x1b0] sm:%s2069]
                %2187 = vst [vmem:[%s2077 + $0x330] sm:%s2069] %v2186
                %v2188 = vld [vmem:[%s2076 + $0x1b8] sm:%s2069]
                %2189 = vst [vmem:[%s2077 + $0x338] sm:%s2069] %v2188
                %v2190 = vld [vmem:[%s2076 + $0x1c0] sm:%s2069]
                %2191 = vst [vmem:[%s2077 + $0x340] sm:%s2069] %v2190
                %v2192 = vld [vmem:[%s2076 + $0x1c8] sm:%s2069]
                %2193 = vst [vmem:[%s2077 + $0x348] sm:%s2069] %v2192
                %v2194 = vld [vmem:[%s2076 + $0x1d0] sm:%s2069]
                %2195 = vst [vmem:[%s2077 + $0x350] sm:%s2069] %v2194
                %v2196 = vld [vmem:[%s2076 + $0x1d8] sm:%s2069]
                %2197 = vst [vmem:[%s2077 + $0x358] sm:%s2069] %v2196
                %v2198 = vld [vmem:[%s2076 + $0x1e0] sm:%s2069]
                %2199 = vst [vmem:[%s2077 + $0x360] sm:%s2069] %v2198
                %v2200 = vld [vmem:[%s2076 + $0x1e8] sm:%s2069]
                %2201 = vst [vmem:[%s2077 + $0x368] sm:%s2069] %v2200
                %v2202 = vld [vmem:[%s2076 + $0x1f0] sm:%s2069]
                %2203 = vst [vmem:[%s2077 + $0x370] sm:%s2069] %v2202
                %v2204 = vld [vmem:[%s2076 + $0x1f8] sm:%s2069]
                %2205 = vst [vmem:[%s2077 + $0x378] sm:%s2069] %v2204
                %v2206 = vld [vmem:[%s2076 + $0x200] sm:%s2069]
                %2207 = vst [vmem:[%s2077 + $0x400] sm:%s2069] %v2206
                %v2208 = vld [vmem:[%s2076 + $0x208] sm:%s2069]
                %2209 = vst [vmem:[%s2077 + $0x408] sm:%s2069] %v2208
                %v2210 = vld [vmem:[%s2076 + $0x210] sm:%s2069]
                %2211 = vst [vmem:[%s2077 + $0x410] sm:%s2069] %v2210
                %v2212 = vld [vmem:[%s2076 + $0x218] sm:%s2069]
                %2213 = vst [vmem:[%s2077 + $0x418] sm:%s2069] %v2212
                %v2214 = vld [vmem:[%s2076 + $0x220] sm:%s2069]
                %2215 = vst [vmem:[%s2077 + $0x420] sm:%s2069] %v2214
                %v2216 = vld [vmem:[%s2076 + $0x228] sm:%s2069]
                %2217 = vst [vmem:[%s2077 + $0x428] sm:%s2069] %v2216
                %v2218 = vld [vmem:[%s2076 + $0x230] sm:%s2069]
                %2219 = vst [vmem:[%s2077 + $0x430] sm:%s2069] %v2218
                %v2220 = vld [vmem:[%s2076 + $0x238] sm:%s2069]
                %2221 = vst [vmem:[%s2077 + $0x438] sm:%s2069] %v2220
                %v2222 = vld [vmem:[%s2076 + $0x240] sm:%s2069]
                %2223 = vst [vmem:[%s2077 + $0x440] sm:%s2069] %v2222
                %v2224 = vld [vmem:[%s2076 + $0x248] sm:%s2069]
                %2225 = vst [vmem:[%s2077 + $0x448] sm:%s2069] %v2224
                %v2226 = vld [vmem:[%s2076 + $0x250] sm:%s2069]
                %2227 = vst [vmem:[%s2077 + $0x450] sm:%s2069] %v2226
                %v2228 = vld [vmem:[%s2076 + $0x258] sm:%s2069]
                %2229 = vst [vmem:[%s2077 + $0x458] sm:%s2069] %v2228
                %v2230 = vld [vmem:[%s2076 + $0x260] sm:%s2069]
                %2231 = vst [vmem:[%s2077 + $0x460] sm:%s2069] %v2230
                %v2232 = vld [vmem:[%s2076 + $0x268] sm:%s2069]
                %2233 = vst [vmem:[%s2077 + $0x468] sm:%s2069] %v2232
                %v2234 = vld [vmem:[%s2076 + $0x270] sm:%s2069]
                %2235 = vst [vmem:[%s2077 + $0x470] sm:%s2069] %v2234
                %v2236 = vld [vmem:[%s2076 + $0x278] sm:%s2069]
                %2237 = vst [vmem:[%s2077 + $0x478] sm:%s2069] %v2236
                %v2238 = vld [vmem:[%s2076 + $0x280] sm:%s2069]
                %2239 = vst [vmem:[%s2077 + $0x500] sm:%s2069] %v2238
                %v2240 = vld [vmem:[%s2076 + $0x288] sm:%s2069]
                %2241 = vst [vmem:[%s2077 + $0x508] sm:%s2069] %v2240
                %v2242 = vld [vmem:[%s2076 + $0x290] sm:%s2069]
                %2243 = vst [vmem:[%s2077 + $0x510] sm:%s2069] %v2242
                %v2244 = vld [vmem:[%s2076 + $0x298] sm:%s2069]
                %2245 = vst [vmem:[%s2077 + $0x518] sm:%s2069] %v2244
                %v2246 = vld [vmem:[%s2076 + $0x2a0] sm:%s2069]
                %2247 = vst [vmem:[%s2077 + $0x520] sm:%s2069] %v2246
                %v2248 = vld [vmem:[%s2076 + $0x2a8] sm:%s2069]
                %2249 = vst [vmem:[%s2077 + $0x528] sm:%s2069] %v2248
                %v2250 = vld [vmem:[%s2076 + $0x2b0] sm:%s2069]
                %2251 = vst [vmem:[%s2077 + $0x530] sm:%s2069] %v2250
                %v2252 = vld [vmem:[%s2076 + $0x2b8] sm:%s2069]
                %2253 = vst [vmem:[%s2077 + $0x538] sm:%s2069] %v2252
                %v2254 = vld [vmem:[%s2076 + $0x2c0] sm:%s2069]
                %2255 = vst [vmem:[%s2077 + $0x540] sm:%s2069] %v2254
                %v2256 = vld [vmem:[%s2076 + $0x2c8] sm:%s2069]
                %2257 = vst [vmem:[%s2077 + $0x548] sm:%s2069] %v2256
                %v2258 = vld [vmem:[%s2076 + $0x2d0] sm:%s2069]
                %2259 = vst [vmem:[%s2077 + $0x550] sm:%s2069] %v2258
                %v2260 = vld [vmem:[%s2076 + $0x2d8] sm:%s2069]
                %2261 = vst [vmem:[%s2077 + $0x558] sm:%s2069] %v2260
                %v2262 = vld [vmem:[%s2076 + $0x2e0] sm:%s2069]
                %2263 = vst [vmem:[%s2077 + $0x560] sm:%s2069] %v2262
                %v2264 = vld [vmem:[%s2076 + $0x2e8] sm:%s2069]
                %2265 = vst [vmem:[%s2077 + $0x568] sm:%s2069] %v2264
                %v2266 = vld [vmem:[%s2076 + $0x2f0] sm:%s2069]
                %2267 = vst [vmem:[%s2077 + $0x570] sm:%s2069] %v2266
                %v2268 = vld [vmem:[%s2076 + $0x2f8] sm:%s2069]
                %2269 = vst [vmem:[%s2077 + $0x578] sm:%s2069] %v2268
                %v2270 = vld [vmem:[%s2076 + $0x300] sm:%s2069]
                %2271 = vst [vmem:[%s2077 + $0x600] sm:%s2069] %v2270
                %v2272 = vld [vmem:[%s2076 + $0x308] sm:%s2069]
                %2273 = vst [vmem:[%s2077 + $0x608] sm:%s2069] %v2272
                %v2274 = vld [vmem:[%s2076 + $0x310] sm:%s2069]
                %2275 = vst [vmem:[%s2077 + $0x610] sm:%s2069] %v2274
                %v2276 = vld [vmem:[%s2076 + $0x318] sm:%s2069]
                %2277 = vst [vmem:[%s2077 + $0x618] sm:%s2069] %v2276
                %v2278 = vld [vmem:[%s2076 + $0x320] sm:%s2069]
                %2279 = vst [vmem:[%s2077 + $0x620] sm:%s2069] %v2278
                %v2280 = vld [vmem:[%s2076 + $0x328] sm:%s2069]
                %2281 = vst [vmem:[%s2077 + $0x628] sm:%s2069] %v2280
                %v2282 = vld [vmem:[%s2076 + $0x330] sm:%s2069]
                %2283 = vst [vmem:[%s2077 + $0x630] sm:%s2069] %v2282
                %v2284 = vld [vmem:[%s2076 + $0x338] sm:%s2069]
                %2285 = vst [vmem:[%s2077 + $0x638] sm:%s2069] %v2284
                %v2286 = vld [vmem:[%s2076 + $0x340] sm:%s2069]
                %2287 = vst [vmem:[%s2077 + $0x640] sm:%s2069] %v2286
                %v2288 = vld [vmem:[%s2076 + $0x348] sm:%s2069]
                %2289 = vst [vmem:[%s2077 + $0x648] sm:%s2069] %v2288
                %v2290 = vld [vmem:[%s2076 + $0x350] sm:%s2069]
                %2291 = vst [vmem:[%s2077 + $0x650] sm:%s2069] %v2290
                %v2292 = vld [vmem:[%s2076 + $0x358] sm:%s2069]
                %2293 = vst [vmem:[%s2077 + $0x658] sm:%s2069] %v2292
                %v2294 = vld [vmem:[%s2076 + $0x360] sm:%s2069]
                %2295 = vst [vmem:[%s2077 + $0x660] sm:%s2069] %v2294
                %v2296 = vld [vmem:[%s2076 + $0x368] sm:%s2069]
                %2297 = vst [vmem:[%s2077 + $0x668] sm:%s2069] %v2296
                %v2298 = vld [vmem:[%s2076 + $0x370] sm:%s2069]
                %2299 = vst [vmem:[%s2077 + $0x670] sm:%s2069] %v2298
                %v2300 = vld [vmem:[%s2076 + $0x378] sm:%s2069]
                %2301 = vst [vmem:[%s2077 + $0x678] sm:%s2069] %v2300
                %v2302 = vld [vmem:[%s2076 + $0x380] sm:%s2069]
                %2303 = vst [vmem:[%s2077 + $0x700] sm:%s2069] %v2302
                %v2304 = vld [vmem:[%s2076 + $0x388] sm:%s2069]
                %2305 = vst [vmem:[%s2077 + $0x708] sm:%s2069] %v2304
                %v2306 = vld [vmem:[%s2076 + $0x390] sm:%s2069]
                %2307 = vst [vmem:[%s2077 + $0x710] sm:%s2069] %v2306
                %v2308 = vld [vmem:[%s2076 + $0x398] sm:%s2069]
                %2309 = vst [vmem:[%s2077 + $0x718] sm:%s2069] %v2308
                %v2310 = vld [vmem:[%s2076 + $0x3a0] sm:%s2069]
                %2311 = vst [vmem:[%s2077 + $0x720] sm:%s2069] %v2310
                %v2312 = vld [vmem:[%s2076 + $0x3a8] sm:%s2069]
                %2313 = vst [vmem:[%s2077 + $0x728] sm:%s2069] %v2312
                %v2314 = vld [vmem:[%s2076 + $0x3b0] sm:%s2069]
                %2315 = vst [vmem:[%s2077 + $0x730] sm:%s2069] %v2314
                %v2316 = vld [vmem:[%s2076 + $0x3b8] sm:%s2069]
                %2317 = vst [vmem:[%s2077 + $0x738] sm:%s2069] %v2316
                %v2318 = vld [vmem:[%s2076 + $0x3c0] sm:%s2069]
                %2319 = vst [vmem:[%s2077 + $0x740] sm:%s2069] %v2318
                %v2320 = vld [vmem:[%s2076 + $0x3c8] sm:%s2069]
                %2321 = vst [vmem:[%s2077 + $0x748] sm:%s2069] %v2320
                %v2322 = vld [vmem:[%s2076 + $0x3d0] sm:%s2069]
                %2323 = vst [vmem:[%s2077 + $0x750] sm:%s2069] %v2322
                %v2324 = vld [vmem:[%s2076 + $0x3d8] sm:%s2069]
                %2325 = vst [vmem:[%s2077 + $0x758] sm:%s2069] %v2324
                %v2326 = vld [vmem:[%s2076 + $0x3e0] sm:%s2069]
                %2327 = vst [vmem:[%s2077 + $0x760] sm:%s2069] %v2326
                %v2328 = vld [vmem:[%s2076 + $0x3e8] sm:%s2069]
                %2329 = vst [vmem:[%s2077 + $0x768] sm:%s2069] %v2328
                %v2330 = vld [vmem:[%s2076 + $0x3f0] sm:%s2069]
                %2331 = vst [vmem:[%s2077 + $0x770] sm:%s2069] %v2330
                %v2332 = vld [vmem:[%s2076 + $0x3f8] sm:%s2069]
                %2333 = vst [vmem:[%s2077 + $0x778] sm:%s2069] %v2332
              $region85: #{tpu_custom_call.1} parent=79 // loop_footer
                %s2075 = sadd.s32 1, %s2071
              $region86: #{tpu_custom_call.1} parent=79 // loop_footer_branch
                %2070 = sbr.rel target = $region82
              $region87: #{tpu_custom_call.1} parent=79 // loop_exit
                _
            $region80: #{tpu_custom_call.1} parent=71 // pred_fallthru
              _
          $region72: #{tpu_custom_call.1} parent=67 // pred_fallthru
            _
          %2602 = vnop
        $region68: #{tpu_custom_call.1} parent=39 // pred_fallthru
          _
      $region40: #{tpu_custom_call.1} parent=5 // pred_fallthru
        _
      %p2603 = scmp.le.s32.totalorder 2, %s21
      // Predicated region
      $region103: #{tpu_custom_call.1} parent=5 // pred_check
        %p2604 = pneg %p2603
      $region104: #{tpu_custom_call.1} parent=5 // pred_check_branch
        %2606 = sbr.rel (%p2604) target = $region106
      $region105: #{tpu_custom_call.1} parent=5 // pred_region
        %s2607 = ssub.s32 %s21, 2
        // Predicated region
        $region107: #{tpu_custom_call.1} parent=105 // pred_check
          %p2608 = pneg %p176
        $region108: #{tpu_custom_call.1} parent=105 // pred_check_branch
          %2610 = sbr.rel (%p2608) target = $region110
        $region109: #{tpu_custom_call.1} parent=105 // pred_region
          %s2611 = sand.u32 %s161, 1
          %s2612 = scalar_lea.sflag [#allocation6], %s2611
          %s2613 = sand.u32 %s161, 1
          %s2614 = smul.addr %s2613, 256
          %s2615 = scalar_lea.vmem [#allocation13], %s2614
          %2616 = dma.done %s2612, 4096
        $region110: #{tpu_custom_call.1} parent=105 // pred_fallthru
          _
        // Predicated region
        $region111: #{tpu_custom_call.1} parent=105 // pred_check
          %p2617 = pneg %p204
        $region112: #{tpu_custom_call.1} parent=105 // pred_check_branch
          %2619 = sbr.rel (%p2617) target = $region114
        $region113: #{tpu_custom_call.1} parent=105 // pred_region
          %s2620 = sand.u32 %s189, 1
          %s2621 = sand.u32 %s189, 1
          %s2622 = smul.addr %s2621, 1024
          %s2623 = scalar_lea.vmem [#allocation14], %s2622
        $region114: #{tpu_custom_call.1} parent=105 // pred_fallthru
          _
      $region106: #{tpu_custom_call.1} parent=5 // pred_fallthru
        _
    $region6: #{tpu_custom_call.1} parent=1 // loop_footer
      %s25 = sadd.s32 1, %s21
    $region7: #{tpu_custom_call.1} parent=1 // loop_footer_branch
      %20 = sbr.rel target = $region3
    $region8: #{tpu_custom_call.1} parent=1 // loop_exit
      _
    %2624 = vsyncpa [#allocation5], 1
    %s2625 = scalar_lea.sflag [#allocation5], 1
    %2626 = vsyncpa %s2625, 1
    %2627 = vsyncpa [#allocation8], 1
    %2628 = vsyncpa [#allocation11], 1
    %2629 = vsyncpa [#allocation6], 1
    %s2630 = scalar_lea.sflag [#allocation6], 1
    %2631 = vsyncpa %s2630, 1

</llo_original>
